<compile_context>
chip_gen: v7x
topology: tpu7x:2x2x1
jax: 0.10.0
libtpu: 0.0.40
codegen_flags: <defaults>
</compile_context>

<pallas_src>
from functools import partial

import jax
import jax.numpy as jnp
from jax.experimental import pallas as pl
from jax.experimental.pallas import tpu as pltpu

ABIT = 4                          # bit_list = [4] -> abit = wbit = 4 (!= 32)
N_LEVELS = float(2 ** ABIT - 1)   # DoReFa-style activation quantization levels
INV_LEVELS = 1.0 / N_LEVELS
BN_EPS = 1e-5


# ------------------------------ small helpers ------------------------------ #

def _round_up(v, m):
    return (v + m - 1) // m * m


# ----------------------------- Pallas kernels ------------------------------ #

def _conv_act_kernel(x_ref, w_ref, b_ref, o_ref, *, taps, out_cols):
    """One image of one conv layer, channel-major / lane-dense.

    x_ref : (K, Lin)      bf16  per-image activation slab (lanes = flat spatial)
    w_ref : (T, Cout, K)  bf16  per-tap weights (BN scale folded in)
    b_ref : (Cout, 1)     f32   bias / folded BN shift
    o_ref : (Cout, Lout)  bf16  activated output columns of this image

        out[:, r] = Act( b + sum_t w[t] @ x[:, r + taps[t]] )

    Act = clamp(0,1) + 4-bit quantize (reference Activate), fused into this
    producer epilogue; exact even when a MaxPool follows (monotone ops commute
    with max).
    """
    x = x_ref[...]                                    # one load; slices below
    acc = jnp.zeros(o_ref.shape, jnp.float32)
    for t, off in enumerate(taps):                    # static unroll: kh*kw taps
        acc = acc + jnp.dot(w_ref[t], x[:, off:off + out_cols],
                            preferred_element_type=jnp.float32)
    acc = acc + b_ref[...]
    acc = jnp.clip(acc, 0.0, 1.0)                     # Activate: clamp
    acc = jnp.round(acc * N_LEVELS) * INV_LEVELS      # Activate: 4-bit quantize
    o_ref[...] = acc.astype(o_ref.dtype)


def _head_kernel(x_ref, w7_ref, wfc_ref, bfc_ref, o_ref):
    """conv7 (1x1 spatial output -> pure matmul) -> Activate(quantize=False) -> fc."""
    h = jnp.dot(x_ref[...], w7_ref[...], preferred_element_type=jnp.float32)
    h = jnp.clip(h, 0.0, 1.0)                         # Activate(quantize=False)
    o_ref[...] = (jnp.dot(h.astype(jnp.bfloat16), wfc_ref[...],
                          preferred_element_type=jnp.float32)
                  + bfc_ref[...]).astype(o_ref.dtype)


# ------------------------------- wrappers ---------------------------------- #

def conv_act_layer(x, w, bias, *, pad, im2col=False):
    """Conv2d (+ bias / folded-BN shift) + fused Activate, lane-dense layout.

    x    : (Cin, B, H, W) bf16/f32 valid activation map (channel-major)
    w    : (kh, kw, Cin, Cout) f32, BN scale already folded in
    bias : (Cout,) f32 bias or folded BN shift
    Returns (Cout, B, Ho, Wo) bf16 activated map.
    """
    cin, b = x.shape[0], x.shape[1]
    kh, kw, _, cout = w.shape
    if pad:
        x = jnp.pad(x, ((0, 0), (0, 0), (pad, pad), (pad, pad)))
    hp, wp = x.shape[2], x.shape[3]
    ho, wo = hp - kh + 1, wp - kw + 1

    if im2col:
        # Pack all kh*kw taps into the contraction dim in the wrapper: used for
        # conv1 (Cin=3 -> K=75), where per-tap K=3 matmuls would waste the MXU.
        x = jnp.concatenate([x[:, :, di:di + ho, dj:dj + wo]
                             for di in range(kh) for dj in range(kw)], axis=0)
        k_eff, taps = kh * kw * cin, (0,)
        cols, row_w = ho * wo, wo            # valid flat cols / row stride
    else:
        k_eff = cin
        taps = tuple(di * wp + dj for di in range(kh) for dj in range(kw))
        cols, row_w = ho * wp, wp

    lout = _round_up(cols, 128)                       # lane-dense output block
    lin = _round_up(taps[-1] + lout, 128)             # per-image input slab
    xs = x.reshape(k_eff, b, -1)
    xs = jnp.pad(xs, ((0, 0), (0, 0), (0, lin - xs.shape[2])))
    xs = xs.reshape(k_eff, b * lin).astype(jnp.bfloat16)
    wt = jnp.transpose(w.reshape(len(taps), k_eff, cout),
                       (0, 2, 1)).astype(jnp.bfloat16)       # (T, Cout, K)
    bcol = bias.reshape(cout, 1).astype(jnp.float32)

    y = pl.pallas_call(
        partial(_conv_act_kernel, taps=taps, out_cols=lout),
        grid=(b,),                                    # one image per step
        out_shape=jax.ShapeDtypeStruct((cout, b * lout), jnp.bfloat16),
        in_specs=[
            pl.BlockSpec((k_eff, lin), lambda i: (0, i)),          # this image
            pl.BlockSpec((len(taps), cout, k_eff), lambda i: (0, 0, 0)),
            pl.BlockSpec((cout, 1), lambda i: (0, 0)),
        ],
        out_specs=pl.BlockSpec((cout, lout), lambda i: (0, i)),
        compiler_params=pltpu.CompilerParams(
            dimension_semantics=("parallel",),
            vmem_limit_bytes=32 * 1024 * 1024),
        cost_estimate=pl.CostEstimate(
            flops=2 * b * lout * len(taps) * k_eff * cout,
            transcendentals=0,
            bytes_accessed=xs.size * 2 + wt.size * 2 + cout * 4
                           + b * lout * cout * 2),
    )(xs, wt, bcol)

    # Drop padding / garbage columns (windows that fall off a row or the image).
    y = y.reshape(cout, b, lout)[:, :, :cols]
    return y.reshape(cout, b, ho, row_w)[:, :, :, :wo]


def head(x2d, w7, wfc, bfc):
    """Fused: conv7(5x5 on 5x5 map == matmul) -> clamp -> fc, all bf16 MXU."""
    k = w7.shape[0] * w7.shape[1] * w7.shape[2]
    c7, n = w7.shape[3], wfc.shape[1]
    vmem = pl.BlockSpec(memory_space=pltpu.MemorySpace.VMEM)
    return pl.pallas_call(
        _head_kernel,
        out_shape=jax.ShapeDtypeStruct((x2d.shape[0], n), jnp.float32),
        in_specs=[vmem] * 4,
        out_specs=vmem,
        cost_estimate=pl.CostEstimate(
            flops=2 * x2d.shape[0] * (k * c7 + c7 * n),
            transcendentals=0,
            bytes_accessed=x2d.size * 2 + k * c7 * 2 + c7 * n * 2
                           + n * 4 + x2d.shape[0] * n * 4),
    )(x2d.astype(jnp.bfloat16),
      w7.reshape(k, c7).astype(jnp.bfloat16),
      wfc.astype(jnp.bfloat16),
      bfc.reshape(1, n).astype(jnp.float32))


def maxpool2(x):
    """MaxPool2d(2) on a (C, B, H, W) map; tiny XLA glue between pallas_calls.
    The Activate that the reference applies AFTER the pool has already been
    applied in the producing conv kernel (exact: clamp/round commute with max),
    so this runs on bf16 quantized data."""
    return jnp.maximum(jnp.maximum(x[:, :, 0::2, 0::2], x[:, :, 0::2, 1::2]),
                       jnp.maximum(x[:, :, 1::2, 0::2], x[:, :, 1::2, 1::2]))


def bn_affine(gamma, beta, mean, var):
    scale = gamma / jnp.sqrt(var + BN_EPS)
    shift = beta - mean * scale
    return scale, shift


# ------------------------------ parameters --------------------------------- #

def init_params(key, expand=1):
    ep = expand
    keys = iter(jax.random.split(key, 32))

    def wgt(shape, fan_in):
        return jax.random.normal(next(keys), shape, jnp.float32) / jnp.sqrt(fan_in)

    def bnp(c):
        return dict(
            gamma=jax.random.uniform(next(keys), (c,), jnp.float32, 0.5, 1.5),
            beta=0.1 * jax.random.normal(next(keys), (c,), jnp.float32),
            mean=0.1 * jax.random.normal(next(keys), (c,), jnp.float32),
            var=jax.random.uniform(next(keys), (c,), jnp.float32, 0.5, 1.5),
        )

    p = {}
    p["conv1_w"] = wgt((5, 5, 3, ep * 6), 5 * 5 * 3)
    p["conv1_b"] = 0.1 * jax.random.normal(next(keys), (ep * 6,), jnp.float32)
    p["conv2_w"] = wgt((3, 3, ep * 6, ep * 8), 9 * ep * 6);    p["bn2"] = bnp(ep * 8)
    p["conv3_w"] = wgt((3, 3, ep * 8, ep * 8), 9 * ep * 8);    p["bn3"] = bnp(ep * 8)
    p["conv4_w"] = wgt((3, 3, ep * 8, ep * 16), 9 * ep * 8);   p["bn4"] = bnp(ep * 16)
    p["conv5_w"] = wgt((3, 3, ep * 16, ep * 16), 9 * ep * 16); p["bn5"] = bnp(ep * 16)
    p["conv6_w"] = wgt((3, 3, ep * 16, ep * 16), 9 * ep * 16); p["bn6"] = bnp(ep * 16)
    p["conv7_w"] = wgt((5, 5, ep * 16, ep * 64), 25 * ep * 16)
    p["fc_w"] = wgt((ep * 64, 10), ep * 64)
    p["fc_b"] = 0.1 * jax.random.normal(next(keys), (10,), jnp.float32)
    return p


# ------------------------------- forward ----------------------------------- #

def svhnq_forward(params, x_nchw):
    # NCHW (PyTorch) -> channel-major (C, B, H, W) for the lane-dense kernels.
    x = jnp.transpose(x_nchw, (1, 0, 2, 3)).astype(jnp.float32)

    # Conv(3, ep*6, 5, pad=0, bias=True) -> [Activate fused] -> MaxPool(2)
    # (reference order conv -> pool -> Activate; exact since Activate is monotone)
    y = conv_act_layer(x, params["conv1_w"], params["conv1_b"], pad=0, im2col=True)
    y = maxpool2(y)

    # Conv_Q -> BN (scale folded into weights, shift is the kernel bias),
    # Activate fused into each producer's epilogue.
    s, sh = bn_affine(**params["bn2"])
    y = conv_act_layer(y, params["conv2_w"] * s, sh, pad=1)
    s, sh = bn_affine(**params["bn3"])
    y = conv_act_layer(y, params["conv3_w"] * s, sh, pad=1)
    y = maxpool2(y)
    s, sh = bn_affine(**params["bn4"])
    y = conv_act_layer(y, params["conv4_w"] * s, sh, pad=0)
    s, sh = bn_affine(**params["bn5"])
    y = conv_act_layer(y, params["conv5_w"] * s, sh, pad=1)
    s, sh = bn_affine(**params["bn6"])
    y = conv_act_layer(y, params["conv6_w"] * s, sh, pad=0)

    # Dropout(0.5): identity in eval mode.  Activate already applied above.
    # Conv_Q(ep*16, ep*64, 5, pad=0) on a 5x5 map -> clamp -> fc (fused head).
    b = y.shape[1]
    x2d = jnp.transpose(y, (1, 2, 3, 0)).reshape(b, -1)   # (B, 5*5*ep*16), (h,w,c)
    return head(x2d, params["conv7_w"], params["fc_w"], params["fc_b"])


if __name__ == "__main__":
    key = jax.random.PRNGKey(0)
    kp, kx = jax.random.split(key)
    params = init_params(kp, expand=1)
    # SVHNQ's layer stack implies a 3-channel 40x40 input (last conv is 5x5 on 5x5).
    x = jax.random.normal(kx, (2, 3, 40, 40), jnp.float32)

    out = jax.block_until_ready(jax.jit(svhnq_forward)(params, x))
    assert out.shape == (2, 10), out.shape
    assert bool(jnp.all(jnp.isfinite(out)))
    print("KERNEL_OK")
</pallas_src>

<mosaic_0001>
module attributes {stable_mosaic.version = 11 : i64} {
  func.func @_conv_act_kernel(%arg0: i32, %arg1: memref<75x1408xbf16, #tpu.memory_space<vmem>>, %arg2: memref<1x6x75xbf16, #tpu.memory_space<vmem>>, %arg3: memref<6x1xf32, #tpu.memory_space<vmem>>, %arg4: memref<6x1408xbf16, #tpu.memory_space<vmem>>) attributes {dimension_semantics = [#tpu.dimension_semantics<parallel>], iteration_bounds = array<i64: 2>, scalar_prefetch = 0 : i64, scratch_operands = 0 : i64, tpu.core_type = #tpu.core_type<tc>, window_params = [{transform_indices = @transform_0, window_bounds = array<i64: 75, 1408>}, {pipeline_mode = #tpu.pipeline_mode<synchronous>, transform_indices = @transform_1, window_bounds = array<i64: 1, 6, 75>}, {pipeline_mode = #tpu.pipeline_mode<synchronous>, transform_indices = @transform_2, window_bounds = array<i64: 6, 1>}, {transform_indices = @transform_3, window_bounds = array<i64: 6, 1408>}]} {
    %c0 = arith.constant 0 : index
    %c0_0 = arith.constant 0 : index
    %0 = vector.load %arg1[%c0, %c0_0] : memref<75x1408xbf16, #tpu.memory_space<vmem>>, vector<75x1408xbf16>
    %cst = arith.constant 0.000000e+00 : f32
    %1 = vector.broadcast %cst : f32 to vector<6x1408xf32>
    %c0_1 = arith.constant 0 : index
    %c0_2 = arith.constant 0 : index
    %c0_3 = arith.constant 0 : index
    %2 = vector.load %arg2[%c0_1, %c0_2, %c0_3] : memref<1x6x75xbf16, #tpu.memory_space<vmem>>, vector<1x6x75xbf16>
    %3 = vector.shape_cast %2 : vector<1x6x75xbf16> to vector<6x75xbf16>
    %cst_4 = arith.constant dense<0.000000e+00> : vector<6x1408xf32>
    %4 = tpu.matmul %3, %0, %cst_4 {dimension_numbers = #tpu.dot_dimension_numbers<[1], [0], [0], [1], [0, 0, 1, 1], [], []>} : vector<6x75xbf16>, vector<75x1408xbf16>, vector<6x1408xf32> -> vector<6x1408xf32>
    %5 = arith.addf %1, %4 : vector<6x1408xf32>
    %c0_5 = arith.constant 0 : index
    %c0_6 = arith.constant 0 : index
    %6 = vector.load %arg3[%c0_5, %c0_6] : memref<6x1xf32, #tpu.memory_space<vmem>>, vector<6x1xf32>
    %7 = vector.broadcast %6 : vector<6x1xf32> to vector<6x1408xf32>
    %8 = arith.addf %5, %7 : vector<6x1408xf32>
    %cst_7 = arith.constant 0.000000e+00 : f32
    %cst_8 = arith.constant 1.000000e+00 : f32
    %9 = vector.broadcast %cst_7 : f32 to vector<6x1408xf32>
    %10 = arith.maximumf %9, %8 : vector<6x1408xf32>
    %11 = vector.broadcast %cst_8 : f32 to vector<6x1408xf32>
    %12 = arith.minimumf %11, %10 : vector<6x1408xf32>
    %cst_9 = arith.constant 1.500000e+01 : f32
    %13 = vector.broadcast %cst_9 : f32 to vector<6x1408xf32>
    %14 = arith.mulf %12, %13 : vector<6x1408xf32>
    %15 = math.roundeven %14 : vector<6x1408xf32>
    %cst_10 = arith.constant 0.0666666701 : f32
    %16 = vector.broadcast %cst_10 : f32 to vector<6x1408xf32>
    %17 = arith.mulf %15, %16 : vector<6x1408xf32>
    %18 = arith.truncf %17 : vector<6x1408xf32> to vector<6x1408xbf16>
    %c0_11 = arith.constant 0 : index
    %c0_12 = arith.constant 0 : index
    %19 = vector.load %arg4[%c0_11, %c0_12] : memref<6x1408xbf16, #tpu.memory_space<vmem>>, vector<6x1408xbf16>
    tpu.vector_store %arg4[%c0_11, %c0_12], %18 {strides = array<i32>} : memref<6x1408xbf16, #tpu.memory_space<vmem>>, vector<6x1408xbf16>,
    return
  }
  func.func @transform_0(%arg0: i32) -> (i32, i32) {
    %c0_i32 = arith.constant 0 : i32
    %c0_i32_0 = arith.constant 0 : i32
    return %c0_i32, %arg0 : i32, i32
  }
  func.func @transform_1(%arg0: i32) -> (i32, i32, i32) {
    %c0_i32 = arith.constant 0 : i32
    %c0_i32_0 = arith.constant 0 : i32
    %c0_i32_1 = arith.constant 0 : i32
    %c0_i32_2 = arith.constant 0 : i32
    return %c0_i32, %c0_i32_0, %c0_i32_1 : i32, i32, i32
  }
  func.func @transform_2(%arg0: i32) -> (i32, i32) {
    %c0_i32 = arith.constant 0 : i32
    %c0_i32_0 = arith.constant 0 : i32
    %c0_i32_1 = arith.constant 0 : i32
    return %c0_i32, %c0_i32_0 : i32, i32
  }
  func.func @transform_3(%arg0: i32) -> (i32, i32) {
    %c0_i32 = arith.constant 0 : i32
    %c0_i32_0 = arith.constant 0 : i32
    return %c0_i32, %arg0 : i32, i32
  }
}

module attributes {stable_mosaic.version = 11 : i64} {
  func.func @_conv_act_kernel(%arg0: i32, %arg1: memref<6x512xbf16, #tpu.memory_space<vmem>>, %arg2: memref<9x8x6xbf16, #tpu.memory_space<vmem>>, %arg3: memref<8x1xf32, #tpu.memory_space<vmem>>, %arg4: memref<8x384xbf16, #tpu.memory_space<vmem>>) attributes {dimension_semantics = [#tpu.dimension_semantics<parallel>], iteration_bounds = array<i64: 2>, scalar_prefetch = 0 : i64, scratch_operands = 0 : i64, tpu.core_type = #tpu.core_type<tc>, window_params = [{transform_indices = @transform_0, window_bounds = array<i64: 6, 512>}, {pipeline_mode = #tpu.pipeline_mode<synchronous>, transform_indices = @transform_1, window_bounds = array<i64: 9, 8, 6>}, {pipeline_mode = #tpu.pipeline_mode<synchronous>, transform_indices = @transform_2, window_bounds = array<i64: 8, 1>}, {transform_indices = @transform_3, window_bounds = array<i64: 8, 384>}]} {
    %c0 = arith.constant 0 : index
    %c0_0 = arith.constant 0 : index
    %0 = vector.load %arg1[%c0, %c0_0] : memref<6x512xbf16, #tpu.memory_space<vmem>>, vector<6x512xbf16>
    %cst = arith.constant 0.000000e+00 : f32
    %1 = vector.broadcast %cst : f32 to vector<8x384xf32>
    %c0_1 = arith.constant 0 : index
    %c0_2 = arith.constant 0 : index
    %c0_3 = arith.constant 0 : index
    %2 = vector.load %arg2[%c0_1, %c0_2, %c0_3] : memref<9x8x6xbf16, #tpu.memory_space<vmem>>, vector<1x8x6xbf16>
    %3 = vector.shape_cast %2 : vector<1x8x6xbf16> to vector<8x6xbf16>
    %4 = vector.extract_strided_slice %0 {offsets = [0, 0], sizes = [6, 384], strides = [1, 1]} : vector<6x512xbf16> to vector<6x384xbf16>
    %cst_4 = arith.constant dense<0.000000e+00> : vector<8x384xf32>
    %5 = tpu.matmul %3, %4, %cst_4 {dimension_numbers = #tpu.dot_dimension_numbers<[1], [0], [0], [1], [0, 0, 1, 1], [], []>} : vector<8x6xbf16>, vector<6x384xbf16>, vector<8x384xf32> -> vector<8x384xf32>
    %6 = arith.addf %1, %5 : vector<8x384xf32>
    %c1 = arith.constant 1 : index
    %c0_5 = arith.constant 0 : index
    %c0_6 = arith.constant 0 : index
    %7 = vector.load %arg2[%c1, %c0_5, %c0_6] : memref<9x8x6xbf16, #tpu.memory_space<vmem>>, vector<1x8x6xbf16>
    %8 = vector.shape_cast %7 : vector<1x8x6xbf16> to vector<8x6xbf16>
    %9 = vector.extract_strided_slice %0 {offsets = [0, 1], sizes = [6, 384], strides = [1, 1]} : vector<6x512xbf16> to vector<6x384xbf16>
    %cst_7 = arith.constant dense<0.000000e+00> : vector<8x384xf32>
    %10 = tpu.matmul %8, %9, %cst_7 {dimension_numbers = #tpu.dot_dimension_numbers<[1], [0], [0], [1], [0, 0, 1, 1], [], []>} : vector<8x6xbf16>, vector<6x384xbf16>, vector<8x384xf32> -> vector<8x384xf32>
    %11 = arith.addf %6, %10 : vector<8x384xf32>
    %c2 = arith.constant 2 : index
    %c0_8 = arith.constant 0 : index
    %c0_9 = arith.constant 0 : index
    %12 = vector.load %arg2[%c2, %c0_8, %c0_9] : memref<9x8x6xbf16, #tpu.memory_space<vmem>>, vector<1x8x6xbf16>
    %13 = vector.shape_cast %12 : vector<1x8x6xbf16> to vector<8x6xbf16>
    %14 = vector.extract_strided_slice %0 {offsets = [0, 2], sizes = [6, 384], strides = [1, 1]} : vector<6x512xbf16> to vector<6x384xbf16>
    %cst_10 = arith.constant dense<0.000000e+00> : vector<8x384xf32>
    %15 = tpu.matmul %13, %14, %cst_10 {dimension_numbers = #tpu.dot_dimension_numbers<[1], [0], [0], [1], [0, 0, 1, 1], [], []>} : vector<8x6xbf16>, vector<6x384xbf16>, vector<8x384xf32> -> vector<8x384xf32>
    %16 = arith.addf %11, %15 : vector<8x384xf32>
    %c3 = arith.constant 3 : index
    %c0_11 = arith.constant 0 : index
    %c0_12 = arith.constant 0 : index
    %17 = vector.load %arg2[%c3, %c0_11, %c0_12] : memref<9x8x6xbf16, #tpu.memory_space<vmem>>, vector<1x8x6xbf16>
    %18 = vector.shape_cast %17 : vector<1x8x6xbf16> to vector<8x6xbf16>
    %19 = vector.extract_strided_slice %0 {offsets = [0, 20], sizes = [6, 384], strides = [1, 1]} : vector<6x512xbf16> to vector<6x384xbf16>
    %cst_13 = arith.constant dense<0.000000e+00> : vector<8x384xf32>
    %20 = tpu.matmul %18, %19, %cst_13 {dimension_numbers = #tpu.dot_dimension_numbers<[1], [0], [0], [1], [0, 0, 1, 1], [], []>} : vector<8x6xbf16>, vector<6x384xbf16>, vector<8x384xf32> -> vector<8x384xf32>
    %21 = arith.addf %16, %20 : vector<8x384xf32>
    %c4 = arith.constant 4 : index
    %c0_14 = arith.constant 0 : index
    %c0_15 = arith.constant 0 : index
    %22 = vector.load %arg2[%c4, %c0_14, %c0_15] : memref<9x8x6xbf16, #tpu.memory_space<vmem>>, vector<1x8x6xbf16>
    %23 = vector.shape_cast %22 : vector<1x8x6xbf16> to vector<8x6xbf16>
    %24 = vector.extract_strided_slice %0 {offsets = [0, 21], sizes = [6, 384], strides = [1, 1]} : vector<6x512xbf16> to vector<6x384xbf16>
    %cst_16 = arith.constant dense<0.000000e+00> : vector<8x384xf32>
    %25 = tpu.matmul %23, %24, %cst_16 {dimension_numbers = #tpu.dot_dimension_numbers<[1], [0], [0], [1], [0, 0, 1, 1], [], []>} : vector<8x6xbf16>, vector<6x384xbf16>, vector<8x384xf32> -> vector<8x384xf32>
    %26 = arith.addf %21, %25 : vector<8x384xf32>
    %c5 = arith.constant 5 : index
    %c0_17 = arith.constant 0 : index
    %c0_18 = arith.constant 0 : index
    %27 = vector.load %arg2[%c5, %c0_17, %c0_18] : memref<9x8x6xbf16, #tpu.memory_space<vmem>>, vector<1x8x6xbf16>
    %28 = vector.shape_cast %27 : vector<1x8x6xbf16> to vector<8x6xbf16>
    %29 = vector.extract_strided_slice %0 {offsets = [0, 22], sizes = [6, 384], strides = [1, 1]} : vector<6x512xbf16> to vector<6x384xbf16>
    %cst_19 = arith.constant dense<0.000000e+00> : vector<8x384xf32>
    %30 = tpu.matmul %28, %29, %cst_19 {dimension_numbers = #tpu.dot_dimension_numbers<[1], [0], [0], [1], [0, 0, 1, 1], [], []>} : vector<8x6xbf16>, vector<6x384xbf16>, vector<8x384xf32> -> vector<8x384xf32>
    %31 = arith.addf %26, %30 : vector<8x384xf32>
    %c6 = arith.constant 6 : index
    %c0_20 = arith.constant 0 : index
    %c0_21 = arith.constant 0 : index
    %32 = vector.load %arg2[%c6, %c0_20, %c0_21] : memref<9x8x6xbf16, #tpu.memory_space<vmem>>, vector<1x8x6xbf16>
    %33 = vector.shape_cast %32 : vector<1x8x6xbf16> to vector<8x6xbf16>
    %34 = vector.extract_strided_slice %0 {offsets = [0, 40], sizes = [6, 384], strides = [1, 1]} : vector<6x512xbf16> to vector<6x384xbf16>
    %cst_22 = arith.constant dense<0.000000e+00> : vector<8x384xf32>
    %35 = tpu.matmul %33, %34, %cst_22 {dimension_numbers = #tpu.dot_dimension_numbers<[1], [0], [0], [1], [0, 0, 1, 1], [], []>} : vector<8x6xbf16>, vector<6x384xbf16>, vector<8x384xf32> -> vector<8x384xf32>
    %36 = arith.addf %31, %35 : vector<8x384xf32>
    %c7 = arith.constant 7 : index
    %c0_23 = arith.constant 0 : index
    %c0_24 = arith.constant 0 : index
    %37 = vector.load %arg2[%c7, %c0_23, %c0_24] : memref<9x8x6xbf16, #tpu.memory_space<vmem>>, vector<1x8x6xbf16>
    %38 = vector.shape_cast %37 : vector<1x8x6xbf16> to vector<8x6xbf16>
    %39 = vector.extract_strided_slice %0 {offsets = [0, 41], sizes = [6, 384], strides = [1, 1]} : vector<6x512xbf16> to vector<6x384xbf16>
    %cst_25 = arith.constant dense<0.000000e+00> : vector<8x384xf32>
    %40 = tpu.matmul %38, %39, %cst_25 {dimension_numbers = #tpu.dot_dimension_numbers<[1], [0], [0], [1], [0, 0, 1, 1], [], []>} : vector<8x6xbf16>, vector<6x384xbf16>, vector<8x384xf32> -> vector<8x384xf32>
    %41 = arith.addf %36, %40 : vector<8x384xf32>
    %c8 = arith.constant 8 : index
    %c0_26 = arith.constant 0 : index
    %c0_27 = arith.constant 0 : index
    %42 = vector.load %arg2[%c8, %c0_26, %c0_27] : memref<9x8x6xbf16, #tpu.memory_space<vmem>>, vector<1x8x6xbf16>
    %43 = vector.shape_cast %42 : vector<1x8x6xbf16> to vector<8x6xbf16>
    %44 = vector.extract_strided_slice %0 {offsets = [0, 42], sizes = [6, 384], strides = [1, 1]} : vector<6x512xbf16> to vector<6x384xbf16>
    %cst_28 = arith.constant dense<0.000000e+00> : vector<8x384xf32>
    %45 = tpu.matmul %43, %44, %cst_28 {dimension_numbers = #tpu.dot_dimension_numbers<[1], [0], [0], [1], [0, 0, 1, 1], [], []>} : vector<8x6xbf16>, vector<6x384xbf16>, vector<8x384xf32> -> vector<8x384xf32>
    %46 = arith.addf %41, %45 : vector<8x384xf32>
    %c0_29 = arith.constant 0 : index
    %c0_30 = arith.constant 0 : index
    %47 = vector.load %arg3[%c0_29, %c0_30] : memref<8x1xf32, #tpu.memory_space<vmem>>, vector<8x1xf32>
    %48 = vector.broadcast %47 : vector<8x1xf32> to vector<8x384xf32>
    %49 = arith.addf %46, %48 : vector<8x384xf32>
    %cst_31 = arith.constant 0.000000e+00 : f32
    %cst_32 = arith.constant 1.000000e+00 : f32
    %50 = vector.broadcast %cst_31 : f32 to vector<8x384xf32>
    %51 = arith.maximumf %50, %49 : vector<8x384xf32>
    %52 = vector.broadcast %cst_32 : f32 to vector<8x384xf32>
    %53 = arith.minimumf %52, %51 : vector<8x384xf32>
    %cst_33 = arith.constant 1.500000e+01 : f32
    %54 = vector.broadcast %cst_33 : f32 to vector<8x384xf32>
    %55 = arith.mulf %53, %54 : vector<8x384xf32>
    %56 = math.roundeven %55 : vector<8x384xf32>
    %cst_34 = arith.constant 0.0666666701 : f32
    %57 = vector.broadcast %cst_34 : f32 to vector<8x384xf32>
    %58 = arith.mulf %56, %57 : vector<8x384xf32>
    %59 = arith.truncf %58 : vector<8x384xf32> to vector<8x384xbf16>
    %c0_35 = arith.constant 0 : index
    %c0_36 = arith.constant 0 : index
    %60 = vector.load %arg4[%c0_35, %c0_36] : memref<8x384xbf16, #tpu.memory_space<vmem>>, vector<8x384xbf16>
    tpu.vector_store %arg4[%c0_35, %c0_36], %59 {strides = array<i32>} : memref<8x384xbf16, #tpu.memory_space<vmem>>, vector<8x384xbf16>,
    return
  }
  func.func @transform_0(%arg0: i32) -> (i32, i32) {
    %c0_i32 = arith.constant 0 : i32
    %c0_i32_0 = arith.constant 0 : i32
    return %c0_i32, %arg0 : i32, i32
  }
  func.func @transform_1(%arg0: i32) -> (i32, i32, i32) {
    %c0_i32 = arith.constant 0 : i32
    %c0_i32_0 = arith.constant 0 : i32
    %c0_i32_1 = arith.constant 0 : i32
    %c0_i32_2 = arith.constant 0 : i32
    return %c0_i32, %c0_i32_0, %c0_i32_1 : i32, i32, i32
  }
  func.func @transform_2(%arg0: i32) -> (i32, i32) {
    %c0_i32 = arith.constant 0 : i32
    %c0_i32_0 = arith.constant 0 : i32
    %c0_i32_1 = arith.constant 0 : i32
    return %c0_i32, %c0_i32_0 : i32, i32
  }
  func.func @transform_3(%arg0: i32) -> (i32, i32) {
    %c0_i32 = arith.constant 0 : i32
    %c0_i32_0 = arith.constant 0 : i32
    return %c0_i32, %arg0 : i32, i32
  }
}

module attributes {stable_mosaic.version = 11 : i64} {
  func.func @_conv_act_kernel(%arg0: i32, %arg1: memref<8x512xbf16, #tpu.memory_space<vmem>>, %arg2: memref<9x8x8xbf16, #tpu.memory_space<vmem>>, %arg3: memref<8x1xf32, #tpu.memory_space<vmem>>, %arg4: memref<8x384xbf16, #tpu.memory_space<vmem>>) attributes {dimension_semantics = [#tpu.dimension_semantics<parallel>], iteration_bounds = array<i64: 2>, scalar_prefetch = 0 : i64, scratch_operands = 0 : i64, tpu.core_type = #tpu.core_type<tc>, window_params = [{transform_indices = @transform_0, window_bounds = array<i64: 8, 512>}, {pipeline_mode = #tpu.pipeline_mode<synchronous>, transform_indices = @transform_1, window_bounds = array<i64: 9, 8, 8>}, {pipeline_mode = #tpu.pipeline_mode<synchronous>, transform_indices = @transform_2, window_bounds = array<i64: 8, 1>}, {transform_indices = @transform_3, window_bounds = array<i64: 8, 384>}]} {
    %c0 = arith.constant 0 : index
    %c0_0 = arith.constant 0 : index
    %0 = vector.load %arg1[%c0, %c0_0] : memref<8x512xbf16, #tpu.memory_space<vmem>>, vector<8x512xbf16>
    %cst = arith.constant 0.000000e+00 : f32
    %1 = vector.broadcast %cst : f32 to vector<8x384xf32>
    %c0_1 = arith.constant 0 : index
    %c0_2 = arith.constant 0 : index
    %c0_3 = arith.constant 0 : index
    %2 = vector.load %arg2[%c0_1, %c0_2, %c0_3] : memref<9x8x8xbf16, #tpu.memory_space<vmem>>, vector<1x8x8xbf16>
    %3 = vector.shape_cast %2 : vector<1x8x8xbf16> to vector<8x8xbf16>
    %4 = vector.extract_strided_slice %0 {offsets = [0, 0], sizes = [8, 384], strides = [1, 1]} : vector<8x512xbf16> to vector<8x384xbf16>
    %cst_4 = arith.constant dense<0.000000e+00> : vector<8x384xf32>
    %5 = tpu.matmul %3, %4, %cst_4 {dimension_numbers = #tpu.dot_dimension_numbers<[1], [0], [0], [1], [0, 0, 1, 1], [], []>} : vector<8x8xbf16>, vector<8x384xbf16>, vector<8x384xf32> -> vector<8x384xf32>
    %6 = arith.addf %1, %5 : vector<8x384xf32>
    %c1 = arith.constant 1 : index
    %c0_5 = arith.constant 0 : index
    %c0_6 = arith.constant 0 : index
    %7 = vector.load %arg2[%c1, %c0_5, %c0_6] : memref<9x8x8xbf16, #tpu.memory_space<vmem>>, vector<1x8x8xbf16>
    %8 = vector.shape_cast %7 : vector<1x8x8xbf16> to vector<8x8xbf16>
    %9 = vector.extract_strided_slice %0 {offsets = [0, 1], sizes = [8, 384], strides = [1, 1]} : vector<8x512xbf16> to vector<8x384xbf16>
    %cst_7 = arith.constant dense<0.000000e+00> : vector<8x384xf32>
    %10 = tpu.matmul %8, %9, %cst_7 {dimension_numbers = #tpu.dot_dimension_numbers<[1], [0], [0], [1], [0, 0, 1, 1], [], []>} : vector<8x8xbf16>, vector<8x384xbf16>, vector<8x384xf32> -> vector<8x384xf32>
    %11 = arith.addf %6, %10 : vector<8x384xf32>
    %c2 = arith.constant 2 : index
    %c0_8 = arith.constant 0 : index
    %c0_9 = arith.constant 0 : index
    %12 = vector.load %arg2[%c2, %c0_8, %c0_9] : memref<9x8x8xbf16, #tpu.memory_space<vmem>>, vector<1x8x8xbf16>
    %13 = vector.shape_cast %12 : vector<1x8x8xbf16> to vector<8x8xbf16>
    %14 = vector.extract_strided_slice %0 {offsets = [0, 2], sizes = [8, 384], strides = [1, 1]} : vector<8x512xbf16> to vector<8x384xbf16>
    %cst_10 = arith.constant dense<0.000000e+00> : vector<8x384xf32>
    %15 = tpu.matmul %13, %14, %cst_10 {dimension_numbers = #tpu.dot_dimension_numbers<[1], [0], [0], [1], [0, 0, 1, 1], [], []>} : vector<8x8xbf16>, vector<8x384xbf16>, vector<8x384xf32> -> vector<8x384xf32>
    %16 = arith.addf %11, %15 : vector<8x384xf32>
    %c3 = arith.constant 3 : index
    %c0_11 = arith.constant 0 : index
    %c0_12 = arith.constant 0 : index
    %17 = vector.load %arg2[%c3, %c0_11, %c0_12] : memref<9x8x8xbf16, #tpu.memory_space<vmem>>, vector<1x8x8xbf16>
    %18 = vector.shape_cast %17 : vector<1x8x8xbf16> to vector<8x8xbf16>
    %19 = vector.extract_strided_slice %0 {offsets = [0, 20], sizes = [8, 384], strides = [1, 1]} : vector<8x512xbf16> to vector<8x384xbf16>
    %cst_13 = arith.constant dense<0.000000e+00> : vector<8x384xf32>
    %20 = tpu.matmul %18, %19, %cst_13 {dimension_numbers = #tpu.dot_dimension_numbers<[1], [0], [0], [1], [0, 0, 1, 1], [], []>} : vector<8x8xbf16>, vector<8x384xbf16>, vector<8x384xf32> -> vector<8x384xf32>
    %21 = arith.addf %16, %20 : vector<8x384xf32>
    %c4 = arith.constant 4 : index
    %c0_14 = arith.constant 0 : index
    %c0_15 = arith.constant 0 : index
    %22 = vector.load %arg2[%c4, %c0_14, %c0_15] : memref<9x8x8xbf16, #tpu.memory_space<vmem>>, vector<1x8x8xbf16>
    %23 = vector.shape_cast %22 : vector<1x8x8xbf16> to vector<8x8xbf16>
    %24 = vector.extract_strided_slice %0 {offsets = [0, 21], sizes = [8, 384], strides = [1, 1]} : vector<8x512xbf16> to vector<8x384xbf16>
    %cst_16 = arith.constant dense<0.000000e+00> : vector<8x384xf32>
    %25 = tpu.matmul %23, %24, %cst_16 {dimension_numbers = #tpu.dot_dimension_numbers<[1], [0], [0], [1], [0, 0, 1, 1], [], []>} : vector<8x8xbf16>, vector<8x384xbf16>, vector<8x384xf32> -> vector<8x384xf32>
    %26 = arith.addf %21, %25 : vector<8x384xf32>
    %c5 = arith.constant 5 : index
    %c0_17 = arith.constant 0 : index
    %c0_18 = arith.constant 0 : index
    %27 = vector.load %arg2[%c5, %c0_17, %c0_18] : memref<9x8x8xbf16, #tpu.memory_space<vmem>>, vector<1x8x8xbf16>
    %28 = vector.shape_cast %27 : vector<1x8x8xbf16> to vector<8x8xbf16>
    %29 = vector.extract_strided_slice %0 {offsets = [0, 22], sizes = [8, 384], strides = [1, 1]} : vector<8x512xbf16> to vector<8x384xbf16>
    %cst_19 = arith.constant dense<0.000000e+00> : vector<8x384xf32>
    %30 = tpu.matmul %28, %29, %cst_19 {dimension_numbers = #tpu.dot_dimension_numbers<[1], [0], [0], [1], [0, 0, 1, 1], [], []>} : vector<8x8xbf16>, vector<8x384xbf16>, vector<8x384xf32> -> vector<8x384xf32>
    %31 = arith.addf %26, %30 : vector<8x384xf32>
    %c6 = arith.constant 6 : index
    %c0_20 = arith.constant 0 : index
    %c0_21 = arith.constant 0 : index
    %32 = vector.load %arg2[%c6, %c0_20, %c0_21] : memref<9x8x8xbf16, #tpu.memory_space<vmem>>, vector<1x8x8xbf16>
    %33 = vector.shape_cast %32 : vector<1x8x8xbf16> to vector<8x8xbf16>
    %34 = vector.extract_strided_slice %0 {offsets = [0, 40], sizes = [8, 384], strides = [1, 1]} : vector<8x512xbf16> to vector<8x384xbf16>
    %cst_22 = arith.constant dense<0.000000e+00> : vector<8x384xf32>
    %35 = tpu.matmul %33, %34, %cst_22 {dimension_numbers = #tpu.dot_dimension_numbers<[1], [0], [0], [1], [0, 0, 1, 1], [], []>} : vector<8x8xbf16>, vector<8x384xbf16>, vector<8x384xf32> -> vector<8x384xf32>
    %36 = arith.addf %31, %35 : vector<8x384xf32>
    %c7 = arith.constant 7 : index
    %c0_23 = arith.constant 0 : index
    %c0_24 = arith.constant 0 : index
    %37 = vector.load %arg2[%c7, %c0_23, %c0_24] : memref<9x8x8xbf16, #tpu.memory_space<vmem>>, vector<1x8x8xbf16>
    %38 = vector.shape_cast %37 : vector<1x8x8xbf16> to vector<8x8xbf16>
    %39 = vector.extract_strided_slice %0 {offsets = [0, 41], sizes = [8, 384], strides = [1, 1]} : vector<8x512xbf16> to vector<8x384xbf16>
    %cst_25 = arith.constant dense<0.000000e+00> : vector<8x384xf32>
    %40 = tpu.matmul %38, %39, %cst_25 {dimension_numbers = #tpu.dot_dimension_numbers<[1], [0], [0], [1], [0, 0, 1, 1], [], []>} : vector<8x8xbf16>, vector<8x384xbf16>, vector<8x384xf32> -> vector<8x384xf32>
    %41 = arith.addf %36, %40 : vector<8x384xf32>
    %c8 = arith.constant 8 : index
    %c0_26 = arith.constant 0 : index
    %c0_27 = arith.constant 0 : index
    %42 = vector.load %arg2[%c8, %c0_26, %c0_27] : memref<9x8x8xbf16, #tpu.memory_space<vmem>>, vector<1x8x8xbf16>
    %43 = vector.shape_cast %42 : vector<1x8x8xbf16> to vector<8x8xbf16>
    %44 = vector.extract_strided_slice %0 {offsets = [0, 42], sizes = [8, 384], strides = [1, 1]} : vector<8x512xbf16> to vector<8x384xbf16>
    %cst_28 = arith.constant dense<0.000000e+00> : vector<8x384xf32>
    %45 = tpu.matmul %43, %44, %cst_28 {dimension_numbers = #tpu.dot_dimension_numbers<[1], [0], [0], [1], [0, 0, 1, 1], [], []>} : vector<8x8xbf16>, vector<8x384xbf16>, vector<8x384xf32> -> vector<8x384xf32>
    %46 = arith.addf %41, %45 : vector<8x384xf32>
    %c0_29 = arith.constant 0 : index
    %c0_30 = arith.constant 0 : index
    %47 = vector.load %arg3[%c0_29, %c0_30] : memref<8x1xf32, #tpu.memory_space<vmem>>, vector<8x1xf32>
    %48 = vector.broadcast %47 : vector<8x1xf32> to vector<8x384xf32>
    %49 = arith.addf %46, %48 : vector<8x384xf32>
    %cst_31 = arith.constant 0.000000e+00 : f32
    %cst_32 = arith.constant 1.000000e+00 : f32
    %50 = vector.broadcast %cst_31 : f32 to vector<8x384xf32>
    %51 = arith.maximumf %50, %49 : vector<8x384xf32>
    %52 = vector.broadcast %cst_32 : f32 to vector<8x384xf32>
    %53 = arith.minimumf %52, %51 : vector<8x384xf32>
    %cst_33 = arith.constant 1.500000e+01 : f32
    %54 = vector.broadcast %cst_33 : f32 to vector<8x384xf32>
    %55 = arith.mulf %53, %54 : vector<8x384xf32>
    %56 = math.roundeven %55 : vector<8x384xf32>
    %cst_34 = arith.constant 0.0666666701 : f32
    %57 = vector.broadcast %cst_34 : f32 to vector<8x384xf32>
    %58 = arith.mulf %56, %57 : vector<8x384xf32>
    %59 = arith.truncf %58 : vector<8x384xf32> to vector<8x384xbf16>
    %c0_35 = arith.constant 0 : index
    %c0_36 = arith.constant 0 : index
    %60 = vector.load %arg4[%c0_35, %c0_36] : memref<8x384xbf16, #tpu.memory_space<vmem>>, vector<8x384xbf16>
    tpu.vector_store %arg4[%c0_35, %c0_36], %59 {strides = array<i32>} : memref<8x384xbf16, #tpu.memory_space<vmem>>, vector<8x384xbf16>,
    return
  }
  func.func @transform_0(%arg0: i32) -> (i32, i32) {
    %c0_i32 = arith.constant 0 : i32
    %c0_i32_0 = arith.constant 0 : i32
    return %c0_i32, %arg0 : i32, i32
  }
  func.func @transform_1(%arg0: i32) -> (i32, i32, i32) {
    %c0_i32 = arith.constant 0 : i32
    %c0_i32_0 = arith.constant 0 : i32
    %c0_i32_1 = arith.constant 0 : i32
    %c0_i32_2 = arith.constant 0 : i32
    return %c0_i32, %c0_i32_0, %c0_i32_1 : i32, i32, i32
  }
  func.func @transform_2(%arg0: i32) -> (i32, i32) {
    %c0_i32 = arith.constant 0 : i32
    %c0_i32_0 = arith.constant 0 : i32
    %c0_i32_1 = arith.constant 0 : i32
    return %c0_i32, %c0_i32_0 : i32, i32
  }
  func.func @transform_3(%arg0: i32) -> (i32, i32) {
    %c0_i32 = arith.constant 0 : i32
    %c0_i32_0 = arith.constant 0 : i32
    return %c0_i32, %arg0 : i32, i32
  }
}

module attributes {stable_mosaic.version = 11 : i64} {
  func.func @_conv_act_kernel(%arg0: i32, %arg1: memref<8x256xbf16, #tpu.memory_space<vmem>>, %arg2: memref<9x16x8xbf16, #tpu.memory_space<vmem>>, %arg3: memref<16x1xf32, #tpu.memory_space<vmem>>, %arg4: memref<16x128xbf16, #tpu.memory_space<vmem>>) attributes {dimension_semantics = [#tpu.dimension_semantics<parallel>], iteration_bounds = array<i64: 2>, scalar_prefetch = 0 : i64, scratch_operands = 0 : i64, tpu.core_type = #tpu.core_type<tc>, window_params = [{transform_indices = @transform_0, window_bounds = array<i64: 8, 256>}, {pipeline_mode = #tpu.pipeline_mode<synchronous>, transform_indices = @transform_1, window_bounds = array<i64: 9, 16, 8>}, {pipeline_mode = #tpu.pipeline_mode<synchronous>, transform_indices = @transform_2, window_bounds = array<i64: 16, 1>}, {transform_indices = @transform_3, window_bounds = array<i64: 16, 128>}]} {
    %c0 = arith.constant 0 : index
    %c0_0 = arith.constant 0 : index
    %0 = vector.load %arg1[%c0, %c0_0] : memref<8x256xbf16, #tpu.memory_space<vmem>>, vector<8x256xbf16>
    %cst = arith.constant 0.000000e+00 : f32
    %1 = vector.broadcast %cst : f32 to vector<16x128xf32>
    %c0_1 = arith.constant 0 : index
    %c0_2 = arith.constant 0 : index
    %c0_3 = arith.constant 0 : index
    %2 = vector.load %arg2[%c0_1, %c0_2, %c0_3] : memref<9x16x8xbf16, #tpu.memory_space<vmem>>, vector<1x16x8xbf16>
    %3 = vector.shape_cast %2 : vector<1x16x8xbf16> to vector<16x8xbf16>
    %4 = vector.extract_strided_slice %0 {offsets = [0, 0], sizes = [8, 128], strides = [1, 1]} : vector<8x256xbf16> to vector<8x128xbf16>
    %cst_4 = arith.constant dense<0.000000e+00> : vector<16x128xf32>
    %5 = tpu.matmul %3, %4, %cst_4 {dimension_numbers = #tpu.dot_dimension_numbers<[1], [0], [0], [1], [0, 0, 1, 1], [], []>} : vector<16x8xbf16>, vector<8x128xbf16>, vector<16x128xf32> -> vector<16x128xf32>
    %6 = arith.addf %1, %5 : vector<16x128xf32>
    %c1 = arith.constant 1 : index
    %c0_5 = arith.constant 0 : index
    %c0_6 = arith.constant 0 : index
    %7 = vector.load %arg2[%c1, %c0_5, %c0_6] : memref<9x16x8xbf16, #tpu.memory_space<vmem>>, vector<1x16x8xbf16>
    %8 = vector.shape_cast %7 : vector<1x16x8xbf16> to vector<16x8xbf16>
    %9 = vector.extract_strided_slice %0 {offsets = [0, 1], sizes = [8, 128], strides = [1, 1]} : vector<8x256xbf16> to vector<8x128xbf16>
    %cst_7 = arith.constant dense<0.000000e+00> : vector<16x128xf32>
    %10 = tpu.matmul %8, %9, %cst_7 {dimension_numbers = #tpu.dot_dimension_numbers<[1], [0], [0], [1], [0, 0, 1, 1], [], []>} : vector<16x8xbf16>, vector<8x128xbf16>, vector<16x128xf32> -> vector<16x128xf32>
    %11 = arith.addf %6, %10 : vector<16x128xf32>
    %c2 = arith.constant 2 : index
    %c0_8 = arith.constant 0 : index
    %c0_9 = arith.constant 0 : index
    %12 = vector.load %arg2[%c2, %c0_8, %c0_9] : memref<9x16x8xbf16, #tpu.memory_space<vmem>>, vector<1x16x8xbf16>
    %13 = vector.shape_cast %12 : vector<1x16x8xbf16> to vector<16x8xbf16>
    %14 = vector.extract_strided_slice %0 {offsets = [0, 2], sizes = [8, 128], strides = [1, 1]} : vector<8x256xbf16> to vector<8x128xbf16>
    %cst_10 = arith.constant dense<0.000000e+00> : vector<16x128xf32>
    %15 = tpu.matmul %13, %14, %cst_10 {dimension_numbers = #tpu.dot_dimension_numbers<[1], [0], [0], [1], [0, 0, 1, 1], [], []>} : vector<16x8xbf16>, vector<8x128xbf16>, vector<16x128xf32> -> vector<16x128xf32>
    %16 = arith.addf %11, %15 : vector<16x128xf32>
    %c3 = arith.constant 3 : index
    %c0_11 = arith.constant 0 : index
    %c0_12 = arith.constant 0 : index
    %17 = vector.load %arg2[%c3, %c0_11, %c0_12] : memref<9x16x8xbf16, #tpu.memory_space<vmem>>, vector<1x16x8xbf16>
    %18 = vector.shape_cast %17 : vector<1x16x8xbf16> to vector<16x8xbf16>
    %19 = vector.extract_strided_slice %0 {offsets = [0, 9], sizes = [8, 128], strides = [1, 1]} : vector<8x256xbf16> to vector<8x128xbf16>
    %cst_13 = arith.constant dense<0.000000e+00> : vector<16x128xf32>
    %20 = tpu.matmul %18, %19, %cst_13 {dimension_numbers = #tpu.dot_dimension_numbers<[1], [0], [0], [1], [0, 0, 1, 1], [], []>} : vector<16x8xbf16>, vector<8x128xbf16>, vector<16x128xf32> -> vector<16x128xf32>
    %21 = arith.addf %16, %20 : vector<16x128xf32>
    %c4 = arith.constant 4 : index
    %c0_14 = arith.constant 0 : index
    %c0_15 = arith.constant 0 : index
    %22 = vector.load %arg2[%c4, %c0_14, %c0_15] : memref<9x16x8xbf16, #tpu.memory_space<vmem>>, vector<1x16x8xbf16>
    %23 = vector.shape_cast %22 : vector<1x16x8xbf16> to vector<16x8xbf16>
    %24 = vector.extract_strided_slice %0 {offsets = [0, 10], sizes = [8, 128], strides = [1, 1]} : vector<8x256xbf16> to vector<8x128xbf16>
    %cst_16 = arith.constant dense<0.000000e+00> : vector<16x128xf32>
    %25 = tpu.matmul %23, %24, %cst_16 {dimension_numbers = #tpu.dot_dimension_numbers<[1], [0], [0], [1], [0, 0, 1, 1], [], []>} : vector<16x8xbf16>, vector<8x128xbf16>, vector<16x128xf32> -> vector<16x128xf32>
    %26 = arith.addf %21, %25 : vector<16x128xf32>
    %c5 = arith.constant 5 : index
    %c0_17 = arith.constant 0 : index
    %c0_18 = arith.constant 0 : index
    %27 = vector.load %arg2[%c5, %c0_17, %c0_18] : memref<9x16x8xbf16, #tpu.memory_space<vmem>>, vector<1x16x8xbf16>
    %28 = vector.shape_cast %27 : vector<1x16x8xbf16> to vector<16x8xbf16>
    %29 = vector.extract_strided_slice %0 {offsets = [0, 11], sizes = [8, 128], strides = [1, 1]} : vector<8x256xbf16> to vector<8x128xbf16>
    %cst_19 = arith.constant dense<0.000000e+00> : vector<16x128xf32>
    %30 = tpu.matmul %28, %29, %cst_19 {dimension_numbers = #tpu.dot_dimension_numbers<[1], [0], [0], [1], [0, 0, 1, 1], [], []>} : vector<16x8xbf16>, vector<8x128xbf16>, vector<16x128xf32> -> vector<16x128xf32>
    %31 = arith.addf %26, %30 : vector<16x128xf32>
    %c6 = arith.constant 6 : index
    %c0_20 = arith.constant 0 : index
    %c0_21 = arith.constant 0 : index
    %32 = vector.load %arg2[%c6, %c0_20, %c0_21] : memref<9x16x8xbf16, #tpu.memory_space<vmem>>, vector<1x16x8xbf16>
    %33 = vector.shape_cast %32 : vector<1x16x8xbf16> to vector<16x8xbf16>
    %34 = vector.extract_strided_slice %0 {offsets = [0, 18], sizes = [8, 128], strides = [1, 1]} : vector<8x256xbf16> to vector<8x128xbf16>
    %cst_22 = arith.constant dense<0.000000e+00> : vector<16x128xf32>
    %35 = tpu.matmul %33, %34, %cst_22 {dimension_numbers = #tpu.dot_dimension_numbers<[1], [0], [0], [1], [0, 0, 1, 1], [], []>} : vector<16x8xbf16>, vector<8x128xbf16>, vector<16x128xf32> -> vector<16x128xf32>
    %36 = arith.addf %31, %35 : vector<16x128xf32>
    %c7 = arith.constant 7 : index
    %c0_23 = arith.constant 0 : index
    %c0_24 = arith.constant 0 : index
    %37 = vector.load %arg2[%c7, %c0_23, %c0_24] : memref<9x16x8xbf16, #tpu.memory_space<vmem>>, vector<1x16x8xbf16>
    %38 = vector.shape_cast %37 : vector<1x16x8xbf16> to vector<16x8xbf16>
    %39 = vector.extract_strided_slice %0 {offsets = [0, 19], sizes = [8, 128], strides = [1, 1]} : vector<8x256xbf16> to vector<8x128xbf16>
    %cst_25 = arith.constant dense<0.000000e+00> : vector<16x128xf32>
    %40 = tpu.matmul %38, %39, %cst_25 {dimension_numbers = #tpu.dot_dimension_numbers<[1], [0], [0], [1], [0, 0, 1, 1], [], []>} : vector<16x8xbf16>, vector<8x128xbf16>, vector<16x128xf32> -> vector<16x128xf32>
    %41 = arith.addf %36, %40 : vector<16x128xf32>
    %c8 = arith.constant 8 : index
    %c0_26 = arith.constant 0 : index
    %c0_27 = arith.constant 0 : index
    %42 = vector.load %arg2[%c8, %c0_26, %c0_27] : memref<9x16x8xbf16, #tpu.memory_space<vmem>>, vector<1x16x8xbf16>
    %43 = vector.shape_cast %42 : vector<1x16x8xbf16> to vector<16x8xbf16>
    %44 = vector.extract_strided_slice %0 {offsets = [0, 20], sizes = [8, 128], strides = [1, 1]} : vector<8x256xbf16> to vector<8x128xbf16>
    %cst_28 = arith.constant dense<0.000000e+00> : vector<16x128xf32>
    %45 = tpu.matmul %43, %44, %cst_28 {dimension_numbers = #tpu.dot_dimension_numbers<[1], [0], [0], [1], [0, 0, 1, 1], [], []>} : vector<16x8xbf16>, vector<8x128xbf16>, vector<16x128xf32> -> vector<16x128xf32>
    %46 = arith.addf %41, %45 : vector<16x128xf32>
    %c0_29 = arith.constant 0 : index
    %c0_30 = arith.constant 0 : index
    %47 = vector.load %arg3[%c0_29, %c0_30] : memref<16x1xf32, #tpu.memory_space<vmem>>, vector<16x1xf32>
    %48 = vector.broadcast %47 : vector<16x1xf32> to vector<16x128xf32>
    %49 = arith.addf %46, %48 : vector<16x128xf32>
    %cst_31 = arith.constant 0.000000e+00 : f32
    %cst_32 = arith.constant 1.000000e+00 : f32
    %50 = vector.broadcast %cst_31 : f32 to vector<16x128xf32>
    %51 = arith.maximumf %50, %49 : vector<16x128xf32>
    %52 = vector.broadcast %cst_32 : f32 to vector<16x128xf32>
    %53 = arith.minimumf %52, %51 : vector<16x128xf32>
    %cst_33 = arith.constant 1.500000e+01 : f32
    %54 = vector.broadcast %cst_33 : f32 to vector<16x128xf32>
    %55 = arith.mulf %53, %54 : vector<16x128xf32>
    %56 = math.roundeven %55 : vector<16x128xf32>
    %cst_34 = arith.constant 0.0666666701 : f32
    %57 = vector.broadcast %cst_34 : f32 to vector<16x128xf32>
    %58 = arith.mulf %56, %57 : vector<16x128xf32>
    %59 = arith.truncf %58 : vector<16x128xf32> to vector<16x128xbf16>
    %c0_35 = arith.constant 0 : index
    %c0_36 = arith.constant 0 : index
    %60 = vector.load %arg4[%c0_35, %c0_36] : memref<16x128xbf16, #tpu.memory_space<vmem>>, vector<16x128xbf16>
    tpu.vector_store %arg4[%c0_35, %c0_36], %59 {strides = array<i32>} : memref<16x128xbf16, #tpu.memory_space<vmem>>, vector<16x128xbf16>,
    return
  }
  func.func @transform_0(%arg0: i32) -> (i32, i32) {
    %c0_i32 = arith.constant 0 : i32
    %c0_i32_0 = arith.constant 0 : i32
    return %c0_i32, %arg0 : i32, i32
  }
  func.func @transform_1(%arg0: i32) -> (i32, i32, i32) {
    %c0_i32 = arith.constant 0 : i32
    %c0_i32_0 = arith.constant 0 : i32
    %c0_i32_1 = arith.constant 0 : i32
    %c0_i32_2 = arith.constant 0 : i32
    return %c0_i32, %c0_i32_0, %c0_i32_1 : i32, i32, i32
  }
  func.func @transform_2(%arg0: i32) -> (i32, i32) {
    %c0_i32 = arith.constant 0 : i32
    %c0_i32_0 = arith.constant 0 : i32
    %c0_i32_1 = arith.constant 0 : i32
    return %c0_i32, %c0_i32_0 : i32, i32
  }
  func.func @transform_3(%arg0: i32) -> (i32, i32) {
    %c0_i32 = arith.constant 0 : i32
    %c0_i32_0 = arith.constant 0 : i32
    return %c0_i32, %arg0 : i32, i32
  }
}

module attributes {stable_mosaic.version = 11 : i64} {
  func.func @_conv_act_kernel(%arg0: i32, %arg1: memref<16x256xbf16, #tpu.memory_space<vmem>>, %arg2: memref<9x16x16xbf16, #tpu.memory_space<vmem>>, %arg3: memref<16x1xf32, #tpu.memory_space<vmem>>, %arg4: memref<16x128xbf16, #tpu.memory_space<vmem>>) attributes {dimension_semantics = [#tpu.dimension_semantics<parallel>], iteration_bounds = array<i64: 2>, scalar_prefetch = 0 : i64, scratch_operands = 0 : i64, tpu.core_type = #tpu.core_type<tc>, window_params = [{transform_indices = @transform_0, window_bounds = array<i64: 16, 256>}, {pipeline_mode = #tpu.pipeline_mode<synchronous>, transform_indices = @transform_1, window_bounds = array<i64: 9, 16, 16>}, {pipeline_mode = #tpu.pipeline_mode<synchronous>, transform_indices = @transform_2, window_bounds = array<i64: 16, 1>}, {transform_indices = @transform_3, window_bounds = array<i64: 16, 128>}]} {
    %c0 = arith.constant 0 : index
    %c0_0 = arith.constant 0 : index
    %0 = vector.load %arg1[%c0, %c0_0] : memref<16x256xbf16, #tpu.memory_space<vmem>>, vector<16x256xbf16>
    %cst = arith.constant 0.000000e+00 : f32
    %1 = vector.broadcast %cst : f32 to vector<16x128xf32>
    %c0_1 = arith.constant 0 : index
    %c0_2 = arith.constant 0 : index
    %c0_3 = arith.constant 0 : index
    %2 = vector.load %arg2[%c0_1, %c0_2, %c0_3] : memref<9x16x16xbf16, #tpu.memory_space<vmem>>, vector<1x16x16xbf16>
    %3 = vector.shape_cast %2 : vector<1x16x16xbf16> to vector<16x16xbf16>
    %4 = vector.extract_strided_slice %0 {offsets = [0, 0], sizes = [16, 128], strides = [1, 1]} : vector<16x256xbf16> to vector<16x128xbf16>
    %cst_4 = arith.constant dense<0.000000e+00> : vector<16x128xf32>
    %5 = tpu.matmul %3, %4, %cst_4 {dimension_numbers = #tpu.dot_dimension_numbers<[1], [0], [0], [1], [0, 0, 1, 1], [], []>} : vector<16x16xbf16>, vector<16x128xbf16>, vector<16x128xf32> -> vector<16x128xf32>
    %6 = arith.addf %1, %5 : vector<16x128xf32>
    %c1 = arith.constant 1 : index
    %c0_5 = arith.constant 0 : index
    %c0_6 = arith.constant 0 : index
    %7 = vector.load %arg2[%c1, %c0_5, %c0_6] : memref<9x16x16xbf16, #tpu.memory_space<vmem>>, vector<1x16x16xbf16>
    %8 = vector.shape_cast %7 : vector<1x16x16xbf16> to vector<16x16xbf16>
    %9 = vector.extract_strided_slice %0 {offsets = [0, 1], sizes = [16, 128], strides = [1, 1]} : vector<16x256xbf16> to vector<16x128xbf16>
    %cst_7 = arith.constant dense<0.000000e+00> : vector<16x128xf32>
    %10 = tpu.matmul %8, %9, %cst_7 {dimension_numbers = #tpu.dot_dimension_numbers<[1], [0], [0], [1], [0, 0, 1, 1], [], []>} : vector<16x16xbf16>, vector<16x128xbf16>, vector<16x128xf32> -> vector<16x128xf32>
    %11 = arith.addf %6, %10 : vector<16x128xf32>
    %c2 = arith.constant 2 : index
    %c0_8 = arith.constant 0 : index
    %c0_9 = arith.constant 0 : index
    %12 = vector.load %arg2[%c2, %c0_8, %c0_9] : memref<9x16x16xbf16, #tpu.memory_space<vmem>>, vector<1x16x16xbf16>
    %13 = vector.shape_cast %12 : vector<1x16x16xbf16> to vector<16x16xbf16>
    %14 = vector.extract_strided_slice %0 {offsets = [0, 2], sizes = [16, 128], strides = [1, 1]} : vector<16x256xbf16> to vector<16x128xbf16>
    %cst_10 = arith.constant dense<0.000000e+00> : vector<16x128xf32>
    %15 = tpu.matmul %13, %14, %cst_10 {dimension_numbers = #tpu.dot_dimension_numbers<[1], [0], [0], [1], [0, 0, 1, 1], [], []>} : vector<16x16xbf16>, vector<16x128xbf16>, vector<16x128xf32> -> vector<16x128xf32>
    %16 = arith.addf %11, %15 : vector<16x128xf32>
    %c3 = arith.constant 3 : index
    %c0_11 = arith.constant 0 : index
    %c0_12 = arith.constant 0 : index
    %17 = vector.load %arg2[%c3, %c0_11, %c0_12] : memref<9x16x16xbf16, #tpu.memory_space<vmem>>, vector<1x16x16xbf16>
    %18 = vector.shape_cast %17 : vector<1x16x16xbf16> to vector<16x16xbf16>
    %19 = vector.extract_strided_slice %0 {offsets = [0, 9], sizes = [16, 128], strides = [1, 1]} : vector<16x256xbf16> to vector<16x128xbf16>
    %cst_13 = arith.constant dense<0.000000e+00> : vector<16x128xf32>
    %20 = tpu.matmul %18, %19, %cst_13 {dimension_numbers = #tpu.dot_dimension_numbers<[1], [0], [0], [1], [0, 0, 1, 1], [], []>} : vector<16x16xbf16>, vector<16x128xbf16>, vector<16x128xf32> -> vector<16x128xf32>
    %21 = arith.addf %16, %20 : vector<16x128xf32>
    %c4 = arith.constant 4 : index
    %c0_14 = arith.constant 0 : index
    %c0_15 = arith.constant 0 : index
    %22 = vector.load %arg2[%c4, %c0_14, %c0_15] : memref<9x16x16xbf16, #tpu.memory_space<vmem>>, vector<1x16x16xbf16>
    %23 = vector.shape_cast %22 : vector<1x16x16xbf16> to vector<16x16xbf16>
    %24 = vector.extract_strided_slice %0 {offsets = [0, 10], sizes = [16, 128], strides = [1, 1]} : vector<16x256xbf16> to vector<16x128xbf16>
    %cst_16 = arith.constant dense<0.000000e+00> : vector<16x128xf32>
    %25 = tpu.matmul %23, %24, %cst_16 {dimension_numbers = #tpu.dot_dimension_numbers<[1], [0], [0], [1], [0, 0, 1, 1], [], []>} : vector<16x16xbf16>, vector<16x128xbf16>, vector<16x128xf32> -> vector<16x128xf32>
    %26 = arith.addf %21, %25 : vector<16x128xf32>
    %c5 = arith.constant 5 : index
    %c0_17 = arith.constant 0 : index
    %c0_18 = arith.constant 0 : index
    %27 = vector.load %arg2[%c5, %c0_17, %c0_18] : memref<9x16x16xbf16, #tpu.memory_space<vmem>>, vector<1x16x16xbf16>
    %28 = vector.shape_cast %27 : vector<1x16x16xbf16> to vector<16x16xbf16>
    %29 = vector.extract_strided_slice %0 {offsets = [0, 11], sizes = [16, 128], strides = [1, 1]} : vector<16x256xbf16> to vector<16x128xbf16>
    %cst_19 = arith.constant dense<0.000000e+00> : vector<16x128xf32>
    %30 = tpu.matmul %28, %29, %cst_19 {dimension_numbers = #tpu.dot_dimension_numbers<[1], [0], [0], [1], [0, 0, 1, 1], [], []>} : vector<16x16xbf16>, vector<16x128xbf16>, vector<16x128xf32> -> vector<16x128xf32>
    %31 = arith.addf %26, %30 : vector<16x128xf32>
    %c6 = arith.constant 6 : index
    %c0_20 = arith.constant 0 : index
    %c0_21 = arith.constant 0 : index
    %32 = vector.load %arg2[%c6, %c0_20, %c0_21] : memref<9x16x16xbf16, #tpu.memory_space<vmem>>, vector<1x16x16xbf16>
    %33 = vector.shape_cast %32 : vector<1x16x16xbf16> to vector<16x16xbf16>
    %34 = vector.extract_strided_slice %0 {offsets = [0, 18], sizes = [16, 128], strides = [1, 1]} : vector<16x256xbf16> to vector<16x128xbf16>
    %cst_22 = arith.constant dense<0.000000e+00> : vector<16x128xf32>
    %35 = tpu.matmul %33, %34, %cst_22 {dimension_numbers = #tpu.dot_dimension_numbers<[1], [0], [0], [1], [0, 0, 1, 1], [], []>} : vector<16x16xbf16>, vector<16x128xbf16>, vector<16x128xf32> -> vector<16x128xf32>
    %36 = arith.addf %31, %35 : vector<16x128xf32>
    %c7 = arith.constant 7 : index
    %c0_23 = arith.constant 0 : index
    %c0_24 = arith.constant 0 : index
    %37 = vector.load %arg2[%c7, %c0_23, %c0_24] : memref<9x16x16xbf16, #tpu.memory_space<vmem>>, vector<1x16x16xbf16>
    %38 = vector.shape_cast %37 : vector<1x16x16xbf16> to vector<16x16xbf16>
    %39 = vector.extract_strided_slice %0 {offsets = [0, 19], sizes = [16, 128], strides = [1, 1]} : vector<16x256xbf16> to vector<16x128xbf16>
    %cst_25 = arith.constant dense<0.000000e+00> : vector<16x128xf32>
    %40 = tpu.matmul %38, %39, %cst_25 {dimension_numbers = #tpu.dot_dimension_numbers<[1], [0], [0], [1], [0, 0, 1, 1], [], []>} : vector<16x16xbf16>, vector<16x128xbf16>, vector<16x128xf32> -> vector<16x128xf32>
    %41 = arith.addf %36, %40 : vector<16x128xf32>
    %c8 = arith.constant 8 : index
    %c0_26 = arith.constant 0 : index
    %c0_27 = arith.constant 0 : index
    %42 = vector.load %arg2[%c8, %c0_26, %c0_27] : memref<9x16x16xbf16, #tpu.memory_space<vmem>>, vector<1x16x16xbf16>
    %43 = vector.shape_cast %42 : vector<1x16x16xbf16> to vector<16x16xbf16>
    %44 = vector.extract_strided_slice %0 {offsets = [0, 20], sizes = [16, 128], strides = [1, 1]} : vector<16x256xbf16> to vector<16x128xbf16>
    %cst_28 = arith.constant dense<0.000000e+00> : vector<16x128xf32>
    %45 = tpu.matmul %43, %44, %cst_28 {dimension_numbers = #tpu.dot_dimension_numbers<[1], [0], [0], [1], [0, 0, 1, 1], [], []>} : vector<16x16xbf16>, vector<16x128xbf16>, vector<16x128xf32> -> vector<16x128xf32>
    %46 = arith.addf %41, %45 : vector<16x128xf32>
    %c0_29 = arith.constant 0 : index
    %c0_30 = arith.constant 0 : index
    %47 = vector.load %arg3[%c0_29, %c0_30] : memref<16x1xf32, #tpu.memory_space<vmem>>, vector<16x1xf32>
    %48 = vector.broadcast %47 : vector<16x1xf32> to vector<16x128xf32>
    %49 = arith.addf %46, %48 : vector<16x128xf32>
    %cst_31 = arith.constant 0.000000e+00 : f32
    %cst_32 = arith.constant 1.000000e+00 : f32
    %50 = vector.broadcast %cst_31 : f32 to vector<16x128xf32>
    %51 = arith.maximumf %50, %49 : vector<16x128xf32>
    %52 = vector.broadcast %cst_32 : f32 to vector<16x128xf32>
    %53 = arith.minimumf %52, %51 : vector<16x128xf32>
    %cst_33 = arith.constant 1.500000e+01 : f32
    %54 = vector.broadcast %cst_33 : f32 to vector<16x128xf32>
    %55 = arith.mulf %53, %54 : vector<16x128xf32>
    %56 = math.roundeven %55 : vector<16x128xf32>
    %cst_34 = arith.constant 0.0666666701 : f32
    %57 = vector.broadcast %cst_34 : f32 to vector<16x128xf32>
    %58 = arith.mulf %56, %57 : vector<16x128xf32>
    %59 = arith.truncf %58 : vector<16x128xf32> to vector<16x128xbf16>
    %c0_35 = arith.constant 0 : index
    %c0_36 = arith.constant 0 : index
    %60 = vector.load %arg4[%c0_35, %c0_36] : memref<16x128xbf16, #tpu.memory_space<vmem>>, vector<16x128xbf16>
    tpu.vector_store %arg4[%c0_35, %c0_36], %59 {strides = array<i32>} : memref<16x128xbf16, #tpu.memory_space<vmem>>, vector<16x128xbf16>,
    return
  }
  func.func @transform_0(%arg0: i32) -> (i32, i32) {
    %c0_i32 = arith.constant 0 : i32
    %c0_i32_0 = arith.constant 0 : i32
    return %c0_i32, %arg0 : i32, i32
  }
  func.func @transform_1(%arg0: i32) -> (i32, i32, i32) {
    %c0_i32 = arith.constant 0 : i32
    %c0_i32_0 = arith.constant 0 : i32
    %c0_i32_1 = arith.constant 0 : i32
    %c0_i32_2 = arith.constant 0 : i32
    return %c0_i32, %c0_i32_0, %c0_i32_1 : i32, i32, i32
  }
  func.func @transform_2(%arg0: i32) -> (i32, i32) {
    %c0_i32 = arith.constant 0 : i32
    %c0_i32_0 = arith.constant 0 : i32
    %c0_i32_1 = arith.constant 0 : i32
    return %c0_i32, %c0_i32_0 : i32, i32
  }
  func.func @transform_3(%arg0: i32) -> (i32, i32) {
    %c0_i32 = arith.constant 0 : i32
    %c0_i32_0 = arith.constant 0 : i32
    return %c0_i32, %arg0 : i32, i32
  }
}

module attributes {stable_mosaic.version = 11 : i64} {
  func.func @_conv_act_kernel(%arg0: i32, %arg1: memref<16x256xbf16, #tpu.memory_space<vmem>>, %arg2: memref<9x16x16xbf16, #tpu.memory_space<vmem>>, %arg3: memref<16x1xf32, #tpu.memory_space<vmem>>, %arg4: memref<16x128xbf16, #tpu.memory_space<vmem>>) attributes {dimension_semantics = [#tpu.dimension_semantics<parallel>], iteration_bounds = array<i64: 2>, scalar_prefetch = 0 : i64, scratch_operands = 0 : i64, tpu.core_type = #tpu.core_type<tc>, window_params = [{transform_indices = @transform_0, window_bounds = array<i64: 16, 256>}, {pipeline_mode = #tpu.pipeline_mode<synchronous>, transform_indices = @transform_1, window_bounds = array<i64: 9, 16, 16>}, {pipeline_mode = #tpu.pipeline_mode<synchronous>, transform_indices = @transform_2, window_bounds = array<i64: 16, 1>}, {transform_indices = @transform_3, window_bounds = array<i64: 16, 128>}]} {
    %c0 = arith.constant 0 : index
    %c0_0 = arith.constant 0 : index
    %0 = vector.load %arg1[%c0, %c0_0] : memref<16x256xbf16, #tpu.memory_space<vmem>>, vector<16x256xbf16>
    %cst = arith.constant 0.000000e+00 : f32
    %1 = vector.broadcast %cst : f32 to vector<16x128xf32>
    %c0_1 = arith.constant 0 : index
    %c0_2 = arith.constant 0 : index
    %c0_3 = arith.constant 0 : index
    %2 = vector.load %arg2[%c0_1, %c0_2, %c0_3] : memref<9x16x16xbf16, #tpu.memory_space<vmem>>, vector<1x16x16xbf16>
    %3 = vector.shape_cast %2 : vector<1x16x16xbf16> to vector<16x16xbf16>
    %4 = vector.extract_strided_slice %0 {offsets = [0, 0], sizes = [16, 128], strides = [1, 1]} : vector<16x256xbf16> to vector<16x128xbf16>
    %cst_4 = arith.constant dense<0.000000e+00> : vector<16x128xf32>
    %5 = tpu.matmul %3, %4, %cst_4 {dimension_numbers = #tpu.dot_dimension_numbers<[1], [0], [0], [1], [0, 0, 1, 1], [], []>} : vector<16x16xbf16>, vector<16x128xbf16>, vector<16x128xf32> -> vector<16x128xf32>
    %6 = arith.addf %1, %5 : vector<16x128xf32>
    %c1 = arith.constant 1 : index
    %c0_5 = arith.constant 0 : index
    %c0_6 = arith.constant 0 : index
    %7 = vector.load %arg2[%c1, %c0_5, %c0_6] : memref<9x16x16xbf16, #tpu.memory_space<vmem>>, vector<1x16x16xbf16>
    %8 = vector.shape_cast %7 : vector<1x16x16xbf16> to vector<16x16xbf16>
    %9 = vector.extract_strided_slice %0 {offsets = [0, 1], sizes = [16, 128], strides = [1, 1]} : vector<16x256xbf16> to vector<16x128xbf16>
    %cst_7 = arith.constant dense<0.000000e+00> : vector<16x128xf32>
    %10 = tpu.matmul %8, %9, %cst_7 {dimension_numbers = #tpu.dot_dimension_numbers<[1], [0], [0], [1], [0, 0, 1, 1], [], []>} : vector<16x16xbf16>, vector<16x128xbf16>, vector<16x128xf32> -> vector<16x128xf32>
    %11 = arith.addf %6, %10 : vector<16x128xf32>
    %c2 = arith.constant 2 : index
    %c0_8 = arith.constant 0 : index
    %c0_9 = arith.constant 0 : index
    %12 = vector.load %arg2[%c2, %c0_8, %c0_9] : memref<9x16x16xbf16, #tpu.memory_space<vmem>>, vector<1x16x16xbf16>
    %13 = vector.shape_cast %12 : vector<1x16x16xbf16> to vector<16x16xbf16>
    %14 = vector.extract_strided_slice %0 {offsets = [0, 2], sizes = [16, 128], strides = [1, 1]} : vector<16x256xbf16> to vector<16x128xbf16>
    %cst_10 = arith.constant dense<0.000000e+00> : vector<16x128xf32>
    %15 = tpu.matmul %13, %14, %cst_10 {dimension_numbers = #tpu.dot_dimension_numbers<[1], [0], [0], [1], [0, 0, 1, 1], [], []>} : vector<16x16xbf16>, vector<16x128xbf16>, vector<16x128xf32> -> vector<16x128xf32>
    %16 = arith.addf %11, %15 : vector<16x128xf32>
    %c3 = arith.constant 3 : index
    %c0_11 = arith.constant 0 : index
    %c0_12 = arith.constant 0 : index
    %17 = vector.load %arg2[%c3, %c0_11, %c0_12] : memref<9x16x16xbf16, #tpu.memory_space<vmem>>, vector<1x16x16xbf16>
    %18 = vector.shape_cast %17 : vector<1x16x16xbf16> to vector<16x16xbf16>
    %19 = vector.extract_strided_slice %0 {offsets = [0, 7], sizes = [16, 128], strides = [1, 1]} : vector<16x256xbf16> to vector<16x128xbf16>
    %cst_13 = arith.constant dense<0.000000e+00> : vector<16x128xf32>
    %20 = tpu.matmul %18, %19, %cst_13 {dimension_numbers = #tpu.dot_dimension_numbers<[1], [0], [0], [1], [0, 0, 1, 1], [], []>} : vector<16x16xbf16>, vector<16x128xbf16>, vector<16x128xf32> -> vector<16x128xf32>
    %21 = arith.addf %16, %20 : vector<16x128xf32>
    %c4 = arith.constant 4 : index
    %c0_14 = arith.constant 0 : index
    %c0_15 = arith.constant 0 : index
    %22 = vector.load %arg2[%c4, %c0_14, %c0_15] : memref<9x16x16xbf16, #tpu.memory_space<vmem>>, vector<1x16x16xbf16>
    %23 = vector.shape_cast %22 : vector<1x16x16xbf16> to vector<16x16xbf16>
    %24 = vector.extract_strided_slice %0 {offsets = [0, 8], sizes = [16, 128], strides = [1, 1]} : vector<16x256xbf16> to vector<16x128xbf16>
    %cst_16 = arith.constant dense<0.000000e+00> : vector<16x128xf32>
    %25 = tpu.matmul %23, %24, %cst_16 {dimension_numbers = #tpu.dot_dimension_numbers<[1], [0], [0], [1], [0, 0, 1, 1], [], []>} : vector<16x16xbf16>, vector<16x128xbf16>, vector<16x128xf32> -> vector<16x128xf32>
    %26 = arith.addf %21, %25 : vector<16x128xf32>
    %c5 = arith.constant 5 : index
    %c0_17 = arith.constant 0 : index
    %c0_18 = arith.constant 0 : index
    %27 = vector.load %arg2[%c5, %c0_17, %c0_18] : memref<9x16x16xbf16, #tpu.memory_space<vmem>>, vector<1x16x16xbf16>
    %28 = vector.shape_cast %27 : vector<1x16x16xbf16> to vector<16x16xbf16>
    %29 = vector.extract_strided_slice %0 {offsets = [0, 9], sizes = [16, 128], strides = [1, 1]} : vector<16x256xbf16> to vector<16x128xbf16>
    %cst_19 = arith.constant dense<0.000000e+00> : vector<16x128xf32>
    %30 = tpu.matmul %28, %29, %cst_19 {dimension_numbers = #tpu.dot_dimension_numbers<[1], [0], [0], [1], [0, 0, 1, 1], [], []>} : vector<16x16xbf16>, vector<16x128xbf16>, vector<16x128xf32> -> vector<16x128xf32>
    %31 = arith.addf %26, %30 : vector<16x128xf32>
    %c6 = arith.constant 6 : index
    %c0_20 = arith.constant 0 : index
    %c0_21 = arith.constant 0 : index
    %32 = vector.load %arg2[%c6, %c0_20, %c0_21] : memref<9x16x16xbf16, #tpu.memory_space<vmem>>, vector<1x16x16xbf16>
    %33 = vector.shape_cast %32 : vector<1x16x16xbf16> to vector<16x16xbf16>
    %34 = vector.extract_strided_slice %0 {offsets = [0, 14], sizes = [16, 128], strides = [1, 1]} : vector<16x256xbf16> to vector<16x128xbf16>
    %cst_22 = arith.constant dense<0.000000e+00> : vector<16x128xf32>
    %35 = tpu.matmul %33, %34, %cst_22 {dimension_numbers = #tpu.dot_dimension_numbers<[1], [0], [0], [1], [0, 0, 1, 1], [], []>} : vector<16x16xbf16>, vector<16x128xbf16>, vector<16x128xf32> -> vector<16x128xf32>
    %36 = arith.addf %31, %35 : vector<16x128xf32>
    %c7 = arith.constant 7 : index
    %c0_23 = arith.constant 0 : index
    %c0_24 = arith.constant 0 : index
    %37 = vector.load %arg2[%c7, %c0_23, %c0_24] : memref<9x16x16xbf16, #tpu.memory_space<vmem>>, vector<1x16x16xbf16>
    %38 = vector.shape_cast %37 : vector<1x16x16xbf16> to vector<16x16xbf16>
    %39 = vector.extract_strided_slice %0 {offsets = [0, 15], sizes = [16, 128], strides = [1, 1]} : vector<16x256xbf16> to vector<16x128xbf16>
    %cst_25 = arith.constant dense<0.000000e+00> : vector<16x128xf32>
    %40 = tpu.matmul %38, %39, %cst_25 {dimension_numbers = #tpu.dot_dimension_numbers<[1], [0], [0], [1], [0, 0, 1, 1], [], []>} : vector<16x16xbf16>, vector<16x128xbf16>, vector<16x128xf32> -> vector<16x128xf32>
    %41 = arith.addf %36, %40 : vector<16x128xf32>
    %c8 = arith.constant 8 : index
    %c0_26 = arith.constant 0 : index
    %c0_27 = arith.constant 0 : index
    %42 = vector.load %arg2[%c8, %c0_26, %c0_27] : memref<9x16x16xbf16, #tpu.memory_space<vmem>>, vector<1x16x16xbf16>
    %43 = vector.shape_cast %42 : vector<1x16x16xbf16> to vector<16x16xbf16>
    %44 = vector.extract_strided_slice %0 {offsets = [0, 16], sizes = [16, 128], strides = [1, 1]} : vector<16x256xbf16> to vector<16x128xbf16>
    %cst_28 = arith.constant dense<0.000000e+00> : vector<16x128xf32>
    %45 = tpu.matmul %43, %44, %cst_28 {dimension_numbers = #tpu.dot_dimension_numbers<[1], [0], [0], [1], [0, 0, 1, 1], [], []>} : vector<16x16xbf16>, vector<16x128xbf16>, vector<16x128xf32> -> vector<16x128xf32>
    %46 = arith.addf %41, %45 : vector<16x128xf32>
    %c0_29 = arith.constant 0 : index
    %c0_30 = arith.constant 0 : index
    %47 = vector.load %arg3[%c0_29, %c0_30] : memref<16x1xf32, #tpu.memory_space<vmem>>, vector<16x1xf32>
    %48 = vector.broadcast %47 : vector<16x1xf32> to vector<16x128xf32>
    %49 = arith.addf %46, %48 : vector<16x128xf32>
    %cst_31 = arith.constant 0.000000e+00 : f32
    %cst_32 = arith.constant 1.000000e+00 : f32
    %50 = vector.broadcast %cst_31 : f32 to vector<16x128xf32>
    %51 = arith.maximumf %50, %49 : vector<16x128xf32>
    %52 = vector.broadcast %cst_32 : f32 to vector<16x128xf32>
    %53 = arith.minimumf %52, %51 : vector<16x128xf32>
    %cst_33 = arith.constant 1.500000e+01 : f32
    %54 = vector.broadcast %cst_33 : f32 to vector<16x128xf32>
    %55 = arith.mulf %53, %54 : vector<16x128xf32>
    %56 = math.roundeven %55 : vector<16x128xf32>
    %cst_34 = arith.constant 0.0666666701 : f32
    %57 = vector.broadcast %cst_34 : f32 to vector<16x128xf32>
    %58 = arith.mulf %56, %57 : vector<16x128xf32>
    %59 = arith.truncf %58 : vector<16x128xf32> to vector<16x128xbf16>
    %c0_35 = arith.constant 0 : index
    %c0_36 = arith.constant 0 : index
    %60 = vector.load %arg4[%c0_35, %c0_36] : memref<16x128xbf16, #tpu.memory_space<vmem>>, vector<16x128xbf16>
    tpu.vector_store %arg4[%c0_35, %c0_36], %59 {strides = array<i32>} : memref<16x128xbf16, #tpu.memory_space<vmem>>, vector<16x128xbf16>,
    return
  }
  func.func @transform_0(%arg0: i32) -> (i32, i32) {
    %c0_i32 = arith.constant 0 : i32
    %c0_i32_0 = arith.constant 0 : i32
    return %c0_i32, %arg0 : i32, i32
  }
  func.func @transform_1(%arg0: i32) -> (i32, i32, i32) {
    %c0_i32 = arith.constant 0 : i32
    %c0_i32_0 = arith.constant 0 : i32
    %c0_i32_1 = arith.constant 0 : i32
    %c0_i32_2 = arith.constant 0 : i32
    return %c0_i32, %c0_i32_0, %c0_i32_1 : i32, i32, i32
  }
  func.func @transform_2(%arg0: i32) -> (i32, i32) {
    %c0_i32 = arith.constant 0 : i32
    %c0_i32_0 = arith.constant 0 : i32
    %c0_i32_1 = arith.constant 0 : i32
    return %c0_i32, %c0_i32_0 : i32, i32
  }
  func.func @transform_3(%arg0: i32) -> (i32, i32) {
    %c0_i32 = arith.constant 0 : i32
    %c0_i32_0 = arith.constant 0 : i32
    return %c0_i32, %arg0 : i32, i32
  }
}

module attributes {stable_mosaic.version = 11 : i64} {
  func.func @_head_kernel(%arg0: memref<2x400xbf16, #tpu.memory_space<vmem>>, %arg1: memref<400x64xbf16, #tpu.memory_space<vmem>>, %arg2: memref<64x10xbf16, #tpu.memory_space<vmem>>, %arg3: memref<1x10xf32, #tpu.memory_space<vmem>>, %arg4: memref<2x10xf32, #tpu.memory_space<vmem>>) attributes {dimension_semantics = [], scalar_prefetch = 0 : i64, scratch_operands = 0 : i64, tpu.core_type = #tpu.core_type<tc>} {
    %c0 = arith.constant 0 : index
    %c0_0 = arith.constant 0 : index
    %0 = vector.load %arg0[%c0, %c0_0] : memref<2x400xbf16, #tpu.memory_space<vmem>>, vector<2x400xbf16>
    %c0_1 = arith.constant 0 : index
    %c0_2 = arith.constant 0 : index
    %1 = vector.load %arg1[%c0_1, %c0_2] : memref<400x64xbf16, #tpu.memory_space<vmem>>, vector<400x64xbf16>
    %cst = arith.constant dense<0.000000e+00> : vector<2x64xf32>
    %2 = tpu.matmul %0, %1, %cst {dimension_numbers = #tpu.dot_dimension_numbers<[1], [0], [0], [1], [0, 0, 1, 1], [], []>} : vector<2x400xbf16>, vector<400x64xbf16>, vector<2x64xf32> -> vector<2x64xf32>
    %cst_3 = arith.constant 0.000000e+00 : f32
    %cst_4 = arith.constant 1.000000e+00 : f32
    %3 = vector.broadcast %cst_3 : f32 to vector<2x64xf32>
    %4 = arith.maximumf %3, %2 : vector<2x64xf32>
    %5 = vector.broadcast %cst_4 : f32 to vector<2x64xf32>
    %6 = arith.minimumf %5, %4 : vector<2x64xf32>
    %7 = arith.truncf %6 : vector<2x64xf32> to vector<2x64xbf16>
    %c0_5 = arith.constant 0 : index
    %c0_6 = arith.constant 0 : index
    %8 = vector.load %arg2[%c0_5, %c0_6] : memref<64x10xbf16, #tpu.memory_space<vmem>>, vector<64x10xbf16>
    %cst_7 = arith.constant dense<0.000000e+00> : vector<2x10xf32>
    %9 = tpu.matmul %7, %8, %cst_7 {dimension_numbers = #tpu.dot_dimension_numbers<[1], [0], [0], [1], [0, 0, 1, 1], [], []>} : vector<2x64xbf16>, vector<64x10xbf16>, vector<2x10xf32> -> vector<2x10xf32>
    %c0_8 = arith.constant 0 : index
    %c0_9 = arith.constant 0 : index
    %10 = vector.load %arg3[%c0_8, %c0_9] : memref<1x10xf32, #tpu.memory_space<vmem>>, vector<1x10xf32>
    %11 = vector.broadcast %10 : vector<1x10xf32> to vector<2x10xf32>
    %12 = arith.addf %9, %11 : vector<2x10xf32>
    %c0_10 = arith.constant 0 : index
    %c0_11 = arith.constant 0 : index
    %13 = vector.load %arg4[%c0_10, %c0_11] : memref<2x10xf32, #tpu.memory_space<vmem>>, vector<2x10xf32>
    tpu.vector_store %arg4[%c0_10, %c0_11], %12 {strides = array<i32>} : memref<2x10xf32, #tpu.memory_space<vmem>>, vector<2x10xf32>,
    return
  }
}

</mosaic_0001>

<llo_original>
// kernel: svhnq_forward.7
$region0: #{svhnq_forward.7}
  #allocation0 [shape = 'u32[]', space=smem, size = 0x4, offset = 0x4, fixed_abs, tag = 'smem constant byte address 0x4 - core index']
  #allocation1 [shape = 'u32[144,128]{1,0:T(1,128)}', space=vmem, size = 0x12000, scoped, tag = 'internal scratch']
  %s0 = inlined_call_operand.vmem [shape: bf16[75,2816], index: 0, kind: input, shape index: {}]
  %s1 = inlined_call_operand.vmem [shape: bf16[1,6,75], index: 1, kind: input, shape index: {}]
  %s2 = inlined_call_operand.vmem [shape: f32[6,1], index: 2, kind: input, shape index: {}]
  %s3 = inlined_call_operand.vmem [shape: bf16[6,2816], index: 3, kind: output, shape index: {}]
  %s4 = sld [smem:[#allocation0]]
  $region71: #{svhnq_forward.7} parent=0
    _
  %s6 = ssub.s32 1, %s4
  %s7 = scalar_select 0, %s6, %s4
  $region1: #{svhnq_forward.7} parent=0
    #allocation2 [shape = 'u8[450560]{0}', space=vmem, size = 0x6e000, scoped, tag = 'input window, operand 0']
    loop: start=0, step=1, limit=4
    $region2: #{svhnq_forward.7} parent=1 // loop_pre_header
      _
    $region3: #{svhnq_forward.7} parent=1 // loop_header
      %s9 = sphi 0, %s13
      %p10 = scmp.ge.s32.totalorder %s9, 4
      %s19 = sphi 0, %s21
      %s22 = sphi 0, %s19
      %s23 = sphi 0, %s22
      %s39 = sphi 0, %s23
      %s43 = sphi 0, %s43
      %s45 = sphi 0, %s43
      %s46 = sphi 0, %s45
      %s60 = sphi 0, %s46
      %s64 = sphi 0, %s64
      %s66 = sphi 0, %s64
      %s67 = sphi 0, %s66
      %s81 = sphi 0, %s67
      %s87 = sphi 0, %s89
      %s90 = sphi 0, %s87
      %s91 = sphi 0, %s90
      %s107 = sphi 0, %s91
    $region4: #{svhnq_forward.7} parent=1 // loop_header_branch
      %12 = sbr.rel (%p10) target = $region8
    $region5: #{svhnq_forward.7} parent=1 // loop_body
      %s14 = ssub.s32 %s9, 1
      %s15 = ssub.s32 %s9, 2
      %s16 = sadd.s32 %s9, 1
      %s17 = ssub.s32 %s9, %s16
      %p18 = scmp.eq.s32.totalorder %s17, 0
      %s20 = sadd.s32 %s19, 1
      %s21 = scalar_select %p18, %s19, %s20
      %p24 = pneg %p18
      %p25 = scmp.eq.s32.totalorder %s9, 1
      %p26 = por %p24, %p25
      %p27 = scmp.ne.s32.totalorder %s19, %s22
      %p28 = scmp.eq.s32.totalorder %s9, 0
      %p29 = por %p27, %p28
      %p30 = scmp.ne.s32.totalorder %s19, %s22
      %p31 = scmp.eq.s32.totalorder %s14, 1
      %p32 = por %p30, %p31
      %p33 = scmp.ne.s32.totalorder %s22, %s23
      %p34 = scmp.eq.s32.totalorder %s14, 0
      %p35 = por %p33, %p34
      %p36 = scmp.ne.s32.totalorder %s22, %s23
      %p37 = scmp.eq.s32.totalorder %s15, 1
      %p38 = por %p36, %p37
      %p40 = scmp.ne.s32.totalorder %s23, %s39
      %p41 = scmp.eq.s32.totalorder %s15, 0
      %p42 = por %p40, %p41
      %s44 = sadd.s32 %s43, 1
      %p47 = scmp.eq.s32.totalorder %s9, 1
      %p48 = scmp.ne.s32.totalorder %s43, %s45
      %p49 = scmp.eq.s32.totalorder %s9, 0
      %p50 = por %p48, %p49
      %p51 = scmp.ne.s32.totalorder %s43, %s45
      %p52 = scmp.eq.s32.totalorder %s14, 1
      %p53 = por %p51, %p52
      %p54 = scmp.ne.s32.totalorder %s45, %s46
      %p55 = scmp.eq.s32.totalorder %s14, 0
      %p56 = por %p54, %p55
      %p57 = scmp.ne.s32.totalorder %s45, %s46
      %p58 = scmp.eq.s32.totalorder %s15, 1
      %p59 = por %p57, %p58
      %p61 = scmp.ne.s32.totalorder %s46, %s60
      %p62 = scmp.eq.s32.totalorder %s15, 0
      %p63 = por %p61, %p62
      %s65 = sadd.s32 %s64, 1
      %p68 = scmp.eq.s32.totalorder %s9, 1
      %p69 = scmp.ne.s32.totalorder %s64, %s66
      %p70 = scmp.eq.s32.totalorder %s9, 0
      %p71 = por %p69, %p70
      %p72 = scmp.ne.s32.totalorder %s64, %s66
      %p73 = scmp.eq.s32.totalorder %s14, 1
      %p74 = por %p72, %p73
      %p75 = scmp.ne.s32.totalorder %s66, %s67
      %p76 = scmp.eq.s32.totalorder %s14, 0
      %p77 = por %p75, %p76
      %p78 = scmp.ne.s32.totalorder %s66, %s67
      %p79 = scmp.eq.s32.totalorder %s15, 1
      %p80 = por %p78, %p79
      %p82 = scmp.ne.s32.totalorder %s67, %s81
      %p83 = scmp.eq.s32.totalorder %s15, 0
      %p84 = por %p82, %p83
      %s85 = ssub.s32 %s9, %s16
      %p86 = scmp.eq.s32.totalorder %s85, 0
      %s88 = sadd.s32 %s87, 1
      %s89 = scalar_select %p86, %s87, %s88
      %p92 = pneg %p86
      %p93 = scmp.eq.s32.totalorder %s9, 1
      %p94 = por %p92, %p93
      %p95 = scmp.ne.s32.totalorder %s87, %s90
      %p96 = scmp.eq.s32.totalorder %s9, 0
      %p97 = por %p95, %p96
      %p98 = scmp.ne.s32.totalorder %s87, %s90
      %p99 = scmp.eq.s32.totalorder %s14, 1
      %p100 = por %p98, %p99
      %p101 = scmp.ne.s32.totalorder %s90, %s91
      %p102 = scmp.eq.s32.totalorder %s14, 0
      %p103 = por %p101, %p102
      %p104 = scmp.ne.s32.totalorder %s90, %s91
      %p105 = scmp.eq.s32.totalorder %s15, 1
      %p106 = por %p104, %p105
      %p108 = scmp.ne.s32.totalorder %s91, %s107
      %p109 = scmp.eq.s32.totalorder %s15, 0
      %p110 = por %p108, %p109
      %p111 = scmp.le.s32.totalorder 1, %s9
      %p112 = scmp.lt.s32.totalorder %s9, 3
      %p113 = pnand %p111, %p112
      %p114 = pneg %p113
      // Predicated region
      $region9: #{svhnq_forward.7} parent=5 // pred_check
        _
      $region10: #{svhnq_forward.7} parent=5 // pred_check_branch
        %116 = sbr.rel (%p113) target = $region12
      $region11: #{svhnq_forward.7} parent=5 // pred_region
        %s117 = ssub.s32 %s9, 1
        // Predicated region
        $region13: #{svhnq_forward.7} parent=11 // pred_check
          %p118 = pneg %p56
        $region14: #{svhnq_forward.7} parent=11 // pred_check_branch
          %120 = sbr.rel (%p118) target = $region16
        $region15: #{svhnq_forward.7} parent=11 // pred_region
          _
        $region16: #{svhnq_forward.7} parent=11 // pred_fallthru
          _
        // Predicated region
        $region17: #{svhnq_forward.7} parent=11 // pred_check
          %p121 = pneg %p77
        $region18: #{svhnq_forward.7} parent=11 // pred_check_branch
          %123 = sbr.rel (%p121) target = $region20
        $region19: #{svhnq_forward.7} parent=11 // pred_region
          _
        $region20: #{svhnq_forward.7} parent=11 // pred_fallthru
          _
      $region12: #{svhnq_forward.7} parent=5 // pred_fallthru
        _
      %p124 = scmp.lt.s32.totalorder %s9, 2
      // Predicated region
      $region21: #{svhnq_forward.7} parent=5 // pred_check
        %p125 = pneg %p124
      $region22: #{svhnq_forward.7} parent=5 // pred_check_branch
        %127 = sbr.rel (%p125) target = $region24
      $region23: #{svhnq_forward.7} parent=5 // pred_region
        // Predicated region
        $region25: #{svhnq_forward.7} parent=23 // pred_check
          %p128 = pneg %p29
        $region26: #{svhnq_forward.7} parent=23 // pred_check_branch
          %130 = sbr.rel (%p128) target = $region28
        $region27: #{svhnq_forward.7} parent=23 // pred_region
          %s131 = sand.u32 %s19, 1
          %s132 = sand.u32 %s19, 1
          %s133 = smul.addr %s132, 440
          %s134 = scalar_lea.vmem [#allocation2], %s133
          %s135 = smul.u32 11, %s9
          %s136 = smul.addr %s135, 4
          %s137 = scalar_lea.vmem %s0, %s136
          // Predicated region
          $region29: #{svhnq_forward.7} parent=27 // pred_check
            _
          $region30: #{svhnq_forward.7} parent=27 // pred_check_branch
            %139 = sbr.rel (0) target = $region32
          $region31: #{svhnq_forward.7} parent=27 // pred_region
            // Predicated region
            $region33: #{svhnq_forward.7} parent=31 // pred_check
              _
            $region34: #{svhnq_forward.7} parent=31 // pred_check_branch
              %141 = sbr.rel (0) target = $region36
            $region35: #{svhnq_forward.7} parent=31 // pred_region
              %s142 = scalar_lea.vmem %s137, 40
              %s143 = scalar_lea.vmem %s134, 40 [#allocation2]
              loop: start=0, step=1, limit=1
              $region37: #{svhnq_forward.7} parent=35 // loop_pre_header
                _
              $region38: #{svhnq_forward.7} parent=35 // loop_header
                %s145 = sphi 0, %s149
                %p146 = scmp.ge.s32.totalorder %s145, 1
                %s150 = sphi %s137, %s137
                %s151 = sphi %s134, %s134
              $region39: #{svhnq_forward.7} parent=35 // loop_header_branch
                %148 = sbr.rel (%p146) target = $region43
              $region40: #{svhnq_forward.7} parent=35 // loop_body
                %v152 = vld [vmem:[%s150] sm:$0xff]
                %153 = vst [vmem:[%s151] sm:$0xff] %v152
                %v154 = vld [vmem:[%s150 + $0x8] sm:$0xff]
                %155 = vst [vmem:[%s151 + $0x8] sm:$0xff] %v154
                %v156 = vld [vmem:[%s150 + $0x10] sm:$0xff]
                %157 = vst [vmem:[%s151 + $0x10] sm:$0xff] %v156
                %v158 = vld [vmem:[%s150 + $0x18] sm:$0xff]
                %159 = vst [vmem:[%s151 + $0x18] sm:$0xff] %v158
                %v160 = vld [vmem:[%s150 + $0x20] sm:$0xff]
                %161 = vst [vmem:[%s151 + $0x20] sm:$0xff] %v160
                %v162 = vld [vmem:[%s150 + $0x58] sm:$0xff]
                %163 = vst [vmem:[%s151 + $0x2c] sm:$0xff] %v162
                %v164 = vld [vmem:[%s150 + $0x60] sm:$0xff]
                %165 = vst [vmem:[%s151 + $0x34] sm:$0xff] %v164
                %v166 = vld [vmem:[%s150 + $0x68] sm:$0xff]
                %167 = vst [vmem:[%s151 + $0x3c] sm:$0xff] %v166
                %v168 = vld [vmem:[%s150 + $0x70] sm:$0xff]
                %169 = vst [vmem:[%s151 + $0x44] sm:$0xff] %v168
                %v170 = vld [vmem:[%s150 + $0x78] sm:$0xff]
                %171 = vst [vmem:[%s151 + $0x4c] sm:$0xff] %v170
                %v172 = vld [vmem:[%s150 + $0xb0] sm:$0xff]
                %173 = vst [vmem:[%s151 + $0x58] sm:$0xff] %v172
                %v174 = vld [vmem:[%s150 + $0xb8] sm:$0xff]
                %175 = vst [vmem:[%s151 + $0x60] sm:$0xff] %v174
                %v176 = vld [vmem:[%s150 + $0xc0] sm:$0xff]
                %177 = vst [vmem:[%s151 + $0x68] sm:$0xff] %v176
                %v178 = vld [vmem:[%s150 + $0xc8] sm:$0xff]
                %179 = vst [vmem:[%s151 + $0x70] sm:$0xff] %v178
                %v180 = vld [vmem:[%s150 + $0xd0] sm:$0xff]
                %181 = vst [vmem:[%s151 + $0x78] sm:$0xff] %v180
                %v182 = vld [vmem:[%s150 + $0x108] sm:$0xff]
                %183 = vst [vmem:[%s151 + $0x84] sm:$0xff] %v182
                %v184 = vld [vmem:[%s150 + $0x110] sm:$0xff]
                %185 = vst [vmem:[%s151 + $0x8c] sm:$0xff] %v184
                %v186 = vld [vmem:[%s150 + $0x118] sm:$0xff]
                %187 = vst [vmem:[%s151 + $0x94] sm:$0xff] %v186
                %v188 = vld [vmem:[%s150 + $0x120] sm:$0xff]
                %189 = vst [vmem:[%s151 + $0x9c] sm:$0xff] %v188
                %v190 = vld [vmem:[%s150 + $0x128] sm:$0xff]
                %191 = vst [vmem:[%s151 + $0xa4] sm:$0xff] %v190
                %v192 = vld [vmem:[%s150 + $0x160] sm:$0xff]
                %193 = vst [vmem:[%s151 + $0xb0] sm:$0xff] %v192
                %v194 = vld [vmem:[%s150 + $0x168] sm:$0xff]
                %195 = vst [vmem:[%s151 + $0xb8] sm:$0xff] %v194
                %v196 = vld [vmem:[%s150 + $0x170] sm:$0xff]
                %197 = vst [vmem:[%s151 + $0xc0] sm:$0xff] %v196
                %v198 = vld [vmem:[%s150 + $0x178] sm:$0xff]
                %199 = vst [vmem:[%s151 + $0xc8] sm:$0xff] %v198
                %v200 = vld [vmem:[%s150 + $0x180] sm:$0xff]
                %201 = vst [vmem:[%s151 + $0xd0] sm:$0xff] %v200
                %v202 = vld [vmem:[%s150 + $0x1b8] sm:$0xff]
                %203 = vst [vmem:[%s151 + $0xdc] sm:$0xff] %v202
                %v204 = vld [vmem:[%s150 + $0x1c0] sm:$0xff]
                %205 = vst [vmem:[%s151 + $0xe4] sm:$0xff] %v204
                %v206 = vld [vmem:[%s150 + $0x1c8] sm:$0xff]
                %207 = vst [vmem:[%s151 + $0xec] sm:$0xff] %v206
                %v208 = vld [vmem:[%s150 + $0x1d0] sm:$0xff]
                %209 = vst [vmem:[%s151 + $0xf4] sm:$0xff] %v208
                %v210 = vld [vmem:[%s150 + $0x1d8] sm:$0xff]
                %211 = vst [vmem:[%s151 + $0xfc] sm:$0xff] %v210
                %v212 = vld [vmem:[%s150 + $0x210] sm:$0xff]
                %213 = vst [vmem:[%s151 + $0x108] sm:$0xff] %v212
                %v214 = vld [vmem:[%s150 + $0x218] sm:$0xff]
                %215 = vst [vmem:[%s151 + $0x110] sm:$0xff] %v214
                %v216 = vld [vmem:[%s150 + $0x220] sm:$0xff]
                %217 = vst [vmem:[%s151 + $0x118] sm:$0xff] %v216
                %v218 = vld [vmem:[%s150 + $0x228] sm:$0xff]
                %219 = vst [vmem:[%s151 + $0x120] sm:$0xff] %v218
                %v220 = vld [vmem:[%s150 + $0x230] sm:$0xff]
                %221 = vst [vmem:[%s151 + $0x128] sm:$0xff] %v220
                %v222 = vld [vmem:[%s150 + $0x268] sm:$0xff]
                %223 = vst [vmem:[%s151 + $0x134] sm:$0xff] %v222
                %v224 = vld [vmem:[%s150 + $0x270] sm:$0xff]
                %225 = vst [vmem:[%s151 + $0x13c] sm:$0xff] %v224
                %v226 = vld [vmem:[%s150 + $0x278] sm:$0xff]
                %227 = vst [vmem:[%s151 + $0x144] sm:$0xff] %v226
                %v228 = vld [vmem:[%s150 + $0x280] sm:$0xff]
                %229 = vst [vmem:[%s151 + $0x14c] sm:$0xff] %v228
                %v230 = vld [vmem:[%s150 + $0x288] sm:$0xff]
                %231 = vst [vmem:[%s151 + $0x154] sm:$0xff] %v230
                %v232 = vld [vmem:[%s150 + $0x2c0] sm:$0xff]
                %233 = vst [vmem:[%s151 + $0x160] sm:$0xff] %v232
                %v234 = vld [vmem:[%s150 + $0x2c8] sm:$0xff]
                %235 = vst [vmem:[%s151 + $0x168] sm:$0xff] %v234
                %v236 = vld [vmem:[%s150 + $0x2d0] sm:$0xff]
                %237 = vst [vmem:[%s151 + $0x170] sm:$0xff] %v236
                %v238 = vld [vmem:[%s150 + $0x2d8] sm:$0xff]
                %239 = vst [vmem:[%s151 + $0x178] sm:$0xff] %v238
                %v240 = vld [vmem:[%s150 + $0x2e0] sm:$0xff]
                %241 = vst [vmem:[%s151 + $0x180] sm:$0xff] %v240
                %v242 = vld [vmem:[%s150 + $0x318] sm:$0xff]
                %243 = vst [vmem:[%s151 + $0x18c] sm:$0xff] %v242
                %v244 = vld [vmem:[%s150 + $0x320] sm:$0xff]
                %245 = vst [vmem:[%s151 + $0x194] sm:$0xff] %v244
                %v246 = vld [vmem:[%s150 + $0x328] sm:$0xff]
                %247 = vst [vmem:[%s151 + $0x19c] sm:$0xff] %v246
                %v248 = vld [vmem:[%s150 + $0x330] sm:$0xff]
                %249 = vst [vmem:[%s151 + $0x1a4] sm:$0xff] %v248
                %v250 = vld [vmem:[%s150 + $0x338] sm:$0xff]
                %251 = vst [vmem:[%s151 + $0x1ac] sm:$0xff] %v250
              $region41: #{svhnq_forward.7} parent=35 // loop_footer
                %s149 = sadd.s32 1, %s145
              $region42: #{svhnq_forward.7} parent=35 // loop_footer_branch
                %144 = sbr.rel target = $region38
              $region43: #{svhnq_forward.7} parent=35 // loop_exit
                _
              loop: start=0, step=1, limit=1
              $region44: #{svhnq_forward.7} parent=35 // loop_pre_header
                _
              $region45: #{svhnq_forward.7} parent=35 // loop_header
                %s254 = sphi 0, %s258
                %p255 = scmp.ge.s32.totalorder %s254, 1
                %s259 = sphi %s142, %s142
                %s260 = sphi %s143, %s143
              $region46: #{svhnq_forward.7} parent=35 // loop_header_branch
                %257 = sbr.rel (%p255) target = $region50
              $region47: #{svhnq_forward.7} parent=35 // loop_body
                %v261 = vld [vmem:[%s259] sm:$0xf]
                %262 = vst [vmem:[%s260] sm:$0xf] %v261
                %v263 = vld [vmem:[%s259 + $0x58] sm:$0xf]
                %264 = vst [vmem:[%s260 + $0x2c] sm:$0xf] %v263
                %v265 = vld [vmem:[%s259 + $0xb0] sm:$0xf]
                %266 = vst [vmem:[%s260 + $0x58] sm:$0xf] %v265
                %v267 = vld [vmem:[%s259 + $0x108] sm:$0xf]
                %268 = vst [vmem:[%s260 + $0x84] sm:$0xf] %v267
                %v269 = vld [vmem:[%s259 + $0x160] sm:$0xf]
                %270 = vst [vmem:[%s260 + $0xb0] sm:$0xf] %v269
                %v271 = vld [vmem:[%s259 + $0x1b8] sm:$0xf]
                %272 = vst [vmem:[%s260 + $0xdc] sm:$0xf] %v271
                %v273 = vld [vmem:[%s259 + $0x210] sm:$0xf]
                %274 = vst [vmem:[%s260 + $0x108] sm:$0xf] %v273
                %v275 = vld [vmem:[%s259 + $0x268] sm:$0xf]
                %276 = vst [vmem:[%s260 + $0x134] sm:$0xf] %v275
                %v277 = vld [vmem:[%s259 + $0x2c0] sm:$0xf]
                %278 = vst [vmem:[%s260 + $0x160] sm:$0xf] %v277
                %v279 = vld [vmem:[%s259 + $0x318] sm:$0xf]
                %280 = vst [vmem:[%s260 + $0x18c] sm:$0xf] %v279
              $region48: #{svhnq_forward.7} parent=35 // loop_footer
                %s258 = sadd.s32 1, %s254
              $region49: #{svhnq_forward.7} parent=35 // loop_footer_branch
                %253 = sbr.rel target = $region45
              $region50: #{svhnq_forward.7} parent=35 // loop_exit
                _
            $region36: #{svhnq_forward.7} parent=31 // pred_fallthru
              _
          $region32: #{svhnq_forward.7} parent=27 // pred_fallthru
            _
          %281 = vnop
        $region28: #{svhnq_forward.7} parent=23 // pred_fallthru
          _
      $region24: #{svhnq_forward.7} parent=5 // pred_fallthru
        _
      %p282 = scmp.le.s32.totalorder 1, %s9
      %p283 = scmp.lt.s32.totalorder %s9, 3
      %p284 = pnand %p282, %p283
      %p285 = pneg %p284
      // Predicated region
      $region51: #{svhnq_forward.7} parent=5 // pred_check
        _
      $region52: #{svhnq_forward.7} parent=5 // pred_check_branch
        %287 = sbr.rel (%p284) target = $region54
      $region53: #{svhnq_forward.7} parent=5 // pred_region
        %s288 = ssub.s32 %s9, 1
        %s289 = sand.u32 %s22, 1
        %s290 = sand.u32 %s22, 1
        %s291 = smul.addr %s290, 440
        %s292 = scalar_lea.vmem [#allocation2], %s291
        // Predicated region
        $region55: #{svhnq_forward.7} parent=53 // pred_check
          %p293 = pneg %p35
        $region56: #{svhnq_forward.7} parent=53 // pred_check_branch
          %295 = sbr.rel (%p293) target = $region58
        $region57: #{svhnq_forward.7} parent=53 // pred_region
          _
        $region58: #{svhnq_forward.7} parent=53 // pred_fallthru
          _
        %s296 = sand.u32 %s22, 1
        %s297 = sand.u32 %s22, 1
        %s298 = smul.addr %s297, 440
        %s299 = scalar_lea.vmem [#allocation2], %s298
        %p300 = pneg %p35
        %p301 = pneg %p32
        %p302 = pneg %p56
        %p303 = pneg %p53
        %p304 = pneg %p77
        %p305 = pneg %p74
        %p306 = pneg %p103
        %p307 = pneg %p100
        %s308 = smul.u32 11, %s14
        %p309 = scmp.lt.s32.totalorder %s308, 21
        %s310 = scalar_select %p309, %s308, 21
        %s311 = smul.addr %s310, 4
        %s312 = scalar_lea.vmem %s3, %s311
        %s313 = smul.u32 11, %s14
        %s314 = smul.u32 11, %s14
        %p315 = scmp.lt.s32.totalorder %s314, 21
        %s316 = scalar_select %p315, %s314, 21
        %s317 = smul.addr %s316, 4
        %s318 = scalar_lea.vmem %s3, %s317
        %s319 = smul.u32 11, %s14
        %v321 = vld [vmem:[%s292] sm:$0xff]
        %v322 = vld [vmem:[%s292 + $0x8] sm:$0xff]
        %v323 = vld [vmem:[%s292 + $0x10] sm:$0xff]
        %v324 = vld [vmem:[%s292 + $0x18] sm:$0xff]
        %v325 = vld [vmem:[%s292 + $0x20] sm:$0xff]
        %v326 = vld [vmem:[%s292 + $0x28] sm:$0xf]
        %v327 = vld [vmem:[%s292 + $0x2c] sm:$0xff]
        %v328 = vld [vmem:[%s292 + $0x34] sm:$0xff]
        %v329 = vld [vmem:[%s292 + $0x3c] sm:$0xff]
        %v330 = vld [vmem:[%s292 + $0x44] sm:$0xff]
        %v331 = vld [vmem:[%s292 + $0x4c] sm:$0xff]
        %v332 = vld [vmem:[%s292 + $0x54] sm:$0xf]
        %v333 = vld [vmem:[%s292 + $0x58] sm:$0xff]
        %v334 = vld [vmem:[%s292 + $0x60] sm:$0xff]
        %v335 = vld [vmem:[%s292 + $0x68] sm:$0xff]
        %v336 = vld [vmem:[%s292 + $0x70] sm:$0xff]
        %v337 = vld [vmem:[%s292 + $0x78] sm:$0xff]
        %v338 = vld [vmem:[%s292 + $0x80] sm:$0xf]
        %v339 = vld [vmem:[%s292 + $0x84] sm:$0xff]
        %v340 = vld [vmem:[%s292 + $0x8c] sm:$0xff]
        %v341 = vld [vmem:[%s292 + $0x94] sm:$0xff]
        %v342 = vld [vmem:[%s292 + $0x9c] sm:$0xff]
        %v343 = vld [vmem:[%s292 + $0xa4] sm:$0xff]
        %v344 = vld [vmem:[%s292 + $0xac] sm:$0xf]
        %v345 = vld [vmem:[%s292 + $0xb0] sm:$0xff]
        %v346 = vld [vmem:[%s292 + $0xb8] sm:$0xff]
        %v347 = vld [vmem:[%s292 + $0xc0] sm:$0xff]
        %v348 = vld [vmem:[%s292 + $0xc8] sm:$0xff]
        %v349 = vld [vmem:[%s292 + $0xd0] sm:$0xff]
        %v350 = vld [vmem:[%s292 + $0xd8] sm:$0xf]
        %v351 = vld [vmem:[%s292 + $0xdc] sm:$0xff]
        %v352 = vld [vmem:[%s292 + $0xe4] sm:$0xff]
        %v353 = vld [vmem:[%s292 + $0xec] sm:$0xff]
        %v354 = vld [vmem:[%s292 + $0xf4] sm:$0xff]
        %v355 = vld [vmem:[%s292 + $0xfc] sm:$0xff]
        %v356 = vld [vmem:[%s292 + $0x104] sm:$0xf]
        %v357 = vld [vmem:[%s292 + $0x108] sm:$0xff]
        %v358 = vld [vmem:[%s292 + $0x110] sm:$0xff]
        %v359 = vld [vmem:[%s292 + $0x118] sm:$0xff]
        %v360 = vld [vmem:[%s292 + $0x120] sm:$0xff]
        %v361 = vld [vmem:[%s292 + $0x128] sm:$0xff]
        %v362 = vld [vmem:[%s292 + $0x130] sm:$0xf]
        %v363 = vld [vmem:[%s292 + $0x134] sm:$0xff]
        %v364 = vld [vmem:[%s292 + $0x13c] sm:$0xff]
        %v365 = vld [vmem:[%s292 + $0x144] sm:$0xff]
        %v366 = vld [vmem:[%s292 + $0x14c] sm:$0xff]
        %v367 = vld [vmem:[%s292 + $0x154] sm:$0xff]
        %v368 = vld [vmem:[%s292 + $0x15c] sm:$0xf]
        %v369 = vld [vmem:[%s292 + $0x160] sm:$0xff]
        %v370 = vld [vmem:[%s292 + $0x168] sm:$0xff]
        %v371 = vld [vmem:[%s292 + $0x170] sm:$0xff]
        %v372 = vld [vmem:[%s292 + $0x178] sm:$0xff]
        %v373 = vld [vmem:[%s292 + $0x180] sm:$0xff]
        %v374 = vld [vmem:[%s292 + $0x188] sm:$0xf]
        %v375 = vld [vmem:[%s292 + $0x18c] sm:$0x33]
        %v376 = vld [vmem:[%s292 + $0x194] sm:$0x33]
        %v377 = vld [vmem:[%s292 + $0x19c] sm:$0x33]
        %v378 = vld [vmem:[%s292 + $0x1a4] sm:$0x33]
        %v379 = vld [vmem:[%s292 + $0x1ac] sm:$0x33]
        %v380 = vld [vmem:[%s292 + $0x1b4] sm:$0x3]
        %v381 = vld [vmem:[%s1] sm:$0x7]
        %v382 = vld [vmem:[%s2] sm:$0x3f]
        %384 = vset.pattern.permute.xlu0 0
        %385 = vperm.xlu0 %384, %v382
        %v386 = vpop.permute.xlu0 %385
        %v448 = vunpack.c.l.b16 %v321
        %v449 = vunpack.c.h.b16 %v321
        %v450 = vunpack.c.l.b16 %v322
        %v451 = vunpack.c.h.b16 %v322
        %v452 = vunpack.c.l.b16 %v323
        %v453 = vunpack.c.h.b16 %v323
        %v454 = vunpack.c.l.b16 %v324
        %v455 = vunpack.c.h.b16 %v324
        %v456 = vunpack.c.l.b16 %v325
        %v457 = vunpack.c.h.b16 %v325
        %v458 = vunpack.c.l.b16 %v326
        %v459 = vunpack.c.l.b16 %v327
        %v460 = vunpack.c.h.b16 %v327
        %v461 = vunpack.c.l.b16 %v328
        %v462 = vunpack.c.h.b16 %v328
        %v463 = vunpack.c.l.b16 %v329
        %v464 = vunpack.c.h.b16 %v329
        %v465 = vunpack.c.l.b16 %v330
        %v466 = vunpack.c.h.b16 %v330
        %v467 = vunpack.c.l.b16 %v331
        %v468 = vunpack.c.h.b16 %v331
        %v469 = vunpack.c.l.b16 %v332
        %v470 = vunpack.c.l.b16 %v333
        %v471 = vunpack.c.h.b16 %v333
        %v472 = vunpack.c.l.b16 %v334
        %v473 = vunpack.c.h.b16 %v334
        %v474 = vunpack.c.l.b16 %v335
        %v475 = vunpack.c.h.b16 %v335
        %v476 = vunpack.c.l.b16 %v336
        %v477 = vunpack.c.h.b16 %v336
        %v478 = vunpack.c.l.b16 %v337
        %v479 = vunpack.c.h.b16 %v337
        %v480 = vunpack.c.l.b16 %v338
        %v481 = vunpack.c.l.b16 %v339
        %v482 = vunpack.c.h.b16 %v339
        %v483 = vunpack.c.l.b16 %v340
        %v484 = vunpack.c.h.b16 %v340
        %v485 = vunpack.c.l.b16 %v341
        %v486 = vunpack.c.h.b16 %v341
        %v487 = vunpack.c.l.b16 %v342
        %v488 = vunpack.c.h.b16 %v342
        %v489 = vunpack.c.l.b16 %v343
        %v490 = vunpack.c.h.b16 %v343
        %v491 = vunpack.c.l.b16 %v344
        %v492 = vunpack.c.l.b16 %v345
        %v493 = vunpack.c.h.b16 %v345
        %v494 = vunpack.c.l.b16 %v346
        %v495 = vunpack.c.h.b16 %v346
        %v496 = vunpack.c.l.b16 %v347
        %v497 = vunpack.c.h.b16 %v347
        %v498 = vunpack.c.l.b16 %v348
        %v499 = vunpack.c.h.b16 %v348
        %v500 = vunpack.c.l.b16 %v349
        %v501 = vunpack.c.h.b16 %v349
        %v502 = vunpack.c.l.b16 %v350
        %v503 = vunpack.c.l.b16 %v351
        %v504 = vunpack.c.h.b16 %v351
        %v505 = vunpack.c.l.b16 %v352
        %v506 = vunpack.c.h.b16 %v352
        %v507 = vunpack.c.l.b16 %v353
        %v508 = vunpack.c.h.b16 %v353
        %v509 = vunpack.c.l.b16 %v354
        %v510 = vunpack.c.h.b16 %v354
        %v511 = vunpack.c.l.b16 %v355
        %v512 = vunpack.c.h.b16 %v355
        %v513 = vunpack.c.l.b16 %v356
        %v514 = vunpack.c.l.b16 %v357
        %v515 = vunpack.c.h.b16 %v357
        %v516 = vunpack.c.l.b16 %v358
        %v517 = vunpack.c.h.b16 %v358
        %v518 = vunpack.c.l.b16 %v359
        %v519 = vunpack.c.h.b16 %v359
        %v520 = vunpack.c.l.b16 %v360
        %v521 = vunpack.c.h.b16 %v360
        %v522 = vunpack.c.l.b16 %v361
        %v523 = vunpack.c.h.b16 %v361
        %v524 = vunpack.c.l.b16 %v362
        %v525 = vunpack.c.l.b16 %v363
        %v526 = vunpack.c.h.b16 %v363
        %v527 = vunpack.c.l.b16 %v364
        %v528 = vunpack.c.h.b16 %v364
        %v529 = vunpack.c.l.b16 %v365
        %v530 = vunpack.c.h.b16 %v365
        %v531 = vunpack.c.l.b16 %v366
        %v532 = vunpack.c.h.b16 %v366
        %v533 = vunpack.c.l.b16 %v367
        %v534 = vunpack.c.h.b16 %v367
        %v535 = vunpack.c.l.b16 %v368
        %v536 = vunpack.c.l.b16 %v369
        %v537 = vunpack.c.h.b16 %v369
        %v538 = vunpack.c.l.b16 %v370
        %v539 = vunpack.c.h.b16 %v370
        %v540 = vunpack.c.l.b16 %v371
        %v541 = vunpack.c.h.b16 %v371
        %v542 = vunpack.c.l.b16 %v372
        %v543 = vunpack.c.h.b16 %v372
        %v544 = vunpack.c.l.b16 %v373
        %v545 = vunpack.c.h.b16 %v373
        %v546 = vunpack.c.l.b16 %v374
        %v547 = vunpack.c.l.b16 %v375
        %v548 = vunpack.c.h.b16 %v375
        %v549 = vunpack.c.l.b16 %v376
        %v550 = vunpack.c.h.b16 %v376
        %v551 = vunpack.c.l.b16 %v377
        %v552 = vunpack.c.h.b16 %v377
        %v553 = vunpack.c.l.b16 %v378
        %v554 = vunpack.c.h.b16 %v378
        %v555 = vunpack.c.l.b16 %v379
        %v556 = vunpack.c.h.b16 %v379
        %v557 = vunpack.c.l.b16 %v380
        %v558 = vpack.c.b16 %v459, %v448
        %v559 = vpack.c.b16 %v460, %v449
        %v560 = vpack.c.b16 %v461, %v450
        %v561 = vpack.c.b16 %v462, %v451
        %v562 = vpack.c.b16 %v463, %v452
        %v563 = vpack.c.b16 %v464, %v453
        %v564 = vpack.c.b16 %v465, %v454
        %v565 = vpack.c.b16 %v466, %v455
        %v566 = vpack.c.b16 %v467, %v456
        %v567 = vpack.c.b16 %v468, %v457
        %v568 = vpack.c.b16 %v469, %v458
        %v569 = vpack.c.b16 %v481, %v470
        %v570 = vpack.c.b16 %v482, %v471
        %v571 = vpack.c.b16 %v483, %v472
        %v572 = vpack.c.b16 %v484, %v473
        %v573 = vpack.c.b16 %v485, %v474
        %v574 = vpack.c.b16 %v486, %v475
        %v575 = vpack.c.b16 %v487, %v476
        %v576 = vpack.c.b16 %v488, %v477
        %v577 = vpack.c.b16 %v489, %v478
        %v578 = vpack.c.b16 %v490, %v479
        %v579 = vpack.c.b16 %v491, %v480
        %v580 = vpack.c.b16 %v503, %v492
        %v581 = vpack.c.b16 %v504, %v493
        %v582 = vpack.c.b16 %v505, %v494
        %v583 = vpack.c.b16 %v506, %v495
        %v584 = vpack.c.b16 %v507, %v496
        %v585 = vpack.c.b16 %v508, %v497
        %v586 = vpack.c.b16 %v509, %v498
        %v587 = vpack.c.b16 %v510, %v499
        %v588 = vpack.c.b16 %v511, %v500
        %v589 = vpack.c.b16 %v512, %v501
        %v590 = vpack.c.b16 %v513, %v502
        %v591 = vpack.c.b16 %v525, %v514
        %v592 = vpack.c.b16 %v526, %v515
        %v593 = vpack.c.b16 %v527, %v516
        %v594 = vpack.c.b16 %v528, %v517
        %v595 = vpack.c.b16 %v529, %v518
        %v596 = vpack.c.b16 %v530, %v519
        %v597 = vpack.c.b16 %v531, %v520
        %v598 = vpack.c.b16 %v532, %v521
        %v599 = vpack.c.b16 %v533, %v522
        %v600 = vpack.c.b16 %v534, %v523
        %v601 = vpack.c.b16 %v535, %v524
        %v602 = vpack.c.b16 %v547, %v536
        %v603 = vpack.c.b16 %v548, %v537
        %v604 = vpack.c.b16 %v549, %v538
        %v605 = vpack.c.b16 %v550, %v539
        %v606 = vpack.c.b16 %v551, %v540
        %v607 = vpack.c.b16 %v552, %v541
        %v608 = vpack.c.b16 %v553, %v542
        %v609 = vpack.c.b16 %v554, %v543
        %v610 = vpack.c.b16 %v555, %v544
        %v611 = vpack.c.b16 %v556, %v545
        %v612 = vpack.c.b16 %v557, %v546
        %vm657 = vcmask 613376
        %v659 = vsel %vm657, %v381, 0
        %vm661 = vcmask 1044480
        %vm662 = vcmask 1045504
        %v663 = vsel %vm661, 4294967295, 65535
        %v664 = vsel %vm662, %v663, 0
        %v666 = vand.u32 %v602, %v664
        %v669 = vand.u32 %v603, %v664
        %v672 = vand.u32 %v604, %v664
        %v675 = vand.u32 %v605, %v664
        %v678 = vand.u32 %v606, %v664
        %v681 = vand.u32 %v607, %v664
        %v684 = vand.u32 %v608, %v664
        %v687 = vand.u32 %v609, %v664
        %v690 = vand.u32 %v610, %v664
        %v693 = vand.u32 %v611, %v664
        %v696 = vand.u32 %v612, %v664
        %698 = vmatprep.subr.bf16.mxu0 %v559
        %699 = vmatpush1.bf16.msra.mxu0 %v558
        %700 = vmatprep.subr.bf16.mxu0 %v570
        %701 = vmatpush1.bf16.msra.mxu0 %v569
        %702 = vmatprep.subr.bf16.mxu0 %v581
        %703 = vmatpush1.bf16.msra.mxu0 %v580
        %704 = vmatprep.subr.bf16.mxu0 %v592
        %705 = vmatpush1.bf16.msra.mxu0 %v591
        %706 = vmatprep.subr.bf16.mxu0 %v669
        %707 = vmatpush1.bf16.msra.mxu0 %v666
        %708 = vmatprep.subr.bf16.mxu0 0
        %709 = vmatpush1.bf16.msra.mxu0 0
        %710 = vmatprep.subr.bf16.mxu0 0
        %711 = vmatpush1.bf16.msra.mxu0 0
        %712 = vmatprep.subr.bf16.mxu0 0
        %713 = vmatpush1.bf16.msra.mxu0 0
        %714 = vmatprep.subr.bf16.mxu0 0
        %715 = vmatpush1.bf16.msra.mxu0 0
        %716 = vmatprep.subr.bf16.mxu0 0
        %717 = vmatpush1.bf16.msra.mxu0 0
        %718 = vmatprep.subr.bf16.mxu0 0
        %719 = vmatpush1.bf16.msra.mxu0 0
        %720 = vmatprep.subr.bf16.mxu0 0
        %721 = vmatpush1.bf16.msra.mxu0 0
        %722 = vmatprep.subr.bf16.mxu0 0
        %723 = vmatpush1.bf16.msra.mxu0 0
        %724 = vmatprep.subr.bf16.mxu0 0
        %725 = vmatpush1.bf16.msra.mxu0 0
        %726 = vmatprep.subr.bf16.mxu0 0
        %727 = vmatpush1.bf16.msra.mxu0 0
        %728 = vmatprep.subr.bf16.mxu0 0
        %729 = vmatpush1.bf16.msra.mxu0 0
        %730 = vmatprep.mubr.bf16.mxu0 0
        %731 = vmatmul.mubr.bf16.gmra.mrb[0].mxu0 %v659
        %v732 = vpop.f32.mrb[0].mxu0
        %v733 = vadd.f32 %v386, %v732
        %v734 = vpop.f32.mrb[0].mxu0
        %v735 = vadd.f32 %v386, %v734
        %v736 = vpop.f32.mrb[0].mxu0
        %v737 = vpop.f32.mrb[0].mxu0
        %738 = vdwg.mxu0
        %739 = vmatprep.subr.bf16.mxu0 %v561
        %740 = vmatpush1.bf16.msra.mxu0 %v560
        %741 = vmatprep.subr.bf16.mxu0 %v572
        %742 = vmatpush1.bf16.msra.mxu0 %v571
        %743 = vmatprep.subr.bf16.mxu0 %v583
        %744 = vmatpush1.bf16.msra.mxu0 %v582
        %745 = vmatprep.subr.bf16.mxu0 %v594
        %746 = vmatpush1.bf16.msra.mxu0 %v593
        %747 = vmatprep.subr.bf16.mxu0 %v675
        %748 = vmatpush1.bf16.msra.mxu0 %v672
        %749 = vmatprep.subr.bf16.mxu0 0
        %750 = vmatpush1.bf16.msra.mxu0 0
        %751 = vmatprep.subr.bf16.mxu0 0
        %752 = vmatpush1.bf16.msra.mxu0 0
        %753 = vmatprep.subr.bf16.mxu0 0
        %754 = vmatpush1.bf16.msra.mxu0 0
        %755 = vmatprep.subr.bf16.mxu0 0
        %756 = vmatpush1.bf16.msra.mxu0 0
        %757 = vmatprep.subr.bf16.mxu0 0
        %758 = vmatpush1.bf16.msra.mxu0 0
        %759 = vmatprep.subr.bf16.mxu0 0
        %760 = vmatpush1.bf16.msra.mxu0 0
        %761 = vmatprep.subr.bf16.mxu0 0
        %762 = vmatpush1.bf16.msra.mxu0 0
        %763 = vmatprep.subr.bf16.mxu0 0
        %764 = vmatpush1.bf16.msra.mxu0 0
        %765 = vmatprep.subr.bf16.mxu0 0
        %766 = vmatpush1.bf16.msra.mxu0 0
        %767 = vmatprep.subr.bf16.mxu0 0
        %768 = vmatpush1.bf16.msra.mxu0 0
        %769 = vmatprep.subr.bf16.mxu0 0
        %770 = vmatpush1.bf16.msra.mxu0 0
        %771 = vmatprep.mubr.bf16.mxu0 0
        %772 = vmatmul.mubr.bf16.gmra.mrb[0].mxu0 %v659
        %v773 = vpop.f32.mrb[0].mxu0
        %v774 = vadd.f32 %v386, %v773
        %v775 = vpop.f32.mrb[0].mxu0
        %v776 = vadd.f32 %v386, %v775
        %v777 = vpop.f32.mrb[0].mxu0
        %v778 = vpop.f32.mrb[0].mxu0
        %779 = vdwg.mxu0
        %780 = vmatprep.subr.bf16.mxu0 %v563
        %781 = vmatpush1.bf16.msra.mxu0 %v562
        %782 = vmatprep.subr.bf16.mxu0 %v574
        %783 = vmatpush1.bf16.msra.mxu0 %v573
        %784 = vmatprep.subr.bf16.mxu0 %v585
        %785 = vmatpush1.bf16.msra.mxu0 %v584
        %786 = vmatprep.subr.bf16.mxu0 %v596
        %787 = vmatpush1.bf16.msra.mxu0 %v595
        %788 = vmatprep.subr.bf16.mxu0 %v681
        %789 = vmatpush1.bf16.msra.mxu0 %v678
        %790 = vmatprep.subr.bf16.mxu0 0
        %791 = vmatpush1.bf16.msra.mxu0 0
        %792 = vmatprep.subr.bf16.mxu0 0
        %793 = vmatpush1.bf16.msra.mxu0 0
        %794 = vmatprep.subr.bf16.mxu0 0
        %795 = vmatpush1.bf16.msra.mxu0 0
        %796 = vmatprep.subr.bf16.mxu0 0
        %797 = vmatpush1.bf16.msra.mxu0 0
        %798 = vmatprep.subr.bf16.mxu0 0
        %799 = vmatpush1.bf16.msra.mxu0 0
        %800 = vmatprep.subr.bf16.mxu0 0
        %801 = vmatpush1.bf16.msra.mxu0 0
        %802 = vmatprep.subr.bf16.mxu0 0
        %803 = vmatpush1.bf16.msra.mxu0 0
        %804 = vmatprep.subr.bf16.mxu0 0
        %805 = vmatpush1.bf16.msra.mxu0 0
        %806 = vmatprep.subr.bf16.mxu0 0
        %807 = vmatpush1.bf16.msra.mxu0 0
        %808 = vmatprep.subr.bf16.mxu0 0
        %809 = vmatpush1.bf16.msra.mxu0 0
        %810 = vmatprep.subr.bf16.mxu0 0
        %811 = vmatpush1.bf16.msra.mxu0 0
        %812 = vmatprep.mubr.bf16.mxu0 0
        %813 = vmatmul.mubr.bf16.gmra.mrb[0].mxu0 %v659
        %v814 = vpop.f32.mrb[0].mxu0
        %v815 = vadd.f32 %v386, %v814
        %v816 = vpop.f32.mrb[0].mxu0
        %v817 = vadd.f32 %v386, %v816
        %v818 = vpop.f32.mrb[0].mxu0
        %v819 = vpop.f32.mrb[0].mxu0
        %820 = vdwg.mxu0
        %821 = vmatprep.subr.bf16.mxu0 %v565
        %822 = vmatpush1.bf16.msra.mxu0 %v564
        %823 = vmatprep.subr.bf16.mxu0 %v576
        %824 = vmatpush1.bf16.msra.mxu0 %v575
        %825 = vmatprep.subr.bf16.mxu0 %v587
        %826 = vmatpush1.bf16.msra.mxu0 %v586
        %827 = vmatprep.subr.bf16.mxu0 %v598
        %828 = vmatpush1.bf16.msra.mxu0 %v597
        %829 = vmatprep.subr.bf16.mxu0 %v687
        %830 = vmatpush1.bf16.msra.mxu0 %v684
        %831 = vmatprep.subr.bf16.mxu0 0
        %832 = vmatpush1.bf16.msra.mxu0 0
        %833 = vmatprep.subr.bf16.mxu0 0
        %834 = vmatpush1.bf16.msra.mxu0 0
        %835 = vmatprep.subr.bf16.mxu0 0
        %836 = vmatpush1.bf16.msra.mxu0 0
        %837 = vmatprep.subr.bf16.mxu0 0
        %838 = vmatpush1.bf16.msra.mxu0 0
        %839 = vmatprep.subr.bf16.mxu0 0
        %840 = vmatpush1.bf16.msra.mxu0 0
        %841 = vmatprep.subr.bf16.mxu0 0
        %842 = vmatpush1.bf16.msra.mxu0 0
        %843 = vmatprep.subr.bf16.mxu0 0
        %844 = vmatpush1.bf16.msra.mxu0 0
        %845 = vmatprep.subr.bf16.mxu0 0
        %846 = vmatpush1.bf16.msra.mxu0 0
        %847 = vmatprep.subr.bf16.mxu0 0
        %848 = vmatpush1.bf16.msra.mxu0 0
        %849 = vmatprep.subr.bf16.mxu0 0
        %850 = vmatpush1.bf16.msra.mxu0 0
        %851 = vmatprep.subr.bf16.mxu0 0
        %852 = vmatpush1.bf16.msra.mxu0 0
        %853 = vmatprep.mubr.bf16.mxu0 0
        %854 = vmatmul.mubr.bf16.gmra.mrb[0].mxu0 %v659
        %v855 = vpop.f32.mrb[0].mxu0
        %v856 = vadd.f32 %v386, %v855
        %v857 = vpop.f32.mrb[0].mxu0
        %v858 = vadd.f32 %v386, %v857
        %v859 = vpop.f32.mrb[0].mxu0
        %v860 = vpop.f32.mrb[0].mxu0
        %861 = vdwg.mxu0
        %862 = vmatprep.subr.bf16.mxu0 %v567
        %863 = vmatpush1.bf16.msra.mxu0 %v566
        %864 = vmatprep.subr.bf16.mxu0 %v578
        %865 = vmatpush1.bf16.msra.mxu0 %v577
        %866 = vmatprep.subr.bf16.mxu0 %v589
        %867 = vmatpush1.bf16.msra.mxu0 %v588
        %868 = vmatprep.subr.bf16.mxu0 %v600
        %869 = vmatpush1.bf16.msra.mxu0 %v599
        %870 = vmatprep.subr.bf16.mxu0 %v693
        %871 = vmatpush1.bf16.msra.mxu0 %v690
        %872 = vmatprep.subr.bf16.mxu0 0
        %873 = vmatpush1.bf16.msra.mxu0 0
        %874 = vmatprep.subr.bf16.mxu0 0
        %875 = vmatpush1.bf16.msra.mxu0 0
        %876 = vmatprep.subr.bf16.mxu0 0
        %877 = vmatpush1.bf16.msra.mxu0 0
        %878 = vmatprep.subr.bf16.mxu0 0
        %879 = vmatpush1.bf16.msra.mxu0 0
        %880 = vmatprep.subr.bf16.mxu0 0
        %881 = vmatpush1.bf16.msra.mxu0 0
        %882 = vmatprep.subr.bf16.mxu0 0
        %883 = vmatpush1.bf16.msra.mxu0 0
        %884 = vmatprep.subr.bf16.mxu0 0
        %885 = vmatpush1.bf16.msra.mxu0 0
        %886 = vmatprep.subr.bf16.mxu0 0
        %887 = vmatpush1.bf16.msra.mxu0 0
        %888 = vmatprep.subr.bf16.mxu0 0
        %889 = vmatpush1.bf16.msra.mxu0 0
        %890 = vmatprep.subr.bf16.mxu0 0
        %891 = vmatpush1.bf16.msra.mxu0 0
        %892 = vmatprep.subr.bf16.mxu0 0
        %893 = vmatpush1.bf16.msra.mxu0 0
        %894 = vmatprep.mubr.bf16.mxu0 0
        %895 = vmatmul.mubr.bf16.gmra.mrb[0].mxu0 %v659
        %v896 = vpop.f32.mrb[0].mxu0
        %v897 = vadd.f32 %v386, %v896
        %v898 = vpop.f32.mrb[0].mxu0
        %v899 = vadd.f32 %v386, %v898
        %v900 = vpop.f32.mrb[0].mxu0
        %v901 = vpop.f32.mrb[0].mxu0
        %902 = vdwg.mxu0
        %903 = vmatprep.subr.bf16.mxu0 0
        %904 = vmatpush1.bf16.msra.mxu0 %v568
        %905 = vmatprep.subr.bf16.mxu0 0
        %906 = vmatpush1.bf16.msra.mxu0 %v579
        %907 = vmatprep.subr.bf16.mxu0 0
        %908 = vmatpush1.bf16.msra.mxu0 %v590
        %909 = vmatprep.subr.bf16.mxu0 0
        %910 = vmatpush1.bf16.msra.mxu0 %v601
        %911 = vmatprep.subr.bf16.mxu0 0
        %912 = vmatpush1.bf16.msra.mxu0 %v696
        %913 = vmatprep.subr.bf16.mxu0 0
        %914 = vmatpush1.bf16.msra.mxu0 0
        %915 = vmatprep.subr.bf16.mxu0 0
        %916 = vmatpush1.bf16.msra.mxu0 0
        %917 = vmatprep.subr.bf16.mxu0 0
        %918 = vmatpush1.bf16.msra.mxu0 0
        %919 = vmatprep.subr.bf16.mxu0 0
        %920 = vmatpush1.bf16.msra.mxu0 0
        %921 = vmatprep.subr.bf16.mxu0 0
        %922 = vmatpush1.bf16.msra.mxu0 0
        %923 = vmatprep.subr.bf16.mxu0 0
        %924 = vmatpush1.bf16.msra.mxu0 0
        %925 = vmatprep.subr.bf16.mxu0 0
        %926 = vmatpush1.bf16.msra.mxu0 0
        %927 = vmatprep.subr.bf16.mxu0 0
        %928 = vmatpush1.bf16.msra.mxu0 0
        %929 = vmatprep.subr.bf16.mxu0 0
        %930 = vmatpush1.bf16.msra.mxu0 0
        %931 = vmatprep.subr.bf16.mxu0 0
        %932 = vmatpush1.bf16.msra.mxu0 0
        %933 = vmatprep.subr.bf16.mxu0 0
        %934 = vmatpush1.bf16.msra.mxu0 0
        %935 = vmatprep.mubr.bf16.mxu0 0
        %936 = vmatmul.mubr.bf16.gmra.mrb[0].mxu0 %v659
        %v937 = vpop.f32.mrb[0].mxu0
        %v938 = vadd.f32 %v386, %v937
        %v939 = vpop.f32.mrb[0].mxu0
        %v940 = vpop.f32.mrb[0].mxu0
        %v941 = vpop.f32.mrb[0].mxu0
        %942 = vdwg.mxu0
        %v943 = vmax.f32 %v733, 0.0
        %v944 = vmax.f32 %v735, 0.0
        %v945 = vmax.f32 %v774, 0.0
        %v946 = vmax.f32 %v776, 0.0
        %v947 = vmax.f32 %v815, 0.0
        %v948 = vmax.f32 %v817, 0.0
        %v949 = vmax.f32 %v856, 0.0
        %v950 = vmax.f32 %v858, 0.0
        %v951 = vmax.f32 %v897, 0.0
        %v952 = vmax.f32 %v899, 0.0
        %v953 = vmax.f32 %v938, 0.0
        %v954 = vmin.f32 %v943, 1.0
        %v955 = vmin.f32 %v944, 1.0
        %v956 = vmin.f32 %v945, 1.0
        %v957 = vmin.f32 %v946, 1.0
        %v958 = vmin.f32 %v947, 1.0
        %v959 = vmin.f32 %v948, 1.0
        %v960 = vmin.f32 %v949, 1.0
        %v961 = vmin.f32 %v950, 1.0
        %v962 = vmin.f32 %v951, 1.0
        %v963 = vmin.f32 %v952, 1.0
        %v964 = vmin.f32 %v953, 1.0
        %v965 = vmul.f32 %v954, 15.0
        %v966 = vmul.f32 %v955, 15.0
        %v967 = vmul.f32 %v956, 15.0
        %v968 = vmul.f32 %v957, 15.0
        %v969 = vmul.f32 %v958, 15.0
        %v970 = vmul.f32 %v959, 15.0
        %v971 = vmul.f32 %v960, 15.0
        %v972 = vmul.f32 %v961, 15.0
        %v973 = vmul.f32 %v962, 15.0
        %v974 = vmul.f32 %v963, 15.0
        %v975 = vmul.f32 %v964, 15.0
        %v976 = vround.ne.pseudo %v965
        %v977 = vround.ne.pseudo %v966
        %v978 = vround.ne.pseudo %v967
        %v979 = vround.ne.pseudo %v968
        %v980 = vround.ne.pseudo %v969
        %v981 = vround.ne.pseudo %v970
        %v982 = vround.ne.pseudo %v971
        %v983 = vround.ne.pseudo %v972
        %v984 = vround.ne.pseudo %v973
        %v985 = vround.ne.pseudo %v974
        %v986 = vround.ne.pseudo %v975
        %v987 = vmul.f32 %v976, 0.06666667
        %v988 = vmul.f32 %v977, 0.06666667
        %v989 = vmul.f32 %v978, 0.06666667
        %v990 = vmul.f32 %v979, 0.06666667
        %v991 = vmul.f32 %v980, 0.06666667
        %v992 = vmul.f32 %v981, 0.06666667
        %v993 = vmul.f32 %v982, 0.06666667
        %v994 = vmul.f32 %v983, 0.06666667
        %v995 = vmul.f32 %v984, 0.06666667
        %v996 = vmul.f32 %v985, 0.06666667
        %v997 = vmul.f32 %v986, 0.06666667
        %v998 = vpack.c.bf16 %v987, %v987
        %v999 = vpack.c.bf16 %v988, %v988
        %v1000 = vpack.c.bf16 %v989, %v989
        %v1001 = vpack.c.bf16 %v990, %v990
        %v1002 = vpack.c.bf16 %v991, %v991
        %v1003 = vpack.c.bf16 %v992, %v992
        %v1004 = vpack.c.bf16 %v993, %v993
        %v1005 = vpack.c.bf16 %v994, %v994
        %v1006 = vpack.c.bf16 %v995, %v995
        %v1007 = vpack.c.bf16 %v996, %v996
        %v1008 = vpack.c.bf16 %v997, %v997
        %v1020 = vunpack.c.l.b16 %v998
        %v1021 = vunpack.c.l.b16 %v999
        %v1022 = vunpack.c.l.b16 %v1000
        %v1023 = vunpack.c.l.b16 %v1001
        %v1024 = vunpack.c.l.b16 %v1002
        %v1025 = vunpack.c.l.b16 %v1003
        %v1026 = vunpack.c.l.b16 %v1004
        %v1027 = vunpack.c.l.b16 %v1005
        %v1028 = vunpack.c.l.b16 %v1006
        %v1029 = vunpack.c.l.b16 %v1007
        %v1030 = vunpack.c.l.b16 %v1008
        %v1031 = vpack.c.b16 %v1021, %v1020
        %v1032 = vpack.c.b16 %v1023, %v1022
        %v1033 = vpack.c.b16 %v1025, %v1024
        %v1034 = vpack.c.b16 %v1027, %v1026
        %v1035 = vpack.c.b16 %v1029, %v1028
        %v1036 = vpack.c.b16 %v1030, %v1030
        %1043 = vst [vmem:[%s318] sm:$0x77] %v1031
        %1044 = vst [vmem:[%s318 + $0x8] sm:$0x77] %v1032
        %1045 = vst [vmem:[%s318 + $0x10] sm:$0x77] %v1033
        %1046 = vst [vmem:[%s318 + $0x18] sm:$0x77] %v1034
        %1047 = vst [vmem:[%s318 + $0x20] sm:$0x77] %v1035
        %1048 = vst [vmem:[%s318 + $0x28] sm:$0x7] %v1036
        %s1049 = smul.u32 11, %s14
        %p1050 = scmp.lt.s32.totalorder %s1049, 21
        %s1051 = scalar_select %p1050, %s1049, 21
        %s1052 = smul.addr %s1051, 4
        %s1053 = scalar_lea.vmem %s3, %s1052
        // Predicated region
        $region59: #{svhnq_forward.7} parent=53 // pred_check
          %p1054 = pneg %p100
        $region60: #{svhnq_forward.7} parent=53 // pred_check_branch
          %1056 = sbr.rel (%p1054) target = $region62
        $region61: #{svhnq_forward.7} parent=53 // pred_region
          %s1057 = smul.u32 11, %s14
        $region62: #{svhnq_forward.7} parent=53 // pred_fallthru
          _
      $region54: #{svhnq_forward.7} parent=5 // pred_fallthru
        _
      %p1058 = scmp.le.s32.totalorder 2, %s9
      // Predicated region
      $region63: #{svhnq_forward.7} parent=5 // pred_check
        %p1059 = pneg %p1058
      $region64: #{svhnq_forward.7} parent=5 // pred_check_branch
        %1061 = sbr.rel (%p1059) target = $region66
      $region65: #{svhnq_forward.7} parent=5 // pred_region
        %s1062 = ssub.s32 %s9, 2
        // Predicated region
        $region67: #{svhnq_forward.7} parent=65 // pred_check
          %p1063 = pneg %p106
        $region68: #{svhnq_forward.7} parent=65 // pred_check_branch
          %1065 = sbr.rel (%p1063) target = $region70
        $region69: #{svhnq_forward.7} parent=65 // pred_region
          %s1066 = smul.u32 11, %s15
          %p1067 = scmp.lt.s32.totalorder %s1066, 21
          %s1068 = scalar_select %p1067, %s1066, 21
          %s1069 = smul.addr %s1068, 4
          %s1070 = scalar_lea.vmem %s3, %s1069
        $region70: #{svhnq_forward.7} parent=65 // pred_fallthru
          _
      $region66: #{svhnq_forward.7} parent=5 // pred_fallthru
        _
    $region6: #{svhnq_forward.7} parent=1 // loop_footer
      %s13 = sadd.s32 1, %s9
    $region7: #{svhnq_forward.7} parent=1 // loop_footer_branch
      %8 = sbr.rel target = $region3
    $region8: #{svhnq_forward.7} parent=1 // loop_exit
      _

// kernel: svhnq_forward.8
$region0: #{svhnq_forward.8}
  #allocation0 [shape = 'u32[]', space=smem, size = 0x4, offset = 0x4, fixed_abs, tag = 'smem constant byte address 0x4 - core index']
  #allocation1 [shape = 'u32[144,128]{1,0:T(1,128)}', space=vmem, size = 0x12000, scoped, tag = 'internal scratch']
  %s0 = inlined_call_operand.vmem [shape: bf16[6,1024], index: 0, kind: input, shape index: {}]
  %s1 = inlined_call_operand.vmem [shape: bf16[9,8,6], index: 1, kind: input, shape index: {}]
  %s2 = inlined_call_operand.vmem [shape: f32[8,1], index: 2, kind: input, shape index: {}]
  %s3 = inlined_call_operand.vmem [shape: bf16[8,768], index: 3, kind: output, shape index: {}]
  %s4 = sld [smem:[#allocation0]]
  $region45: #{svhnq_forward.8} parent=0
    _
  %s6 = ssub.s32 1, %s4
  %s7 = scalar_select 0, %s6, %s4
  loop: start=0, step=1, limit=4
  $region2: #{svhnq_forward.8} parent=0 // loop_pre_header
    _
  $region3: #{svhnq_forward.8} parent=0 // loop_header
    %s9 = sphi 0, %s13
    %p10 = scmp.ge.s32.totalorder %s9, 4
    %s19 = sphi 0, %s21
    %s22 = sphi 0, %s19
    %s23 = sphi 0, %s22
    %s39 = sphi 0, %s23
    %s43 = sphi 0, %s43
    %s45 = sphi 0, %s43
    %s46 = sphi 0, %s45
    %s60 = sphi 0, %s46
    %s64 = sphi 0, %s64
    %s66 = sphi 0, %s64
    %s67 = sphi 0, %s66
    %s81 = sphi 0, %s67
    %s87 = sphi 0, %s89
    %s90 = sphi 0, %s87
    %s91 = sphi 0, %s90
    %s107 = sphi 0, %s91
  $region4: #{svhnq_forward.8} parent=0 // loop_header_branch
    %12 = sbr.rel (%p10) target = $region8
  $region5: #{svhnq_forward.8} parent=0 // loop_body
    %s14 = ssub.s32 %s9, 1
    %s15 = ssub.s32 %s9, 2
    %s16 = sadd.s32 %s9, 1
    %s17 = ssub.s32 %s9, %s16
    %p18 = scmp.eq.s32.totalorder %s17, 0
    %s20 = sadd.s32 %s19, 1
    %s21 = scalar_select %p18, %s19, %s20
    %p24 = pneg %p18
    %p25 = scmp.eq.s32.totalorder %s9, 1
    %p26 = por %p24, %p25
    %p27 = scmp.ne.s32.totalorder %s19, %s22
    %p28 = scmp.eq.s32.totalorder %s9, 0
    %p29 = por %p27, %p28
    %p30 = scmp.ne.s32.totalorder %s19, %s22
    %p31 = scmp.eq.s32.totalorder %s14, 1
    %p32 = por %p30, %p31
    %p33 = scmp.ne.s32.totalorder %s22, %s23
    %p34 = scmp.eq.s32.totalorder %s14, 0
    %p35 = por %p33, %p34
    %p36 = scmp.ne.s32.totalorder %s22, %s23
    %p37 = scmp.eq.s32.totalorder %s15, 1
    %p38 = por %p36, %p37
    %p40 = scmp.ne.s32.totalorder %s23, %s39
    %p41 = scmp.eq.s32.totalorder %s15, 0
    %p42 = por %p40, %p41
    %s44 = sadd.s32 %s43, 1
    %p47 = scmp.eq.s32.totalorder %s9, 1
    %p48 = scmp.ne.s32.totalorder %s43, %s45
    %p49 = scmp.eq.s32.totalorder %s9, 0
    %p50 = por %p48, %p49
    %p51 = scmp.ne.s32.totalorder %s43, %s45
    %p52 = scmp.eq.s32.totalorder %s14, 1
    %p53 = por %p51, %p52
    %p54 = scmp.ne.s32.totalorder %s45, %s46
    %p55 = scmp.eq.s32.totalorder %s14, 0
    %p56 = por %p54, %p55
    %p57 = scmp.ne.s32.totalorder %s45, %s46
    %p58 = scmp.eq.s32.totalorder %s15, 1
    %p59 = por %p57, %p58
    %p61 = scmp.ne.s32.totalorder %s46, %s60
    %p62 = scmp.eq.s32.totalorder %s15, 0
    %p63 = por %p61, %p62
    %s65 = sadd.s32 %s64, 1
    %p68 = scmp.eq.s32.totalorder %s9, 1
    %p69 = scmp.ne.s32.totalorder %s64, %s66
    %p70 = scmp.eq.s32.totalorder %s9, 0
    %p71 = por %p69, %p70
    %p72 = scmp.ne.s32.totalorder %s64, %s66
    %p73 = scmp.eq.s32.totalorder %s14, 1
    %p74 = por %p72, %p73
    %p75 = scmp.ne.s32.totalorder %s66, %s67
    %p76 = scmp.eq.s32.totalorder %s14, 0
    %p77 = por %p75, %p76
    %p78 = scmp.ne.s32.totalorder %s66, %s67
    %p79 = scmp.eq.s32.totalorder %s15, 1
    %p80 = por %p78, %p79
    %p82 = scmp.ne.s32.totalorder %s67, %s81
    %p83 = scmp.eq.s32.totalorder %s15, 0
    %p84 = por %p82, %p83
    %s85 = ssub.s32 %s9, %s16
    %p86 = scmp.eq.s32.totalorder %s85, 0
    %s88 = sadd.s32 %s87, 1
    %s89 = scalar_select %p86, %s87, %s88
    %p92 = pneg %p86
    %p93 = scmp.eq.s32.totalorder %s9, 1
    %p94 = por %p92, %p93
    %p95 = scmp.ne.s32.totalorder %s87, %s90
    %p96 = scmp.eq.s32.totalorder %s9, 0
    %p97 = por %p95, %p96
    %p98 = scmp.ne.s32.totalorder %s87, %s90
    %p99 = scmp.eq.s32.totalorder %s14, 1
    %p100 = por %p98, %p99
    %p101 = scmp.ne.s32.totalorder %s90, %s91
    %p102 = scmp.eq.s32.totalorder %s14, 0
    %p103 = por %p101, %p102
    %p104 = scmp.ne.s32.totalorder %s90, %s91
    %p105 = scmp.eq.s32.totalorder %s15, 1
    %p106 = por %p104, %p105
    %p108 = scmp.ne.s32.totalorder %s91, %s107
    %p109 = scmp.eq.s32.totalorder %s15, 0
    %p110 = por %p108, %p109
    %p111 = scmp.le.s32.totalorder 1, %s9
    %p112 = scmp.lt.s32.totalorder %s9, 3
    %p113 = pnand %p111, %p112
    %p114 = pneg %p113
    // Predicated region
    $region9: #{svhnq_forward.8} parent=5 // pred_check
      _
    $region10: #{svhnq_forward.8} parent=5 // pred_check_branch
      %116 = sbr.rel (%p113) target = $region12
    $region11: #{svhnq_forward.8} parent=5 // pred_region
      %s117 = ssub.s32 %s9, 1
      // Predicated region
      $region13: #{svhnq_forward.8} parent=11 // pred_check
        %p118 = pneg %p56
      $region14: #{svhnq_forward.8} parent=11 // pred_check_branch
        %120 = sbr.rel (%p118) target = $region16
      $region15: #{svhnq_forward.8} parent=11 // pred_region
        _
      $region16: #{svhnq_forward.8} parent=11 // pred_fallthru
        _
      // Predicated region
      $region17: #{svhnq_forward.8} parent=11 // pred_check
        %p121 = pneg %p77
      $region18: #{svhnq_forward.8} parent=11 // pred_check_branch
        %123 = sbr.rel (%p121) target = $region20
      $region19: #{svhnq_forward.8} parent=11 // pred_region
        _
      $region20: #{svhnq_forward.8} parent=11 // pred_fallthru
        _
    $region12: #{svhnq_forward.8} parent=5 // pred_fallthru
      _
    %p124 = scmp.lt.s32.totalorder %s9, 2
    // Predicated region
    $region21: #{svhnq_forward.8} parent=5 // pred_check
      %p125 = pneg %p124
    $region22: #{svhnq_forward.8} parent=5 // pred_check_branch
      %127 = sbr.rel (%p125) target = $region24
    $region23: #{svhnq_forward.8} parent=5 // pred_region
      // Predicated region
      $region25: #{svhnq_forward.8} parent=23 // pred_check
        %p128 = pneg %p29
      $region26: #{svhnq_forward.8} parent=23 // pred_check_branch
        %130 = sbr.rel (%p128) target = $region28
      $region27: #{svhnq_forward.8} parent=23 // pred_region
        %s131 = smul.u32 4, %s9
        %p132 = scmp.lt.s32.totalorder %s131, 7
        %s133 = scalar_select %p132, %s131, 7
        %s134 = smul.addr %s133, 4
        %s135 = scalar_lea.vmem %s0, %s134
        %s136 = smul.u32 4, %s9
      $region28: #{svhnq_forward.8} parent=23 // pred_fallthru
        _
    $region24: #{svhnq_forward.8} parent=5 // pred_fallthru
      _
    %p137 = scmp.le.s32.totalorder 1, %s9
    %p138 = scmp.lt.s32.totalorder %s9, 3
    %p139 = pnand %p137, %p138
    %p140 = pneg %p139
    // Predicated region
    $region29: #{svhnq_forward.8} parent=5 // pred_check
      _
    $region30: #{svhnq_forward.8} parent=5 // pred_check_branch
      %142 = sbr.rel (%p139) target = $region32
    $region31: #{svhnq_forward.8} parent=5 // pred_region
      %s143 = ssub.s32 %s9, 1
      %s144 = smul.u32 4, %s14
      %p145 = scmp.lt.s32.totalorder %s144, 7
      %s146 = scalar_select %p145, %s144, 7
      %s147 = smul.addr %s146, 4
      %s148 = scalar_lea.vmem %s0, %s147
      %p149 = pneg %p35
      %p150 = pneg %p32
      %p151 = pneg %p56
      %p152 = pneg %p53
      %p153 = pneg %p77
      %p154 = pneg %p74
      %p155 = pneg %p103
      %p156 = pneg %p100
      %s157 = smul.u32 3, %s14
      %p158 = scmp.lt.s32.totalorder %s157, 5
      %s159 = scalar_select %p158, %s157, 5
      %s160 = smul.addr %s159, 4
      %s161 = scalar_lea.vmem %s3, %s160
      %s162 = smul.u32 4, %s14
      %p163 = scmp.lt.s32.totalorder %s162, 7
      %s164 = scalar_select %p163, %s162, 7
      %s165 = smul.addr %s164, 4
      %s166 = scalar_lea.vmem %s0, %s165
      %s167 = smul.u32 4, %s14
      %s168 = smul.u32 3, %s14
      %p169 = scmp.lt.s32.totalorder %s168, 5
      %s170 = scalar_select %p169, %s168, 5
      %s171 = smul.addr %s170, 4
      %s172 = scalar_lea.vmem %s3, %s171
      %s173 = smul.u32 3, %s14
      %v175 = vld [vmem:[%s166] sm:$0x77]
      %v176 = vld [vmem:[%s166 + $0x8] sm:$0x77]
      %v177 = vld [vmem:[%s1] sm:$0xf]
      %s178 = scalar_lea.vmem %s1, 4
      %v179 = vld [vmem:[%s178] sm:$0xf]
      %v182 = vunpack.c.l.b16 %v175
      %v183 = vunpack.c.h.b16 %v175
      %v184 = vunpack.c.l.b16 %v176
      %v185 = vunpack.c.h.b16 %v176
      %v186 = vpack.c.b16 %v182, %v182
      %v187 = vpack.c.b16 %v183, %v183
      %v188 = vpack.c.b16 %v184, %v184
      %v189 = vpack.c.b16 %v185, %v185
      %190 = vrot.lane.b32.xlu0 %v186, 127
      %v191 = vpop.permute.xlu0 %190
      %192 = vrot.lane.b32.xlu0 %v187, 127
      %v193 = vpop.permute.xlu0 %192
      %194 = vrot.lane.b32.xlu0 %v188, 127
      %v195 = vpop.permute.xlu0 %194
      %196 = vrot.lane.b32.xlu0 %v189, 127
      %v197 = vpop.permute.xlu0 %196
      %vm198 = vcmask 1039360
      %v199 = vsel %vm198, %v191, %v193
      %v200 = vsel %vm198, %v193, %v195
      %v201 = vsel %vm198, %v195, %v197
      %vm202 = vcmask 48128
      %v204 = vsel %vm202, %v179, 0
      %vm206 = vcmask 1042432
      %v208 = vsel %vm206, %v199, 0
      %v211 = vsel %vm206, %v200, 0
      %v214 = vsel %vm206, %v201, 0
      %216 = vmatprep.subr.bf16.mxu0 %v211
      %217 = vmatpush1.bf16.msra.mxu0 %v208
      %218 = vmatprep.subr.bf16.mxu0 0
      %219 = vmatpush1.bf16.msra.mxu0 0
      %220 = vmatprep.subr.bf16.mxu0 0
      %221 = vmatpush1.bf16.msra.mxu0 0
      %222 = vmatprep.subr.bf16.mxu0 0
      %223 = vmatpush1.bf16.msra.mxu0 0
      %224 = vmatprep.subr.bf16.mxu0 0
      %225 = vmatpush1.bf16.msra.mxu0 0
      %226 = vmatprep.subr.bf16.mxu0 0
      %227 = vmatpush1.bf16.msra.mxu0 0
      %228 = vmatprep.subr.bf16.mxu0 0
      %229 = vmatpush1.bf16.msra.mxu0 0
      %230 = vmatprep.subr.bf16.mxu0 0
      %231 = vmatpush1.bf16.msra.mxu0 0
      %232 = vmatprep.subr.bf16.mxu0 0
      %233 = vmatpush1.bf16.msra.mxu0 0
      %234 = vmatprep.subr.bf16.mxu0 0
      %235 = vmatpush1.bf16.msra.mxu0 0
      %236 = vmatprep.subr.bf16.mxu0 0
      %237 = vmatpush1.bf16.msra.mxu0 0
      %238 = vmatprep.subr.bf16.mxu0 0
      %239 = vmatpush1.bf16.msra.mxu0 0
      %240 = vmatprep.subr.bf16.mxu0 0
      %241 = vmatpush1.bf16.msra.mxu0 0
      %242 = vmatprep.subr.bf16.mxu0 0
      %243 = vmatpush1.bf16.msra.mxu0 0
      %244 = vmatprep.subr.bf16.mxu0 0
      %245 = vmatpush1.bf16.msra.mxu0 0
      %246 = vmatprep.subr.bf16.mxu0 0
      %247 = vmatpush1.bf16.msra.mxu0 0
      %248 = vmatprep.mubr.bf16.mxu0 0
      %249 = vmatmul.mubr.bf16.gmra.mrb[0].mxu0 %v204
      %v250 = vpop.f32.mrb[0].mxu0
      %v251 = vadd.f32 0.0, %v250
      %v252 = vpop.f32.mrb[0].mxu0
      %v253 = vadd.f32 0.0, %v252
      %v254 = vpop.f32.mrb[0].mxu0
      %v255 = vpop.f32.mrb[0].mxu0
      %256 = vdwg.mxu0
      %257 = vmatprep.subr.bf16.mxu0 0
      %258 = vmatpush1.bf16.msra.mxu0 %v214
      %259 = vmatprep.subr.bf16.mxu0 0
      %260 = vmatpush1.bf16.msra.mxu0 0
      %261 = vmatprep.subr.bf16.mxu0 0
      %262 = vmatpush1.bf16.msra.mxu0 0
      %263 = vmatprep.subr.bf16.mxu0 0
      %264 = vmatpush1.bf16.msra.mxu0 0
      %265 = vmatprep.subr.bf16.mxu0 0
      %266 = vmatpush1.bf16.msra.mxu0 0
      %267 = vmatprep.subr.bf16.mxu0 0
      %268 = vmatpush1.bf16.msra.mxu0 0
      %269 = vmatprep.subr.bf16.mxu0 0
      %270 = vmatpush1.bf16.msra.mxu0 0
      %271 = vmatprep.subr.bf16.mxu0 0
      %272 = vmatpush1.bf16.msra.mxu0 0
      %273 = vmatprep.subr.bf16.mxu0 0
      %274 = vmatpush1.bf16.msra.mxu0 0
      %275 = vmatprep.subr.bf16.mxu0 0
      %276 = vmatpush1.bf16.msra.mxu0 0
      %277 = vmatprep.subr.bf16.mxu0 0
      %278 = vmatpush1.bf16.msra.mxu0 0
      %279 = vmatprep.subr.bf16.mxu0 0
      %280 = vmatpush1.bf16.msra.mxu0 0
      %281 = vmatprep.subr.bf16.mxu0 0
      %282 = vmatpush1.bf16.msra.mxu0 0
      %283 = vmatprep.subr.bf16.mxu0 0
      %284 = vmatpush1.bf16.msra.mxu0 0
      %285 = vmatprep.subr.bf16.mxu0 0
      %286 = vmatpush1.bf16.msra.mxu0 0
      %287 = vmatprep.subr.bf16.mxu0 0
      %288 = vmatpush1.bf16.msra.mxu0 0
      %289 = vmatprep.mubr.bf16.mxu0 0
      %290 = vmatmul.mubr.bf16.gmra.mrb[0].mxu0 %v204
      %v291 = vpop.f32.mrb[0].mxu0
      %v292 = vadd.f32 0.0, %v291
      %v293 = vpop.f32.mrb[0].mxu0
      %v294 = vpop.f32.mrb[0].mxu0
      %v295 = vpop.f32.mrb[0].mxu0
      %296 = vdwg.mxu0
      %v298 = vsel %vm202, %v177, 0
      %v301 = vsel %vm206, %v186, 0
      %v304 = vsel %vm206, %v187, 0
      %v307 = vsel %vm206, %v188, 0
      %309 = vmatprep.subr.bf16.mxu0 %v304
      %310 = vmatpush1.bf16.msra.mxu0 %v301
      %311 = vmatprep.subr.bf16.mxu0 0
      %312 = vmatpush1.bf16.msra.mxu0 0
      %313 = vmatprep.subr.bf16.mxu0 0
      %314 = vmatpush1.bf16.msra.mxu0 0
      %315 = vmatprep.subr.bf16.mxu0 0
      %316 = vmatpush1.bf16.msra.mxu0 0
      %317 = vmatprep.subr.bf16.mxu0 0
      %318 = vmatpush1.bf16.msra.mxu0 0
      %319 = vmatprep.subr.bf16.mxu0 0
      %320 = vmatpush1.bf16.msra.mxu0 0
      %321 = vmatprep.subr.bf16.mxu0 0
      %322 = vmatpush1.bf16.msra.mxu0 0
      %323 = vmatprep.subr.bf16.mxu0 0
      %324 = vmatpush1.bf16.msra.mxu0 0
      %325 = vmatprep.subr.bf16.mxu0 0
      %326 = vmatpush1.bf16.msra.mxu0 0
      %327 = vmatprep.subr.bf16.mxu0 0
      %328 = vmatpush1.bf16.msra.mxu0 0
      %329 = vmatprep.subr.bf16.mxu0 0
      %330 = vmatpush1.bf16.msra.mxu0 0
      %331 = vmatprep.subr.bf16.mxu0 0
      %332 = vmatpush1.bf16.msra.mxu0 0
      %333 = vmatprep.subr.bf16.mxu0 0
      %334 = vmatpush1.bf16.msra.mxu0 0
      %335 = vmatprep.subr.bf16.mxu0 0
      %336 = vmatpush1.bf16.msra.mxu0 0
      %337 = vmatprep.subr.bf16.mxu0 0
      %338 = vmatpush1.bf16.msra.mxu0 0
      %339 = vmatprep.subr.bf16.mxu0 0
      %340 = vmatpush1.bf16.msra.mxu0 0
      %341 = vmatprep.mubr.bf16.mxu0 0
      %342 = vmatmul.mubr.bf16.gmra.mrb[0].mxu0 %v298
      %v343 = vpop.f32.mrb[0].mxu0
      %v344 = vadd.f32 %v251, %v343
      %v345 = vpop.f32.mrb[0].mxu0
      %v346 = vadd.f32 %v253, %v345
      %v347 = vpop.f32.mrb[0].mxu0
      %v348 = vpop.f32.mrb[0].mxu0
      %349 = vdwg.mxu0
      %350 = vmatprep.subr.bf16.mxu0 0
      %351 = vmatpush1.bf16.msra.mxu0 %v307
      %352 = vmatprep.subr.bf16.mxu0 0
      %353 = vmatpush1.bf16.msra.mxu0 0
      %354 = vmatprep.subr.bf16.mxu0 0
      %355 = vmatpush1.bf16.msra.mxu0 0
      %356 = vmatprep.subr.bf16.mxu0 0
      %357 = vmatpush1.bf16.msra.mxu0 0
      %358 = vmatprep.subr.bf16.mxu0 0
      %359 = vmatpush1.bf16.msra.mxu0 0
      %360 = vmatprep.subr.bf16.mxu0 0
      %361 = vmatpush1.bf16.msra.mxu0 0
      %362 = vmatprep.subr.bf16.mxu0 0
      %363 = vmatpush1.bf16.msra.mxu0 0
      %364 = vmatprep.subr.bf16.mxu0 0
      %365 = vmatpush1.bf16.msra.mxu0 0
      %366 = vmatprep.subr.bf16.mxu0 0
      %367 = vmatpush1.bf16.msra.mxu0 0
      %368 = vmatprep.subr.bf16.mxu0 0
      %369 = vmatpush1.bf16.msra.mxu0 0
      %370 = vmatprep.subr.bf16.mxu0 0
      %371 = vmatpush1.bf16.msra.mxu0 0
      %372 = vmatprep.subr.bf16.mxu0 0
      %373 = vmatpush1.bf16.msra.mxu0 0
      %374 = vmatprep.subr.bf16.mxu0 0
      %375 = vmatpush1.bf16.msra.mxu0 0
      %376 = vmatprep.subr.bf16.mxu0 0
      %377 = vmatpush1.bf16.msra.mxu0 0
      %378 = vmatprep.subr.bf16.mxu0 0
      %379 = vmatpush1.bf16.msra.mxu0 0
      %380 = vmatprep.subr.bf16.mxu0 0
      %381 = vmatpush1.bf16.msra.mxu0 0
      %382 = vmatprep.mubr.bf16.mxu0 0
      %383 = vmatmul.mubr.bf16.gmra.mrb[0].mxu0 %v298
      %v384 = vpop.f32.mrb[0].mxu0
      %v385 = vadd.f32 %v292, %v384
      %v386 = vpop.f32.mrb[0].mxu0
      %v387 = vpop.f32.mrb[0].mxu0
      %v388 = vpop.f32.mrb[0].mxu0
      %389 = vdwg.mxu0
      %s390 = scalar_lea.vmem %s1, 8
      %v391 = vld [vmem:[%s390] sm:$0xf]
      %392 = vrot.lane.b32.xlu0 %v186, 126
      %v393 = vpop.permute.xlu0 %392
      %394 = vrot.lane.b32.xlu0 %v187, 126
      %v395 = vpop.permute.xlu0 %394
      %396 = vrot.lane.b32.xlu0 %v188, 126
      %v397 = vpop.permute.xlu0 %396
      %398 = vrot.lane.b32.xlu0 %v189, 126
      %v399 = vpop.permute.xlu0 %398
      %vm400 = vcmask 1031168
      %v401 = vsel %vm400, %v393, %v395
      %v402 = vsel %vm400, %v395, %v397
      %v403 = vsel %vm400, %v397, %v399
      %v405 = vsel %vm202, %v391, 0
      %v408 = vsel %vm206, %v401, 0
      %v411 = vsel %vm206, %v402, 0
      %v414 = vsel %vm206, %v403, 0
      %416 = vmatprep.subr.bf16.mxu0 %v411
      %417 = vmatpush1.bf16.msra.mxu0 %v408
      %418 = vmatprep.subr.bf16.mxu0 0
      %419 = vmatpush1.bf16.msra.mxu0 0
      %420 = vmatprep.subr.bf16.mxu0 0
      %421 = vmatpush1.bf16.msra.mxu0 0
      %422 = vmatprep.subr.bf16.mxu0 0
      %423 = vmatpush1.bf16.msra.mxu0 0
      %424 = vmatprep.subr.bf16.mxu0 0
      %425 = vmatpush1.bf16.msra.mxu0 0
      %426 = vmatprep.subr.bf16.mxu0 0
      %427 = vmatpush1.bf16.msra.mxu0 0
      %428 = vmatprep.subr.bf16.mxu0 0
      %429 = vmatpush1.bf16.msra.mxu0 0
      %430 = vmatprep.subr.bf16.mxu0 0
      %431 = vmatpush1.bf16.msra.mxu0 0
      %432 = vmatprep.subr.bf16.mxu0 0
      %433 = vmatpush1.bf16.msra.mxu0 0
      %434 = vmatprep.subr.bf16.mxu0 0
      %435 = vmatpush1.bf16.msra.mxu0 0
      %436 = vmatprep.subr.bf16.mxu0 0
      %437 = vmatpush1.bf16.msra.mxu0 0
      %438 = vmatprep.subr.bf16.mxu0 0
      %439 = vmatpush1.bf16.msra.mxu0 0
      %440 = vmatprep.subr.bf16.mxu0 0
      %441 = vmatpush1.bf16.msra.mxu0 0
      %442 = vmatprep.subr.bf16.mxu0 0
      %443 = vmatpush1.bf16.msra.mxu0 0
      %444 = vmatprep.subr.bf16.mxu0 0
      %445 = vmatpush1.bf16.msra.mxu0 0
      %446 = vmatprep.subr.bf16.mxu0 0
      %447 = vmatpush1.bf16.msra.mxu0 0
      %448 = vmatprep.mubr.bf16.mxu0 0
      %449 = vmatmul.mubr.bf16.gmra.mrb[0].mxu0 %v405
      %v450 = vpop.f32.mrb[0].mxu0
      %v451 = vadd.f32 0.0, %v450
      %v452 = vpop.f32.mrb[0].mxu0
      %v453 = vadd.f32 0.0, %v452
      %v454 = vpop.f32.mrb[0].mxu0
      %v455 = vpop.f32.mrb[0].mxu0
      %456 = vdwg.mxu0
      %457 = vmatprep.subr.bf16.mxu0 0
      %458 = vmatpush1.bf16.msra.mxu0 %v414
      %459 = vmatprep.subr.bf16.mxu0 0
      %460 = vmatpush1.bf16.msra.mxu0 0
      %461 = vmatprep.subr.bf16.mxu0 0
      %462 = vmatpush1.bf16.msra.mxu0 0
      %463 = vmatprep.subr.bf16.mxu0 0
      %464 = vmatpush1.bf16.msra.mxu0 0
      %465 = vmatprep.subr.bf16.mxu0 0
      %466 = vmatpush1.bf16.msra.mxu0 0
      %467 = vmatprep.subr.bf16.mxu0 0
      %468 = vmatpush1.bf16.msra.mxu0 0
      %469 = vmatprep.subr.bf16.mxu0 0
      %470 = vmatpush1.bf16.msra.mxu0 0
      %471 = vmatprep.subr.bf16.mxu0 0
      %472 = vmatpush1.bf16.msra.mxu0 0
      %473 = vmatprep.subr.bf16.mxu0 0
      %474 = vmatpush1.bf16.msra.mxu0 0
      %475 = vmatprep.subr.bf16.mxu0 0
      %476 = vmatpush1.bf16.msra.mxu0 0
      %477 = vmatprep.subr.bf16.mxu0 0
      %478 = vmatpush1.bf16.msra.mxu0 0
      %479 = vmatprep.subr.bf16.mxu0 0
      %480 = vmatpush1.bf16.msra.mxu0 0
      %481 = vmatprep.subr.bf16.mxu0 0
      %482 = vmatpush1.bf16.msra.mxu0 0
      %483 = vmatprep.subr.bf16.mxu0 0
      %484 = vmatpush1.bf16.msra.mxu0 0
      %485 = vmatprep.subr.bf16.mxu0 0
      %486 = vmatpush1.bf16.msra.mxu0 0
      %487 = vmatprep.subr.bf16.mxu0 0
      %488 = vmatpush1.bf16.msra.mxu0 0
      %489 = vmatprep.mubr.bf16.mxu0 0
      %490 = vmatmul.mubr.bf16.gmra.mrb[0].mxu0 %v405
      %v491 = vpop.f32.mrb[0].mxu0
      %v492 = vadd.f32 0.0, %v491
      %v493 = vpop.f32.mrb[0].mxu0
      %v494 = vpop.f32.mrb[0].mxu0
      %v495 = vpop.f32.mrb[0].mxu0
      %496 = vdwg.mxu0
      %v497 = vadd.f32 %v344, %v451
      %v498 = vadd.f32 %v346, %v453
      %v499 = vadd.f32 %v385, %v492
      %s500 = scalar_lea.vmem %s1, 12
      %v501 = vld [vmem:[%s500] sm:$0xf]
      %502 = vrot.lane.b32.xlu0 %v186, 108
      %v503 = vpop.permute.xlu0 %502
      %504 = vrot.lane.b32.xlu0 %v187, 108
      %v505 = vpop.permute.xlu0 %504
      %506 = vrot.lane.b32.xlu0 %v188, 108
      %v507 = vpop.permute.xlu0 %506
      %508 = vrot.lane.b32.xlu0 %v189, 108
      %v509 = vpop.permute.xlu0 %508
      %vm510 = vcmask 883712
      %v511 = vsel %vm510, %v503, %v505
      %v512 = vsel %vm510, %v505, %v507
      %v513 = vsel %vm510, %v507, %v509
      %v515 = vsel %vm202, %v501, 0
      %v518 = vsel %vm206, %v511, 0
      %v521 = vsel %vm206, %v512, 0
      %v524 = vsel %vm206, %v513, 0
      %526 = vmatprep.subr.bf16.mxu0 %v521
      %527 = vmatpush1.bf16.msra.mxu0 %v518
      %528 = vmatprep.subr.bf16.mxu0 0
      %529 = vmatpush1.bf16.msra.mxu0 0
      %530 = vmatprep.subr.bf16.mxu0 0
      %531 = vmatpush1.bf16.msra.mxu0 0
      %532 = vmatprep.subr.bf16.mxu0 0
      %533 = vmatpush1.bf16.msra.mxu0 0
      %534 = vmatprep.subr.bf16.mxu0 0
      %535 = vmatpush1.bf16.msra.mxu0 0
      %536 = vmatprep.subr.bf16.mxu0 0
      %537 = vmatpush1.bf16.msra.mxu0 0
      %538 = vmatprep.subr.bf16.mxu0 0
      %539 = vmatpush1.bf16.msra.mxu0 0
      %540 = vmatprep.subr.bf16.mxu0 0
      %541 = vmatpush1.bf16.msra.mxu0 0
      %542 = vmatprep.subr.bf16.mxu0 0
      %543 = vmatpush1.bf16.msra.mxu0 0
      %544 = vmatprep.subr.bf16.mxu0 0
      %545 = vmatpush1.bf16.msra.mxu0 0
      %546 = vmatprep.subr.bf16.mxu0 0
      %547 = vmatpush1.bf16.msra.mxu0 0
      %548 = vmatprep.subr.bf16.mxu0 0
      %549 = vmatpush1.bf16.msra.mxu0 0
      %550 = vmatprep.subr.bf16.mxu0 0
      %551 = vmatpush1.bf16.msra.mxu0 0
      %552 = vmatprep.subr.bf16.mxu0 0
      %553 = vmatpush1.bf16.msra.mxu0 0
      %554 = vmatprep.subr.bf16.mxu0 0
      %555 = vmatpush1.bf16.msra.mxu0 0
      %556 = vmatprep.subr.bf16.mxu0 0
      %557 = vmatpush1.bf16.msra.mxu0 0
      %558 = vmatprep.mubr.bf16.mxu0 0
      %559 = vmatmul.mubr.bf16.gmra.mrb[0].mxu0 %v515
      %v560 = vpop.f32.mrb[0].mxu0
      %v561 = vadd.f32 0.0, %v560
      %v562 = vpop.f32.mrb[0].mxu0
      %v563 = vadd.f32 0.0, %v562
      %v564 = vpop.f32.mrb[0].mxu0
      %v565 = vpop.f32.mrb[0].mxu0
      %566 = vdwg.mxu0
      %567 = vmatprep.subr.bf16.mxu0 0
      %568 = vmatpush1.bf16.msra.mxu0 %v524
      %569 = vmatprep.subr.bf16.mxu0 0
      %570 = vmatpush1.bf16.msra.mxu0 0
      %571 = vmatprep.subr.bf16.mxu0 0
      %572 = vmatpush1.bf16.msra.mxu0 0
      %573 = vmatprep.subr.bf16.mxu0 0
      %574 = vmatpush1.bf16.msra.mxu0 0
      %575 = vmatprep.subr.bf16.mxu0 0
      %576 = vmatpush1.bf16.msra.mxu0 0
      %577 = vmatprep.subr.bf16.mxu0 0
      %578 = vmatpush1.bf16.msra.mxu0 0
      %579 = vmatprep.subr.bf16.mxu0 0
      %580 = vmatpush1.bf16.msra.mxu0 0
      %581 = vmatprep.subr.bf16.mxu0 0
      %582 = vmatpush1.bf16.msra.mxu0 0
      %583 = vmatprep.subr.bf16.mxu0 0
      %584 = vmatpush1.bf16.msra.mxu0 0
      %585 = vmatprep.subr.bf16.mxu0 0
      %586 = vmatpush1.bf16.msra.mxu0 0
      %587 = vmatprep.subr.bf16.mxu0 0
      %588 = vmatpush1.bf16.msra.mxu0 0
      %589 = vmatprep.subr.bf16.mxu0 0
      %590 = vmatpush1.bf16.msra.mxu0 0
      %591 = vmatprep.subr.bf16.mxu0 0
      %592 = vmatpush1.bf16.msra.mxu0 0
      %593 = vmatprep.subr.bf16.mxu0 0
      %594 = vmatpush1.bf16.msra.mxu0 0
      %595 = vmatprep.subr.bf16.mxu0 0
      %596 = vmatpush1.bf16.msra.mxu0 0
      %597 = vmatprep.subr.bf16.mxu0 0
      %598 = vmatpush1.bf16.msra.mxu0 0
      %599 = vmatprep.mubr.bf16.mxu0 0
      %600 = vmatmul.mubr.bf16.gmra.mrb[0].mxu0 %v515
      %v601 = vpop.f32.mrb[0].mxu0
      %v602 = vadd.f32 0.0, %v601
      %v603 = vpop.f32.mrb[0].mxu0
      %v604 = vpop.f32.mrb[0].mxu0
      %v605 = vpop.f32.mrb[0].mxu0
      %606 = vdwg.mxu0
      %v607 = vadd.f32 %v497, %v561
      %v608 = vadd.f32 %v498, %v563
      %v609 = vadd.f32 %v499, %v602
      %s610 = scalar_lea.vmem %s1, 16
      %v611 = vld [vmem:[%s610] sm:$0xf]
      %612 = vrot.lane.b32.xlu0 %v186, 107
      %v613 = vpop.permute.xlu0 %612
      %614 = vrot.lane.b32.xlu0 %v187, 107
      %v615 = vpop.permute.xlu0 %614
      %616 = vrot.lane.b32.xlu0 %v188, 107
      %v617 = vpop.permute.xlu0 %616
      %618 = vrot.lane.b32.xlu0 %v189, 107
      %v619 = vpop.permute.xlu0 %618
      %vm620 = vcmask 875520
      %v621 = vsel %vm620, %v613, %v615
      %v622 = vsel %vm620, %v615, %v617
      %v623 = vsel %vm620, %v617, %v619
      %v625 = vsel %vm202, %v611, 0
      %v628 = vsel %vm206, %v621, 0
      %v631 = vsel %vm206, %v622, 0
      %v634 = vsel %vm206, %v623, 0
      %636 = vmatprep.subr.bf16.mxu0 %v631
      %637 = vmatpush1.bf16.msra.mxu0 %v628
      %638 = vmatprep.subr.bf16.mxu0 0
      %639 = vmatpush1.bf16.msra.mxu0 0
      %640 = vmatprep.subr.bf16.mxu0 0
      %641 = vmatpush1.bf16.msra.mxu0 0
      %642 = vmatprep.subr.bf16.mxu0 0
      %643 = vmatpush1.bf16.msra.mxu0 0
      %644 = vmatprep.subr.bf16.mxu0 0
      %645 = vmatpush1.bf16.msra.mxu0 0
      %646 = vmatprep.subr.bf16.mxu0 0
      %647 = vmatpush1.bf16.msra.mxu0 0
      %648 = vmatprep.subr.bf16.mxu0 0
      %649 = vmatpush1.bf16.msra.mxu0 0
      %650 = vmatprep.subr.bf16.mxu0 0
      %651 = vmatpush1.bf16.msra.mxu0 0
      %652 = vmatprep.subr.bf16.mxu0 0
      %653 = vmatpush1.bf16.msra.mxu0 0
      %654 = vmatprep.subr.bf16.mxu0 0
      %655 = vmatpush1.bf16.msra.mxu0 0
      %656 = vmatprep.subr.bf16.mxu0 0
      %657 = vmatpush1.bf16.msra.mxu0 0
      %658 = vmatprep.subr.bf16.mxu0 0
      %659 = vmatpush1.bf16.msra.mxu0 0
      %660 = vmatprep.subr.bf16.mxu0 0
      %661 = vmatpush1.bf16.msra.mxu0 0
      %662 = vmatprep.subr.bf16.mxu0 0
      %663 = vmatpush1.bf16.msra.mxu0 0
      %664 = vmatprep.subr.bf16.mxu0 0
      %665 = vmatpush1.bf16.msra.mxu0 0
      %666 = vmatprep.subr.bf16.mxu0 0
      %667 = vmatpush1.bf16.msra.mxu0 0
      %668 = vmatprep.mubr.bf16.mxu0 0
      %669 = vmatmul.mubr.bf16.gmra.mrb[0].mxu0 %v625
      %v670 = vpop.f32.mrb[0].mxu0
      %v671 = vadd.f32 0.0, %v670
      %v672 = vpop.f32.mrb[0].mxu0
      %v673 = vadd.f32 0.0, %v672
      %v674 = vpop.f32.mrb[0].mxu0
      %v675 = vpop.f32.mrb[0].mxu0
      %676 = vdwg.mxu0
      %677 = vmatprep.subr.bf16.mxu0 0
      %678 = vmatpush1.bf16.msra.mxu0 %v634
      %679 = vmatprep.subr.bf16.mxu0 0
      %680 = vmatpush1.bf16.msra.mxu0 0
      %681 = vmatprep.subr.bf16.mxu0 0
      %682 = vmatpush1.bf16.msra.mxu0 0
      %683 = vmatprep.subr.bf16.mxu0 0
      %684 = vmatpush1.bf16.msra.mxu0 0
      %685 = vmatprep.subr.bf16.mxu0 0
      %686 = vmatpush1.bf16.msra.mxu0 0
      %687 = vmatprep.subr.bf16.mxu0 0
      %688 = vmatpush1.bf16.msra.mxu0 0
      %689 = vmatprep.subr.bf16.mxu0 0
      %690 = vmatpush1.bf16.msra.mxu0 0
      %691 = vmatprep.subr.bf16.mxu0 0
      %692 = vmatpush1.bf16.msra.mxu0 0
      %693 = vmatprep.subr.bf16.mxu0 0
      %694 = vmatpush1.bf16.msra.mxu0 0
      %695 = vmatprep.subr.bf16.mxu0 0
      %696 = vmatpush1.bf16.msra.mxu0 0
      %697 = vmatprep.subr.bf16.mxu0 0
      %698 = vmatpush1.bf16.msra.mxu0 0
      %699 = vmatprep.subr.bf16.mxu0 0
      %700 = vmatpush1.bf16.msra.mxu0 0
      %701 = vmatprep.subr.bf16.mxu0 0
      %702 = vmatpush1.bf16.msra.mxu0 0
      %703 = vmatprep.subr.bf16.mxu0 0
      %704 = vmatpush1.bf16.msra.mxu0 0
      %705 = vmatprep.subr.bf16.mxu0 0
      %706 = vmatpush1.bf16.msra.mxu0 0
      %707 = vmatprep.subr.bf16.mxu0 0
      %708 = vmatpush1.bf16.msra.mxu0 0
      %709 = vmatprep.mubr.bf16.mxu0 0
      %710 = vmatmul.mubr.bf16.gmra.mrb[0].mxu0 %v625
      %v711 = vpop.f32.mrb[0].mxu0
      %v712 = vadd.f32 0.0, %v711
      %v713 = vpop.f32.mrb[0].mxu0
      %v714 = vpop.f32.mrb[0].mxu0
      %v715 = vpop.f32.mrb[0].mxu0
      %716 = vdwg.mxu0
      %v717 = vadd.f32 %v607, %v671
      %v718 = vadd.f32 %v608, %v673
      %v719 = vadd.f32 %v609, %v712
      %s720 = scalar_lea.vmem %s1, 20
      %v721 = vld [vmem:[%s720] sm:$0xf]
      %722 = vrot.lane.b32.xlu0 %v186, 106
      %v723 = vpop.permute.xlu0 %722
      %724 = vrot.lane.b32.xlu0 %v187, 106
      %v725 = vpop.permute.xlu0 %724
      %726 = vrot.lane.b32.xlu0 %v188, 106
      %v727 = vpop.permute.xlu0 %726
      %728 = vrot.lane.b32.xlu0 %v189, 106
      %v729 = vpop.permute.xlu0 %728
      %vm730 = vcmask 867328
      %v731 = vsel %vm730, %v723, %v725
      %v732 = vsel %vm730, %v725, %v727
      %v733 = vsel %vm730, %v727, %v729
      %v735 = vsel %vm202, %v721, 0
      %v738 = vsel %vm206, %v731, 0
      %v741 = vsel %vm206, %v732, 0
      %v744 = vsel %vm206, %v733, 0
      %746 = vmatprep.subr.bf16.mxu0 %v741
      %747 = vmatpush1.bf16.msra.mxu0 %v738
      %748 = vmatprep.subr.bf16.mxu0 0
      %749 = vmatpush1.bf16.msra.mxu0 0
      %750 = vmatprep.subr.bf16.mxu0 0
      %751 = vmatpush1.bf16.msra.mxu0 0
      %752 = vmatprep.subr.bf16.mxu0 0
      %753 = vmatpush1.bf16.msra.mxu0 0
      %754 = vmatprep.subr.bf16.mxu0 0
      %755 = vmatpush1.bf16.msra.mxu0 0
      %756 = vmatprep.subr.bf16.mxu0 0
      %757 = vmatpush1.bf16.msra.mxu0 0
      %758 = vmatprep.subr.bf16.mxu0 0
      %759 = vmatpush1.bf16.msra.mxu0 0
      %760 = vmatprep.subr.bf16.mxu0 0
      %761 = vmatpush1.bf16.msra.mxu0 0
      %762 = vmatprep.subr.bf16.mxu0 0
      %763 = vmatpush1.bf16.msra.mxu0 0
      %764 = vmatprep.subr.bf16.mxu0 0
      %765 = vmatpush1.bf16.msra.mxu0 0
      %766 = vmatprep.subr.bf16.mxu0 0
      %767 = vmatpush1.bf16.msra.mxu0 0
      %768 = vmatprep.subr.bf16.mxu0 0
      %769 = vmatpush1.bf16.msra.mxu0 0
      %770 = vmatprep.subr.bf16.mxu0 0
      %771 = vmatpush1.bf16.msra.mxu0 0
      %772 = vmatprep.subr.bf16.mxu0 0
      %773 = vmatpush1.bf16.msra.mxu0 0
      %774 = vmatprep.subr.bf16.mxu0 0
      %775 = vmatpush1.bf16.msra.mxu0 0
      %776 = vmatprep.subr.bf16.mxu0 0
      %777 = vmatpush1.bf16.msra.mxu0 0
      %778 = vmatprep.mubr.bf16.mxu0 0
      %779 = vmatmul.mubr.bf16.gmra.mrb[0].mxu0 %v735
      %v780 = vpop.f32.mrb[0].mxu0
      %v781 = vadd.f32 0.0, %v780
      %v782 = vpop.f32.mrb[0].mxu0
      %v783 = vadd.f32 0.0, %v782
      %v784 = vpop.f32.mrb[0].mxu0
      %v785 = vpop.f32.mrb[0].mxu0
      %786 = vdwg.mxu0
      %787 = vmatprep.subr.bf16.mxu0 0
      %788 = vmatpush1.bf16.msra.mxu0 %v744
      %789 = vmatprep.subr.bf16.mxu0 0
      %790 = vmatpush1.bf16.msra.mxu0 0
      %791 = vmatprep.subr.bf16.mxu0 0
      %792 = vmatpush1.bf16.msra.mxu0 0
      %793 = vmatprep.subr.bf16.mxu0 0
      %794 = vmatpush1.bf16.msra.mxu0 0
      %795 = vmatprep.subr.bf16.mxu0 0
      %796 = vmatpush1.bf16.msra.mxu0 0
      %797 = vmatprep.subr.bf16.mxu0 0
      %798 = vmatpush1.bf16.msra.mxu0 0
      %799 = vmatprep.subr.bf16.mxu0 0
      %800 = vmatpush1.bf16.msra.mxu0 0
      %801 = vmatprep.subr.bf16.mxu0 0
      %802 = vmatpush1.bf16.msra.mxu0 0
      %803 = vmatprep.subr.bf16.mxu0 0
      %804 = vmatpush1.bf16.msra.mxu0 0
      %805 = vmatprep.subr.bf16.mxu0 0
      %806 = vmatpush1.bf16.msra.mxu0 0
      %807 = vmatprep.subr.bf16.mxu0 0
      %808 = vmatpush1.bf16.msra.mxu0 0
      %809 = vmatprep.subr.bf16.mxu0 0
      %810 = vmatpush1.bf16.msra.mxu0 0
      %811 = vmatprep.subr.bf16.mxu0 0
      %812 = vmatpush1.bf16.msra.mxu0 0
      %813 = vmatprep.subr.bf16.mxu0 0
      %814 = vmatpush1.bf16.msra.mxu0 0
      %815 = vmatprep.subr.bf16.mxu0 0
      %816 = vmatpush1.bf16.msra.mxu0 0
      %817 = vmatprep.subr.bf16.mxu0 0
      %818 = vmatpush1.bf16.msra.mxu0 0
      %819 = vmatprep.mubr.bf16.mxu0 0
      %820 = vmatmul.mubr.bf16.gmra.mrb[0].mxu0 %v735
      %v821 = vpop.f32.mrb[0].mxu0
      %v822 = vadd.f32 0.0, %v821
      %v823 = vpop.f32.mrb[0].mxu0
      %v824 = vpop.f32.mrb[0].mxu0
      %v825 = vpop.f32.mrb[0].mxu0
      %826 = vdwg.mxu0
      %v827 = vadd.f32 %v717, %v781
      %v828 = vadd.f32 %v718, %v783
      %v829 = vadd.f32 %v719, %v822
      %s830 = scalar_lea.vmem %s1, 24
      %v831 = vld [vmem:[%s830] sm:$0xf]
      %832 = vrot.lane.b32.xlu0 %v186, 88
      %v833 = vpop.permute.xlu0 %832
      %834 = vrot.lane.b32.xlu0 %v187, 88
      %v835 = vpop.permute.xlu0 %834
      %836 = vrot.lane.b32.xlu0 %v188, 88
      %v837 = vpop.permute.xlu0 %836
      %838 = vrot.lane.b32.xlu0 %v189, 88
      %v839 = vpop.permute.xlu0 %838
      %vm840 = vcmask 719872
      %v841 = vsel %vm840, %v833, %v835
      %v842 = vsel %vm840, %v835, %v837
      %v843 = vsel %vm840, %v837, %v839
      %v845 = vsel %vm202, %v831, 0
      %v848 = vsel %vm206, %v841, 0
      %v851 = vsel %vm206, %v842, 0
      %v854 = vsel %vm206, %v843, 0
      %856 = vmatprep.subr.bf16.mxu0 %v851
      %857 = vmatpush1.bf16.msra.mxu0 %v848
      %858 = vmatprep.subr.bf16.mxu0 0
      %859 = vmatpush1.bf16.msra.mxu0 0
      %860 = vmatprep.subr.bf16.mxu0 0
      %861 = vmatpush1.bf16.msra.mxu0 0
      %862 = vmatprep.subr.bf16.mxu0 0
      %863 = vmatpush1.bf16.msra.mxu0 0
      %864 = vmatprep.subr.bf16.mxu0 0
      %865 = vmatpush1.bf16.msra.mxu0 0
      %866 = vmatprep.subr.bf16.mxu0 0
      %867 = vmatpush1.bf16.msra.mxu0 0
      %868 = vmatprep.subr.bf16.mxu0 0
      %869 = vmatpush1.bf16.msra.mxu0 0
      %870 = vmatprep.subr.bf16.mxu0 0
      %871 = vmatpush1.bf16.msra.mxu0 0
      %872 = vmatprep.subr.bf16.mxu0 0
      %873 = vmatpush1.bf16.msra.mxu0 0
      %874 = vmatprep.subr.bf16.mxu0 0
      %875 = vmatpush1.bf16.msra.mxu0 0
      %876 = vmatprep.subr.bf16.mxu0 0
      %877 = vmatpush1.bf16.msra.mxu0 0
      %878 = vmatprep.subr.bf16.mxu0 0
      %879 = vmatpush1.bf16.msra.mxu0 0
      %880 = vmatprep.subr.bf16.mxu0 0
      %881 = vmatpush1.bf16.msra.mxu0 0
      %882 = vmatprep.subr.bf16.mxu0 0
      %883 = vmatpush1.bf16.msra.mxu0 0
      %884 = vmatprep.subr.bf16.mxu0 0
      %885 = vmatpush1.bf16.msra.mxu0 0
      %886 = vmatprep.subr.bf16.mxu0 0
      %887 = vmatpush1.bf16.msra.mxu0 0
      %888 = vmatprep.mubr.bf16.mxu0 0
      %889 = vmatmul.mubr.bf16.gmra.mrb[0].mxu0 %v845
      %v890 = vpop.f32.mrb[0].mxu0
      %v891 = vadd.f32 0.0, %v890
      %v892 = vpop.f32.mrb[0].mxu0
      %v893 = vadd.f32 0.0, %v892
      %v894 = vpop.f32.mrb[0].mxu0
      %v895 = vpop.f32.mrb[0].mxu0
      %896 = vdwg.mxu0
      %897 = vmatprep.subr.bf16.mxu0 0
      %898 = vmatpush1.bf16.msra.mxu0 %v854
      %899 = vmatprep.subr.bf16.mxu0 0
      %900 = vmatpush1.bf16.msra.mxu0 0
      %901 = vmatprep.subr.bf16.mxu0 0
      %902 = vmatpush1.bf16.msra.mxu0 0
      %903 = vmatprep.subr.bf16.mxu0 0
      %904 = vmatpush1.bf16.msra.mxu0 0
      %905 = vmatprep.subr.bf16.mxu0 0
      %906 = vmatpush1.bf16.msra.mxu0 0
      %907 = vmatprep.subr.bf16.mxu0 0
      %908 = vmatpush1.bf16.msra.mxu0 0
      %909 = vmatprep.subr.bf16.mxu0 0
      %910 = vmatpush1.bf16.msra.mxu0 0
      %911 = vmatprep.subr.bf16.mxu0 0
      %912 = vmatpush1.bf16.msra.mxu0 0
      %913 = vmatprep.subr.bf16.mxu0 0
      %914 = vmatpush1.bf16.msra.mxu0 0
      %915 = vmatprep.subr.bf16.mxu0 0
      %916 = vmatpush1.bf16.msra.mxu0 0
      %917 = vmatprep.subr.bf16.mxu0 0
      %918 = vmatpush1.bf16.msra.mxu0 0
      %919 = vmatprep.subr.bf16.mxu0 0
      %920 = vmatpush1.bf16.msra.mxu0 0
      %921 = vmatprep.subr.bf16.mxu0 0
      %922 = vmatpush1.bf16.msra.mxu0 0
      %923 = vmatprep.subr.bf16.mxu0 0
      %924 = vmatpush1.bf16.msra.mxu0 0
      %925 = vmatprep.subr.bf16.mxu0 0
      %926 = vmatpush1.bf16.msra.mxu0 0
      %927 = vmatprep.subr.bf16.mxu0 0
      %928 = vmatpush1.bf16.msra.mxu0 0
      %929 = vmatprep.mubr.bf16.mxu0 0
      %930 = vmatmul.mubr.bf16.gmra.mrb[0].mxu0 %v845
      %v931 = vpop.f32.mrb[0].mxu0
      %v932 = vadd.f32 0.0, %v931
      %v933 = vpop.f32.mrb[0].mxu0
      %v934 = vpop.f32.mrb[0].mxu0
      %v935 = vpop.f32.mrb[0].mxu0
      %936 = vdwg.mxu0
      %v937 = vadd.f32 %v827, %v891
      %v938 = vadd.f32 %v828, %v893
      %v939 = vadd.f32 %v829, %v932
      %s940 = scalar_lea.vmem %s1, 28
      %v941 = vld [vmem:[%s940] sm:$0xf]
      %942 = vrot.lane.b32.xlu0 %v186, 87
      %v943 = vpop.permute.xlu0 %942
      %944 = vrot.lane.b32.xlu0 %v187, 87
      %v945 = vpop.permute.xlu0 %944
      %946 = vrot.lane.b32.xlu0 %v188, 87
      %v947 = vpop.permute.xlu0 %946
      %948 = vrot.lane.b32.xlu0 %v189, 87
      %v949 = vpop.permute.xlu0 %948
      %vm950 = vcmask 711680
      %v951 = vsel %vm950, %v943, %v945
      %v952 = vsel %vm950, %v945, %v947
      %v953 = vsel %vm950, %v947, %v949
      %v955 = vsel %vm202, %v941, 0
      %v958 = vsel %vm206, %v951, 0
      %v961 = vsel %vm206, %v952, 0
      %v964 = vsel %vm206, %v953, 0
      %966 = vmatprep.subr.bf16.mxu0 %v961
      %967 = vmatpush1.bf16.msra.mxu0 %v958
      %968 = vmatprep.subr.bf16.mxu0 0
      %969 = vmatpush1.bf16.msra.mxu0 0
      %970 = vmatprep.subr.bf16.mxu0 0
      %971 = vmatpush1.bf16.msra.mxu0 0
      %972 = vmatprep.subr.bf16.mxu0 0
      %973 = vmatpush1.bf16.msra.mxu0 0
      %974 = vmatprep.subr.bf16.mxu0 0
      %975 = vmatpush1.bf16.msra.mxu0 0
      %976 = vmatprep.subr.bf16.mxu0 0
      %977 = vmatpush1.bf16.msra.mxu0 0
      %978 = vmatprep.subr.bf16.mxu0 0
      %979 = vmatpush1.bf16.msra.mxu0 0
      %980 = vmatprep.subr.bf16.mxu0 0
      %981 = vmatpush1.bf16.msra.mxu0 0
      %982 = vmatprep.subr.bf16.mxu0 0
      %983 = vmatpush1.bf16.msra.mxu0 0
      %984 = vmatprep.subr.bf16.mxu0 0
      %985 = vmatpush1.bf16.msra.mxu0 0
      %986 = vmatprep.subr.bf16.mxu0 0
      %987 = vmatpush1.bf16.msra.mxu0 0
      %988 = vmatprep.subr.bf16.mxu0 0
      %989 = vmatpush1.bf16.msra.mxu0 0
      %990 = vmatprep.subr.bf16.mxu0 0
      %991 = vmatpush1.bf16.msra.mxu0 0
      %992 = vmatprep.subr.bf16.mxu0 0
      %993 = vmatpush1.bf16.msra.mxu0 0
      %994 = vmatprep.subr.bf16.mxu0 0
      %995 = vmatpush1.bf16.msra.mxu0 0
      %996 = vmatprep.subr.bf16.mxu0 0
      %997 = vmatpush1.bf16.msra.mxu0 0
      %998 = vmatprep.mubr.bf16.mxu0 0
      %999 = vmatmul.mubr.bf16.gmra.mrb[0].mxu0 %v955
      %v1000 = vpop.f32.mrb[0].mxu0
      %v1001 = vadd.f32 0.0, %v1000
      %v1002 = vpop.f32.mrb[0].mxu0
      %v1003 = vadd.f32 0.0, %v1002
      %v1004 = vpop.f32.mrb[0].mxu0
      %v1005 = vpop.f32.mrb[0].mxu0
      %1006 = vdwg.mxu0
      %1007 = vmatprep.subr.bf16.mxu0 0
      %1008 = vmatpush1.bf16.msra.mxu0 %v964
      %1009 = vmatprep.subr.bf16.mxu0 0
      %1010 = vmatpush1.bf16.msra.mxu0 0
      %1011 = vmatprep.subr.bf16.mxu0 0
      %1012 = vmatpush1.bf16.msra.mxu0 0
      %1013 = vmatprep.subr.bf16.mxu0 0
      %1014 = vmatpush1.bf16.msra.mxu0 0
      %1015 = vmatprep.subr.bf16.mxu0 0
      %1016 = vmatpush1.bf16.msra.mxu0 0
      %1017 = vmatprep.subr.bf16.mxu0 0
      %1018 = vmatpush1.bf16.msra.mxu0 0
      %1019 = vmatprep.subr.bf16.mxu0 0
      %1020 = vmatpush1.bf16.msra.mxu0 0
      %1021 = vmatprep.subr.bf16.mxu0 0
      %1022 = vmatpush1.bf16.msra.mxu0 0
      %1023 = vmatprep.subr.bf16.mxu0 0
      %1024 = vmatpush1.bf16.msra.mxu0 0
      %1025 = vmatprep.subr.bf16.mxu0 0
      %1026 = vmatpush1.bf16.msra.mxu0 0
      %1027 = vmatprep.subr.bf16.mxu0 0
      %1028 = vmatpush1.bf16.msra.mxu0 0
      %1029 = vmatprep.subr.bf16.mxu0 0
      %1030 = vmatpush1.bf16.msra.mxu0 0
      %1031 = vmatprep.subr.bf16.mxu0 0
      %1032 = vmatpush1.bf16.msra.mxu0 0
      %1033 = vmatprep.subr.bf16.mxu0 0
      %1034 = vmatpush1.bf16.msra.mxu0 0
      %1035 = vmatprep.subr.bf16.mxu0 0
      %1036 = vmatpush1.bf16.msra.mxu0 0
      %1037 = vmatprep.subr.bf16.mxu0 0
      %1038 = vmatpush1.bf16.msra.mxu0 0
      %1039 = vmatprep.mubr.bf16.mxu0 0
      %1040 = vmatmul.mubr.bf16.gmra.mrb[0].mxu0 %v955
      %v1041 = vpop.f32.mrb[0].mxu0
      %v1042 = vadd.f32 0.0, %v1041
      %v1043 = vpop.f32.mrb[0].mxu0
      %v1044 = vpop.f32.mrb[0].mxu0
      %v1045 = vpop.f32.mrb[0].mxu0
      %1046 = vdwg.mxu0
      %v1047 = vadd.f32 %v937, %v1001
      %v1048 = vadd.f32 %v938, %v1003
      %v1049 = vadd.f32 %v939, %v1042
      %s1050 = scalar_lea.vmem %s1, 32
      %v1051 = vld [vmem:[%s1050] sm:$0xf]
      %1052 = vrot.lane.b32.xlu0 %v186, 86
      %v1053 = vpop.permute.xlu0 %1052
      %1054 = vrot.lane.b32.xlu0 %v187, 86
      %v1055 = vpop.permute.xlu0 %1054
      %1056 = vrot.lane.b32.xlu0 %v188, 86
      %v1057 = vpop.permute.xlu0 %1056
      %1058 = vrot.lane.b32.xlu0 %v189, 86
      %v1059 = vpop.permute.xlu0 %1058
      %vm1060 = vcmask 703488
      %v1061 = vsel %vm1060, %v1053, %v1055
      %v1062 = vsel %vm1060, %v1055, %v1057
      %v1063 = vsel %vm1060, %v1057, %v1059
      %v1065 = vsel %vm202, %v1051, 0
      %v1068 = vsel %vm206, %v1061, 0
      %v1071 = vsel %vm206, %v1062, 0
      %v1074 = vsel %vm206, %v1063, 0
      %1076 = vmatprep.subr.bf16.mxu0 %v1071
      %1077 = vmatpush1.bf16.msra.mxu0 %v1068
      %1078 = vmatprep.subr.bf16.mxu0 0
      %1079 = vmatpush1.bf16.msra.mxu0 0
      %1080 = vmatprep.subr.bf16.mxu0 0
      %1081 = vmatpush1.bf16.msra.mxu0 0
      %1082 = vmatprep.subr.bf16.mxu0 0
      %1083 = vmatpush1.bf16.msra.mxu0 0
      %1084 = vmatprep.subr.bf16.mxu0 0
      %1085 = vmatpush1.bf16.msra.mxu0 0
      %1086 = vmatprep.subr.bf16.mxu0 0
      %1087 = vmatpush1.bf16.msra.mxu0 0
      %1088 = vmatprep.subr.bf16.mxu0 0
      %1089 = vmatpush1.bf16.msra.mxu0 0
      %1090 = vmatprep.subr.bf16.mxu0 0
      %1091 = vmatpush1.bf16.msra.mxu0 0
      %1092 = vmatprep.subr.bf16.mxu0 0
      %1093 = vmatpush1.bf16.msra.mxu0 0
      %1094 = vmatprep.subr.bf16.mxu0 0
      %1095 = vmatpush1.bf16.msra.mxu0 0
      %1096 = vmatprep.subr.bf16.mxu0 0
      %1097 = vmatpush1.bf16.msra.mxu0 0
      %1098 = vmatprep.subr.bf16.mxu0 0
      %1099 = vmatpush1.bf16.msra.mxu0 0
      %1100 = vmatprep.subr.bf16.mxu0 0
      %1101 = vmatpush1.bf16.msra.mxu0 0
      %1102 = vmatprep.subr.bf16.mxu0 0
      %1103 = vmatpush1.bf16.msra.mxu0 0
      %1104 = vmatprep.subr.bf16.mxu0 0
      %1105 = vmatpush1.bf16.msra.mxu0 0
      %1106 = vmatprep.subr.bf16.mxu0 0
      %1107 = vmatpush1.bf16.msra.mxu0 0
      %1108 = vmatprep.mubr.bf16.mxu0 0
      %1109 = vmatmul.mubr.bf16.gmra.mrb[0].mxu0 %v1065
      %v1110 = vpop.f32.mrb[0].mxu0
      %v1111 = vadd.f32 0.0, %v1110
      %v1112 = vpop.f32.mrb[0].mxu0
      %v1113 = vadd.f32 0.0, %v1112
      %v1114 = vpop.f32.mrb[0].mxu0
      %v1115 = vpop.f32.mrb[0].mxu0
      %1116 = vdwg.mxu0
      %1117 = vmatprep.subr.bf16.mxu0 0
      %1118 = vmatpush1.bf16.msra.mxu0 %v1074
      %1119 = vmatprep.subr.bf16.mxu0 0
      %1120 = vmatpush1.bf16.msra.mxu0 0
      %1121 = vmatprep.subr.bf16.mxu0 0
      %1122 = vmatpush1.bf16.msra.mxu0 0
      %1123 = vmatprep.subr.bf16.mxu0 0
      %1124 = vmatpush1.bf16.msra.mxu0 0
      %1125 = vmatprep.subr.bf16.mxu0 0
      %1126 = vmatpush1.bf16.msra.mxu0 0
      %1127 = vmatprep.subr.bf16.mxu0 0
      %1128 = vmatpush1.bf16.msra.mxu0 0
      %1129 = vmatprep.subr.bf16.mxu0 0
      %1130 = vmatpush1.bf16.msra.mxu0 0
      %1131 = vmatprep.subr.bf16.mxu0 0
      %1132 = vmatpush1.bf16.msra.mxu0 0
      %1133 = vmatprep.subr.bf16.mxu0 0
      %1134 = vmatpush1.bf16.msra.mxu0 0
      %1135 = vmatprep.subr.bf16.mxu0 0
      %1136 = vmatpush1.bf16.msra.mxu0 0
      %1137 = vmatprep.subr.bf16.mxu0 0
      %1138 = vmatpush1.bf16.msra.mxu0 0
      %1139 = vmatprep.subr.bf16.mxu0 0
      %1140 = vmatpush1.bf16.msra.mxu0 0
      %1141 = vmatprep.subr.bf16.mxu0 0
      %1142 = vmatpush1.bf16.msra.mxu0 0
      %1143 = vmatprep.subr.bf16.mxu0 0
      %1144 = vmatpush1.bf16.msra.mxu0 0
      %1145 = vmatprep.subr.bf16.mxu0 0
      %1146 = vmatpush1.bf16.msra.mxu0 0
      %1147 = vmatprep.subr.bf16.mxu0 0
      %1148 = vmatpush1.bf16.msra.mxu0 0
      %1149 = vmatprep.mubr.bf16.mxu0 0
      %1150 = vmatmul.mubr.bf16.gmra.mrb[0].mxu0 %v1065
      %v1151 = vpop.f32.mrb[0].mxu0
      %v1152 = vadd.f32 0.0, %v1151
      %v1153 = vpop.f32.mrb[0].mxu0
      %v1154 = vpop.f32.mrb[0].mxu0
      %v1155 = vpop.f32.mrb[0].mxu0
      %1156 = vdwg.mxu0
      %v1157 = vadd.f32 %v1047, %v1111
      %v1158 = vadd.f32 %v1048, %v1113
      %v1159 = vadd.f32 %v1049, %v1152
      %v1160 = vld [vmem:[%s2] sm:$0xff]
      %1162 = vset.pattern.permute.xlu0 0
      %1163 = vperm.xlu0 %1162, %v1160
      %v1164 = vpop.permute.xlu0 %1163
      %v1166 = vadd.f32 %v1157, %v1164
      %v1167 = vadd.f32 %v1158, %v1164
      %v1168 = vadd.f32 %v1159, %v1164
      %v1169 = vmax.f32 %v1166, 0.0
      %v1170 = vmax.f32 %v1167, 0.0
      %v1171 = vmax.f32 %v1168, 0.0
      %v1172 = vmin.f32 %v1169, 1.0
      %v1173 = vmin.f32 %v1170, 1.0
      %v1174 = vmin.f32 %v1171, 1.0
      %v1175 = vmul.f32 %v1172, 15.0
      %v1176 = vmul.f32 %v1173, 15.0
      %v1177 = vmul.f32 %v1174, 15.0
      %v1178 = vround.ne.pseudo %v1175
      %v1179 = vround.ne.pseudo %v1176
      %v1180 = vround.ne.pseudo %v1177
      %v1181 = vmul.f32 %v1178, 0.06666667
      %v1182 = vmul.f32 %v1179, 0.06666667
      %v1183 = vmul.f32 %v1180, 0.06666667
      %v1184 = vpack.c.bf16 %v1181, %v1181
      %v1185 = vpack.c.bf16 %v1182, %v1182
      %v1186 = vpack.c.bf16 %v1183, %v1183
      %v1190 = vunpack.c.l.b16 %v1184
      %v1191 = vunpack.c.l.b16 %v1185
      %v1192 = vunpack.c.l.b16 %v1186
      %v1193 = vpack.c.b16 %v1191, %v1190
      %v1194 = vpack.c.b16 %v1192, %v1192
      %1197 = vst [vmem:[%s172] sm:$0xff] %v1193
      %1198 = vst [vmem:[%s172 + $0x8] sm:$0xf] %v1194
      %s1199 = smul.u32 3, %s14
      %p1200 = scmp.lt.s32.totalorder %s1199, 5
      %s1201 = scalar_select %p1200, %s1199, 5
      %s1202 = smul.addr %s1201, 4
      %s1203 = scalar_lea.vmem %s3, %s1202
      // Predicated region
      $region33: #{svhnq_forward.8} parent=31 // pred_check
        %p1204 = pneg %p100
      $region34: #{svhnq_forward.8} parent=31 // pred_check_branch
        %1206 = sbr.rel (%p1204) target = $region36
      $region35: #{svhnq_forward.8} parent=31 // pred_region
        %s1207 = smul.u32 3, %s14
      $region36: #{svhnq_forward.8} parent=31 // pred_fallthru
        _
    $region32: #{svhnq_forward.8} parent=5 // pred_fallthru
      _
    %p1208 = scmp.le.s32.totalorder 2, %s9
    // Predicated region
    $region37: #{svhnq_forward.8} parent=5 // pred_check
      %p1209 = pneg %p1208
    $region38: #{svhnq_forward.8} parent=5 // pred_check_branch
      %1211 = sbr.rel (%p1209) target = $region40
    $region39: #{svhnq_forward.8} parent=5 // pred_region
      %s1212 = ssub.s32 %s9, 2
      // Predicated region
      $region41: #{svhnq_forward.8} parent=39 // pred_check
        %p1213 = pneg %p106
      $region42: #{svhnq_forward.8} parent=39 // pred_check_branch
        %1215 = sbr.rel (%p1213) target = $region44
      $region43: #{svhnq_forward.8} parent=39 // pred_region
        %s1216 = smul.u32 3, %s15
        %p1217 = scmp.lt.s32.totalorder %s1216, 5
        %s1218 = scalar_select %p1217, %s1216, 5
        %s1219 = smul.addr %s1218, 4
        %s1220 = scalar_lea.vmem %s3, %s1219
      $region44: #{svhnq_forward.8} parent=39 // pred_fallthru
        _
    $region40: #{svhnq_forward.8} parent=5 // pred_fallthru
      _
  $region6: #{svhnq_forward.8} parent=0 // loop_footer
    %s13 = sadd.s32 1, %s9
  $region7: #{svhnq_forward.8} parent=0 // loop_footer_branch
    %8 = sbr.rel target = $region3
  $region8: #{svhnq_forward.8} parent=0 // loop_exit
    _

// kernel: svhnq_forward.9
$region0: #{svhnq_forward.9}
  #allocation0 [shape = 'u32[]', space=smem, size = 0x4, offset = 0x4, fixed_abs, tag = 'smem constant byte address 0x4 - core index']
  #allocation1 [shape = 'u32[144,128]{1,0:T(1,128)}', space=vmem, size = 0x12000, scoped, tag = 'internal scratch']
  %s0 = inlined_call_operand.vmem [shape: bf16[8,1024], index: 0, kind: input, shape index: {}]
  %s1 = inlined_call_operand.vmem [shape: bf16[9,8,8], index: 1, kind: input, shape index: {}]
  %s2 = inlined_call_operand.vmem [shape: f32[8,1], index: 2, kind: input, shape index: {}]
  %s3 = inlined_call_operand.vmem [shape: bf16[8,768], index: 3, kind: output, shape index: {}]
  %s4 = sld [smem:[#allocation0]]
  $region45: #{svhnq_forward.9} parent=0
    _
  %s6 = ssub.s32 1, %s4
  %s7 = scalar_select 0, %s6, %s4
  loop: start=0, step=1, limit=4
  $region2: #{svhnq_forward.9} parent=0 // loop_pre_header
    _
  $region3: #{svhnq_forward.9} parent=0 // loop_header
    %s9 = sphi 0, %s13
    %p10 = scmp.ge.s32.totalorder %s9, 4
    %s19 = sphi 0, %s21
    %s22 = sphi 0, %s19
    %s23 = sphi 0, %s22
    %s39 = sphi 0, %s23
    %s43 = sphi 0, %s43
    %s45 = sphi 0, %s43
    %s46 = sphi 0, %s45
    %s60 = sphi 0, %s46
    %s64 = sphi 0, %s64
    %s66 = sphi 0, %s64
    %s67 = sphi 0, %s66
    %s81 = sphi 0, %s67
    %s87 = sphi 0, %s89
    %s90 = sphi 0, %s87
    %s91 = sphi 0, %s90
    %s107 = sphi 0, %s91
  $region4: #{svhnq_forward.9} parent=0 // loop_header_branch
    %12 = sbr.rel (%p10) target = $region8
  $region5: #{svhnq_forward.9} parent=0 // loop_body
    %s14 = ssub.s32 %s9, 1
    %s15 = ssub.s32 %s9, 2
    %s16 = sadd.s32 %s9, 1
    %s17 = ssub.s32 %s9, %s16
    %p18 = scmp.eq.s32.totalorder %s17, 0
    %s20 = sadd.s32 %s19, 1
    %s21 = scalar_select %p18, %s19, %s20
    %p24 = pneg %p18
    %p25 = scmp.eq.s32.totalorder %s9, 1
    %p26 = por %p24, %p25
    %p27 = scmp.ne.s32.totalorder %s19, %s22
    %p28 = scmp.eq.s32.totalorder %s9, 0
    %p29 = por %p27, %p28
    %p30 = scmp.ne.s32.totalorder %s19, %s22
    %p31 = scmp.eq.s32.totalorder %s14, 1
    %p32 = por %p30, %p31
    %p33 = scmp.ne.s32.totalorder %s22, %s23
    %p34 = scmp.eq.s32.totalorder %s14, 0
    %p35 = por %p33, %p34
    %p36 = scmp.ne.s32.totalorder %s22, %s23
    %p37 = scmp.eq.s32.totalorder %s15, 1
    %p38 = por %p36, %p37
    %p40 = scmp.ne.s32.totalorder %s23, %s39
    %p41 = scmp.eq.s32.totalorder %s15, 0
    %p42 = por %p40, %p41
    %s44 = sadd.s32 %s43, 1
    %p47 = scmp.eq.s32.totalorder %s9, 1
    %p48 = scmp.ne.s32.totalorder %s43, %s45
    %p49 = scmp.eq.s32.totalorder %s9, 0
    %p50 = por %p48, %p49
    %p51 = scmp.ne.s32.totalorder %s43, %s45
    %p52 = scmp.eq.s32.totalorder %s14, 1
    %p53 = por %p51, %p52
    %p54 = scmp.ne.s32.totalorder %s45, %s46
    %p55 = scmp.eq.s32.totalorder %s14, 0
    %p56 = por %p54, %p55
    %p57 = scmp.ne.s32.totalorder %s45, %s46
    %p58 = scmp.eq.s32.totalorder %s15, 1
    %p59 = por %p57, %p58
    %p61 = scmp.ne.s32.totalorder %s46, %s60
    %p62 = scmp.eq.s32.totalorder %s15, 0
    %p63 = por %p61, %p62
    %s65 = sadd.s32 %s64, 1
    %p68 = scmp.eq.s32.totalorder %s9, 1
    %p69 = scmp.ne.s32.totalorder %s64, %s66
    %p70 = scmp.eq.s32.totalorder %s9, 0
    %p71 = por %p69, %p70
    %p72 = scmp.ne.s32.totalorder %s64, %s66
    %p73 = scmp.eq.s32.totalorder %s14, 1
    %p74 = por %p72, %p73
    %p75 = scmp.ne.s32.totalorder %s66, %s67
    %p76 = scmp.eq.s32.totalorder %s14, 0
    %p77 = por %p75, %p76
    %p78 = scmp.ne.s32.totalorder %s66, %s67
    %p79 = scmp.eq.s32.totalorder %s15, 1
    %p80 = por %p78, %p79
    %p82 = scmp.ne.s32.totalorder %s67, %s81
    %p83 = scmp.eq.s32.totalorder %s15, 0
    %p84 = por %p82, %p83
    %s85 = ssub.s32 %s9, %s16
    %p86 = scmp.eq.s32.totalorder %s85, 0
    %s88 = sadd.s32 %s87, 1
    %s89 = scalar_select %p86, %s87, %s88
    %p92 = pneg %p86
    %p93 = scmp.eq.s32.totalorder %s9, 1
    %p94 = por %p92, %p93
    %p95 = scmp.ne.s32.totalorder %s87, %s90
    %p96 = scmp.eq.s32.totalorder %s9, 0
    %p97 = por %p95, %p96
    %p98 = scmp.ne.s32.totalorder %s87, %s90
    %p99 = scmp.eq.s32.totalorder %s14, 1
    %p100 = por %p98, %p99
    %p101 = scmp.ne.s32.totalorder %s90, %s91
    %p102 = scmp.eq.s32.totalorder %s14, 0
    %p103 = por %p101, %p102
    %p104 = scmp.ne.s32.totalorder %s90, %s91
    %p105 = scmp.eq.s32.totalorder %s15, 1
    %p106 = por %p104, %p105
    %p108 = scmp.ne.s32.totalorder %s91, %s107
    %p109 = scmp.eq.s32.totalorder %s15, 0
    %p110 = por %p108, %p109
    %p111 = scmp.le.s32.totalorder 1, %s9
    %p112 = scmp.lt.s32.totalorder %s9, 3
    %p113 = pnand %p111, %p112
    %p114 = pneg %p113
    // Predicated region
    $region9: #{svhnq_forward.9} parent=5 // pred_check
      _
    $region10: #{svhnq_forward.9} parent=5 // pred_check_branch
      %116 = sbr.rel (%p113) target = $region12
    $region11: #{svhnq_forward.9} parent=5 // pred_region
      %s117 = ssub.s32 %s9, 1
      // Predicated region
      $region13: #{svhnq_forward.9} parent=11 // pred_check
        %p118 = pneg %p56
      $region14: #{svhnq_forward.9} parent=11 // pred_check_branch
        %120 = sbr.rel (%p118) target = $region16
      $region15: #{svhnq_forward.9} parent=11 // pred_region
        _
      $region16: #{svhnq_forward.9} parent=11 // pred_fallthru
        _
      // Predicated region
      $region17: #{svhnq_forward.9} parent=11 // pred_check
        %p121 = pneg %p77
      $region18: #{svhnq_forward.9} parent=11 // pred_check_branch
        %123 = sbr.rel (%p121) target = $region20
      $region19: #{svhnq_forward.9} parent=11 // pred_region
        _
      $region20: #{svhnq_forward.9} parent=11 // pred_fallthru
        _
    $region12: #{svhnq_forward.9} parent=5 // pred_fallthru
      _
    %p124 = scmp.lt.s32.totalorder %s9, 2
    // Predicated region
    $region21: #{svhnq_forward.9} parent=5 // pred_check
      %p125 = pneg %p124
    $region22: #{svhnq_forward.9} parent=5 // pred_check_branch
      %127 = sbr.rel (%p125) target = $region24
    $region23: #{svhnq_forward.9} parent=5 // pred_region
      // Predicated region
      $region25: #{svhnq_forward.9} parent=23 // pred_check
        %p128 = pneg %p29
      $region26: #{svhnq_forward.9} parent=23 // pred_check_branch
        %130 = sbr.rel (%p128) target = $region28
      $region27: #{svhnq_forward.9} parent=23 // pred_region
        %s131 = smul.u32 4, %s9
        %p132 = scmp.lt.s32.totalorder %s131, 7
        %s133 = scalar_select %p132, %s131, 7
        %s134 = smul.addr %s133, 4
        %s135 = scalar_lea.vmem %s0, %s134
        %s136 = smul.u32 4, %s9
      $region28: #{svhnq_forward.9} parent=23 // pred_fallthru
        _
    $region24: #{svhnq_forward.9} parent=5 // pred_fallthru
      _
    %p137 = scmp.le.s32.totalorder 1, %s9
    %p138 = scmp.lt.s32.totalorder %s9, 3
    %p139 = pnand %p137, %p138
    %p140 = pneg %p139
    // Predicated region
    $region29: #{svhnq_forward.9} parent=5 // pred_check
      _
    $region30: #{svhnq_forward.9} parent=5 // pred_check_branch
      %142 = sbr.rel (%p139) target = $region32
    $region31: #{svhnq_forward.9} parent=5 // pred_region
      %s143 = ssub.s32 %s9, 1
      %s144 = smul.u32 4, %s14
      %p145 = scmp.lt.s32.totalorder %s144, 7
      %s146 = scalar_select %p145, %s144, 7
      %s147 = smul.addr %s146, 4
      %s148 = scalar_lea.vmem %s0, %s147
      %p149 = pneg %p35
      %p150 = pneg %p32
      %p151 = pneg %p56
      %p152 = pneg %p53
      %p153 = pneg %p77
      %p154 = pneg %p74
      %p155 = pneg %p103
      %p156 = pneg %p100
      %s157 = smul.u32 3, %s14
      %p158 = scmp.lt.s32.totalorder %s157, 5
      %s159 = scalar_select %p158, %s157, 5
      %s160 = smul.addr %s159, 4
      %s161 = scalar_lea.vmem %s3, %s160
      %s162 = smul.u32 4, %s14
      %p163 = scmp.lt.s32.totalorder %s162, 7
      %s164 = scalar_select %p163, %s162, 7
      %s165 = smul.addr %s164, 4
      %s166 = scalar_lea.vmem %s0, %s165
      %s167 = smul.u32 4, %s14
      %s168 = smul.u32 3, %s14
      %p169 = scmp.lt.s32.totalorder %s168, 5
      %s170 = scalar_select %p169, %s168, 5
      %s171 = smul.addr %s170, 4
      %s172 = scalar_lea.vmem %s3, %s171
      %s173 = smul.u32 3, %s14
      %v175 = vld [vmem:[%s166] sm:$0xff]
      %v176 = vld [vmem:[%s166 + $0x8] sm:$0xff]
      %v177 = vld [vmem:[%s1] sm:$0xf]
      %s178 = scalar_lea.vmem %s1, 4
      %v179 = vld [vmem:[%s178] sm:$0xf]
      %v182 = vunpack.c.l.b16 %v175
      %v183 = vunpack.c.h.b16 %v175
      %v184 = vunpack.c.l.b16 %v176
      %v185 = vunpack.c.h.b16 %v176
      %v186 = vpack.c.b16 %v182, %v182
      %v187 = vpack.c.b16 %v183, %v183
      %v188 = vpack.c.b16 %v184, %v184
      %v189 = vpack.c.b16 %v185, %v185
      %190 = vrot.lane.b32.xlu0 %v186, 127
      %v191 = vpop.permute.xlu0 %190
      %192 = vrot.lane.b32.xlu0 %v187, 127
      %v193 = vpop.permute.xlu0 %192
      %194 = vrot.lane.b32.xlu0 %v188, 127
      %v195 = vpop.permute.xlu0 %194
      %196 = vrot.lane.b32.xlu0 %v189, 127
      %v197 = vpop.permute.xlu0 %196
      %vm198 = vcmask 1039360
      %v199 = vsel %vm198, %v191, %v193
      %v200 = vsel %vm198, %v193, %v195
      %v201 = vsel %vm198, %v195, %v197
      %vm202 = vcmask 64512
      %v204 = vsel %vm202, %v179, 0
      %vm206 = vcmask 1043456
      %v208 = vsel %vm206, %v199, 0
      %v211 = vsel %vm206, %v200, 0
      %v214 = vsel %vm206, %v201, 0
      %216 = vmatprep.subr.bf16.mxu0 %v211
      %217 = vmatpush1.bf16.msra.mxu0 %v208
      %218 = vmatprep.subr.bf16.mxu0 0
      %219 = vmatpush1.bf16.msra.mxu0 0
      %220 = vmatprep.subr.bf16.mxu0 0
      %221 = vmatpush1.bf16.msra.mxu0 0
      %222 = vmatprep.subr.bf16.mxu0 0
      %223 = vmatpush1.bf16.msra.mxu0 0
      %224 = vmatprep.subr.bf16.mxu0 0
      %225 = vmatpush1.bf16.msra.mxu0 0
      %226 = vmatprep.subr.bf16.mxu0 0
      %227 = vmatpush1.bf16.msra.mxu0 0
      %228 = vmatprep.subr.bf16.mxu0 0
      %229 = vmatpush1.bf16.msra.mxu0 0
      %230 = vmatprep.subr.bf16.mxu0 0
      %231 = vmatpush1.bf16.msra.mxu0 0
      %232 = vmatprep.subr.bf16.mxu0 0
      %233 = vmatpush1.bf16.msra.mxu0 0
      %234 = vmatprep.subr.bf16.mxu0 0
      %235 = vmatpush1.bf16.msra.mxu0 0
      %236 = vmatprep.subr.bf16.mxu0 0
      %237 = vmatpush1.bf16.msra.mxu0 0
      %238 = vmatprep.subr.bf16.mxu0 0
      %239 = vmatpush1.bf16.msra.mxu0 0
      %240 = vmatprep.subr.bf16.mxu0 0
      %241 = vmatpush1.bf16.msra.mxu0 0
      %242 = vmatprep.subr.bf16.mxu0 0
      %243 = vmatpush1.bf16.msra.mxu0 0
      %244 = vmatprep.subr.bf16.mxu0 0
      %245 = vmatpush1.bf16.msra.mxu0 0
      %246 = vmatprep.subr.bf16.mxu0 0
      %247 = vmatpush1.bf16.msra.mxu0 0
      %248 = vmatprep.mubr.bf16.mxu0 0
      %249 = vmatmul.mubr.bf16.gmra.mrb[0].mxu0 %v204
      %v250 = vpop.f32.mrb[0].mxu0
      %v251 = vadd.f32 0.0, %v250
      %v252 = vpop.f32.mrb[0].mxu0
      %v253 = vadd.f32 0.0, %v252
      %v254 = vpop.f32.mrb[0].mxu0
      %v255 = vpop.f32.mrb[0].mxu0
      %256 = vdwg.mxu0
      %257 = vmatprep.subr.bf16.mxu0 0
      %258 = vmatpush1.bf16.msra.mxu0 %v214
      %259 = vmatprep.subr.bf16.mxu0 0
      %260 = vmatpush1.bf16.msra.mxu0 0
      %261 = vmatprep.subr.bf16.mxu0 0
      %262 = vmatpush1.bf16.msra.mxu0 0
      %263 = vmatprep.subr.bf16.mxu0 0
      %264 = vmatpush1.bf16.msra.mxu0 0
      %265 = vmatprep.subr.bf16.mxu0 0
      %266 = vmatpush1.bf16.msra.mxu0 0
      %267 = vmatprep.subr.bf16.mxu0 0
      %268 = vmatpush1.bf16.msra.mxu0 0
      %269 = vmatprep.subr.bf16.mxu0 0
      %270 = vmatpush1.bf16.msra.mxu0 0
      %271 = vmatprep.subr.bf16.mxu0 0
      %272 = vmatpush1.bf16.msra.mxu0 0
      %273 = vmatprep.subr.bf16.mxu0 0
      %274 = vmatpush1.bf16.msra.mxu0 0
      %275 = vmatprep.subr.bf16.mxu0 0
      %276 = vmatpush1.bf16.msra.mxu0 0
      %277 = vmatprep.subr.bf16.mxu0 0
      %278 = vmatpush1.bf16.msra.mxu0 0
      %279 = vmatprep.subr.bf16.mxu0 0
      %280 = vmatpush1.bf16.msra.mxu0 0
      %281 = vmatprep.subr.bf16.mxu0 0
      %282 = vmatpush1.bf16.msra.mxu0 0
      %283 = vmatprep.subr.bf16.mxu0 0
      %284 = vmatpush1.bf16.msra.mxu0 0
      %285 = vmatprep.subr.bf16.mxu0 0
      %286 = vmatpush1.bf16.msra.mxu0 0
      %287 = vmatprep.subr.bf16.mxu0 0
      %288 = vmatpush1.bf16.msra.mxu0 0
      %289 = vmatprep.mubr.bf16.mxu0 0
      %290 = vmatmul.mubr.bf16.gmra.mrb[0].mxu0 %v204
      %v291 = vpop.f32.mrb[0].mxu0
      %v292 = vadd.f32 0.0, %v291
      %v293 = vpop.f32.mrb[0].mxu0
      %v294 = vpop.f32.mrb[0].mxu0
      %v295 = vpop.f32.mrb[0].mxu0
      %296 = vdwg.mxu0
      %v298 = vsel %vm202, %v177, 0
      %v301 = vsel %vm206, %v186, 0
      %v304 = vsel %vm206, %v187, 0
      %v307 = vsel %vm206, %v188, 0
      %309 = vmatprep.subr.bf16.mxu0 %v304
      %310 = vmatpush1.bf16.msra.mxu0 %v301
      %311 = vmatprep.subr.bf16.mxu0 0
      %312 = vmatpush1.bf16.msra.mxu0 0
      %313 = vmatprep.subr.bf16.mxu0 0
      %314 = vmatpush1.bf16.msra.mxu0 0
      %315 = vmatprep.subr.bf16.mxu0 0
      %316 = vmatpush1.bf16.msra.mxu0 0
      %317 = vmatprep.subr.bf16.mxu0 0
      %318 = vmatpush1.bf16.msra.mxu0 0
      %319 = vmatprep.subr.bf16.mxu0 0
      %320 = vmatpush1.bf16.msra.mxu0 0
      %321 = vmatprep.subr.bf16.mxu0 0
      %322 = vmatpush1.bf16.msra.mxu0 0
      %323 = vmatprep.subr.bf16.mxu0 0
      %324 = vmatpush1.bf16.msra.mxu0 0
      %325 = vmatprep.subr.bf16.mxu0 0
      %326 = vmatpush1.bf16.msra.mxu0 0
      %327 = vmatprep.subr.bf16.mxu0 0
      %328 = vmatpush1.bf16.msra.mxu0 0
      %329 = vmatprep.subr.bf16.mxu0 0
      %330 = vmatpush1.bf16.msra.mxu0 0
      %331 = vmatprep.subr.bf16.mxu0 0
      %332 = vmatpush1.bf16.msra.mxu0 0
      %333 = vmatprep.subr.bf16.mxu0 0
      %334 = vmatpush1.bf16.msra.mxu0 0
      %335 = vmatprep.subr.bf16.mxu0 0
      %336 = vmatpush1.bf16.msra.mxu0 0
      %337 = vmatprep.subr.bf16.mxu0 0
      %338 = vmatpush1.bf16.msra.mxu0 0
      %339 = vmatprep.subr.bf16.mxu0 0
      %340 = vmatpush1.bf16.msra.mxu0 0
      %341 = vmatprep.mubr.bf16.mxu0 0
      %342 = vmatmul.mubr.bf16.gmra.mrb[0].mxu0 %v298
      %v343 = vpop.f32.mrb[0].mxu0
      %v344 = vadd.f32 %v251, %v343
      %v345 = vpop.f32.mrb[0].mxu0
      %v346 = vadd.f32 %v253, %v345
      %v347 = vpop.f32.mrb[0].mxu0
      %v348 = vpop.f32.mrb[0].mxu0
      %349 = vdwg.mxu0
      %350 = vmatprep.subr.bf16.mxu0 0
      %351 = vmatpush1.bf16.msra.mxu0 %v307
      %352 = vmatprep.subr.bf16.mxu0 0
      %353 = vmatpush1.bf16.msra.mxu0 0
      %354 = vmatprep.subr.bf16.mxu0 0
      %355 = vmatpush1.bf16.msra.mxu0 0
      %356 = vmatprep.subr.bf16.mxu0 0
      %357 = vmatpush1.bf16.msra.mxu0 0
      %358 = vmatprep.subr.bf16.mxu0 0
      %359 = vmatpush1.bf16.msra.mxu0 0
      %360 = vmatprep.subr.bf16.mxu0 0
      %361 = vmatpush1.bf16.msra.mxu0 0
      %362 = vmatprep.subr.bf16.mxu0 0
      %363 = vmatpush1.bf16.msra.mxu0 0
      %364 = vmatprep.subr.bf16.mxu0 0
      %365 = vmatpush1.bf16.msra.mxu0 0
      %366 = vmatprep.subr.bf16.mxu0 0
      %367 = vmatpush1.bf16.msra.mxu0 0
      %368 = vmatprep.subr.bf16.mxu0 0
      %369 = vmatpush1.bf16.msra.mxu0 0
      %370 = vmatprep.subr.bf16.mxu0 0
      %371 = vmatpush1.bf16.msra.mxu0 0
      %372 = vmatprep.subr.bf16.mxu0 0
      %373 = vmatpush1.bf16.msra.mxu0 0
      %374 = vmatprep.subr.bf16.mxu0 0
      %375 = vmatpush1.bf16.msra.mxu0 0
      %376 = vmatprep.subr.bf16.mxu0 0
      %377 = vmatpush1.bf16.msra.mxu0 0
      %378 = vmatprep.subr.bf16.mxu0 0
      %379 = vmatpush1.bf16.msra.mxu0 0
      %380 = vmatprep.subr.bf16.mxu0 0
      %381 = vmatpush1.bf16.msra.mxu0 0
      %382 = vmatprep.mubr.bf16.mxu0 0
      %383 = vmatmul.mubr.bf16.gmra.mrb[0].mxu0 %v298
      %v384 = vpop.f32.mrb[0].mxu0
      %v385 = vadd.f32 %v292, %v384
      %v386 = vpop.f32.mrb[0].mxu0
      %v387 = vpop.f32.mrb[0].mxu0
      %v388 = vpop.f32.mrb[0].mxu0
      %389 = vdwg.mxu0
      %s390 = scalar_lea.vmem %s1, 8
      %v391 = vld [vmem:[%s390] sm:$0xf]
      %392 = vrot.lane.b32.xlu0 %v186, 126
      %v393 = vpop.permute.xlu0 %392
      %394 = vrot.lane.b32.xlu0 %v187, 126
      %v395 = vpop.permute.xlu0 %394
      %396 = vrot.lane.b32.xlu0 %v188, 126
      %v397 = vpop.permute.xlu0 %396
      %398 = vrot.lane.b32.xlu0 %v189, 126
      %v399 = vpop.permute.xlu0 %398
      %vm400 = vcmask 1031168
      %v401 = vsel %vm400, %v393, %v395
      %v402 = vsel %vm400, %v395, %v397
      %v403 = vsel %vm400, %v397, %v399
      %v405 = vsel %vm202, %v391, 0
      %v408 = vsel %vm206, %v401, 0
      %v411 = vsel %vm206, %v402, 0
      %v414 = vsel %vm206, %v403, 0
      %416 = vmatprep.subr.bf16.mxu0 %v411
      %417 = vmatpush1.bf16.msra.mxu0 %v408
      %418 = vmatprep.subr.bf16.mxu0 0
      %419 = vmatpush1.bf16.msra.mxu0 0
      %420 = vmatprep.subr.bf16.mxu0 0
      %421 = vmatpush1.bf16.msra.mxu0 0
      %422 = vmatprep.subr.bf16.mxu0 0
      %423 = vmatpush1.bf16.msra.mxu0 0
      %424 = vmatprep.subr.bf16.mxu0 0
      %425 = vmatpush1.bf16.msra.mxu0 0
      %426 = vmatprep.subr.bf16.mxu0 0
      %427 = vmatpush1.bf16.msra.mxu0 0
      %428 = vmatprep.subr.bf16.mxu0 0
      %429 = vmatpush1.bf16.msra.mxu0 0
      %430 = vmatprep.subr.bf16.mxu0 0
      %431 = vmatpush1.bf16.msra.mxu0 0
      %432 = vmatprep.subr.bf16.mxu0 0
      %433 = vmatpush1.bf16.msra.mxu0 0
      %434 = vmatprep.subr.bf16.mxu0 0
      %435 = vmatpush1.bf16.msra.mxu0 0
      %436 = vmatprep.subr.bf16.mxu0 0
      %437 = vmatpush1.bf16.msra.mxu0 0
      %438 = vmatprep.subr.bf16.mxu0 0
      %439 = vmatpush1.bf16.msra.mxu0 0
      %440 = vmatprep.subr.bf16.mxu0 0
      %441 = vmatpush1.bf16.msra.mxu0 0
      %442 = vmatprep.subr.bf16.mxu0 0
      %443 = vmatpush1.bf16.msra.mxu0 0
      %444 = vmatprep.subr.bf16.mxu0 0
      %445 = vmatpush1.bf16.msra.mxu0 0
      %446 = vmatprep.subr.bf16.mxu0 0
      %447 = vmatpush1.bf16.msra.mxu0 0
      %448 = vmatprep.mubr.bf16.mxu0 0
      %449 = vmatmul.mubr.bf16.gmra.mrb[0].mxu0 %v405
      %v450 = vpop.f32.mrb[0].mxu0
      %v451 = vadd.f32 0.0, %v450
      %v452 = vpop.f32.mrb[0].mxu0
      %v453 = vadd.f32 0.0, %v452
      %v454 = vpop.f32.mrb[0].mxu0
      %v455 = vpop.f32.mrb[0].mxu0
      %456 = vdwg.mxu0
      %457 = vmatprep.subr.bf16.mxu0 0
      %458 = vmatpush1.bf16.msra.mxu0 %v414
      %459 = vmatprep.subr.bf16.mxu0 0
      %460 = vmatpush1.bf16.msra.mxu0 0
      %461 = vmatprep.subr.bf16.mxu0 0
      %462 = vmatpush1.bf16.msra.mxu0 0
      %463 = vmatprep.subr.bf16.mxu0 0
      %464 = vmatpush1.bf16.msra.mxu0 0
      %465 = vmatprep.subr.bf16.mxu0 0
      %466 = vmatpush1.bf16.msra.mxu0 0
      %467 = vmatprep.subr.bf16.mxu0 0
      %468 = vmatpush1.bf16.msra.mxu0 0
      %469 = vmatprep.subr.bf16.mxu0 0
      %470 = vmatpush1.bf16.msra.mxu0 0
      %471 = vmatprep.subr.bf16.mxu0 0
      %472 = vmatpush1.bf16.msra.mxu0 0
      %473 = vmatprep.subr.bf16.mxu0 0
      %474 = vmatpush1.bf16.msra.mxu0 0
      %475 = vmatprep.subr.bf16.mxu0 0
      %476 = vmatpush1.bf16.msra.mxu0 0
      %477 = vmatprep.subr.bf16.mxu0 0
      %478 = vmatpush1.bf16.msra.mxu0 0
      %479 = vmatprep.subr.bf16.mxu0 0
      %480 = vmatpush1.bf16.msra.mxu0 0
      %481 = vmatprep.subr.bf16.mxu0 0
      %482 = vmatpush1.bf16.msra.mxu0 0
      %483 = vmatprep.subr.bf16.mxu0 0
      %484 = vmatpush1.bf16.msra.mxu0 0
      %485 = vmatprep.subr.bf16.mxu0 0
      %486 = vmatpush1.bf16.msra.mxu0 0
      %487 = vmatprep.subr.bf16.mxu0 0
      %488 = vmatpush1.bf16.msra.mxu0 0
      %489 = vmatprep.mubr.bf16.mxu0 0
      %490 = vmatmul.mubr.bf16.gmra.mrb[0].mxu0 %v405
      %v491 = vpop.f32.mrb[0].mxu0
      %v492 = vadd.f32 0.0, %v491
      %v493 = vpop.f32.mrb[0].mxu0
      %v494 = vpop.f32.mrb[0].mxu0
      %v495 = vpop.f32.mrb[0].mxu0
      %496 = vdwg.mxu0
      %v497 = vadd.f32 %v344, %v451
      %v498 = vadd.f32 %v346, %v453
      %v499 = vadd.f32 %v385, %v492
      %s500 = scalar_lea.vmem %s1, 12
      %v501 = vld [vmem:[%s500] sm:$0xf]
      %502 = vrot.lane.b32.xlu0 %v186, 108
      %v503 = vpop.permute.xlu0 %502
      %504 = vrot.lane.b32.xlu0 %v187, 108
      %v505 = vpop.permute.xlu0 %504
      %506 = vrot.lane.b32.xlu0 %v188, 108
      %v507 = vpop.permute.xlu0 %506
      %508 = vrot.lane.b32.xlu0 %v189, 108
      %v509 = vpop.permute.xlu0 %508
      %vm510 = vcmask 883712
      %v511 = vsel %vm510, %v503, %v505
      %v512 = vsel %vm510, %v505, %v507
      %v513 = vsel %vm510, %v507, %v509
      %v515 = vsel %vm202, %v501, 0
      %v518 = vsel %vm206, %v511, 0
      %v521 = vsel %vm206, %v512, 0
      %v524 = vsel %vm206, %v513, 0
      %526 = vmatprep.subr.bf16.mxu0 %v521
      %527 = vmatpush1.bf16.msra.mxu0 %v518
      %528 = vmatprep.subr.bf16.mxu0 0
      %529 = vmatpush1.bf16.msra.mxu0 0
      %530 = vmatprep.subr.bf16.mxu0 0
      %531 = vmatpush1.bf16.msra.mxu0 0
      %532 = vmatprep.subr.bf16.mxu0 0
      %533 = vmatpush1.bf16.msra.mxu0 0
      %534 = vmatprep.subr.bf16.mxu0 0
      %535 = vmatpush1.bf16.msra.mxu0 0
      %536 = vmatprep.subr.bf16.mxu0 0
      %537 = vmatpush1.bf16.msra.mxu0 0
      %538 = vmatprep.subr.bf16.mxu0 0
      %539 = vmatpush1.bf16.msra.mxu0 0
      %540 = vmatprep.subr.bf16.mxu0 0
      %541 = vmatpush1.bf16.msra.mxu0 0
      %542 = vmatprep.subr.bf16.mxu0 0
      %543 = vmatpush1.bf16.msra.mxu0 0
      %544 = vmatprep.subr.bf16.mxu0 0
      %545 = vmatpush1.bf16.msra.mxu0 0
      %546 = vmatprep.subr.bf16.mxu0 0
      %547 = vmatpush1.bf16.msra.mxu0 0
      %548 = vmatprep.subr.bf16.mxu0 0
      %549 = vmatpush1.bf16.msra.mxu0 0
      %550 = vmatprep.subr.bf16.mxu0 0
      %551 = vmatpush1.bf16.msra.mxu0 0
      %552 = vmatprep.subr.bf16.mxu0 0
      %553 = vmatpush1.bf16.msra.mxu0 0
      %554 = vmatprep.subr.bf16.mxu0 0
      %555 = vmatpush1.bf16.msra.mxu0 0
      %556 = vmatprep.subr.bf16.mxu0 0
      %557 = vmatpush1.bf16.msra.mxu0 0
      %558 = vmatprep.mubr.bf16.mxu0 0
      %559 = vmatmul.mubr.bf16.gmra.mrb[0].mxu0 %v515
      %v560 = vpop.f32.mrb[0].mxu0
      %v561 = vadd.f32 0.0, %v560
      %v562 = vpop.f32.mrb[0].mxu0
      %v563 = vadd.f32 0.0, %v562
      %v564 = vpop.f32.mrb[0].mxu0
      %v565 = vpop.f32.mrb[0].mxu0
      %566 = vdwg.mxu0
      %567 = vmatprep.subr.bf16.mxu0 0
      %568 = vmatpush1.bf16.msra.mxu0 %v524
      %569 = vmatprep.subr.bf16.mxu0 0
      %570 = vmatpush1.bf16.msra.mxu0 0
      %571 = vmatprep.subr.bf16.mxu0 0
      %572 = vmatpush1.bf16.msra.mxu0 0
      %573 = vmatprep.subr.bf16.mxu0 0
      %574 = vmatpush1.bf16.msra.mxu0 0
      %575 = vmatprep.subr.bf16.mxu0 0
      %576 = vmatpush1.bf16.msra.mxu0 0
      %577 = vmatprep.subr.bf16.mxu0 0
      %578 = vmatpush1.bf16.msra.mxu0 0
      %579 = vmatprep.subr.bf16.mxu0 0
      %580 = vmatpush1.bf16.msra.mxu0 0
      %581 = vmatprep.subr.bf16.mxu0 0
      %582 = vmatpush1.bf16.msra.mxu0 0
      %583 = vmatprep.subr.bf16.mxu0 0
      %584 = vmatpush1.bf16.msra.mxu0 0
      %585 = vmatprep.subr.bf16.mxu0 0
      %586 = vmatpush1.bf16.msra.mxu0 0
      %587 = vmatprep.subr.bf16.mxu0 0
      %588 = vmatpush1.bf16.msra.mxu0 0
      %589 = vmatprep.subr.bf16.mxu0 0
      %590 = vmatpush1.bf16.msra.mxu0 0
      %591 = vmatprep.subr.bf16.mxu0 0
      %592 = vmatpush1.bf16.msra.mxu0 0
      %593 = vmatprep.subr.bf16.mxu0 0
      %594 = vmatpush1.bf16.msra.mxu0 0
      %595 = vmatprep.subr.bf16.mxu0 0
      %596 = vmatpush1.bf16.msra.mxu0 0
      %597 = vmatprep.subr.bf16.mxu0 0
      %598 = vmatpush1.bf16.msra.mxu0 0
      %599 = vmatprep.mubr.bf16.mxu0 0
      %600 = vmatmul.mubr.bf16.gmra.mrb[0].mxu0 %v515
      %v601 = vpop.f32.mrb[0].mxu0
      %v602 = vadd.f32 0.0, %v601
      %v603 = vpop.f32.mrb[0].mxu0
      %v604 = vpop.f32.mrb[0].mxu0
      %v605 = vpop.f32.mrb[0].mxu0
      %606 = vdwg.mxu0
      %v607 = vadd.f32 %v497, %v561
      %v608 = vadd.f32 %v498, %v563
      %v609 = vadd.f32 %v499, %v602
      %s610 = scalar_lea.vmem %s1, 16
      %v611 = vld [vmem:[%s610] sm:$0xf]
      %612 = vrot.lane.b32.xlu0 %v186, 107
      %v613 = vpop.permute.xlu0 %612
      %614 = vrot.lane.b32.xlu0 %v187, 107
      %v615 = vpop.permute.xlu0 %614
      %616 = vrot.lane.b32.xlu0 %v188, 107
      %v617 = vpop.permute.xlu0 %616
      %618 = vrot.lane.b32.xlu0 %v189, 107
      %v619 = vpop.permute.xlu0 %618
      %vm620 = vcmask 875520
      %v621 = vsel %vm620, %v613, %v615
      %v622 = vsel %vm620, %v615, %v617
      %v623 = vsel %vm620, %v617, %v619
      %v625 = vsel %vm202, %v611, 0
      %v628 = vsel %vm206, %v621, 0
      %v631 = vsel %vm206, %v622, 0
      %v634 = vsel %vm206, %v623, 0
      %636 = vmatprep.subr.bf16.mxu0 %v631
      %637 = vmatpush1.bf16.msra.mxu0 %v628
      %638 = vmatprep.subr.bf16.mxu0 0
      %639 = vmatpush1.bf16.msra.mxu0 0
      %640 = vmatprep.subr.bf16.mxu0 0
      %641 = vmatpush1.bf16.msra.mxu0 0
      %642 = vmatprep.subr.bf16.mxu0 0
      %643 = vmatpush1.bf16.msra.mxu0 0
      %644 = vmatprep.subr.bf16.mxu0 0
      %645 = vmatpush1.bf16.msra.mxu0 0
      %646 = vmatprep.subr.bf16.mxu0 0
      %647 = vmatpush1.bf16.msra.mxu0 0
      %648 = vmatprep.subr.bf16.mxu0 0
      %649 = vmatpush1.bf16.msra.mxu0 0
      %650 = vmatprep.subr.bf16.mxu0 0
      %651 = vmatpush1.bf16.msra.mxu0 0
      %652 = vmatprep.subr.bf16.mxu0 0
      %653 = vmatpush1.bf16.msra.mxu0 0
      %654 = vmatprep.subr.bf16.mxu0 0
      %655 = vmatpush1.bf16.msra.mxu0 0
      %656 = vmatprep.subr.bf16.mxu0 0
      %657 = vmatpush1.bf16.msra.mxu0 0
      %658 = vmatprep.subr.bf16.mxu0 0
      %659 = vmatpush1.bf16.msra.mxu0 0
      %660 = vmatprep.subr.bf16.mxu0 0
      %661 = vmatpush1.bf16.msra.mxu0 0
      %662 = vmatprep.subr.bf16.mxu0 0
      %663 = vmatpush1.bf16.msra.mxu0 0
      %664 = vmatprep.subr.bf16.mxu0 0
      %665 = vmatpush1.bf16.msra.mxu0 0
      %666 = vmatprep.subr.bf16.mxu0 0
      %667 = vmatpush1.bf16.msra.mxu0 0
      %668 = vmatprep.mubr.bf16.mxu0 0
      %669 = vmatmul.mubr.bf16.gmra.mrb[0].mxu0 %v625
      %v670 = vpop.f32.mrb[0].mxu0
      %v671 = vadd.f32 0.0, %v670
      %v672 = vpop.f32.mrb[0].mxu0
      %v673 = vadd.f32 0.0, %v672
      %v674 = vpop.f32.mrb[0].mxu0
      %v675 = vpop.f32.mrb[0].mxu0
      %676 = vdwg.mxu0
      %677 = vmatprep.subr.bf16.mxu0 0
      %678 = vmatpush1.bf16.msra.mxu0 %v634
      %679 = vmatprep.subr.bf16.mxu0 0
      %680 = vmatpush1.bf16.msra.mxu0 0
      %681 = vmatprep.subr.bf16.mxu0 0
      %682 = vmatpush1.bf16.msra.mxu0 0
      %683 = vmatprep.subr.bf16.mxu0 0
      %684 = vmatpush1.bf16.msra.mxu0 0
      %685 = vmatprep.subr.bf16.mxu0 0
      %686 = vmatpush1.bf16.msra.mxu0 0
      %687 = vmatprep.subr.bf16.mxu0 0
      %688 = vmatpush1.bf16.msra.mxu0 0
      %689 = vmatprep.subr.bf16.mxu0 0
      %690 = vmatpush1.bf16.msra.mxu0 0
      %691 = vmatprep.subr.bf16.mxu0 0
      %692 = vmatpush1.bf16.msra.mxu0 0
      %693 = vmatprep.subr.bf16.mxu0 0
      %694 = vmatpush1.bf16.msra.mxu0 0
      %695 = vmatprep.subr.bf16.mxu0 0
      %696 = vmatpush1.bf16.msra.mxu0 0
      %697 = vmatprep.subr.bf16.mxu0 0
      %698 = vmatpush1.bf16.msra.mxu0 0
      %699 = vmatprep.subr.bf16.mxu0 0
      %700 = vmatpush1.bf16.msra.mxu0 0
      %701 = vmatprep.subr.bf16.mxu0 0
      %702 = vmatpush1.bf16.msra.mxu0 0
      %703 = vmatprep.subr.bf16.mxu0 0
      %704 = vmatpush1.bf16.msra.mxu0 0
      %705 = vmatprep.subr.bf16.mxu0 0
      %706 = vmatpush1.bf16.msra.mxu0 0
      %707 = vmatprep.subr.bf16.mxu0 0
      %708 = vmatpush1.bf16.msra.mxu0 0
      %709 = vmatprep.mubr.bf16.mxu0 0
      %710 = vmatmul.mubr.bf16.gmra.mrb[0].mxu0 %v625
      %v711 = vpop.f32.mrb[0].mxu0
      %v712 = vadd.f32 0.0, %v711
      %v713 = vpop.f32.mrb[0].mxu0
      %v714 = vpop.f32.mrb[0].mxu0
      %v715 = vpop.f32.mrb[0].mxu0
      %716 = vdwg.mxu0
      %v717 = vadd.f32 %v607, %v671
      %v718 = vadd.f32 %v608, %v673
      %v719 = vadd.f32 %v609, %v712
      %s720 = scalar_lea.vmem %s1, 20
      %v721 = vld [vmem:[%s720] sm:$0xf]
      %722 = vrot.lane.b32.xlu0 %v186, 106
      %v723 = vpop.permute.xlu0 %722
      %724 = vrot.lane.b32.xlu0 %v187, 106
      %v725 = vpop.permute.xlu0 %724
      %726 = vrot.lane.b32.xlu0 %v188, 106
      %v727 = vpop.permute.xlu0 %726
      %728 = vrot.lane.b32.xlu0 %v189, 106
      %v729 = vpop.permute.xlu0 %728
      %vm730 = vcmask 867328
      %v731 = vsel %vm730, %v723, %v725
      %v732 = vsel %vm730, %v725, %v727
      %v733 = vsel %vm730, %v727, %v729
      %v735 = vsel %vm202, %v721, 0
      %v738 = vsel %vm206, %v731, 0
      %v741 = vsel %vm206, %v732, 0
      %v744 = vsel %vm206, %v733, 0
      %746 = vmatprep.subr.bf16.mxu0 %v741
      %747 = vmatpush1.bf16.msra.mxu0 %v738
      %748 = vmatprep.subr.bf16.mxu0 0
      %749 = vmatpush1.bf16.msra.mxu0 0
      %750 = vmatprep.subr.bf16.mxu0 0
      %751 = vmatpush1.bf16.msra.mxu0 0
      %752 = vmatprep.subr.bf16.mxu0 0
      %753 = vmatpush1.bf16.msra.mxu0 0
      %754 = vmatprep.subr.bf16.mxu0 0
      %755 = vmatpush1.bf16.msra.mxu0 0
      %756 = vmatprep.subr.bf16.mxu0 0
      %757 = vmatpush1.bf16.msra.mxu0 0
      %758 = vmatprep.subr.bf16.mxu0 0
      %759 = vmatpush1.bf16.msra.mxu0 0
      %760 = vmatprep.subr.bf16.mxu0 0
      %761 = vmatpush1.bf16.msra.mxu0 0
      %762 = vmatprep.subr.bf16.mxu0 0
      %763 = vmatpush1.bf16.msra.mxu0 0
      %764 = vmatprep.subr.bf16.mxu0 0
      %765 = vmatpush1.bf16.msra.mxu0 0
      %766 = vmatprep.subr.bf16.mxu0 0
      %767 = vmatpush1.bf16.msra.mxu0 0
      %768 = vmatprep.subr.bf16.mxu0 0
      %769 = vmatpush1.bf16.msra.mxu0 0
      %770 = vmatprep.subr.bf16.mxu0 0
      %771 = vmatpush1.bf16.msra.mxu0 0
      %772 = vmatprep.subr.bf16.mxu0 0
      %773 = vmatpush1.bf16.msra.mxu0 0
      %774 = vmatprep.subr.bf16.mxu0 0
      %775 = vmatpush1.bf16.msra.mxu0 0
      %776 = vmatprep.subr.bf16.mxu0 0
      %777 = vmatpush1.bf16.msra.mxu0 0
      %778 = vmatprep.mubr.bf16.mxu0 0
      %779 = vmatmul.mubr.bf16.gmra.mrb[0].mxu0 %v735
      %v780 = vpop.f32.mrb[0].mxu0
      %v781 = vadd.f32 0.0, %v780
      %v782 = vpop.f32.mrb[0].mxu0
      %v783 = vadd.f32 0.0, %v782
      %v784 = vpop.f32.mrb[0].mxu0
      %v785 = vpop.f32.mrb[0].mxu0
      %786 = vdwg.mxu0
      %787 = vmatprep.subr.bf16.mxu0 0
      %788 = vmatpush1.bf16.msra.mxu0 %v744
      %789 = vmatprep.subr.bf16.mxu0 0
      %790 = vmatpush1.bf16.msra.mxu0 0
      %791 = vmatprep.subr.bf16.mxu0 0
      %792 = vmatpush1.bf16.msra.mxu0 0
      %793 = vmatprep.subr.bf16.mxu0 0
      %794 = vmatpush1.bf16.msra.mxu0 0
      %795 = vmatprep.subr.bf16.mxu0 0
      %796 = vmatpush1.bf16.msra.mxu0 0
      %797 = vmatprep.subr.bf16.mxu0 0
      %798 = vmatpush1.bf16.msra.mxu0 0
      %799 = vmatprep.subr.bf16.mxu0 0
      %800 = vmatpush1.bf16.msra.mxu0 0
      %801 = vmatprep.subr.bf16.mxu0 0
      %802 = vmatpush1.bf16.msra.mxu0 0
      %803 = vmatprep.subr.bf16.mxu0 0
      %804 = vmatpush1.bf16.msra.mxu0 0
      %805 = vmatprep.subr.bf16.mxu0 0
      %806 = vmatpush1.bf16.msra.mxu0 0
      %807 = vmatprep.subr.bf16.mxu0 0
      %808 = vmatpush1.bf16.msra.mxu0 0
      %809 = vmatprep.subr.bf16.mxu0 0
      %810 = vmatpush1.bf16.msra.mxu0 0
      %811 = vmatprep.subr.bf16.mxu0 0
      %812 = vmatpush1.bf16.msra.mxu0 0
      %813 = vmatprep.subr.bf16.mxu0 0
      %814 = vmatpush1.bf16.msra.mxu0 0
      %815 = vmatprep.subr.bf16.mxu0 0
      %816 = vmatpush1.bf16.msra.mxu0 0
      %817 = vmatprep.subr.bf16.mxu0 0
      %818 = vmatpush1.bf16.msra.mxu0 0
      %819 = vmatprep.mubr.bf16.mxu0 0
      %820 = vmatmul.mubr.bf16.gmra.mrb[0].mxu0 %v735
      %v821 = vpop.f32.mrb[0].mxu0
      %v822 = vadd.f32 0.0, %v821
      %v823 = vpop.f32.mrb[0].mxu0
      %v824 = vpop.f32.mrb[0].mxu0
      %v825 = vpop.f32.mrb[0].mxu0
      %826 = vdwg.mxu0
      %v827 = vadd.f32 %v717, %v781
      %v828 = vadd.f32 %v718, %v783
      %v829 = vadd.f32 %v719, %v822
      %s830 = scalar_lea.vmem %s1, 24
      %v831 = vld [vmem:[%s830] sm:$0xf]
      %832 = vrot.lane.b32.xlu0 %v186, 88
      %v833 = vpop.permute.xlu0 %832
      %834 = vrot.lane.b32.xlu0 %v187, 88
      %v835 = vpop.permute.xlu0 %834
      %836 = vrot.lane.b32.xlu0 %v188, 88
      %v837 = vpop.permute.xlu0 %836
      %838 = vrot.lane.b32.xlu0 %v189, 88
      %v839 = vpop.permute.xlu0 %838
      %vm840 = vcmask 719872
      %v841 = vsel %vm840, %v833, %v835
      %v842 = vsel %vm840, %v835, %v837
      %v843 = vsel %vm840, %v837, %v839
      %v845 = vsel %vm202, %v831, 0
      %v848 = vsel %vm206, %v841, 0
      %v851 = vsel %vm206, %v842, 0
      %v854 = vsel %vm206, %v843, 0
      %856 = vmatprep.subr.bf16.mxu0 %v851
      %857 = vmatpush1.bf16.msra.mxu0 %v848
      %858 = vmatprep.subr.bf16.mxu0 0
      %859 = vmatpush1.bf16.msra.mxu0 0
      %860 = vmatprep.subr.bf16.mxu0 0
      %861 = vmatpush1.bf16.msra.mxu0 0
      %862 = vmatprep.subr.bf16.mxu0 0
      %863 = vmatpush1.bf16.msra.mxu0 0
      %864 = vmatprep.subr.bf16.mxu0 0
      %865 = vmatpush1.bf16.msra.mxu0 0
      %866 = vmatprep.subr.bf16.mxu0 0
      %867 = vmatpush1.bf16.msra.mxu0 0
      %868 = vmatprep.subr.bf16.mxu0 0
      %869 = vmatpush1.bf16.msra.mxu0 0
      %870 = vmatprep.subr.bf16.mxu0 0
      %871 = vmatpush1.bf16.msra.mxu0 0
      %872 = vmatprep.subr.bf16.mxu0 0
      %873 = vmatpush1.bf16.msra.mxu0 0
      %874 = vmatprep.subr.bf16.mxu0 0
      %875 = vmatpush1.bf16.msra.mxu0 0
      %876 = vmatprep.subr.bf16.mxu0 0
      %877 = vmatpush1.bf16.msra.mxu0 0
      %878 = vmatprep.subr.bf16.mxu0 0
      %879 = vmatpush1.bf16.msra.mxu0 0
      %880 = vmatprep.subr.bf16.mxu0 0
      %881 = vmatpush1.bf16.msra.mxu0 0
      %882 = vmatprep.subr.bf16.mxu0 0
      %883 = vmatpush1.bf16.msra.mxu0 0
      %884 = vmatprep.subr.bf16.mxu0 0
      %885 = vmatpush1.bf16.msra.mxu0 0
      %886 = vmatprep.subr.bf16.mxu0 0
      %887 = vmatpush1.bf16.msra.mxu0 0
      %888 = vmatprep.mubr.bf16.mxu0 0
      %889 = vmatmul.mubr.bf16.gmra.mrb[0].mxu0 %v845
      %v890 = vpop.f32.mrb[0].mxu0
      %v891 = vadd.f32 0.0, %v890
      %v892 = vpop.f32.mrb[0].mxu0
      %v893 = vadd.f32 0.0, %v892
      %v894 = vpop.f32.mrb[0].mxu0
      %v895 = vpop.f32.mrb[0].mxu0
      %896 = vdwg.mxu0
      %897 = vmatprep.subr.bf16.mxu0 0
      %898 = vmatpush1.bf16.msra.mxu0 %v854
      %899 = vmatprep.subr.bf16.mxu0 0
      %900 = vmatpush1.bf16.msra.mxu0 0
      %901 = vmatprep.subr.bf16.mxu0 0
      %902 = vmatpush1.bf16.msra.mxu0 0
      %903 = vmatprep.subr.bf16.mxu0 0
      %904 = vmatpush1.bf16.msra.mxu0 0
      %905 = vmatprep.subr.bf16.mxu0 0
      %906 = vmatpush1.bf16.msra.mxu0 0
      %907 = vmatprep.subr.bf16.mxu0 0
      %908 = vmatpush1.bf16.msra.mxu0 0
      %909 = vmatprep.subr.bf16.mxu0 0
      %910 = vmatpush1.bf16.msra.mxu0 0
      %911 = vmatprep.subr.bf16.mxu0 0
      %912 = vmatpush1.bf16.msra.mxu0 0
      %913 = vmatprep.subr.bf16.mxu0 0
      %914 = vmatpush1.bf16.msra.mxu0 0
      %915 = vmatprep.subr.bf16.mxu0 0
      %916 = vmatpush1.bf16.msra.mxu0 0
      %917 = vmatprep.subr.bf16.mxu0 0
      %918 = vmatpush1.bf16.msra.mxu0 0
      %919 = vmatprep.subr.bf16.mxu0 0
      %920 = vmatpush1.bf16.msra.mxu0 0
      %921 = vmatprep.subr.bf16.mxu0 0
      %922 = vmatpush1.bf16.msra.mxu0 0
      %923 = vmatprep.subr.bf16.mxu0 0
      %924 = vmatpush1.bf16.msra.mxu0 0
      %925 = vmatprep.subr.bf16.mxu0 0
      %926 = vmatpush1.bf16.msra.mxu0 0
      %927 = vmatprep.subr.bf16.mxu0 0
      %928 = vmatpush1.bf16.msra.mxu0 0
      %929 = vmatprep.mubr.bf16.mxu0 0
      %930 = vmatmul.mubr.bf16.gmra.mrb[0].mxu0 %v845
      %v931 = vpop.f32.mrb[0].mxu0
      %v932 = vadd.f32 0.0, %v931
      %v933 = vpop.f32.mrb[0].mxu0
      %v934 = vpop.f32.mrb[0].mxu0
      %v935 = vpop.f32.mrb[0].mxu0
      %936 = vdwg.mxu0
      %v937 = vadd.f32 %v827, %v891
      %v938 = vadd.f32 %v828, %v893
      %v939 = vadd.f32 %v829, %v932
      %s940 = scalar_lea.vmem %s1, 28
      %v941 = vld [vmem:[%s940] sm:$0xf]
      %942 = vrot.lane.b32.xlu0 %v186, 87
      %v943 = vpop.permute.xlu0 %942
      %944 = vrot.lane.b32.xlu0 %v187, 87
      %v945 = vpop.permute.xlu0 %944
      %946 = vrot.lane.b32.xlu0 %v188, 87
      %v947 = vpop.permute.xlu0 %946
      %948 = vrot.lane.b32.xlu0 %v189, 87
      %v949 = vpop.permute.xlu0 %948
      %vm950 = vcmask 711680
      %v951 = vsel %vm950, %v943, %v945
      %v952 = vsel %vm950, %v945, %v947
      %v953 = vsel %vm950, %v947, %v949
      %v955 = vsel %vm202, %v941, 0
      %v958 = vsel %vm206, %v951, 0
      %v961 = vsel %vm206, %v952, 0
      %v964 = vsel %vm206, %v953, 0
      %966 = vmatprep.subr.bf16.mxu0 %v961
      %967 = vmatpush1.bf16.msra.mxu0 %v958
      %968 = vmatprep.subr.bf16.mxu0 0
      %969 = vmatpush1.bf16.msra.mxu0 0
      %970 = vmatprep.subr.bf16.mxu0 0
      %971 = vmatpush1.bf16.msra.mxu0 0
      %972 = vmatprep.subr.bf16.mxu0 0
      %973 = vmatpush1.bf16.msra.mxu0 0
      %974 = vmatprep.subr.bf16.mxu0 0
      %975 = vmatpush1.bf16.msra.mxu0 0
      %976 = vmatprep.subr.bf16.mxu0 0
      %977 = vmatpush1.bf16.msra.mxu0 0
      %978 = vmatprep.subr.bf16.mxu0 0
      %979 = vmatpush1.bf16.msra.mxu0 0
      %980 = vmatprep.subr.bf16.mxu0 0
      %981 = vmatpush1.bf16.msra.mxu0 0
      %982 = vmatprep.subr.bf16.mxu0 0
      %983 = vmatpush1.bf16.msra.mxu0 0
      %984 = vmatprep.subr.bf16.mxu0 0
      %985 = vmatpush1.bf16.msra.mxu0 0
      %986 = vmatprep.subr.bf16.mxu0 0
      %987 = vmatpush1.bf16.msra.mxu0 0
      %988 = vmatprep.subr.bf16.mxu0 0
      %989 = vmatpush1.bf16.msra.mxu0 0
      %990 = vmatprep.subr.bf16.mxu0 0
      %991 = vmatpush1.bf16.msra.mxu0 0
      %992 = vmatprep.subr.bf16.mxu0 0
      %993 = vmatpush1.bf16.msra.mxu0 0
      %994 = vmatprep.subr.bf16.mxu0 0
      %995 = vmatpush1.bf16.msra.mxu0 0
      %996 = vmatprep.subr.bf16.mxu0 0
      %997 = vmatpush1.bf16.msra.mxu0 0
      %998 = vmatprep.mubr.bf16.mxu0 0
      %999 = vmatmul.mubr.bf16.gmra.mrb[0].mxu0 %v955
      %v1000 = vpop.f32.mrb[0].mxu0
      %v1001 = vadd.f32 0.0, %v1000
      %v1002 = vpop.f32.mrb[0].mxu0
      %v1003 = vadd.f32 0.0, %v1002
      %v1004 = vpop.f32.mrb[0].mxu0
      %v1005 = vpop.f32.mrb[0].mxu0
      %1006 = vdwg.mxu0
      %1007 = vmatprep.subr.bf16.mxu0 0
      %1008 = vmatpush1.bf16.msra.mxu0 %v964
      %1009 = vmatprep.subr.bf16.mxu0 0
      %1010 = vmatpush1.bf16.msra.mxu0 0
      %1011 = vmatprep.subr.bf16.mxu0 0
      %1012 = vmatpush1.bf16.msra.mxu0 0
      %1013 = vmatprep.subr.bf16.mxu0 0
      %1014 = vmatpush1.bf16.msra.mxu0 0
      %1015 = vmatprep.subr.bf16.mxu0 0
      %1016 = vmatpush1.bf16.msra.mxu0 0
      %1017 = vmatprep.subr.bf16.mxu0 0
      %1018 = vmatpush1.bf16.msra.mxu0 0
      %1019 = vmatprep.subr.bf16.mxu0 0
      %1020 = vmatpush1.bf16.msra.mxu0 0
      %1021 = vmatprep.subr.bf16.mxu0 0
      %1022 = vmatpush1.bf16.msra.mxu0 0
      %1023 = vmatprep.subr.bf16.mxu0 0
      %1024 = vmatpush1.bf16.msra.mxu0 0
      %1025 = vmatprep.subr.bf16.mxu0 0
      %1026 = vmatpush1.bf16.msra.mxu0 0
      %1027 = vmatprep.subr.bf16.mxu0 0
      %1028 = vmatpush1.bf16.msra.mxu0 0
      %1029 = vmatprep.subr.bf16.mxu0 0
      %1030 = vmatpush1.bf16.msra.mxu0 0
      %1031 = vmatprep.subr.bf16.mxu0 0
      %1032 = vmatpush1.bf16.msra.mxu0 0
      %1033 = vmatprep.subr.bf16.mxu0 0
      %1034 = vmatpush1.bf16.msra.mxu0 0
      %1035 = vmatprep.subr.bf16.mxu0 0
      %1036 = vmatpush1.bf16.msra.mxu0 0
      %1037 = vmatprep.subr.bf16.mxu0 0
      %1038 = vmatpush1.bf16.msra.mxu0 0
      %1039 = vmatprep.mubr.bf16.mxu0 0
      %1040 = vmatmul.mubr.bf16.gmra.mrb[0].mxu0 %v955
      %v1041 = vpop.f32.mrb[0].mxu0
      %v1042 = vadd.f32 0.0, %v1041
      %v1043 = vpop.f32.mrb[0].mxu0
      %v1044 = vpop.f32.mrb[0].mxu0
      %v1045 = vpop.f32.mrb[0].mxu0
      %1046 = vdwg.mxu0
      %v1047 = vadd.f32 %v937, %v1001
      %v1048 = vadd.f32 %v938, %v1003
      %v1049 = vadd.f32 %v939, %v1042
      %s1050 = scalar_lea.vmem %s1, 32
      %v1051 = vld [vmem:[%s1050] sm:$0xf]
      %1052 = vrot.lane.b32.xlu0 %v186, 86
      %v1053 = vpop.permute.xlu0 %1052
      %1054 = vrot.lane.b32.xlu0 %v187, 86
      %v1055 = vpop.permute.xlu0 %1054
      %1056 = vrot.lane.b32.xlu0 %v188, 86
      %v1057 = vpop.permute.xlu0 %1056
      %1058 = vrot.lane.b32.xlu0 %v189, 86
      %v1059 = vpop.permute.xlu0 %1058
      %vm1060 = vcmask 703488
      %v1061 = vsel %vm1060, %v1053, %v1055
      %v1062 = vsel %vm1060, %v1055, %v1057
      %v1063 = vsel %vm1060, %v1057, %v1059
      %v1065 = vsel %vm202, %v1051, 0
      %v1068 = vsel %vm206, %v1061, 0
      %v1071 = vsel %vm206, %v1062, 0
      %v1074 = vsel %vm206, %v1063, 0
      %1076 = vmatprep.subr.bf16.mxu0 %v1071
      %1077 = vmatpush1.bf16.msra.mxu0 %v1068
      %1078 = vmatprep.subr.bf16.mxu0 0
      %1079 = vmatpush1.bf16.msra.mxu0 0
      %1080 = vmatprep.subr.bf16.mxu0 0
      %1081 = vmatpush1.bf16.msra.mxu0 0
      %1082 = vmatprep.subr.bf16.mxu0 0
      %1083 = vmatpush1.bf16.msra.mxu0 0
      %1084 = vmatprep.subr.bf16.mxu0 0
      %1085 = vmatpush1.bf16.msra.mxu0 0
      %1086 = vmatprep.subr.bf16.mxu0 0
      %1087 = vmatpush1.bf16.msra.mxu0 0
      %1088 = vmatprep.subr.bf16.mxu0 0
      %1089 = vmatpush1.bf16.msra.mxu0 0
      %1090 = vmatprep.subr.bf16.mxu0 0
      %1091 = vmatpush1.bf16.msra.mxu0 0
      %1092 = vmatprep.subr.bf16.mxu0 0
      %1093 = vmatpush1.bf16.msra.mxu0 0
      %1094 = vmatprep.subr.bf16.mxu0 0
      %1095 = vmatpush1.bf16.msra.mxu0 0
      %1096 = vmatprep.subr.bf16.mxu0 0
      %1097 = vmatpush1.bf16.msra.mxu0 0
      %1098 = vmatprep.subr.bf16.mxu0 0
      %1099 = vmatpush1.bf16.msra.mxu0 0
      %1100 = vmatprep.subr.bf16.mxu0 0
      %1101 = vmatpush1.bf16.msra.mxu0 0
      %1102 = vmatprep.subr.bf16.mxu0 0
      %1103 = vmatpush1.bf16.msra.mxu0 0
      %1104 = vmatprep.subr.bf16.mxu0 0
      %1105 = vmatpush1.bf16.msra.mxu0 0
      %1106 = vmatprep.subr.bf16.mxu0 0
      %1107 = vmatpush1.bf16.msra.mxu0 0
      %1108 = vmatprep.mubr.bf16.mxu0 0
      %1109 = vmatmul.mubr.bf16.gmra.mrb[0].mxu0 %v1065
      %v1110 = vpop.f32.mrb[0].mxu0
      %v1111 = vadd.f32 0.0, %v1110
      %v1112 = vpop.f32.mrb[0].mxu0
      %v1113 = vadd.f32 0.0, %v1112
      %v1114 = vpop.f32.mrb[0].mxu0
      %v1115 = vpop.f32.mrb[0].mxu0
      %1116 = vdwg.mxu0
      %1117 = vmatprep.subr.bf16.mxu0 0
      %1118 = vmatpush1.bf16.msra.mxu0 %v1074
      %1119 = vmatprep.subr.bf16.mxu0 0
      %1120 = vmatpush1.bf16.msra.mxu0 0
      %1121 = vmatprep.subr.bf16.mxu0 0
      %1122 = vmatpush1.bf16.msra.mxu0 0
      %1123 = vmatprep.subr.bf16.mxu0 0
      %1124 = vmatpush1.bf16.msra.mxu0 0
      %1125 = vmatprep.subr.bf16.mxu0 0
      %1126 = vmatpush1.bf16.msra.mxu0 0
      %1127 = vmatprep.subr.bf16.mxu0 0
      %1128 = vmatpush1.bf16.msra.mxu0 0
      %1129 = vmatprep.subr.bf16.mxu0 0
      %1130 = vmatpush1.bf16.msra.mxu0 0
      %1131 = vmatprep.subr.bf16.mxu0 0
      %1132 = vmatpush1.bf16.msra.mxu0 0
      %1133 = vmatprep.subr.bf16.mxu0 0
      %1134 = vmatpush1.bf16.msra.mxu0 0
      %1135 = vmatprep.subr.bf16.mxu0 0
      %1136 = vmatpush1.bf16.msra.mxu0 0
      %1137 = vmatprep.subr.bf16.mxu0 0
      %1138 = vmatpush1.bf16.msra.mxu0 0
      %1139 = vmatprep.subr.bf16.mxu0 0
      %1140 = vmatpush1.bf16.msra.mxu0 0
      %1141 = vmatprep.subr.bf16.mxu0 0
      %1142 = vmatpush1.bf16.msra.mxu0 0
      %1143 = vmatprep.subr.bf16.mxu0 0
      %1144 = vmatpush1.bf16.msra.mxu0 0
      %1145 = vmatprep.subr.bf16.mxu0 0
      %1146 = vmatpush1.bf16.msra.mxu0 0
      %1147 = vmatprep.subr.bf16.mxu0 0
      %1148 = vmatpush1.bf16.msra.mxu0 0
      %1149 = vmatprep.mubr.bf16.mxu0 0
      %1150 = vmatmul.mubr.bf16.gmra.mrb[0].mxu0 %v1065
      %v1151 = vpop.f32.mrb[0].mxu0
      %v1152 = vadd.f32 0.0, %v1151
      %v1153 = vpop.f32.mrb[0].mxu0
      %v1154 = vpop.f32.mrb[0].mxu0
      %v1155 = vpop.f32.mrb[0].mxu0
      %1156 = vdwg.mxu0
      %v1157 = vadd.f32 %v1047, %v1111
      %v1158 = vadd.f32 %v1048, %v1113
      %v1159 = vadd.f32 %v1049, %v1152
      %v1160 = vld [vmem:[%s2] sm:$0xff]
      %1162 = vset.pattern.permute.xlu0 0
      %1163 = vperm.xlu0 %1162, %v1160
      %v1164 = vpop.permute.xlu0 %1163
      %v1166 = vadd.f32 %v1157, %v1164
      %v1167 = vadd.f32 %v1158, %v1164
      %v1168 = vadd.f32 %v1159, %v1164
      %v1169 = vmax.f32 %v1166, 0.0
      %v1170 = vmax.f32 %v1167, 0.0
      %v1171 = vmax.f32 %v1168, 0.0
      %v1172 = vmin.f32 %v1169, 1.0
      %v1173 = vmin.f32 %v1170, 1.0
      %v1174 = vmin.f32 %v1171, 1.0
      %v1175 = vmul.f32 %v1172, 15.0
      %v1176 = vmul.f32 %v1173, 15.0
      %v1177 = vmul.f32 %v1174, 15.0
      %v1178 = vround.ne.pseudo %v1175
      %v1179 = vround.ne.pseudo %v1176
      %v1180 = vround.ne.pseudo %v1177
      %v1181 = vmul.f32 %v1178, 0.06666667
      %v1182 = vmul.f32 %v1179, 0.06666667
      %v1183 = vmul.f32 %v1180, 0.06666667
      %v1184 = vpack.c.bf16 %v1181, %v1181
      %v1185 = vpack.c.bf16 %v1182, %v1182
      %v1186 = vpack.c.bf16 %v1183, %v1183
      %v1190 = vunpack.c.l.b16 %v1184
      %v1191 = vunpack.c.l.b16 %v1185
      %v1192 = vunpack.c.l.b16 %v1186
      %v1193 = vpack.c.b16 %v1191, %v1190
      %v1194 = vpack.c.b16 %v1192, %v1192
      %1197 = vst [vmem:[%s172] sm:$0xff] %v1193
      %1198 = vst [vmem:[%s172 + $0x8] sm:$0xf] %v1194
      %s1199 = smul.u32 3, %s14
      %p1200 = scmp.lt.s32.totalorder %s1199, 5
      %s1201 = scalar_select %p1200, %s1199, 5
      %s1202 = smul.addr %s1201, 4
      %s1203 = scalar_lea.vmem %s3, %s1202
      // Predicated region
      $region33: #{svhnq_forward.9} parent=31 // pred_check
        %p1204 = pneg %p100
      $region34: #{svhnq_forward.9} parent=31 // pred_check_branch
        %1206 = sbr.rel (%p1204) target = $region36
      $region35: #{svhnq_forward.9} parent=31 // pred_region
        %s1207 = smul.u32 3, %s14
      $region36: #{svhnq_forward.9} parent=31 // pred_fallthru
        _
    $region32: #{svhnq_forward.9} parent=5 // pred_fallthru
      _
    %p1208 = scmp.le.s32.totalorder 2, %s9
    // Predicated region
    $region37: #{svhnq_forward.9} parent=5 // pred_check
      %p1209 = pneg %p1208
    $region38: #{svhnq_forward.9} parent=5 // pred_check_branch
      %1211 = sbr.rel (%p1209) target = $region40
    $region39: #{svhnq_forward.9} parent=5 // pred_region
      %s1212 = ssub.s32 %s9, 2
      // Predicated region
      $region41: #{svhnq_forward.9} parent=39 // pred_check
        %p1213 = pneg %p106
      $region42: #{svhnq_forward.9} parent=39 // pred_check_branch
        %1215 = sbr.rel (%p1213) target = $region44
      $region43: #{svhnq_forward.9} parent=39 // pred_region
        %s1216 = smul.u32 3, %s15
        %p1217 = scmp.lt.s32.totalorder %s1216, 5
        %s1218 = scalar_select %p1217, %s1216, 5
        %s1219 = smul.addr %s1218, 4
        %s1220 = scalar_lea.vmem %s3, %s1219
      $region44: #{svhnq_forward.9} parent=39 // pred_fallthru
        _
    $region40: #{svhnq_forward.9} parent=5 // pred_fallthru
      _
  $region6: #{svhnq_forward.9} parent=0 // loop_footer
    %s13 = sadd.s32 1, %s9
  $region7: #{svhnq_forward.9} parent=0 // loop_footer_branch
    %8 = sbr.rel target = $region3
  $region8: #{svhnq_forward.9} parent=0 // loop_exit
    _

// kernel: svhnq_forward.10
$region0: #{svhnq_forward.10}
  #allocation0 [shape = 'u32[]', space=smem, size = 0x4, offset = 0x4, fixed_abs, tag = 'smem constant byte address 0x4 - core index']
  #allocation1 [shape = 'u32[144,128]{1,0:T(1,128)}', space=vmem, size = 0x12000, scoped, tag = 'internal scratch']
  %s0 = inlined_call_operand.vmem [shape: bf16[8,512], index: 0, kind: input, shape index: {}]
  %s1 = inlined_call_operand.vmem [shape: bf16[9,16,8], index: 1, kind: input, shape index: {}]
  %s2 = inlined_call_operand.vmem [shape: f32[16,1], index: 2, kind: input, shape index: {}]
  %s3 = inlined_call_operand.vmem [shape: bf16[16,256], index: 3, kind: output, shape index: {}]
  %s4 = sld [smem:[#allocation0]]
  $region82: #{svhnq_forward.10} parent=0
    _
  %s6 = ssub.s32 1, %s4
  %s7 = scalar_select 0, %s6, %s4
  $region1: #{svhnq_forward.10} parent=0
    #allocation2 [shape = 'u8[8192]{0}', space=vmem, size = 0x2000, scoped, tag = 'output window, operand 0']
    loop: start=0, step=1, limit=4
    $region2: #{svhnq_forward.10} parent=1 // loop_pre_header
      _
    $region3: #{svhnq_forward.10} parent=1 // loop_header
      %s9 = sphi 0, %s13
      %p10 = scmp.ge.s32.totalorder %s9, 4
      %s19 = sphi 0, %s21
      %s22 = sphi 0, %s19
      %s23 = sphi 0, %s22
      %s39 = sphi 0, %s23
      %s43 = sphi 0, %s43
      %s45 = sphi 0, %s43
      %s46 = sphi 0, %s45
      %s60 = sphi 0, %s46
      %s64 = sphi 0, %s64
      %s66 = sphi 0, %s64
      %s67 = sphi 0, %s66
      %s81 = sphi 0, %s67
      %s87 = sphi 0, %s89
      %s90 = sphi 0, %s87
      %s91 = sphi 0, %s90
      %s107 = sphi 0, %s91
    $region4: #{svhnq_forward.10} parent=1 // loop_header_branch
      %12 = sbr.rel (%p10) target = $region8
    $region5: #{svhnq_forward.10} parent=1 // loop_body
      %s14 = ssub.s32 %s9, 1
      %s15 = ssub.s32 %s9, 2
      %s16 = sadd.s32 %s9, 1
      %s17 = ssub.s32 %s9, %s16
      %p18 = scmp.eq.s32.totalorder %s17, 0
      %s20 = sadd.s32 %s19, 1
      %s21 = scalar_select %p18, %s19, %s20
      %p24 = pneg %p18
      %p25 = scmp.eq.s32.totalorder %s9, 1
      %p26 = por %p24, %p25
      %p27 = scmp.ne.s32.totalorder %s19, %s22
      %p28 = scmp.eq.s32.totalorder %s9, 0
      %p29 = por %p27, %p28
      %p30 = scmp.ne.s32.totalorder %s19, %s22
      %p31 = scmp.eq.s32.totalorder %s14, 1
      %p32 = por %p30, %p31
      %p33 = scmp.ne.s32.totalorder %s22, %s23
      %p34 = scmp.eq.s32.totalorder %s14, 0
      %p35 = por %p33, %p34
      %p36 = scmp.ne.s32.totalorder %s22, %s23
      %p37 = scmp.eq.s32.totalorder %s15, 1
      %p38 = por %p36, %p37
      %p40 = scmp.ne.s32.totalorder %s23, %s39
      %p41 = scmp.eq.s32.totalorder %s15, 0
      %p42 = por %p40, %p41
      %s44 = sadd.s32 %s43, 1
      %p47 = scmp.eq.s32.totalorder %s9, 1
      %p48 = scmp.ne.s32.totalorder %s43, %s45
      %p49 = scmp.eq.s32.totalorder %s9, 0
      %p50 = por %p48, %p49
      %p51 = scmp.ne.s32.totalorder %s43, %s45
      %p52 = scmp.eq.s32.totalorder %s14, 1
      %p53 = por %p51, %p52
      %p54 = scmp.ne.s32.totalorder %s45, %s46
      %p55 = scmp.eq.s32.totalorder %s14, 0
      %p56 = por %p54, %p55
      %p57 = scmp.ne.s32.totalorder %s45, %s46
      %p58 = scmp.eq.s32.totalorder %s15, 1
      %p59 = por %p57, %p58
      %p61 = scmp.ne.s32.totalorder %s46, %s60
      %p62 = scmp.eq.s32.totalorder %s15, 0
      %p63 = por %p61, %p62
      %s65 = sadd.s32 %s64, 1
      %p68 = scmp.eq.s32.totalorder %s9, 1
      %p69 = scmp.ne.s32.totalorder %s64, %s66
      %p70 = scmp.eq.s32.totalorder %s9, 0
      %p71 = por %p69, %p70
      %p72 = scmp.ne.s32.totalorder %s64, %s66
      %p73 = scmp.eq.s32.totalorder %s14, 1
      %p74 = por %p72, %p73
      %p75 = scmp.ne.s32.totalorder %s66, %s67
      %p76 = scmp.eq.s32.totalorder %s14, 0
      %p77 = por %p75, %p76
      %p78 = scmp.ne.s32.totalorder %s66, %s67
      %p79 = scmp.eq.s32.totalorder %s15, 1
      %p80 = por %p78, %p79
      %p82 = scmp.ne.s32.totalorder %s67, %s81
      %p83 = scmp.eq.s32.totalorder %s15, 0
      %p84 = por %p82, %p83
      %s85 = ssub.s32 %s9, %s16
      %p86 = scmp.eq.s32.totalorder %s85, 0
      %s88 = sadd.s32 %s87, 1
      %s89 = scalar_select %p86, %s87, %s88
      %p92 = pneg %p86
      %p93 = scmp.eq.s32.totalorder %s9, 1
      %p94 = por %p92, %p93
      %p95 = scmp.ne.s32.totalorder %s87, %s90
      %p96 = scmp.eq.s32.totalorder %s9, 0
      %p97 = por %p95, %p96
      %p98 = scmp.ne.s32.totalorder %s87, %s90
      %p99 = scmp.eq.s32.totalorder %s14, 1
      %p100 = por %p98, %p99
      %p101 = scmp.ne.s32.totalorder %s90, %s91
      %p102 = scmp.eq.s32.totalorder %s14, 0
      %p103 = por %p101, %p102
      %p104 = scmp.ne.s32.totalorder %s90, %s91
      %p105 = scmp.eq.s32.totalorder %s15, 1
      %p106 = por %p104, %p105
      %p108 = scmp.ne.s32.totalorder %s91, %s107
      %p109 = scmp.eq.s32.totalorder %s15, 0
      %p110 = por %p108, %p109
      %p111 = scmp.le.s32.totalorder 1, %s9
      %p112 = scmp.lt.s32.totalorder %s9, 3
      %p113 = pnand %p111, %p112
      %p114 = pneg %p113
      // Predicated region
      $region9: #{svhnq_forward.10} parent=5 // pred_check
        _
      $region10: #{svhnq_forward.10} parent=5 // pred_check_branch
        %116 = sbr.rel (%p113) target = $region12
      $region11: #{svhnq_forward.10} parent=5 // pred_region
        %s117 = ssub.s32 %s9, 1
        // Predicated region
        $region13: #{svhnq_forward.10} parent=11 // pred_check
          %p118 = pneg %p56
        $region14: #{svhnq_forward.10} parent=11 // pred_check_branch
          %120 = sbr.rel (%p118) target = $region16
        $region15: #{svhnq_forward.10} parent=11 // pred_region
          _
        $region16: #{svhnq_forward.10} parent=11 // pred_fallthru
          _
        // Predicated region
        $region17: #{svhnq_forward.10} parent=11 // pred_check
          %p121 = pneg %p77
        $region18: #{svhnq_forward.10} parent=11 // pred_check_branch
          %123 = sbr.rel (%p121) target = $region20
        $region19: #{svhnq_forward.10} parent=11 // pred_region
          _
        $region20: #{svhnq_forward.10} parent=11 // pred_fallthru
          _
      $region12: #{svhnq_forward.10} parent=5 // pred_fallthru
        _
      %p124 = scmp.lt.s32.totalorder %s9, 2
      // Predicated region
      $region21: #{svhnq_forward.10} parent=5 // pred_check
        %p125 = pneg %p124
      $region22: #{svhnq_forward.10} parent=5 // pred_check_branch
        %127 = sbr.rel (%p125) target = $region24
      $region23: #{svhnq_forward.10} parent=5 // pred_region
        // Predicated region
        $region25: #{svhnq_forward.10} parent=23 // pred_check
          %p128 = pneg %p29
        $region26: #{svhnq_forward.10} parent=23 // pred_check_branch
          %130 = sbr.rel (%p128) target = $region28
        $region27: #{svhnq_forward.10} parent=23 // pred_region
          %s131 = smul.u32 2, %s9
          %p132 = scmp.lt.s32.totalorder %s131, 3
          %s133 = scalar_select %p132, %s131, 3
          %s134 = smul.addr %s133, 4
          %s135 = scalar_lea.vmem %s0, %s134
          %s136 = smul.u32 2, %s9
        $region28: #{svhnq_forward.10} parent=23 // pred_fallthru
          _
      $region24: #{svhnq_forward.10} parent=5 // pred_fallthru
        _
      %p137 = scmp.le.s32.totalorder 1, %s9
      %p138 = scmp.lt.s32.totalorder %s9, 3
      %p139 = pnand %p137, %p138
      %p140 = pneg %p139
      // Predicated region
      $region29: #{svhnq_forward.10} parent=5 // pred_check
        _
      $region30: #{svhnq_forward.10} parent=5 // pred_check_branch
        %142 = sbr.rel (%p139) target = $region32
      $region31: #{svhnq_forward.10} parent=5 // pred_region
        %s143 = ssub.s32 %s9, 1
        %s144 = smul.u32 2, %s14
        %p145 = scmp.lt.s32.totalorder %s144, 3
        %s146 = scalar_select %p145, %s144, 3
        %s147 = smul.addr %s146, 4
        %s148 = scalar_lea.vmem %s0, %s147
        %p149 = pneg %p35
        %p150 = pneg %p32
        %p151 = pneg %p56
        %p152 = pneg %p53
        %p153 = pneg %p77
        %p154 = pneg %p74
        %p155 = pneg %p103
        %p156 = pneg %p100
        %s157 = sand.u32 %s90, 1
        %s158 = sand.u32 %s90, 1
        %s159 = smul.addr %s158, 8
        %s160 = scalar_lea.vmem [#allocation2], %s159
        %s161 = smul.u32 2, %s14
        %p162 = scmp.lt.s32.totalorder %s161, 3
        %s163 = scalar_select %p162, %s161, 3
        %s164 = smul.addr %s163, 4
        %s165 = scalar_lea.vmem %s0, %s164
        %s166 = smul.u32 2, %s14
        %v168 = vld [vmem:[%s165] sm:$0xff]
        %v169 = vld [vmem:[%s1] sm:$0xf]
        %v170 = vld [vmem:[%s1 + $0x4] sm:$0xf]
        %s171 = scalar_lea.vmem %s1, 8
        %v172 = vld [vmem:[%s171] sm:$0xf]
        %v173 = vld [vmem:[%s171 + $0x4] sm:$0xf]
        %v176 = vunpack.c.l.b16 %v172
        %v177 = vunpack.c.l.b16 %v173
        %v178 = vpack.c.b16 %v177, %v176
        %v180 = vunpack.c.l.b16 %v168
        %v181 = vunpack.c.h.b16 %v168
        %v182 = vpack.c.b16 %v180, %v180
        %v183 = vpack.c.b16 %v181, %v181
        %184 = vrot.lane.b32.xlu0 %v182, 127
        %v185 = vpop.permute.xlu0 %184
        %186 = vrot.lane.b32.xlu0 %v183, 127
        %v187 = vpop.permute.xlu0 %186
        %vm188 = vcmask 1039360
        %v189 = vsel %vm188, %v185, %v187
        %vm190 = vcmask 64512
        %v192 = vsel %vm190, %v178, 0
        %vm194 = vcmask 1043456
        %v196 = vsel %vm194, %v189, 0
        %198 = vmatprep.subr.bf16.mxu0 0
        %199 = vmatpush1.bf16.msra.mxu0 %v196
        %200 = vmatprep.subr.bf16.mxu0 0
        %201 = vmatpush1.bf16.msra.mxu0 0
        %202 = vmatprep.subr.bf16.mxu0 0
        %203 = vmatpush1.bf16.msra.mxu0 0
        %204 = vmatprep.subr.bf16.mxu0 0
        %205 = vmatpush1.bf16.msra.mxu0 0
        %206 = vmatprep.subr.bf16.mxu0 0
        %207 = vmatpush1.bf16.msra.mxu0 0
        %208 = vmatprep.subr.bf16.mxu0 0
        %209 = vmatpush1.bf16.msra.mxu0 0
        %210 = vmatprep.subr.bf16.mxu0 0
        %211 = vmatpush1.bf16.msra.mxu0 0
        %212 = vmatprep.subr.bf16.mxu0 0
        %213 = vmatpush1.bf16.msra.mxu0 0
        %214 = vmatprep.subr.bf16.mxu0 0
        %215 = vmatpush1.bf16.msra.mxu0 0
        %216 = vmatprep.subr.bf16.mxu0 0
        %217 = vmatpush1.bf16.msra.mxu0 0
        %218 = vmatprep.subr.bf16.mxu0 0
        %219 = vmatpush1.bf16.msra.mxu0 0
        %220 = vmatprep.subr.bf16.mxu0 0
        %221 = vmatpush1.bf16.msra.mxu0 0
        %222 = vmatprep.subr.bf16.mxu0 0
        %223 = vmatpush1.bf16.msra.mxu0 0
        %224 = vmatprep.subr.bf16.mxu0 0
        %225 = vmatpush1.bf16.msra.mxu0 0
        %226 = vmatprep.subr.bf16.mxu0 0
        %227 = vmatpush1.bf16.msra.mxu0 0
        %228 = vmatprep.subr.bf16.mxu0 0
        %229 = vmatpush1.bf16.msra.mxu0 0
        %230 = vmatprep.mubr.bf16.mxu0 0
        %231 = vmatmul.mubr.bf16.gmra.mrb[0].mxu0 %v192
        %v232 = vpop.f32.mrb[0].mxu0
        %v233 = vadd.f32 0.0, %v232
        %v234 = vpop.f32.mrb[0].mxu0
        %v235 = vpop.f32.mrb[0].mxu0
        %v236 = vadd.f32 0.0, %v235
        %v237 = vpop.f32.mrb[0].mxu0
        %238 = vdwg.mxu0
        %v241 = vunpack.c.l.b16 %v169
        %v242 = vunpack.c.l.b16 %v170
        %v243 = vpack.c.b16 %v242, %v241
        %v245 = vsel %vm190, %v243, 0
        %v248 = vsel %vm194, %v168, 0
        %250 = vmatprep.subr.bf16.mxu0 0
        %251 = vmatpush1.bf16.msra.mxu0 %v248
        %252 = vmatprep.subr.bf16.mxu0 0
        %253 = vmatpush1.bf16.msra.mxu0 0
        %254 = vmatprep.subr.bf16.mxu0 0
        %255 = vmatpush1.bf16.msra.mxu0 0
        %256 = vmatprep.subr.bf16.mxu0 0
        %257 = vmatpush1.bf16.msra.mxu0 0
        %258 = vmatprep.subr.bf16.mxu0 0
        %259 = vmatpush1.bf16.msra.mxu0 0
        %260 = vmatprep.subr.bf16.mxu0 0
        %261 = vmatpush1.bf16.msra.mxu0 0
        %262 = vmatprep.subr.bf16.mxu0 0
        %263 = vmatpush1.bf16.msra.mxu0 0
        %264 = vmatprep.subr.bf16.mxu0 0
        %265 = vmatpush1.bf16.msra.mxu0 0
        %266 = vmatprep.subr.bf16.mxu0 0
        %267 = vmatpush1.bf16.msra.mxu0 0
        %268 = vmatprep.subr.bf16.mxu0 0
        %269 = vmatpush1.bf16.msra.mxu0 0
        %270 = vmatprep.subr.bf16.mxu0 0
        %271 = vmatpush1.bf16.msra.mxu0 0
        %272 = vmatprep.subr.bf16.mxu0 0
        %273 = vmatpush1.bf16.msra.mxu0 0
        %274 = vmatprep.subr.bf16.mxu0 0
        %275 = vmatpush1.bf16.msra.mxu0 0
        %276 = vmatprep.subr.bf16.mxu0 0
        %277 = vmatpush1.bf16.msra.mxu0 0
        %278 = vmatprep.subr.bf16.mxu0 0
        %279 = vmatpush1.bf16.msra.mxu0 0
        %280 = vmatprep.subr.bf16.mxu0 0
        %281 = vmatpush1.bf16.msra.mxu0 0
        %282 = vmatprep.mubr.bf16.mxu0 0
        %283 = vmatmul.mubr.bf16.gmra.mrb[0].mxu0 %v245
        %v284 = vpop.f32.mrb[0].mxu0
        %v285 = vadd.f32 %v233, %v284
        %v286 = vpop.f32.mrb[0].mxu0
        %v287 = vpop.f32.mrb[0].mxu0
        %v288 = vadd.f32 %v236, %v287
        %v289 = vpop.f32.mrb[0].mxu0
        %290 = vdwg.mxu0
        %s291 = scalar_lea.vmem %s1, 16
        %v292 = vld [vmem:[%s291] sm:$0xf]
        %v293 = vld [vmem:[%s291 + $0x4] sm:$0xf]
        %v296 = vunpack.c.l.b16 %v292
        %v297 = vunpack.c.l.b16 %v293
        %v298 = vpack.c.b16 %v297, %v296
        %299 = vrot.lane.b32.xlu0 %v182, 126
        %v300 = vpop.permute.xlu0 %299
        %301 = vrot.lane.b32.xlu0 %v183, 126
        %v302 = vpop.permute.xlu0 %301
        %vm303 = vcmask 1031168
        %v304 = vsel %vm303, %v300, %v302
        %v306 = vsel %vm190, %v298, 0
        %v309 = vsel %vm194, %v304, 0
        %311 = vmatprep.subr.bf16.mxu0 0
        %312 = vmatpush1.bf16.msra.mxu0 %v309
        %313 = vmatprep.subr.bf16.mxu0 0
        %314 = vmatpush1.bf16.msra.mxu0 0
        %315 = vmatprep.subr.bf16.mxu0 0
        %316 = vmatpush1.bf16.msra.mxu0 0
        %317 = vmatprep.subr.bf16.mxu0 0
        %318 = vmatpush1.bf16.msra.mxu0 0
        %319 = vmatprep.subr.bf16.mxu0 0
        %320 = vmatpush1.bf16.msra.mxu0 0
        %321 = vmatprep.subr.bf16.mxu0 0
        %322 = vmatpush1.bf16.msra.mxu0 0
        %323 = vmatprep.subr.bf16.mxu0 0
        %324 = vmatpush1.bf16.msra.mxu0 0
        %325 = vmatprep.subr.bf16.mxu0 0
        %326 = vmatpush1.bf16.msra.mxu0 0
        %327 = vmatprep.subr.bf16.mxu0 0
        %328 = vmatpush1.bf16.msra.mxu0 0
        %329 = vmatprep.subr.bf16.mxu0 0
        %330 = vmatpush1.bf16.msra.mxu0 0
        %331 = vmatprep.subr.bf16.mxu0 0
        %332 = vmatpush1.bf16.msra.mxu0 0
        %333 = vmatprep.subr.bf16.mxu0 0
        %334 = vmatpush1.bf16.msra.mxu0 0
        %335 = vmatprep.subr.bf16.mxu0 0
        %336 = vmatpush1.bf16.msra.mxu0 0
        %337 = vmatprep.subr.bf16.mxu0 0
        %338 = vmatpush1.bf16.msra.mxu0 0
        %339 = vmatprep.subr.bf16.mxu0 0
        %340 = vmatpush1.bf16.msra.mxu0 0
        %341 = vmatprep.subr.bf16.mxu0 0
        %342 = vmatpush1.bf16.msra.mxu0 0
        %343 = vmatprep.mubr.bf16.mxu0 0
        %344 = vmatmul.mubr.bf16.gmra.mrb[0].mxu0 %v306
        %v345 = vpop.f32.mrb[0].mxu0
        %v346 = vadd.f32 0.0, %v345
        %v347 = vpop.f32.mrb[0].mxu0
        %v348 = vpop.f32.mrb[0].mxu0
        %v349 = vadd.f32 0.0, %v348
        %v350 = vpop.f32.mrb[0].mxu0
        %351 = vdwg.mxu0
        %v352 = vadd.f32 %v285, %v346
        %v353 = vadd.f32 %v288, %v349
        %s354 = scalar_lea.vmem %s1, 24
        %v355 = vld [vmem:[%s354] sm:$0xf]
        %v356 = vld [vmem:[%s354 + $0x4] sm:$0xf]
        %v359 = vunpack.c.l.b16 %v355
        %v360 = vunpack.c.l.b16 %v356
        %v361 = vpack.c.b16 %v360, %v359
        %362 = vrot.lane.b32.xlu0 %v182, 119
        %v363 = vpop.permute.xlu0 %362
        %364 = vrot.lane.b32.xlu0 %v183, 119
        %v365 = vpop.permute.xlu0 %364
        %vm366 = vcmask 973824
        %v367 = vsel %vm366, %v363, %v365
        %v369 = vsel %vm190, %v361, 0
        %v372 = vsel %vm194, %v367, 0
        %374 = vmatprep.subr.bf16.mxu0 0
        %375 = vmatpush1.bf16.msra.mxu0 %v372
        %376 = vmatprep.subr.bf16.mxu0 0
        %377 = vmatpush1.bf16.msra.mxu0 0
        %378 = vmatprep.subr.bf16.mxu0 0
        %379 = vmatpush1.bf16.msra.mxu0 0
        %380 = vmatprep.subr.bf16.mxu0 0
        %381 = vmatpush1.bf16.msra.mxu0 0
        %382 = vmatprep.subr.bf16.mxu0 0
        %383 = vmatpush1.bf16.msra.mxu0 0
        %384 = vmatprep.subr.bf16.mxu0 0
        %385 = vmatpush1.bf16.msra.mxu0 0
        %386 = vmatprep.subr.bf16.mxu0 0
        %387 = vmatpush1.bf16.msra.mxu0 0
        %388 = vmatprep.subr.bf16.mxu0 0
        %389 = vmatpush1.bf16.msra.mxu0 0
        %390 = vmatprep.subr.bf16.mxu0 0
        %391 = vmatpush1.bf16.msra.mxu0 0
        %392 = vmatprep.subr.bf16.mxu0 0
        %393 = vmatpush1.bf16.msra.mxu0 0
        %394 = vmatprep.subr.bf16.mxu0 0
        %395 = vmatpush1.bf16.msra.mxu0 0
        %396 = vmatprep.subr.bf16.mxu0 0
        %397 = vmatpush1.bf16.msra.mxu0 0
        %398 = vmatprep.subr.bf16.mxu0 0
        %399 = vmatpush1.bf16.msra.mxu0 0
        %400 = vmatprep.subr.bf16.mxu0 0
        %401 = vmatpush1.bf16.msra.mxu0 0
        %402 = vmatprep.subr.bf16.mxu0 0
        %403 = vmatpush1.bf16.msra.mxu0 0
        %404 = vmatprep.subr.bf16.mxu0 0
        %405 = vmatpush1.bf16.msra.mxu0 0
        %406 = vmatprep.mubr.bf16.mxu0 0
        %407 = vmatmul.mubr.bf16.gmra.mrb[0].mxu0 %v369
        %v408 = vpop.f32.mrb[0].mxu0
        %v409 = vadd.f32 0.0, %v408
        %v410 = vpop.f32.mrb[0].mxu0
        %v411 = vpop.f32.mrb[0].mxu0
        %v412 = vadd.f32 0.0, %v411
        %v413 = vpop.f32.mrb[0].mxu0
        %414 = vdwg.mxu0
        %v415 = vadd.f32 %v352, %v409
        %v416 = vadd.f32 %v353, %v412
        %s417 = scalar_lea.vmem %s1, 32
        %v418 = vld [vmem:[%s417] sm:$0xf]
        %v419 = vld [vmem:[%s417 + $0x4] sm:$0xf]
        %v422 = vunpack.c.l.b16 %v418
        %v423 = vunpack.c.l.b16 %v419
        %v424 = vpack.c.b16 %v423, %v422
        %425 = vrot.lane.b32.xlu0 %v182, 118
        %v426 = vpop.permute.xlu0 %425
        %427 = vrot.lane.b32.xlu0 %v183, 118
        %v428 = vpop.permute.xlu0 %427
        %vm429 = vcmask 965632
        %v430 = vsel %vm429, %v426, %v428
        %v432 = vsel %vm190, %v424, 0
        %v435 = vsel %vm194, %v430, 0
        %437 = vmatprep.subr.bf16.mxu0 0
        %438 = vmatpush1.bf16.msra.mxu0 %v435
        %439 = vmatprep.subr.bf16.mxu0 0
        %440 = vmatpush1.bf16.msra.mxu0 0
        %441 = vmatprep.subr.bf16.mxu0 0
        %442 = vmatpush1.bf16.msra.mxu0 0
        %443 = vmatprep.subr.bf16.mxu0 0
        %444 = vmatpush1.bf16.msra.mxu0 0
        %445 = vmatprep.subr.bf16.mxu0 0
        %446 = vmatpush1.bf16.msra.mxu0 0
        %447 = vmatprep.subr.bf16.mxu0 0
        %448 = vmatpush1.bf16.msra.mxu0 0
        %449 = vmatprep.subr.bf16.mxu0 0
        %450 = vmatpush1.bf16.msra.mxu0 0
        %451 = vmatprep.subr.bf16.mxu0 0
        %452 = vmatpush1.bf16.msra.mxu0 0
        %453 = vmatprep.subr.bf16.mxu0 0
        %454 = vmatpush1.bf16.msra.mxu0 0
        %455 = vmatprep.subr.bf16.mxu0 0
        %456 = vmatpush1.bf16.msra.mxu0 0
        %457 = vmatprep.subr.bf16.mxu0 0
        %458 = vmatpush1.bf16.msra.mxu0 0
        %459 = vmatprep.subr.bf16.mxu0 0
        %460 = vmatpush1.bf16.msra.mxu0 0
        %461 = vmatprep.subr.bf16.mxu0 0
        %462 = vmatpush1.bf16.msra.mxu0 0
        %463 = vmatprep.subr.bf16.mxu0 0
        %464 = vmatpush1.bf16.msra.mxu0 0
        %465 = vmatprep.subr.bf16.mxu0 0
        %466 = vmatpush1.bf16.msra.mxu0 0
        %467 = vmatprep.subr.bf16.mxu0 0
        %468 = vmatpush1.bf16.msra.mxu0 0
        %469 = vmatprep.mubr.bf16.mxu0 0
        %470 = vmatmul.mubr.bf16.gmra.mrb[0].mxu0 %v432
        %v471 = vpop.f32.mrb[0].mxu0
        %v472 = vadd.f32 0.0, %v471
        %v473 = vpop.f32.mrb[0].mxu0
        %v474 = vpop.f32.mrb[0].mxu0
        %v475 = vadd.f32 0.0, %v474
        %v476 = vpop.f32.mrb[0].mxu0
        %477 = vdwg.mxu0
        %v478 = vadd.f32 %v415, %v472
        %v479 = vadd.f32 %v416, %v475
        %s480 = scalar_lea.vmem %s1, 40
        %v481 = vld [vmem:[%s480] sm:$0xf]
        %v482 = vld [vmem:[%s480 + $0x4] sm:$0xf]
        %v485 = vunpack.c.l.b16 %v481
        %v486 = vunpack.c.l.b16 %v482
        %v487 = vpack.c.b16 %v486, %v485
        %488 = vrot.lane.b32.xlu0 %v182, 117
        %v489 = vpop.permute.xlu0 %488
        %490 = vrot.lane.b32.xlu0 %v183, 117
        %v491 = vpop.permute.xlu0 %490
        %vm492 = vcmask 957440
        %v493 = vsel %vm492, %v489, %v491
        %v495 = vsel %vm190, %v487, 0
        %v498 = vsel %vm194, %v493, 0
        %500 = vmatprep.subr.bf16.mxu0 0
        %501 = vmatpush1.bf16.msra.mxu0 %v498
        %502 = vmatprep.subr.bf16.mxu0 0
        %503 = vmatpush1.bf16.msra.mxu0 0
        %504 = vmatprep.subr.bf16.mxu0 0
        %505 = vmatpush1.bf16.msra.mxu0 0
        %506 = vmatprep.subr.bf16.mxu0 0
        %507 = vmatpush1.bf16.msra.mxu0 0
        %508 = vmatprep.subr.bf16.mxu0 0
        %509 = vmatpush1.bf16.msra.mxu0 0
        %510 = vmatprep.subr.bf16.mxu0 0
        %511 = vmatpush1.bf16.msra.mxu0 0
        %512 = vmatprep.subr.bf16.mxu0 0
        %513 = vmatpush1.bf16.msra.mxu0 0
        %514 = vmatprep.subr.bf16.mxu0 0
        %515 = vmatpush1.bf16.msra.mxu0 0
        %516 = vmatprep.subr.bf16.mxu0 0
        %517 = vmatpush1.bf16.msra.mxu0 0
        %518 = vmatprep.subr.bf16.mxu0 0
        %519 = vmatpush1.bf16.msra.mxu0 0
        %520 = vmatprep.subr.bf16.mxu0 0
        %521 = vmatpush1.bf16.msra.mxu0 0
        %522 = vmatprep.subr.bf16.mxu0 0
        %523 = vmatpush1.bf16.msra.mxu0 0
        %524 = vmatprep.subr.bf16.mxu0 0
        %525 = vmatpush1.bf16.msra.mxu0 0
        %526 = vmatprep.subr.bf16.mxu0 0
        %527 = vmatpush1.bf16.msra.mxu0 0
        %528 = vmatprep.subr.bf16.mxu0 0
        %529 = vmatpush1.bf16.msra.mxu0 0
        %530 = vmatprep.subr.bf16.mxu0 0
        %531 = vmatpush1.bf16.msra.mxu0 0
        %532 = vmatprep.mubr.bf16.mxu0 0
        %533 = vmatmul.mubr.bf16.gmra.mrb[0].mxu0 %v495
        %v534 = vpop.f32.mrb[0].mxu0
        %v535 = vadd.f32 0.0, %v534
        %v536 = vpop.f32.mrb[0].mxu0
        %v537 = vpop.f32.mrb[0].mxu0
        %v538 = vadd.f32 0.0, %v537
        %v539 = vpop.f32.mrb[0].mxu0
        %540 = vdwg.mxu0
        %v541 = vadd.f32 %v478, %v535
        %v542 = vadd.f32 %v479, %v538
        %s543 = scalar_lea.vmem %s1, 48
        %v544 = vld [vmem:[%s543] sm:$0xf]
        %v545 = vld [vmem:[%s543 + $0x4] sm:$0xf]
        %v548 = vunpack.c.l.b16 %v544
        %v549 = vunpack.c.l.b16 %v545
        %v550 = vpack.c.b16 %v549, %v548
        %551 = vrot.lane.b32.xlu0 %v182, 110
        %v552 = vpop.permute.xlu0 %551
        %553 = vrot.lane.b32.xlu0 %v183, 110
        %v554 = vpop.permute.xlu0 %553
        %vm555 = vcmask 900096
        %v556 = vsel %vm555, %v552, %v554
        %v558 = vsel %vm190, %v550, 0
        %v561 = vsel %vm194, %v556, 0
        %563 = vmatprep.subr.bf16.mxu0 0
        %564 = vmatpush1.bf16.msra.mxu0 %v561
        %565 = vmatprep.subr.bf16.mxu0 0
        %566 = vmatpush1.bf16.msra.mxu0 0
        %567 = vmatprep.subr.bf16.mxu0 0
        %568 = vmatpush1.bf16.msra.mxu0 0
        %569 = vmatprep.subr.bf16.mxu0 0
        %570 = vmatpush1.bf16.msra.mxu0 0
        %571 = vmatprep.subr.bf16.mxu0 0
        %572 = vmatpush1.bf16.msra.mxu0 0
        %573 = vmatprep.subr.bf16.mxu0 0
        %574 = vmatpush1.bf16.msra.mxu0 0
        %575 = vmatprep.subr.bf16.mxu0 0
        %576 = vmatpush1.bf16.msra.mxu0 0
        %577 = vmatprep.subr.bf16.mxu0 0
        %578 = vmatpush1.bf16.msra.mxu0 0
        %579 = vmatprep.subr.bf16.mxu0 0
        %580 = vmatpush1.bf16.msra.mxu0 0
        %581 = vmatprep.subr.bf16.mxu0 0
        %582 = vmatpush1.bf16.msra.mxu0 0
        %583 = vmatprep.subr.bf16.mxu0 0
        %584 = vmatpush1.bf16.msra.mxu0 0
        %585 = vmatprep.subr.bf16.mxu0 0
        %586 = vmatpush1.bf16.msra.mxu0 0
        %587 = vmatprep.subr.bf16.mxu0 0
        %588 = vmatpush1.bf16.msra.mxu0 0
        %589 = vmatprep.subr.bf16.mxu0 0
        %590 = vmatpush1.bf16.msra.mxu0 0
        %591 = vmatprep.subr.bf16.mxu0 0
        %592 = vmatpush1.bf16.msra.mxu0 0
        %593 = vmatprep.subr.bf16.mxu0 0
        %594 = vmatpush1.bf16.msra.mxu0 0
        %595 = vmatprep.mubr.bf16.mxu0 0
        %596 = vmatmul.mubr.bf16.gmra.mrb[0].mxu0 %v558
        %v597 = vpop.f32.mrb[0].mxu0
        %v598 = vadd.f32 0.0, %v597
        %v599 = vpop.f32.mrb[0].mxu0
        %v600 = vpop.f32.mrb[0].mxu0
        %v601 = vadd.f32 0.0, %v600
        %v602 = vpop.f32.mrb[0].mxu0
        %603 = vdwg.mxu0
        %v604 = vadd.f32 %v541, %v598
        %v605 = vadd.f32 %v542, %v601
        %s606 = scalar_lea.vmem %s1, 56
        %v607 = vld [vmem:[%s606] sm:$0xf]
        %v608 = vld [vmem:[%s606 + $0x4] sm:$0xf]
        %v611 = vunpack.c.l.b16 %v607
        %v612 = vunpack.c.l.b16 %v608
        %v613 = vpack.c.b16 %v612, %v611
        %614 = vrot.lane.b32.xlu0 %v182, 109
        %v615 = vpop.permute.xlu0 %614
        %616 = vrot.lane.b32.xlu0 %v183, 109
        %v617 = vpop.permute.xlu0 %616
        %vm618 = vcmask 891904
        %v619 = vsel %vm618, %v615, %v617
        %v621 = vsel %vm190, %v613, 0
        %v624 = vsel %vm194, %v619, 0
        %626 = vmatprep.subr.bf16.mxu0 0
        %627 = vmatpush1.bf16.msra.mxu0 %v624
        %628 = vmatprep.subr.bf16.mxu0 0
        %629 = vmatpush1.bf16.msra.mxu0 0
        %630 = vmatprep.subr.bf16.mxu0 0
        %631 = vmatpush1.bf16.msra.mxu0 0
        %632 = vmatprep.subr.bf16.mxu0 0
        %633 = vmatpush1.bf16.msra.mxu0 0
        %634 = vmatprep.subr.bf16.mxu0 0
        %635 = vmatpush1.bf16.msra.mxu0 0
        %636 = vmatprep.subr.bf16.mxu0 0
        %637 = vmatpush1.bf16.msra.mxu0 0
        %638 = vmatprep.subr.bf16.mxu0 0
        %639 = vmatpush1.bf16.msra.mxu0 0
        %640 = vmatprep.subr.bf16.mxu0 0
        %641 = vmatpush1.bf16.msra.mxu0 0
        %642 = vmatprep.subr.bf16.mxu0 0
        %643 = vmatpush1.bf16.msra.mxu0 0
        %644 = vmatprep.subr.bf16.mxu0 0
        %645 = vmatpush1.bf16.msra.mxu0 0
        %646 = vmatprep.subr.bf16.mxu0 0
        %647 = vmatpush1.bf16.msra.mxu0 0
        %648 = vmatprep.subr.bf16.mxu0 0
        %649 = vmatpush1.bf16.msra.mxu0 0
        %650 = vmatprep.subr.bf16.mxu0 0
        %651 = vmatpush1.bf16.msra.mxu0 0
        %652 = vmatprep.subr.bf16.mxu0 0
        %653 = vmatpush1.bf16.msra.mxu0 0
        %654 = vmatprep.subr.bf16.mxu0 0
        %655 = vmatpush1.bf16.msra.mxu0 0
        %656 = vmatprep.subr.bf16.mxu0 0
        %657 = vmatpush1.bf16.msra.mxu0 0
        %658 = vmatprep.mubr.bf16.mxu0 0
        %659 = vmatmul.mubr.bf16.gmra.mrb[0].mxu0 %v621
        %v660 = vpop.f32.mrb[0].mxu0
        %v661 = vadd.f32 0.0, %v660
        %v662 = vpop.f32.mrb[0].mxu0
        %v663 = vpop.f32.mrb[0].mxu0
        %v664 = vadd.f32 0.0, %v663
        %v665 = vpop.f32.mrb[0].mxu0
        %666 = vdwg.mxu0
        %v667 = vadd.f32 %v604, %v661
        %v668 = vadd.f32 %v605, %v664
        %s669 = scalar_lea.vmem %s1, 64
        %v670 = vld [vmem:[%s669] sm:$0xf]
        %v671 = vld [vmem:[%s669 + $0x4] sm:$0xf]
        %v674 = vunpack.c.l.b16 %v670
        %v675 = vunpack.c.l.b16 %v671
        %v676 = vpack.c.b16 %v675, %v674
        %677 = vrot.lane.b32.xlu0 %v182, 108
        %v678 = vpop.permute.xlu0 %677
        %679 = vrot.lane.b32.xlu0 %v183, 108
        %v680 = vpop.permute.xlu0 %679
        %vm681 = vcmask 883712
        %v682 = vsel %vm681, %v678, %v680
        %v684 = vsel %vm190, %v676, 0
        %v687 = vsel %vm194, %v682, 0
        %689 = vmatprep.subr.bf16.mxu0 0
        %690 = vmatpush1.bf16.msra.mxu0 %v687
        %691 = vmatprep.subr.bf16.mxu0 0
        %692 = vmatpush1.bf16.msra.mxu0 0
        %693 = vmatprep.subr.bf16.mxu0 0
        %694 = vmatpush1.bf16.msra.mxu0 0
        %695 = vmatprep.subr.bf16.mxu0 0
        %696 = vmatpush1.bf16.msra.mxu0 0
        %697 = vmatprep.subr.bf16.mxu0 0
        %698 = vmatpush1.bf16.msra.mxu0 0
        %699 = vmatprep.subr.bf16.mxu0 0
        %700 = vmatpush1.bf16.msra.mxu0 0
        %701 = vmatprep.subr.bf16.mxu0 0
        %702 = vmatpush1.bf16.msra.mxu0 0
        %703 = vmatprep.subr.bf16.mxu0 0
        %704 = vmatpush1.bf16.msra.mxu0 0
        %705 = vmatprep.subr.bf16.mxu0 0
        %706 = vmatpush1.bf16.msra.mxu0 0
        %707 = vmatprep.subr.bf16.mxu0 0
        %708 = vmatpush1.bf16.msra.mxu0 0
        %709 = vmatprep.subr.bf16.mxu0 0
        %710 = vmatpush1.bf16.msra.mxu0 0
        %711 = vmatprep.subr.bf16.mxu0 0
        %712 = vmatpush1.bf16.msra.mxu0 0
        %713 = vmatprep.subr.bf16.mxu0 0
        %714 = vmatpush1.bf16.msra.mxu0 0
        %715 = vmatprep.subr.bf16.mxu0 0
        %716 = vmatpush1.bf16.msra.mxu0 0
        %717 = vmatprep.subr.bf16.mxu0 0
        %718 = vmatpush1.bf16.msra.mxu0 0
        %719 = vmatprep.subr.bf16.mxu0 0
        %720 = vmatpush1.bf16.msra.mxu0 0
        %721 = vmatprep.mubr.bf16.mxu0 0
        %722 = vmatmul.mubr.bf16.gmra.mrb[0].mxu0 %v684
        %v723 = vpop.f32.mrb[0].mxu0
        %v724 = vadd.f32 0.0, %v723
        %v725 = vpop.f32.mrb[0].mxu0
        %v726 = vpop.f32.mrb[0].mxu0
        %v727 = vadd.f32 0.0, %v726
        %v728 = vpop.f32.mrb[0].mxu0
        %729 = vdwg.mxu0
        %v730 = vadd.f32 %v667, %v724
        %v731 = vadd.f32 %v668, %v727
        %v732 = vld [vmem:[%s2] sm:$0xff]
        %v733 = vld [vmem:[%s2 + $0x8] sm:$0xff]
        %735 = vset.pattern.permute.xlu0 0
        %736 = vperm.xlu0 %735, %v732
        %v737 = vpop.permute.xlu0 %736
        %740 = vset.pattern.permute.xlu0 0
        %741 = vperm.xlu0 %740, %v733
        %v742 = vpop.permute.xlu0 %741
        %v744 = vadd.f32 %v730, %v737
        %v745 = vadd.f32 %v731, %v742
        %v746 = vmax.f32 %v744, 0.0
        %v747 = vmax.f32 %v745, 0.0
        %v748 = vmin.f32 %v746, 1.0
        %v749 = vmin.f32 %v747, 1.0
        %v750 = vmul.f32 %v748, 15.0
        %v751 = vmul.f32 %v749, 15.0
        %v752 = vround.ne.pseudo %v750
        %v753 = vround.ne.pseudo %v751
        %v754 = vmul.f32 %v752, 0.06666667
        %v755 = vmul.f32 %v753, 0.06666667
        %v756 = vpack.c.bf16 %v755, %v754
        %v758 = vunpack.c.l.b16 %v756
        %v759 = vunpack.c.h.b16 %v756
        %v760 = vpack.c.b16 %v758, %v758
        %v761 = vpack.c.b16 %v759, %v759
        %764 = vst [vmem:[%s160] sm:$0xf] %v760
        %765 = vst [vmem:[%s160 + $0x4] sm:$0xf] %v761
        %s766 = sand.u32 %s90, 1
        %s767 = sand.u32 %s90, 1
        %s768 = smul.addr %s767, 8
        %s769 = scalar_lea.vmem [#allocation2], %s768
        // Predicated region
        $region33: #{svhnq_forward.10} parent=31 // pred_check
          %p770 = pneg %p100
        $region34: #{svhnq_forward.10} parent=31 // pred_check_branch
          %772 = sbr.rel (%p770) target = $region36
        $region35: #{svhnq_forward.10} parent=31 // pred_region
          %s773 = smul.addr %s14, 4
          %s774 = scalar_lea.vmem %s3, %s773
          // Predicated region
          $region37: #{svhnq_forward.10} parent=35 // pred_check
            _
          $region38: #{svhnq_forward.10} parent=35 // pred_check_branch
            %776 = sbr.rel (0) target = $region40
          $region39: #{svhnq_forward.10} parent=35 // pred_region
            // Predicated region
            $region41: #{svhnq_forward.10} parent=39 // pred_check
              _
            $region42: #{svhnq_forward.10} parent=39 // pred_check_branch
              %778 = sbr.rel target = $region44
            $region43: #{svhnq_forward.10} parent=39 // pred_region
              // Predicated region
              $region56: #{svhnq_forward.10} parent=43 // pred_check
                _
              $region57: #{svhnq_forward.10} parent=43 // pred_check_branch
                %795 = sbr.rel (0) target = $region59
              $region58: #{svhnq_forward.10} parent=43 // pred_region
                loop: start=0, step=1, limit=1
                $region60: #{svhnq_forward.10} parent=58 // loop_pre_header
                  _
                $region61: #{svhnq_forward.10} parent=58 // loop_header
                  %s797 = sphi 0, %s801
                  %p798 = scmp.ge.s32.totalorder %s797, 1
                  %s802 = sphi %s769, %s769
                  %s803 = sphi %s774, %s774
                $region62: #{svhnq_forward.10} parent=58 // loop_header_branch
                  %800 = sbr.rel (%p798) target = $region66
                $region63: #{svhnq_forward.10} parent=58 // loop_body
                  _
                $region64: #{svhnq_forward.10} parent=58 // loop_footer
                  %s801 = sadd.s32 1, %s797
                $region65: #{svhnq_forward.10} parent=58 // loop_footer_branch
                  %796 = sbr.rel target = $region61
                $region66: #{svhnq_forward.10} parent=58 // loop_exit
                  _
                loop: start=0, step=1, limit=1
                $region67: #{svhnq_forward.10} parent=58 // loop_pre_header
                  _
                $region68: #{svhnq_forward.10} parent=58 // loop_header
                  %s806 = sphi 0, %s810
                  %p807 = scmp.ge.s32.totalorder %s806, 1
                  %s811 = sphi %s769, %s769
                  %s812 = sphi %s774, %s774
                $region69: #{svhnq_forward.10} parent=58 // loop_header_branch
                  %809 = sbr.rel (%p807) target = $region73
                $region70: #{svhnq_forward.10} parent=58 // loop_body
                  %v813 = vld [vmem:[%s811] sm:$0xf]
                  %814 = vst [vmem:[%s812] sm:$0xf] %v813
                  %v815 = vld [vmem:[%s811 + $0x4] sm:$0xf]
                  %816 = vst [vmem:[%s812 + $0x8] sm:$0xf] %v815
                $region71: #{svhnq_forward.10} parent=58 // loop_footer
                  %s810 = sadd.s32 1, %s806
                $region72: #{svhnq_forward.10} parent=58 // loop_footer_branch
                  %805 = sbr.rel target = $region68
                $region73: #{svhnq_forward.10} parent=58 // loop_exit
                  _
              $region59: #{svhnq_forward.10} parent=43 // pred_fallthru
                _
            $region44: #{svhnq_forward.10} parent=39 // pred_fallthru
              _
            // Predicated region
            $region45: #{svhnq_forward.10} parent=39 // pred_check
              _
            $region46: #{svhnq_forward.10} parent=39 // pred_check_branch
              %780 = sbr.rel (0) target = $region48
            $region47: #{svhnq_forward.10} parent=39 // pred_region
              loop: start=0, step=1, limit=1
              $region49: #{svhnq_forward.10} parent=47 // loop_pre_header
                _
              $region50: #{svhnq_forward.10} parent=47 // loop_header
                %s783 = sphi 0, %s787
                %p784 = scmp.ge.s32.totalorder %s783, 1
                %s788 = sphi %s769, %s769
                %s789 = sphi %s774, %s774
              $region51: #{svhnq_forward.10} parent=47 // loop_header_branch
                %786 = sbr.rel (%p784) target = $region55
              $region52: #{svhnq_forward.10} parent=47 // loop_body
                %v790 = vld [vmem:[%s788] sm:$0xf]
                %791 = vst [vmem:[%s789] sm:$0xf] %v790
                %v792 = vld [vmem:[%s788 + $0x4] sm:$0xf]
                %793 = vst [vmem:[%s789 + $0x8] sm:$0xf] %v792
              $region53: #{svhnq_forward.10} parent=47 // loop_footer
                %s787 = sadd.s32 1, %s783
              $region54: #{svhnq_forward.10} parent=47 // loop_footer_branch
                %782 = sbr.rel target = $region50
              $region55: #{svhnq_forward.10} parent=47 // loop_exit
                _
            $region48: #{svhnq_forward.10} parent=39 // pred_fallthru
              _
          $region40: #{svhnq_forward.10} parent=35 // pred_fallthru
            _
          %817 = vnop
        $region36: #{svhnq_forward.10} parent=31 // pred_fallthru
          _
      $region32: #{svhnq_forward.10} parent=5 // pred_fallthru
        _
      %p818 = scmp.le.s32.totalorder 2, %s9
      // Predicated region
      $region74: #{svhnq_forward.10} parent=5 // pred_check
        %p819 = pneg %p818
      $region75: #{svhnq_forward.10} parent=5 // pred_check_branch
        %821 = sbr.rel (%p819) target = $region77
      $region76: #{svhnq_forward.10} parent=5 // pred_region
        %s822 = ssub.s32 %s9, 2
        // Predicated region
        $region78: #{svhnq_forward.10} parent=76 // pred_check
          %p823 = pneg %p106
        $region79: #{svhnq_forward.10} parent=76 // pred_check_branch
          %825 = sbr.rel (%p823) target = $region81
        $region80: #{svhnq_forward.10} parent=76 // pred_region
          %s826 = sand.u32 %s91, 1
          %s827 = sand.u32 %s91, 1
          %s828 = smul.addr %s827, 8
          %s829 = scalar_lea.vmem [#allocation2], %s828
        $region81: #{svhnq_forward.10} parent=76 // pred_fallthru
          _
      $region77: #{svhnq_forward.10} parent=5 // pred_fallthru
        _
    $region6: #{svhnq_forward.10} parent=1 // loop_footer
      %s13 = sadd.s32 1, %s9
    $region7: #{svhnq_forward.10} parent=1 // loop_footer_branch
      %8 = sbr.rel target = $region3
    $region8: #{svhnq_forward.10} parent=1 // loop_exit
      _

// kernel: svhnq_forward.11
$region0: #{svhnq_forward.11}
  #allocation0 [shape = 'u32[]', space=smem, size = 0x4, offset = 0x4, fixed_abs, tag = 'smem constant byte address 0x4 - core index']
  #allocation1 [shape = 'u32[144,128]{1,0:T(1,128)}', space=vmem, size = 0x12000, scoped, tag = 'internal scratch']
  %s0 = inlined_call_operand.vmem [shape: bf16[16,512], index: 0, kind: input, shape index: {}]
  %s1 = inlined_call_operand.vmem [shape: bf16[9,16,16], index: 1, kind: input, shape index: {}]
  %s2 = inlined_call_operand.vmem [shape: f32[16,1], index: 2, kind: input, shape index: {}]
  %s3 = inlined_call_operand.vmem [shape: bf16[16,256], index: 3, kind: output, shape index: {}]
  %s4 = sld [smem:[#allocation0]]
  $region120: #{svhnq_forward.11} parent=0
    _
  %s6 = ssub.s32 1, %s4
  %s7 = scalar_select 0, %s6, %s4
  $region1: #{svhnq_forward.11} parent=0
    #allocation2 [shape = 'u8[16384]{0}', space=vmem, size = 0x4000, scoped, tag = 'input window, operand 0']
    #allocation3 [shape = 'u8[8192]{0}', space=vmem, size = 0x2000, scoped, tag = 'output window, operand 0']
    loop: start=0, step=1, limit=4
    $region2: #{svhnq_forward.11} parent=1 // loop_pre_header
      _
    $region3: #{svhnq_forward.11} parent=1 // loop_header
      %s9 = sphi 0, %s13
      %p10 = scmp.ge.s32.totalorder %s9, 4
      %s19 = sphi 0, %s21
      %s22 = sphi 0, %s19
      %s23 = sphi 0, %s22
      %s39 = sphi 0, %s23
      %s43 = sphi 0, %s43
      %s45 = sphi 0, %s43
      %s46 = sphi 0, %s45
      %s60 = sphi 0, %s46
      %s64 = sphi 0, %s64
      %s66 = sphi 0, %s64
      %s67 = sphi 0, %s66
      %s81 = sphi 0, %s67
      %s87 = sphi 0, %s89
      %s90 = sphi 0, %s87
      %s91 = sphi 0, %s90
      %s107 = sphi 0, %s91
    $region4: #{svhnq_forward.11} parent=1 // loop_header_branch
      %12 = sbr.rel (%p10) target = $region8
    $region5: #{svhnq_forward.11} parent=1 // loop_body
      %s14 = ssub.s32 %s9, 1
      %s15 = ssub.s32 %s9, 2
      %s16 = sadd.s32 %s9, 1
      %s17 = ssub.s32 %s9, %s16
      %p18 = scmp.eq.s32.totalorder %s17, 0
      %s20 = sadd.s32 %s19, 1
      %s21 = scalar_select %p18, %s19, %s20
      %p24 = pneg %p18
      %p25 = scmp.eq.s32.totalorder %s9, 1
      %p26 = por %p24, %p25
      %p27 = scmp.ne.s32.totalorder %s19, %s22
      %p28 = scmp.eq.s32.totalorder %s9, 0
      %p29 = por %p27, %p28
      %p30 = scmp.ne.s32.totalorder %s19, %s22
      %p31 = scmp.eq.s32.totalorder %s14, 1
      %p32 = por %p30, %p31
      %p33 = scmp.ne.s32.totalorder %s22, %s23
      %p34 = scmp.eq.s32.totalorder %s14, 0
      %p35 = por %p33, %p34
      %p36 = scmp.ne.s32.totalorder %s22, %s23
      %p37 = scmp.eq.s32.totalorder %s15, 1
      %p38 = por %p36, %p37
      %p40 = scmp.ne.s32.totalorder %s23, %s39
      %p41 = scmp.eq.s32.totalorder %s15, 0
      %p42 = por %p40, %p41
      %s44 = sadd.s32 %s43, 1
      %p47 = scmp.eq.s32.totalorder %s9, 1
      %p48 = scmp.ne.s32.totalorder %s43, %s45
      %p49 = scmp.eq.s32.totalorder %s9, 0
      %p50 = por %p48, %p49
      %p51 = scmp.ne.s32.totalorder %s43, %s45
      %p52 = scmp.eq.s32.totalorder %s14, 1
      %p53 = por %p51, %p52
      %p54 = scmp.ne.s32.totalorder %s45, %s46
      %p55 = scmp.eq.s32.totalorder %s14, 0
      %p56 = por %p54, %p55
      %p57 = scmp.ne.s32.totalorder %s45, %s46
      %p58 = scmp.eq.s32.totalorder %s15, 1
      %p59 = por %p57, %p58
      %p61 = scmp.ne.s32.totalorder %s46, %s60
      %p62 = scmp.eq.s32.totalorder %s15, 0
      %p63 = por %p61, %p62
      %s65 = sadd.s32 %s64, 1
      %p68 = scmp.eq.s32.totalorder %s9, 1
      %p69 = scmp.ne.s32.totalorder %s64, %s66
      %p70 = scmp.eq.s32.totalorder %s9, 0
      %p71 = por %p69, %p70
      %p72 = scmp.ne.s32.totalorder %s64, %s66
      %p73 = scmp.eq.s32.totalorder %s14, 1
      %p74 = por %p72, %p73
      %p75 = scmp.ne.s32.totalorder %s66, %s67
      %p76 = scmp.eq.s32.totalorder %s14, 0
      %p77 = por %p75, %p76
      %p78 = scmp.ne.s32.totalorder %s66, %s67
      %p79 = scmp.eq.s32.totalorder %s15, 1
      %p80 = por %p78, %p79
      %p82 = scmp.ne.s32.totalorder %s67, %s81
      %p83 = scmp.eq.s32.totalorder %s15, 0
      %p84 = por %p82, %p83
      %s85 = ssub.s32 %s9, %s16
      %p86 = scmp.eq.s32.totalorder %s85, 0
      %s88 = sadd.s32 %s87, 1
      %s89 = scalar_select %p86, %s87, %s88
      %p92 = pneg %p86
      %p93 = scmp.eq.s32.totalorder %s9, 1
      %p94 = por %p92, %p93
      %p95 = scmp.ne.s32.totalorder %s87, %s90
      %p96 = scmp.eq.s32.totalorder %s9, 0
      %p97 = por %p95, %p96
      %p98 = scmp.ne.s32.totalorder %s87, %s90
      %p99 = scmp.eq.s32.totalorder %s14, 1
      %p100 = por %p98, %p99
      %p101 = scmp.ne.s32.totalorder %s90, %s91
      %p102 = scmp.eq.s32.totalorder %s14, 0
      %p103 = por %p101, %p102
      %p104 = scmp.ne.s32.totalorder %s90, %s91
      %p105 = scmp.eq.s32.totalorder %s15, 1
      %p106 = por %p104, %p105
      %p108 = scmp.ne.s32.totalorder %s91, %s107
      %p109 = scmp.eq.s32.totalorder %s15, 0
      %p110 = por %p108, %p109
      %p111 = scmp.le.s32.totalorder 1, %s9
      %p112 = scmp.lt.s32.totalorder %s9, 3
      %p113 = pnand %p111, %p112
      %p114 = pneg %p113
      // Predicated region
      $region9: #{svhnq_forward.11} parent=5 // pred_check
        _
      $region10: #{svhnq_forward.11} parent=5 // pred_check_branch
        %116 = sbr.rel (%p113) target = $region12
      $region11: #{svhnq_forward.11} parent=5 // pred_region
        %s117 = ssub.s32 %s9, 1
        // Predicated region
        $region13: #{svhnq_forward.11} parent=11 // pred_check
          %p118 = pneg %p56
        $region14: #{svhnq_forward.11} parent=11 // pred_check_branch
          %120 = sbr.rel (%p118) target = $region16
        $region15: #{svhnq_forward.11} parent=11 // pred_region
          _
        $region16: #{svhnq_forward.11} parent=11 // pred_fallthru
          _
        // Predicated region
        $region17: #{svhnq_forward.11} parent=11 // pred_check
          %p121 = pneg %p77
        $region18: #{svhnq_forward.11} parent=11 // pred_check_branch
          %123 = sbr.rel (%p121) target = $region20
        $region19: #{svhnq_forward.11} parent=11 // pred_region
          _
        $region20: #{svhnq_forward.11} parent=11 // pred_fallthru
          _
      $region12: #{svhnq_forward.11} parent=5 // pred_fallthru
        _
      %p124 = scmp.lt.s32.totalorder %s9, 2
      // Predicated region
      $region21: #{svhnq_forward.11} parent=5 // pred_check
        %p125 = pneg %p124
      $region22: #{svhnq_forward.11} parent=5 // pred_check_branch
        %127 = sbr.rel (%p125) target = $region24
      $region23: #{svhnq_forward.11} parent=5 // pred_region
        // Predicated region
        $region25: #{svhnq_forward.11} parent=23 // pred_check
          %p128 = pneg %p29
        $region26: #{svhnq_forward.11} parent=23 // pred_check_branch
          %130 = sbr.rel (%p128) target = $region28
        $region27: #{svhnq_forward.11} parent=23 // pred_region
          %s131 = sand.u32 %s19, 1
          %s132 = sand.u32 %s19, 1
          %s133 = smul.addr %s132, 16
          %s134 = scalar_lea.vmem [#allocation2], %s133
          %s135 = smul.u32 2, %s9
          %s136 = smul.addr %s135, 4
          %s137 = scalar_lea.vmem %s0, %s136
          // Predicated region
          $region29: #{svhnq_forward.11} parent=27 // pred_check
            _
          $region30: #{svhnq_forward.11} parent=27 // pred_check_branch
            %139 = sbr.rel (0) target = $region32
          $region31: #{svhnq_forward.11} parent=27 // pred_region
            // Predicated region
            $region33: #{svhnq_forward.11} parent=31 // pred_check
              _
            $region34: #{svhnq_forward.11} parent=31 // pred_check_branch
              %141 = sbr.rel (0) target = $region36
            $region35: #{svhnq_forward.11} parent=31 // pred_region
              // Predicated region
              $region48: #{svhnq_forward.11} parent=35 // pred_check
                _
              $region49: #{svhnq_forward.11} parent=35 // pred_check_branch
                %158 = sbr.rel (0) target = $region51
              $region50: #{svhnq_forward.11} parent=35 // pred_region
                loop: start=0, step=1, limit=1
                $region52: #{svhnq_forward.11} parent=50 // loop_pre_header
                  _
                $region53: #{svhnq_forward.11} parent=50 // loop_header
                  %s160 = sphi 0, %s164
                  %p161 = scmp.ge.s32.totalorder %s160, 1
                  %s165 = sphi %s137, %s137
                  %s166 = sphi %s134, %s134
                $region54: #{svhnq_forward.11} parent=50 // loop_header_branch
                  %163 = sbr.rel (%p161) target = $region58
                $region55: #{svhnq_forward.11} parent=50 // loop_body
                  %v167 = vld [vmem:[%s165] sm:$0xff]
                  %168 = vst [vmem:[%s166] sm:$0xff] %v167
                  %v169 = vld [vmem:[%s165 + $0x10] sm:$0xff]
                  %170 = vst [vmem:[%s166 + $0x8] sm:$0xff] %v169
                $region56: #{svhnq_forward.11} parent=50 // loop_footer
                  %s164 = sadd.s32 1, %s160
                $region57: #{svhnq_forward.11} parent=50 // loop_footer_branch
                  %159 = sbr.rel target = $region53
                $region58: #{svhnq_forward.11} parent=50 // loop_exit
                  _
              $region51: #{svhnq_forward.11} parent=35 // pred_fallthru
                _
              // Predicated region
              $region59: #{svhnq_forward.11} parent=35 // pred_check
                _
              $region60: #{svhnq_forward.11} parent=35 // pred_check_branch
                %172 = sbr.rel target = $region62
              $region61: #{svhnq_forward.11} parent=35 // pred_region
                _
              $region62: #{svhnq_forward.11} parent=35 // pred_fallthru
                _
            $region36: #{svhnq_forward.11} parent=31 // pred_fallthru
              _
            // Predicated region
            $region37: #{svhnq_forward.11} parent=31 // pred_check
              _
            $region38: #{svhnq_forward.11} parent=31 // pred_check_branch
              %143 = sbr.rel target = $region40
            $region39: #{svhnq_forward.11} parent=31 // pred_region
              loop: start=0, step=1, limit=1
              $region41: #{svhnq_forward.11} parent=39 // loop_pre_header
                _
              $region42: #{svhnq_forward.11} parent=39 // loop_header
                %s146 = sphi 0, %s150
                %p147 = scmp.ge.s32.totalorder %s146, 1
                %s151 = sphi %s137, %s137
                %s152 = sphi %s134, %s134
              $region43: #{svhnq_forward.11} parent=39 // loop_header_branch
                %149 = sbr.rel (%p147) target = $region47
              $region44: #{svhnq_forward.11} parent=39 // loop_body
                %v153 = vld [vmem:[%s151] sm:$0xff]
                %154 = vst [vmem:[%s152] sm:$0xff] %v153
                %v155 = vld [vmem:[%s151 + $0x10] sm:$0xff]
                %156 = vst [vmem:[%s152 + $0x8] sm:$0xff] %v155
              $region45: #{svhnq_forward.11} parent=39 // loop_footer
                %s150 = sadd.s32 1, %s146
              $region46: #{svhnq_forward.11} parent=39 // loop_footer_branch
                %145 = sbr.rel target = $region42
              $region47: #{svhnq_forward.11} parent=39 // loop_exit
                _
            $region40: #{svhnq_forward.11} parent=31 // pred_fallthru
              _
          $region32: #{svhnq_forward.11} parent=27 // pred_fallthru
            _
          %173 = vnop
        $region28: #{svhnq_forward.11} parent=23 // pred_fallthru
          _
      $region24: #{svhnq_forward.11} parent=5 // pred_fallthru
        _
      %p174 = scmp.le.s32.totalorder 1, %s9
      %p175 = scmp.lt.s32.totalorder %s9, 3
      %p176 = pnand %p174, %p175
      %p177 = pneg %p176
      // Predicated region
      $region63: #{svhnq_forward.11} parent=5 // pred_check
        _
      $region64: #{svhnq_forward.11} parent=5 // pred_check_branch
        %179 = sbr.rel (%p176) target = $region66
      $region65: #{svhnq_forward.11} parent=5 // pred_region
        %s180 = ssub.s32 %s9, 1
        %s181 = sand.u32 %s22, 1
        %s182 = sand.u32 %s22, 1
        %s183 = smul.addr %s182, 16
        %s184 = scalar_lea.vmem [#allocation2], %s183
        // Predicated region
        $region67: #{svhnq_forward.11} parent=65 // pred_check
          %p185 = pneg %p35
        $region68: #{svhnq_forward.11} parent=65 // pred_check_branch
          %187 = sbr.rel (%p185) target = $region70
        $region69: #{svhnq_forward.11} parent=65 // pred_region
          _
        $region70: #{svhnq_forward.11} parent=65 // pred_fallthru
          _
        %s188 = sand.u32 %s22, 1
        %s189 = sand.u32 %s22, 1
        %s190 = smul.addr %s189, 16
        %s191 = scalar_lea.vmem [#allocation2], %s190
        %p192 = pneg %p35
        %p193 = pneg %p32
        %p194 = pneg %p56
        %p195 = pneg %p53
        %p196 = pneg %p77
        %p197 = pneg %p74
        %p198 = pneg %p103
        %p199 = pneg %p100
        %s200 = sand.u32 %s90, 1
        %s201 = sand.u32 %s90, 1
        %s202 = smul.addr %s201, 8
        %s203 = scalar_lea.vmem [#allocation3], %s202
        %s204 = smul.u32 2, %s14
        %v206 = vld [vmem:[%s184] sm:$0xff]
        %v207 = vld [vmem:[%s184 + $0x8] sm:$0xff]
        %v208 = vld [vmem:[%s1] sm:$0xf]
        %v209 = vld [vmem:[%s1 + $0x4] sm:$0xf]
        %s210 = scalar_lea.vmem %s1, 8
        %v211 = vld [vmem:[%s210] sm:$0xf]
        %v212 = vld [vmem:[%s210 + $0x4] sm:$0xf]
        %v215 = vunpack.c.l.b16 %v211
        %v216 = vunpack.c.l.b16 %v212
        %v217 = vpack.c.b16 %v216, %v215
        %v220 = vunpack.c.l.b16 %v206
        %v221 = vunpack.c.h.b16 %v206
        %v222 = vunpack.c.l.b16 %v207
        %v223 = vunpack.c.h.b16 %v207
        %v224 = vpack.c.b16 %v222, %v220
        %v225 = vpack.c.b16 %v223, %v221
        %226 = vrot.lane.b32.xlu0 %v224, 127
        %v227 = vpop.permute.xlu0 %226
        %228 = vrot.lane.b32.xlu0 %v225, 127
        %v229 = vpop.permute.xlu0 %228
        %vm230 = vcmask 1039360
        %v231 = vsel %vm230, %v227, %v229
        %vm233 = vcmask 130048
        %v235 = vsel %vm233, %v217, 0
        %237 = vmatprep.subr.bf16.mxu0 0
        %238 = vmatpush1.bf16.msra.mxu0 %v231
        %239 = vmatprep.subr.bf16.mxu0 0
        %240 = vmatpush1.bf16.msra.mxu0 0
        %241 = vmatprep.subr.bf16.mxu0 0
        %242 = vmatpush1.bf16.msra.mxu0 0
        %243 = vmatprep.subr.bf16.mxu0 0
        %244 = vmatpush1.bf16.msra.mxu0 0
        %245 = vmatprep.subr.bf16.mxu0 0
        %246 = vmatpush1.bf16.msra.mxu0 0
        %247 = vmatprep.subr.bf16.mxu0 0
        %248 = vmatpush1.bf16.msra.mxu0 0
        %249 = vmatprep.subr.bf16.mxu0 0
        %250 = vmatpush1.bf16.msra.mxu0 0
        %251 = vmatprep.subr.bf16.mxu0 0
        %252 = vmatpush1.bf16.msra.mxu0 0
        %253 = vmatprep.subr.bf16.mxu0 0
        %254 = vmatpush1.bf16.msra.mxu0 0
        %255 = vmatprep.subr.bf16.mxu0 0
        %256 = vmatpush1.bf16.msra.mxu0 0
        %257 = vmatprep.subr.bf16.mxu0 0
        %258 = vmatpush1.bf16.msra.mxu0 0
        %259 = vmatprep.subr.bf16.mxu0 0
        %260 = vmatpush1.bf16.msra.mxu0 0
        %261 = vmatprep.subr.bf16.mxu0 0
        %262 = vmatpush1.bf16.msra.mxu0 0
        %263 = vmatprep.subr.bf16.mxu0 0
        %264 = vmatpush1.bf16.msra.mxu0 0
        %265 = vmatprep.subr.bf16.mxu0 0
        %266 = vmatpush1.bf16.msra.mxu0 0
        %267 = vmatprep.subr.bf16.mxu0 0
        %268 = vmatpush1.bf16.msra.mxu0 0
        %269 = vmatprep.mubr.bf16.mxu0 0
        %270 = vmatmul.mubr.bf16.gmra.mrb[0].mxu0 %v235
        %v271 = vpop.f32.mrb[0].mxu0
        %v272 = vadd.f32 0.0, %v271
        %v273 = vpop.f32.mrb[0].mxu0
        %v274 = vpop.f32.mrb[0].mxu0
        %v275 = vadd.f32 0.0, %v274
        %v276 = vpop.f32.mrb[0].mxu0
        %277 = vdwg.mxu0
        %v280 = vunpack.c.l.b16 %v208
        %v281 = vunpack.c.l.b16 %v209
        %v282 = vpack.c.b16 %v281, %v280
        %v285 = vsel %vm233, %v282, 0
        %287 = vmatprep.subr.bf16.mxu0 0
        %288 = vmatpush1.bf16.msra.mxu0 %v224
        %289 = vmatprep.subr.bf16.mxu0 0
        %290 = vmatpush1.bf16.msra.mxu0 0
        %291 = vmatprep.subr.bf16.mxu0 0
        %292 = vmatpush1.bf16.msra.mxu0 0
        %293 = vmatprep.subr.bf16.mxu0 0
        %294 = vmatpush1.bf16.msra.mxu0 0
        %295 = vmatprep.subr.bf16.mxu0 0
        %296 = vmatpush1.bf16.msra.mxu0 0
        %297 = vmatprep.subr.bf16.mxu0 0
        %298 = vmatpush1.bf16.msra.mxu0 0
        %299 = vmatprep.subr.bf16.mxu0 0
        %300 = vmatpush1.bf16.msra.mxu0 0
        %301 = vmatprep.subr.bf16.mxu0 0
        %302 = vmatpush1.bf16.msra.mxu0 0
        %303 = vmatprep.subr.bf16.mxu0 0
        %304 = vmatpush1.bf16.msra.mxu0 0
        %305 = vmatprep.subr.bf16.mxu0 0
        %306 = vmatpush1.bf16.msra.mxu0 0
        %307 = vmatprep.subr.bf16.mxu0 0
        %308 = vmatpush1.bf16.msra.mxu0 0
        %309 = vmatprep.subr.bf16.mxu0 0
        %310 = vmatpush1.bf16.msra.mxu0 0
        %311 = vmatprep.subr.bf16.mxu0 0
        %312 = vmatpush1.bf16.msra.mxu0 0
        %313 = vmatprep.subr.bf16.mxu0 0
        %314 = vmatpush1.bf16.msra.mxu0 0
        %315 = vmatprep.subr.bf16.mxu0 0
        %316 = vmatpush1.bf16.msra.mxu0 0
        %317 = vmatprep.subr.bf16.mxu0 0
        %318 = vmatpush1.bf16.msra.mxu0 0
        %319 = vmatprep.mubr.bf16.mxu0 0
        %320 = vmatmul.mubr.bf16.gmra.mrb[0].mxu0 %v285
        %v321 = vpop.f32.mrb[0].mxu0
        %v322 = vadd.f32 %v272, %v321
        %v323 = vpop.f32.mrb[0].mxu0
        %v324 = vpop.f32.mrb[0].mxu0
        %v325 = vadd.f32 %v275, %v324
        %v326 = vpop.f32.mrb[0].mxu0
        %327 = vdwg.mxu0
        %s328 = scalar_lea.vmem %s1, 16
        %v329 = vld [vmem:[%s328] sm:$0xf]
        %v330 = vld [vmem:[%s328 + $0x4] sm:$0xf]
        %v333 = vunpack.c.l.b16 %v329
        %v334 = vunpack.c.l.b16 %v330
        %v335 = vpack.c.b16 %v334, %v333
        %336 = vrot.lane.b32.xlu0 %v224, 126
        %v337 = vpop.permute.xlu0 %336
        %338 = vrot.lane.b32.xlu0 %v225, 126
        %v339 = vpop.permute.xlu0 %338
        %vm340 = vcmask 1031168
        %v341 = vsel %vm340, %v337, %v339
        %v344 = vsel %vm233, %v335, 0
        %346 = vmatprep.subr.bf16.mxu0 0
        %347 = vmatpush1.bf16.msra.mxu0 %v341
        %348 = vmatprep.subr.bf16.mxu0 0
        %349 = vmatpush1.bf16.msra.mxu0 0
        %350 = vmatprep.subr.bf16.mxu0 0
        %351 = vmatpush1.bf16.msra.mxu0 0
        %352 = vmatprep.subr.bf16.mxu0 0
        %353 = vmatpush1.bf16.msra.mxu0 0
        %354 = vmatprep.subr.bf16.mxu0 0
        %355 = vmatpush1.bf16.msra.mxu0 0
        %356 = vmatprep.subr.bf16.mxu0 0
        %357 = vmatpush1.bf16.msra.mxu0 0
        %358 = vmatprep.subr.bf16.mxu0 0
        %359 = vmatpush1.bf16.msra.mxu0 0
        %360 = vmatprep.subr.bf16.mxu0 0
        %361 = vmatpush1.bf16.msra.mxu0 0
        %362 = vmatprep.subr.bf16.mxu0 0
        %363 = vmatpush1.bf16.msra.mxu0 0
        %364 = vmatprep.subr.bf16.mxu0 0
        %365 = vmatpush1.bf16.msra.mxu0 0
        %366 = vmatprep.subr.bf16.mxu0 0
        %367 = vmatpush1.bf16.msra.mxu0 0
        %368 = vmatprep.subr.bf16.mxu0 0
        %369 = vmatpush1.bf16.msra.mxu0 0
        %370 = vmatprep.subr.bf16.mxu0 0
        %371 = vmatpush1.bf16.msra.mxu0 0
        %372 = vmatprep.subr.bf16.mxu0 0
        %373 = vmatpush1.bf16.msra.mxu0 0
        %374 = vmatprep.subr.bf16.mxu0 0
        %375 = vmatpush1.bf16.msra.mxu0 0
        %376 = vmatprep.subr.bf16.mxu0 0
        %377 = vmatpush1.bf16.msra.mxu0 0
        %378 = vmatprep.mubr.bf16.mxu0 0
        %379 = vmatmul.mubr.bf16.gmra.mrb[0].mxu0 %v344
        %v380 = vpop.f32.mrb[0].mxu0
        %v381 = vadd.f32 0.0, %v380
        %v382 = vpop.f32.mrb[0].mxu0
        %v383 = vpop.f32.mrb[0].mxu0
        %v384 = vadd.f32 0.0, %v383
        %v385 = vpop.f32.mrb[0].mxu0
        %386 = vdwg.mxu0
        %v387 = vadd.f32 %v322, %v381
        %v388 = vadd.f32 %v325, %v384
        %s389 = scalar_lea.vmem %s1, 24
        %v390 = vld [vmem:[%s389] sm:$0xf]
        %v391 = vld [vmem:[%s389 + $0x4] sm:$0xf]
        %v394 = vunpack.c.l.b16 %v390
        %v395 = vunpack.c.l.b16 %v391
        %v396 = vpack.c.b16 %v395, %v394
        %397 = vrot.lane.b32.xlu0 %v224, 119
        %v398 = vpop.permute.xlu0 %397
        %399 = vrot.lane.b32.xlu0 %v225, 119
        %v400 = vpop.permute.xlu0 %399
        %vm401 = vcmask 973824
        %v402 = vsel %vm401, %v398, %v400
        %v405 = vsel %vm233, %v396, 0
        %407 = vmatprep.subr.bf16.mxu0 0
        %408 = vmatpush1.bf16.msra.mxu0 %v402
        %409 = vmatprep.subr.bf16.mxu0 0
        %410 = vmatpush1.bf16.msra.mxu0 0
        %411 = vmatprep.subr.bf16.mxu0 0
        %412 = vmatpush1.bf16.msra.mxu0 0
        %413 = vmatprep.subr.bf16.mxu0 0
        %414 = vmatpush1.bf16.msra.mxu0 0
        %415 = vmatprep.subr.bf16.mxu0 0
        %416 = vmatpush1.bf16.msra.mxu0 0
        %417 = vmatprep.subr.bf16.mxu0 0
        %418 = vmatpush1.bf16.msra.mxu0 0
        %419 = vmatprep.subr.bf16.mxu0 0
        %420 = vmatpush1.bf16.msra.mxu0 0
        %421 = vmatprep.subr.bf16.mxu0 0
        %422 = vmatpush1.bf16.msra.mxu0 0
        %423 = vmatprep.subr.bf16.mxu0 0
        %424 = vmatpush1.bf16.msra.mxu0 0
        %425 = vmatprep.subr.bf16.mxu0 0
        %426 = vmatpush1.bf16.msra.mxu0 0
        %427 = vmatprep.subr.bf16.mxu0 0
        %428 = vmatpush1.bf16.msra.mxu0 0
        %429 = vmatprep.subr.bf16.mxu0 0
        %430 = vmatpush1.bf16.msra.mxu0 0
        %431 = vmatprep.subr.bf16.mxu0 0
        %432 = vmatpush1.bf16.msra.mxu0 0
        %433 = vmatprep.subr.bf16.mxu0 0
        %434 = vmatpush1.bf16.msra.mxu0 0
        %435 = vmatprep.subr.bf16.mxu0 0
        %436 = vmatpush1.bf16.msra.mxu0 0
        %437 = vmatprep.subr.bf16.mxu0 0
        %438 = vmatpush1.bf16.msra.mxu0 0
        %439 = vmatprep.mubr.bf16.mxu0 0
        %440 = vmatmul.mubr.bf16.gmra.mrb[0].mxu0 %v405
        %v441 = vpop.f32.mrb[0].mxu0
        %v442 = vadd.f32 0.0, %v441
        %v443 = vpop.f32.mrb[0].mxu0
        %v444 = vpop.f32.mrb[0].mxu0
        %v445 = vadd.f32 0.0, %v444
        %v446 = vpop.f32.mrb[0].mxu0
        %447 = vdwg.mxu0
        %v448 = vadd.f32 %v387, %v442
        %v449 = vadd.f32 %v388, %v445
        %s450 = scalar_lea.vmem %s1, 32
        %v451 = vld [vmem:[%s450] sm:$0xf]
        %v452 = vld [vmem:[%s450 + $0x4] sm:$0xf]
        %v455 = vunpack.c.l.b16 %v451
        %v456 = vunpack.c.l.b16 %v452
        %v457 = vpack.c.b16 %v456, %v455
        %458 = vrot.lane.b32.xlu0 %v224, 118
        %v459 = vpop.permute.xlu0 %458
        %460 = vrot.lane.b32.xlu0 %v225, 118
        %v461 = vpop.permute.xlu0 %460
        %vm462 = vcmask 965632
        %v463 = vsel %vm462, %v459, %v461
        %v466 = vsel %vm233, %v457, 0
        %468 = vmatprep.subr.bf16.mxu0 0
        %469 = vmatpush1.bf16.msra.mxu0 %v463
        %470 = vmatprep.subr.bf16.mxu0 0
        %471 = vmatpush1.bf16.msra.mxu0 0
        %472 = vmatprep.subr.bf16.mxu0 0
        %473 = vmatpush1.bf16.msra.mxu0 0
        %474 = vmatprep.subr.bf16.mxu0 0
        %475 = vmatpush1.bf16.msra.mxu0 0
        %476 = vmatprep.subr.bf16.mxu0 0
        %477 = vmatpush1.bf16.msra.mxu0 0
        %478 = vmatprep.subr.bf16.mxu0 0
        %479 = vmatpush1.bf16.msra.mxu0 0
        %480 = vmatprep.subr.bf16.mxu0 0
        %481 = vmatpush1.bf16.msra.mxu0 0
        %482 = vmatprep.subr.bf16.mxu0 0
        %483 = vmatpush1.bf16.msra.mxu0 0
        %484 = vmatprep.subr.bf16.mxu0 0
        %485 = vmatpush1.bf16.msra.mxu0 0
        %486 = vmatprep.subr.bf16.mxu0 0
        %487 = vmatpush1.bf16.msra.mxu0 0
        %488 = vmatprep.subr.bf16.mxu0 0
        %489 = vmatpush1.bf16.msra.mxu0 0
        %490 = vmatprep.subr.bf16.mxu0 0
        %491 = vmatpush1.bf16.msra.mxu0 0
        %492 = vmatprep.subr.bf16.mxu0 0
        %493 = vmatpush1.bf16.msra.mxu0 0
        %494 = vmatprep.subr.bf16.mxu0 0
        %495 = vmatpush1.bf16.msra.mxu0 0
        %496 = vmatprep.subr.bf16.mxu0 0
        %497 = vmatpush1.bf16.msra.mxu0 0
        %498 = vmatprep.subr.bf16.mxu0 0
        %499 = vmatpush1.bf16.msra.mxu0 0
        %500 = vmatprep.mubr.bf16.mxu0 0
        %501 = vmatmul.mubr.bf16.gmra.mrb[0].mxu0 %v466
        %v502 = vpop.f32.mrb[0].mxu0
        %v503 = vadd.f32 0.0, %v502
        %v504 = vpop.f32.mrb[0].mxu0
        %v505 = vpop.f32.mrb[0].mxu0
        %v506 = vadd.f32 0.0, %v505
        %v507 = vpop.f32.mrb[0].mxu0
        %508 = vdwg.mxu0
        %v509 = vadd.f32 %v448, %v503
        %v510 = vadd.f32 %v449, %v506
        %s511 = scalar_lea.vmem %s1, 40
        %v512 = vld [vmem:[%s511] sm:$0xf]
        %v513 = vld [vmem:[%s511 + $0x4] sm:$0xf]
        %v516 = vunpack.c.l.b16 %v512
        %v517 = vunpack.c.l.b16 %v513
        %v518 = vpack.c.b16 %v517, %v516
        %519 = vrot.lane.b32.xlu0 %v224, 117
        %v520 = vpop.permute.xlu0 %519
        %521 = vrot.lane.b32.xlu0 %v225, 117
        %v522 = vpop.permute.xlu0 %521
        %vm523 = vcmask 957440
        %v524 = vsel %vm523, %v520, %v522
        %v527 = vsel %vm233, %v518, 0
        %529 = vmatprep.subr.bf16.mxu0 0
        %530 = vmatpush1.bf16.msra.mxu0 %v524
        %531 = vmatprep.subr.bf16.mxu0 0
        %532 = vmatpush1.bf16.msra.mxu0 0
        %533 = vmatprep.subr.bf16.mxu0 0
        %534 = vmatpush1.bf16.msra.mxu0 0
        %535 = vmatprep.subr.bf16.mxu0 0
        %536 = vmatpush1.bf16.msra.mxu0 0
        %537 = vmatprep.subr.bf16.mxu0 0
        %538 = vmatpush1.bf16.msra.mxu0 0
        %539 = vmatprep.subr.bf16.mxu0 0
        %540 = vmatpush1.bf16.msra.mxu0 0
        %541 = vmatprep.subr.bf16.mxu0 0
        %542 = vmatpush1.bf16.msra.mxu0 0
        %543 = vmatprep.subr.bf16.mxu0 0
        %544 = vmatpush1.bf16.msra.mxu0 0
        %545 = vmatprep.subr.bf16.mxu0 0
        %546 = vmatpush1.bf16.msra.mxu0 0
        %547 = vmatprep.subr.bf16.mxu0 0
        %548 = vmatpush1.bf16.msra.mxu0 0
        %549 = vmatprep.subr.bf16.mxu0 0
        %550 = vmatpush1.bf16.msra.mxu0 0
        %551 = vmatprep.subr.bf16.mxu0 0
        %552 = vmatpush1.bf16.msra.mxu0 0
        %553 = vmatprep.subr.bf16.mxu0 0
        %554 = vmatpush1.bf16.msra.mxu0 0
        %555 = vmatprep.subr.bf16.mxu0 0
        %556 = vmatpush1.bf16.msra.mxu0 0
        %557 = vmatprep.subr.bf16.mxu0 0
        %558 = vmatpush1.bf16.msra.mxu0 0
        %559 = vmatprep.subr.bf16.mxu0 0
        %560 = vmatpush1.bf16.msra.mxu0 0
        %561 = vmatprep.mubr.bf16.mxu0 0
        %562 = vmatmul.mubr.bf16.gmra.mrb[0].mxu0 %v527
        %v563 = vpop.f32.mrb[0].mxu0
        %v564 = vadd.f32 0.0, %v563
        %v565 = vpop.f32.mrb[0].mxu0
        %v566 = vpop.f32.mrb[0].mxu0
        %v567 = vadd.f32 0.0, %v566
        %v568 = vpop.f32.mrb[0].mxu0
        %569 = vdwg.mxu0
        %v570 = vadd.f32 %v509, %v564
        %v571 = vadd.f32 %v510, %v567
        %s572 = scalar_lea.vmem %s1, 48
        %v573 = vld [vmem:[%s572] sm:$0xf]
        %v574 = vld [vmem:[%s572 + $0x4] sm:$0xf]
        %v577 = vunpack.c.l.b16 %v573
        %v578 = vunpack.c.l.b16 %v574
        %v579 = vpack.c.b16 %v578, %v577
        %580 = vrot.lane.b32.xlu0 %v224, 110
        %v581 = vpop.permute.xlu0 %580
        %582 = vrot.lane.b32.xlu0 %v225, 110
        %v583 = vpop.permute.xlu0 %582
        %vm584 = vcmask 900096
        %v585 = vsel %vm584, %v581, %v583
        %v588 = vsel %vm233, %v579, 0
        %590 = vmatprep.subr.bf16.mxu0 0
        %591 = vmatpush1.bf16.msra.mxu0 %v585
        %592 = vmatprep.subr.bf16.mxu0 0
        %593 = vmatpush1.bf16.msra.mxu0 0
        %594 = vmatprep.subr.bf16.mxu0 0
        %595 = vmatpush1.bf16.msra.mxu0 0
        %596 = vmatprep.subr.bf16.mxu0 0
        %597 = vmatpush1.bf16.msra.mxu0 0
        %598 = vmatprep.subr.bf16.mxu0 0
        %599 = vmatpush1.bf16.msra.mxu0 0
        %600 = vmatprep.subr.bf16.mxu0 0
        %601 = vmatpush1.bf16.msra.mxu0 0
        %602 = vmatprep.subr.bf16.mxu0 0
        %603 = vmatpush1.bf16.msra.mxu0 0
        %604 = vmatprep.subr.bf16.mxu0 0
        %605 = vmatpush1.bf16.msra.mxu0 0
        %606 = vmatprep.subr.bf16.mxu0 0
        %607 = vmatpush1.bf16.msra.mxu0 0
        %608 = vmatprep.subr.bf16.mxu0 0
        %609 = vmatpush1.bf16.msra.mxu0 0
        %610 = vmatprep.subr.bf16.mxu0 0
        %611 = vmatpush1.bf16.msra.mxu0 0
        %612 = vmatprep.subr.bf16.mxu0 0
        %613 = vmatpush1.bf16.msra.mxu0 0
        %614 = vmatprep.subr.bf16.mxu0 0
        %615 = vmatpush1.bf16.msra.mxu0 0
        %616 = vmatprep.subr.bf16.mxu0 0
        %617 = vmatpush1.bf16.msra.mxu0 0
        %618 = vmatprep.subr.bf16.mxu0 0
        %619 = vmatpush1.bf16.msra.mxu0 0
        %620 = vmatprep.subr.bf16.mxu0 0
        %621 = vmatpush1.bf16.msra.mxu0 0
        %622 = vmatprep.mubr.bf16.mxu0 0
        %623 = vmatmul.mubr.bf16.gmra.mrb[0].mxu0 %v588
        %v624 = vpop.f32.mrb[0].mxu0
        %v625 = vadd.f32 0.0, %v624
        %v626 = vpop.f32.mrb[0].mxu0
        %v627 = vpop.f32.mrb[0].mxu0
        %v628 = vadd.f32 0.0, %v627
        %v629 = vpop.f32.mrb[0].mxu0
        %630 = vdwg.mxu0
        %v631 = vadd.f32 %v570, %v625
        %v632 = vadd.f32 %v571, %v628
        %s633 = scalar_lea.vmem %s1, 56
        %v634 = vld [vmem:[%s633] sm:$0xf]
        %v635 = vld [vmem:[%s633 + $0x4] sm:$0xf]
        %v638 = vunpack.c.l.b16 %v634
        %v639 = vunpack.c.l.b16 %v635
        %v640 = vpack.c.b16 %v639, %v638
        %641 = vrot.lane.b32.xlu0 %v224, 109
        %v642 = vpop.permute.xlu0 %641
        %643 = vrot.lane.b32.xlu0 %v225, 109
        %v644 = vpop.permute.xlu0 %643
        %vm645 = vcmask 891904
        %v646 = vsel %vm645, %v642, %v644
        %v649 = vsel %vm233, %v640, 0
        %651 = vmatprep.subr.bf16.mxu0 0
        %652 = vmatpush1.bf16.msra.mxu0 %v646
        %653 = vmatprep.subr.bf16.mxu0 0
        %654 = vmatpush1.bf16.msra.mxu0 0
        %655 = vmatprep.subr.bf16.mxu0 0
        %656 = vmatpush1.bf16.msra.mxu0 0
        %657 = vmatprep.subr.bf16.mxu0 0
        %658 = vmatpush1.bf16.msra.mxu0 0
        %659 = vmatprep.subr.bf16.mxu0 0
        %660 = vmatpush1.bf16.msra.mxu0 0
        %661 = vmatprep.subr.bf16.mxu0 0
        %662 = vmatpush1.bf16.msra.mxu0 0
        %663 = vmatprep.subr.bf16.mxu0 0
        %664 = vmatpush1.bf16.msra.mxu0 0
        %665 = vmatprep.subr.bf16.mxu0 0
        %666 = vmatpush1.bf16.msra.mxu0 0
        %667 = vmatprep.subr.bf16.mxu0 0
        %668 = vmatpush1.bf16.msra.mxu0 0
        %669 = vmatprep.subr.bf16.mxu0 0
        %670 = vmatpush1.bf16.msra.mxu0 0
        %671 = vmatprep.subr.bf16.mxu0 0
        %672 = vmatpush1.bf16.msra.mxu0 0
        %673 = vmatprep.subr.bf16.mxu0 0
        %674 = vmatpush1.bf16.msra.mxu0 0
        %675 = vmatprep.subr.bf16.mxu0 0
        %676 = vmatpush1.bf16.msra.mxu0 0
        %677 = vmatprep.subr.bf16.mxu0 0
        %678 = vmatpush1.bf16.msra.mxu0 0
        %679 = vmatprep.subr.bf16.mxu0 0
        %680 = vmatpush1.bf16.msra.mxu0 0
        %681 = vmatprep.subr.bf16.mxu0 0
        %682 = vmatpush1.bf16.msra.mxu0 0
        %683 = vmatprep.mubr.bf16.mxu0 0
        %684 = vmatmul.mubr.bf16.gmra.mrb[0].mxu0 %v649
        %v685 = vpop.f32.mrb[0].mxu0
        %v686 = vadd.f32 0.0, %v685
        %v687 = vpop.f32.mrb[0].mxu0
        %v688 = vpop.f32.mrb[0].mxu0
        %v689 = vadd.f32 0.0, %v688
        %v690 = vpop.f32.mrb[0].mxu0
        %691 = vdwg.mxu0
        %v692 = vadd.f32 %v631, %v686
        %v693 = vadd.f32 %v632, %v689
        %s694 = scalar_lea.vmem %s1, 64
        %v695 = vld [vmem:[%s694] sm:$0xf]
        %v696 = vld [vmem:[%s694 + $0x4] sm:$0xf]
        %v699 = vunpack.c.l.b16 %v695
        %v700 = vunpack.c.l.b16 %v696
        %v701 = vpack.c.b16 %v700, %v699
        %702 = vrot.lane.b32.xlu0 %v224, 108
        %v703 = vpop.permute.xlu0 %702
        %704 = vrot.lane.b32.xlu0 %v225, 108
        %v705 = vpop.permute.xlu0 %704
        %vm706 = vcmask 883712
        %v707 = vsel %vm706, %v703, %v705
        %v710 = vsel %vm233, %v701, 0
        %712 = vmatprep.subr.bf16.mxu0 0
        %713 = vmatpush1.bf16.msra.mxu0 %v707
        %714 = vmatprep.subr.bf16.mxu0 0
        %715 = vmatpush1.bf16.msra.mxu0 0
        %716 = vmatprep.subr.bf16.mxu0 0
        %717 = vmatpush1.bf16.msra.mxu0 0
        %718 = vmatprep.subr.bf16.mxu0 0
        %719 = vmatpush1.bf16.msra.mxu0 0
        %720 = vmatprep.subr.bf16.mxu0 0
        %721 = vmatpush1.bf16.msra.mxu0 0
        %722 = vmatprep.subr.bf16.mxu0 0
        %723 = vmatpush1.bf16.msra.mxu0 0
        %724 = vmatprep.subr.bf16.mxu0 0
        %725 = vmatpush1.bf16.msra.mxu0 0
        %726 = vmatprep.subr.bf16.mxu0 0
        %727 = vmatpush1.bf16.msra.mxu0 0
        %728 = vmatprep.subr.bf16.mxu0 0
        %729 = vmatpush1.bf16.msra.mxu0 0
        %730 = vmatprep.subr.bf16.mxu0 0
        %731 = vmatpush1.bf16.msra.mxu0 0
        %732 = vmatprep.subr.bf16.mxu0 0
        %733 = vmatpush1.bf16.msra.mxu0 0
        %734 = vmatprep.subr.bf16.mxu0 0
        %735 = vmatpush1.bf16.msra.mxu0 0
        %736 = vmatprep.subr.bf16.mxu0 0
        %737 = vmatpush1.bf16.msra.mxu0 0
        %738 = vmatprep.subr.bf16.mxu0 0
        %739 = vmatpush1.bf16.msra.mxu0 0
        %740 = vmatprep.subr.bf16.mxu0 0
        %741 = vmatpush1.bf16.msra.mxu0 0
        %742 = vmatprep.subr.bf16.mxu0 0
        %743 = vmatpush1.bf16.msra.mxu0 0
        %744 = vmatprep.mubr.bf16.mxu0 0
        %745 = vmatmul.mubr.bf16.gmra.mrb[0].mxu0 %v710
        %v746 = vpop.f32.mrb[0].mxu0
        %v747 = vadd.f32 0.0, %v746
        %v748 = vpop.f32.mrb[0].mxu0
        %v749 = vpop.f32.mrb[0].mxu0
        %v750 = vadd.f32 0.0, %v749
        %v751 = vpop.f32.mrb[0].mxu0
        %752 = vdwg.mxu0
        %v753 = vadd.f32 %v692, %v747
        %v754 = vadd.f32 %v693, %v750
        %v755 = vld [vmem:[%s2] sm:$0xff]
        %v756 = vld [vmem:[%s2 + $0x8] sm:$0xff]
        %758 = vset.pattern.permute.xlu0 0
        %759 = vperm.xlu0 %758, %v755
        %v760 = vpop.permute.xlu0 %759
        %763 = vset.pattern.permute.xlu0 0
        %764 = vperm.xlu0 %763, %v756
        %v765 = vpop.permute.xlu0 %764
        %v767 = vadd.f32 %v753, %v760
        %v768 = vadd.f32 %v754, %v765
        %v769 = vmax.f32 %v767, 0.0
        %v770 = vmax.f32 %v768, 0.0
        %v771 = vmin.f32 %v769, 1.0
        %v772 = vmin.f32 %v770, 1.0
        %v773 = vmul.f32 %v771, 15.0
        %v774 = vmul.f32 %v772, 15.0
        %v775 = vround.ne.pseudo %v773
        %v776 = vround.ne.pseudo %v774
        %v777 = vmul.f32 %v775, 0.06666667
        %v778 = vmul.f32 %v776, 0.06666667
        %v779 = vpack.c.bf16 %v778, %v777
        %v781 = vunpack.c.l.b16 %v779
        %v782 = vunpack.c.h.b16 %v779
        %v783 = vpack.c.b16 %v781, %v781
        %v784 = vpack.c.b16 %v782, %v782
        %787 = vst [vmem:[%s203] sm:$0xf] %v783
        %788 = vst [vmem:[%s203 + $0x4] sm:$0xf] %v784
        %s789 = sand.u32 %s90, 1
        %s790 = sand.u32 %s90, 1
        %s791 = smul.addr %s790, 8
        %s792 = scalar_lea.vmem [#allocation3], %s791
        // Predicated region
        $region71: #{svhnq_forward.11} parent=65 // pred_check
          %p793 = pneg %p100
        $region72: #{svhnq_forward.11} parent=65 // pred_check_branch
          %795 = sbr.rel (%p793) target = $region74
        $region73: #{svhnq_forward.11} parent=65 // pred_region
          %s796 = smul.addr %s14, 4
          %s797 = scalar_lea.vmem %s3, %s796
          // Predicated region
          $region75: #{svhnq_forward.11} parent=73 // pred_check
            _
          $region76: #{svhnq_forward.11} parent=73 // pred_check_branch
            %799 = sbr.rel (0) target = $region78
          $region77: #{svhnq_forward.11} parent=73 // pred_region
            // Predicated region
            $region79: #{svhnq_forward.11} parent=77 // pred_check
              _
            $region80: #{svhnq_forward.11} parent=77 // pred_check_branch
              %801 = sbr.rel target = $region82
            $region81: #{svhnq_forward.11} parent=77 // pred_region
              // Predicated region
              $region94: #{svhnq_forward.11} parent=81 // pred_check
                _
              $region95: #{svhnq_forward.11} parent=81 // pred_check_branch
                %818 = sbr.rel (0) target = $region97
              $region96: #{svhnq_forward.11} parent=81 // pred_region
                loop: start=0, step=1, limit=1
                $region98: #{svhnq_forward.11} parent=96 // loop_pre_header
                  _
                $region99: #{svhnq_forward.11} parent=96 // loop_header
                  %s820 = sphi 0, %s824
                  %p821 = scmp.ge.s32.totalorder %s820, 1
                  %s825 = sphi %s792, %s792
                  %s826 = sphi %s797, %s797
                $region100: #{svhnq_forward.11} parent=96 // loop_header_branch
                  %823 = sbr.rel (%p821) target = $region104
                $region101: #{svhnq_forward.11} parent=96 // loop_body
                  _
                $region102: #{svhnq_forward.11} parent=96 // loop_footer
                  %s824 = sadd.s32 1, %s820
                $region103: #{svhnq_forward.11} parent=96 // loop_footer_branch
                  %819 = sbr.rel target = $region99
                $region104: #{svhnq_forward.11} parent=96 // loop_exit
                  _
                loop: start=0, step=1, limit=1
                $region105: #{svhnq_forward.11} parent=96 // loop_pre_header
                  _
                $region106: #{svhnq_forward.11} parent=96 // loop_header
                  %s829 = sphi 0, %s833
                  %p830 = scmp.ge.s32.totalorder %s829, 1
                  %s834 = sphi %s792, %s792
                  %s835 = sphi %s797, %s797
                $region107: #{svhnq_forward.11} parent=96 // loop_header_branch
                  %832 = sbr.rel (%p830) target = $region111
                $region108: #{svhnq_forward.11} parent=96 // loop_body
                  %v836 = vld [vmem:[%s834] sm:$0xf]
                  %837 = vst [vmem:[%s835] sm:$0xf] %v836
                  %v838 = vld [vmem:[%s834 + $0x4] sm:$0xf]
                  %839 = vst [vmem:[%s835 + $0x8] sm:$0xf] %v838
                $region109: #{svhnq_forward.11} parent=96 // loop_footer
                  %s833 = sadd.s32 1, %s829
                $region110: #{svhnq_forward.11} parent=96 // loop_footer_branch
                  %828 = sbr.rel target = $region106
                $region111: #{svhnq_forward.11} parent=96 // loop_exit
                  _
              $region97: #{svhnq_forward.11} parent=81 // pred_fallthru
                _
            $region82: #{svhnq_forward.11} parent=77 // pred_fallthru
              _
            // Predicated region
            $region83: #{svhnq_forward.11} parent=77 // pred_check
              _
            $region84: #{svhnq_forward.11} parent=77 // pred_check_branch
              %803 = sbr.rel (0) target = $region86
            $region85: #{svhnq_forward.11} parent=77 // pred_region
              loop: start=0, step=1, limit=1
              $region87: #{svhnq_forward.11} parent=85 // loop_pre_header
                _
              $region88: #{svhnq_forward.11} parent=85 // loop_header
                %s806 = sphi 0, %s810
                %p807 = scmp.ge.s32.totalorder %s806, 1
                %s811 = sphi %s792, %s792
                %s812 = sphi %s797, %s797
              $region89: #{svhnq_forward.11} parent=85 // loop_header_branch
                %809 = sbr.rel (%p807) target = $region93
              $region90: #{svhnq_forward.11} parent=85 // loop_body
                %v813 = vld [vmem:[%s811] sm:$0xf]
                %814 = vst [vmem:[%s812] sm:$0xf] %v813
                %v815 = vld [vmem:[%s811 + $0x4] sm:$0xf]
                %816 = vst [vmem:[%s812 + $0x8] sm:$0xf] %v815
              $region91: #{svhnq_forward.11} parent=85 // loop_footer
                %s810 = sadd.s32 1, %s806
              $region92: #{svhnq_forward.11} parent=85 // loop_footer_branch
                %805 = sbr.rel target = $region88
              $region93: #{svhnq_forward.11} parent=85 // loop_exit
                _
            $region86: #{svhnq_forward.11} parent=77 // pred_fallthru
              _
          $region78: #{svhnq_forward.11} parent=73 // pred_fallthru
            _
          %840 = vnop
        $region74: #{svhnq_forward.11} parent=65 // pred_fallthru
          _
      $region66: #{svhnq_forward.11} parent=5 // pred_fallthru
        _
      %p841 = scmp.le.s32.totalorder 2, %s9
      // Predicated region
      $region112: #{svhnq_forward.11} parent=5 // pred_check
        %p842 = pneg %p841
      $region113: #{svhnq_forward.11} parent=5 // pred_check_branch
        %844 = sbr.rel (%p842) target = $region115
      $region114: #{svhnq_forward.11} parent=5 // pred_region
        %s845 = ssub.s32 %s9, 2
        // Predicated region
        $region116: #{svhnq_forward.11} parent=114 // pred_check
          %p846 = pneg %p106
        $region117: #{svhnq_forward.11} parent=114 // pred_check_branch
          %848 = sbr.rel (%p846) target = $region119
        $region118: #{svhnq_forward.11} parent=114 // pred_region
          %s849 = sand.u32 %s91, 1
          %s850 = sand.u32 %s91, 1
          %s851 = smul.addr %s850, 8
          %s852 = scalar_lea.vmem [#allocation3], %s851
        $region119: #{svhnq_forward.11} parent=114 // pred_fallthru
          _
      $region115: #{svhnq_forward.11} parent=5 // pred_fallthru
        _
    $region6: #{svhnq_forward.11} parent=1 // loop_footer
      %s13 = sadd.s32 1, %s9
    $region7: #{svhnq_forward.11} parent=1 // loop_footer_branch
      %8 = sbr.rel target = $region3
    $region8: #{svhnq_forward.11} parent=1 // loop_exit
      _

// kernel: svhnq_forward.12
$region0: #{svhnq_forward.12}
  #allocation0 [shape = 'u32[]', space=smem, size = 0x4, offset = 0x4, fixed_abs, tag = 'smem constant byte address 0x4 - core index']
  #allocation1 [shape = 'u32[144,128]{1,0:T(1,128)}', space=vmem, size = 0x12000, scoped, tag = 'internal scratch']
  %s0 = inlined_call_operand.vmem [shape: bf16[16,512], index: 0, kind: input, shape index: {}]
  %s1 = inlined_call_operand.vmem [shape: bf16[9,16,16], index: 1, kind: input, shape index: {}]
  %s2 = inlined_call_operand.vmem [shape: f32[16,1], index: 2, kind: input, shape index: {}]
  %s3 = inlined_call_operand.vmem [shape: bf16[16,256], index: 3, kind: output, shape index: {}]
  %s4 = sld [smem:[#allocation0]]
  $region120: #{svhnq_forward.12} parent=0
    _
  %s6 = ssub.s32 1, %s4
  %s7 = scalar_select 0, %s6, %s4
  $region1: #{svhnq_forward.12} parent=0
    #allocation2 [shape = 'u8[16384]{0}', space=vmem, size = 0x4000, scoped, tag = 'input window, operand 0']
    #allocation3 [shape = 'u8[8192]{0}', space=vmem, size = 0x2000, scoped, tag = 'output window, operand 0']
    loop: start=0, step=1, limit=4
    $region2: #{svhnq_forward.12} parent=1 // loop_pre_header
      _
    $region3: #{svhnq_forward.12} parent=1 // loop_header
      %s9 = sphi 0, %s13
      %p10 = scmp.ge.s32.totalorder %s9, 4
      %s19 = sphi 0, %s21
      %s22 = sphi 0, %s19
      %s23 = sphi 0, %s22
      %s39 = sphi 0, %s23
      %s43 = sphi 0, %s43
      %s45 = sphi 0, %s43
      %s46 = sphi 0, %s45
      %s60 = sphi 0, %s46
      %s64 = sphi 0, %s64
      %s66 = sphi 0, %s64
      %s67 = sphi 0, %s66
      %s81 = sphi 0, %s67
      %s87 = sphi 0, %s89
      %s90 = sphi 0, %s87
      %s91 = sphi 0, %s90
      %s107 = sphi 0, %s91
    $region4: #{svhnq_forward.12} parent=1 // loop_header_branch
      %12 = sbr.rel (%p10) target = $region8
    $region5: #{svhnq_forward.12} parent=1 // loop_body
      %s14 = ssub.s32 %s9, 1
      %s15 = ssub.s32 %s9, 2
      %s16 = sadd.s32 %s9, 1
      %s17 = ssub.s32 %s9, %s16
      %p18 = scmp.eq.s32.totalorder %s17, 0
      %s20 = sadd.s32 %s19, 1
      %s21 = scalar_select %p18, %s19, %s20
      %p24 = pneg %p18
      %p25 = scmp.eq.s32.totalorder %s9, 1
      %p26 = por %p24, %p25
      %p27 = scmp.ne.s32.totalorder %s19, %s22
      %p28 = scmp.eq.s32.totalorder %s9, 0
      %p29 = por %p27, %p28
      %p30 = scmp.ne.s32.totalorder %s19, %s22
      %p31 = scmp.eq.s32.totalorder %s14, 1
      %p32 = por %p30, %p31
      %p33 = scmp.ne.s32.totalorder %s22, %s23
      %p34 = scmp.eq.s32.totalorder %s14, 0
      %p35 = por %p33, %p34
      %p36 = scmp.ne.s32.totalorder %s22, %s23
      %p37 = scmp.eq.s32.totalorder %s15, 1
      %p38 = por %p36, %p37
      %p40 = scmp.ne.s32.totalorder %s23, %s39
      %p41 = scmp.eq.s32.totalorder %s15, 0
      %p42 = por %p40, %p41
      %s44 = sadd.s32 %s43, 1
      %p47 = scmp.eq.s32.totalorder %s9, 1
      %p48 = scmp.ne.s32.totalorder %s43, %s45
      %p49 = scmp.eq.s32.totalorder %s9, 0
      %p50 = por %p48, %p49
      %p51 = scmp.ne.s32.totalorder %s43, %s45
      %p52 = scmp.eq.s32.totalorder %s14, 1
      %p53 = por %p51, %p52
      %p54 = scmp.ne.s32.totalorder %s45, %s46
      %p55 = scmp.eq.s32.totalorder %s14, 0
      %p56 = por %p54, %p55
      %p57 = scmp.ne.s32.totalorder %s45, %s46
      %p58 = scmp.eq.s32.totalorder %s15, 1
      %p59 = por %p57, %p58
      %p61 = scmp.ne.s32.totalorder %s46, %s60
      %p62 = scmp.eq.s32.totalorder %s15, 0
      %p63 = por %p61, %p62
      %s65 = sadd.s32 %s64, 1
      %p68 = scmp.eq.s32.totalorder %s9, 1
      %p69 = scmp.ne.s32.totalorder %s64, %s66
      %p70 = scmp.eq.s32.totalorder %s9, 0
      %p71 = por %p69, %p70
      %p72 = scmp.ne.s32.totalorder %s64, %s66
      %p73 = scmp.eq.s32.totalorder %s14, 1
      %p74 = por %p72, %p73
      %p75 = scmp.ne.s32.totalorder %s66, %s67
      %p76 = scmp.eq.s32.totalorder %s14, 0
      %p77 = por %p75, %p76
      %p78 = scmp.ne.s32.totalorder %s66, %s67
      %p79 = scmp.eq.s32.totalorder %s15, 1
      %p80 = por %p78, %p79
      %p82 = scmp.ne.s32.totalorder %s67, %s81
      %p83 = scmp.eq.s32.totalorder %s15, 0
      %p84 = por %p82, %p83
      %s85 = ssub.s32 %s9, %s16
      %p86 = scmp.eq.s32.totalorder %s85, 0
      %s88 = sadd.s32 %s87, 1
      %s89 = scalar_select %p86, %s87, %s88
      %p92 = pneg %p86
      %p93 = scmp.eq.s32.totalorder %s9, 1
      %p94 = por %p92, %p93
      %p95 = scmp.ne.s32.totalorder %s87, %s90
      %p96 = scmp.eq.s32.totalorder %s9, 0
      %p97 = por %p95, %p96
      %p98 = scmp.ne.s32.totalorder %s87, %s90
      %p99 = scmp.eq.s32.totalorder %s14, 1
      %p100 = por %p98, %p99
      %p101 = scmp.ne.s32.totalorder %s90, %s91
      %p102 = scmp.eq.s32.totalorder %s14, 0
      %p103 = por %p101, %p102
      %p104 = scmp.ne.s32.totalorder %s90, %s91
      %p105 = scmp.eq.s32.totalorder %s15, 1
      %p106 = por %p104, %p105
      %p108 = scmp.ne.s32.totalorder %s91, %s107
      %p109 = scmp.eq.s32.totalorder %s15, 0
      %p110 = por %p108, %p109
      %p111 = scmp.le.s32.totalorder 1, %s9
      %p112 = scmp.lt.s32.totalorder %s9, 3
      %p113 = pnand %p111, %p112
      %p114 = pneg %p113
      // Predicated region
      $region9: #{svhnq_forward.12} parent=5 // pred_check
        _
      $region10: #{svhnq_forward.12} parent=5 // pred_check_branch
        %116 = sbr.rel (%p113) target = $region12
      $region11: #{svhnq_forward.12} parent=5 // pred_region
        %s117 = ssub.s32 %s9, 1
        // Predicated region
        $region13: #{svhnq_forward.12} parent=11 // pred_check
          %p118 = pneg %p56
        $region14: #{svhnq_forward.12} parent=11 // pred_check_branch
          %120 = sbr.rel (%p118) target = $region16
        $region15: #{svhnq_forward.12} parent=11 // pred_region
          _
        $region16: #{svhnq_forward.12} parent=11 // pred_fallthru
          _
        // Predicated region
        $region17: #{svhnq_forward.12} parent=11 // pred_check
          %p121 = pneg %p77
        $region18: #{svhnq_forward.12} parent=11 // pred_check_branch
          %123 = sbr.rel (%p121) target = $region20
        $region19: #{svhnq_forward.12} parent=11 // pred_region
          _
        $region20: #{svhnq_forward.12} parent=11 // pred_fallthru
          _
      $region12: #{svhnq_forward.12} parent=5 // pred_fallthru
        _
      %p124 = scmp.lt.s32.totalorder %s9, 2
      // Predicated region
      $region21: #{svhnq_forward.12} parent=5 // pred_check
        %p125 = pneg %p124
      $region22: #{svhnq_forward.12} parent=5 // pred_check_branch
        %127 = sbr.rel (%p125) target = $region24
      $region23: #{svhnq_forward.12} parent=5 // pred_region
        // Predicated region
        $region25: #{svhnq_forward.12} parent=23 // pred_check
          %p128 = pneg %p29
        $region26: #{svhnq_forward.12} parent=23 // pred_check_branch
          %130 = sbr.rel (%p128) target = $region28
        $region27: #{svhnq_forward.12} parent=23 // pred_region
          %s131 = sand.u32 %s19, 1
          %s132 = sand.u32 %s19, 1
          %s133 = smul.addr %s132, 16
          %s134 = scalar_lea.vmem [#allocation2], %s133
          %s135 = smul.u32 2, %s9
          %s136 = smul.addr %s135, 4
          %s137 = scalar_lea.vmem %s0, %s136
          // Predicated region
          $region29: #{svhnq_forward.12} parent=27 // pred_check
            _
          $region30: #{svhnq_forward.12} parent=27 // pred_check_branch
            %139 = sbr.rel (0) target = $region32
          $region31: #{svhnq_forward.12} parent=27 // pred_region
            // Predicated region
            $region33: #{svhnq_forward.12} parent=31 // pred_check
              _
            $region34: #{svhnq_forward.12} parent=31 // pred_check_branch
              %141 = sbr.rel (0) target = $region36
            $region35: #{svhnq_forward.12} parent=31 // pred_region
              // Predicated region
              $region48: #{svhnq_forward.12} parent=35 // pred_check
                _
              $region49: #{svhnq_forward.12} parent=35 // pred_check_branch
                %158 = sbr.rel (0) target = $region51
              $region50: #{svhnq_forward.12} parent=35 // pred_region
                loop: start=0, step=1, limit=1
                $region52: #{svhnq_forward.12} parent=50 // loop_pre_header
                  _
                $region53: #{svhnq_forward.12} parent=50 // loop_header
                  %s160 = sphi 0, %s164
                  %p161 = scmp.ge.s32.totalorder %s160, 1
                  %s165 = sphi %s137, %s137
                  %s166 = sphi %s134, %s134
                $region54: #{svhnq_forward.12} parent=50 // loop_header_branch
                  %163 = sbr.rel (%p161) target = $region58
                $region55: #{svhnq_forward.12} parent=50 // loop_body
                  %v167 = vld [vmem:[%s165] sm:$0xff]
                  %168 = vst [vmem:[%s166] sm:$0xff] %v167
                  %v169 = vld [vmem:[%s165 + $0x10] sm:$0xff]
                  %170 = vst [vmem:[%s166 + $0x8] sm:$0xff] %v169
                $region56: #{svhnq_forward.12} parent=50 // loop_footer
                  %s164 = sadd.s32 1, %s160
                $region57: #{svhnq_forward.12} parent=50 // loop_footer_branch
                  %159 = sbr.rel target = $region53
                $region58: #{svhnq_forward.12} parent=50 // loop_exit
                  _
              $region51: #{svhnq_forward.12} parent=35 // pred_fallthru
                _
              // Predicated region
              $region59: #{svhnq_forward.12} parent=35 // pred_check
                _
              $region60: #{svhnq_forward.12} parent=35 // pred_check_branch
                %172 = sbr.rel target = $region62
              $region61: #{svhnq_forward.12} parent=35 // pred_region
                _
              $region62: #{svhnq_forward.12} parent=35 // pred_fallthru
                _
            $region36: #{svhnq_forward.12} parent=31 // pred_fallthru
              _
            // Predicated region
            $region37: #{svhnq_forward.12} parent=31 // pred_check
              _
            $region38: #{svhnq_forward.12} parent=31 // pred_check_branch
              %143 = sbr.rel target = $region40
            $region39: #{svhnq_forward.12} parent=31 // pred_region
              loop: start=0, step=1, limit=1
              $region41: #{svhnq_forward.12} parent=39 // loop_pre_header
                _
              $region42: #{svhnq_forward.12} parent=39 // loop_header
                %s146 = sphi 0, %s150
                %p147 = scmp.ge.s32.totalorder %s146, 1
                %s151 = sphi %s137, %s137
                %s152 = sphi %s134, %s134
              $region43: #{svhnq_forward.12} parent=39 // loop_header_branch
                %149 = sbr.rel (%p147) target = $region47
              $region44: #{svhnq_forward.12} parent=39 // loop_body
                %v153 = vld [vmem:[%s151] sm:$0xff]
                %154 = vst [vmem:[%s152] sm:$0xff] %v153
                %v155 = vld [vmem:[%s151 + $0x10] sm:$0xff]
                %156 = vst [vmem:[%s152 + $0x8] sm:$0xff] %v155
              $region45: #{svhnq_forward.12} parent=39 // loop_footer
                %s150 = sadd.s32 1, %s146
              $region46: #{svhnq_forward.12} parent=39 // loop_footer_branch
                %145 = sbr.rel target = $region42
              $region47: #{svhnq_forward.12} parent=39 // loop_exit
                _
            $region40: #{svhnq_forward.12} parent=31 // pred_fallthru
              _
          $region32: #{svhnq_forward.12} parent=27 // pred_fallthru
            _
          %173 = vnop
        $region28: #{svhnq_forward.12} parent=23 // pred_fallthru
          _
      $region24: #{svhnq_forward.12} parent=5 // pred_fallthru
        _
      %p174 = scmp.le.s32.totalorder 1, %s9
      %p175 = scmp.lt.s32.totalorder %s9, 3
      %p176 = pnand %p174, %p175
      %p177 = pneg %p176
      // Predicated region
      $region63: #{svhnq_forward.12} parent=5 // pred_check
        _
      $region64: #{svhnq_forward.12} parent=5 // pred_check_branch
        %179 = sbr.rel (%p176) target = $region66
      $region65: #{svhnq_forward.12} parent=5 // pred_region
        %s180 = ssub.s32 %s9, 1
        %s181 = sand.u32 %s22, 1
        %s182 = sand.u32 %s22, 1
        %s183 = smul.addr %s182, 16
        %s184 = scalar_lea.vmem [#allocation2], %s183
        // Predicated region
        $region67: #{svhnq_forward.12} parent=65 // pred_check
          %p185 = pneg %p35
        $region68: #{svhnq_forward.12} parent=65 // pred_check_branch
          %187 = sbr.rel (%p185) target = $region70
        $region69: #{svhnq_forward.12} parent=65 // pred_region
          _
        $region70: #{svhnq_forward.12} parent=65 // pred_fallthru
          _
        %s188 = sand.u32 %s22, 1
        %s189 = sand.u32 %s22, 1
        %s190 = smul.addr %s189, 16
        %s191 = scalar_lea.vmem [#allocation2], %s190
        %p192 = pneg %p35
        %p193 = pneg %p32
        %p194 = pneg %p56
        %p195 = pneg %p53
        %p196 = pneg %p77
        %p197 = pneg %p74
        %p198 = pneg %p103
        %p199 = pneg %p100
        %s200 = sand.u32 %s90, 1
        %s201 = sand.u32 %s90, 1
        %s202 = smul.addr %s201, 8
        %s203 = scalar_lea.vmem [#allocation3], %s202
        %s204 = smul.u32 2, %s14
        %v206 = vld [vmem:[%s184] sm:$0xff]
        %v207 = vld [vmem:[%s184 + $0x8] sm:$0xff]
        %v208 = vld [vmem:[%s1] sm:$0xf]
        %v209 = vld [vmem:[%s1 + $0x4] sm:$0xf]
        %s210 = scalar_lea.vmem %s1, 8
        %v211 = vld [vmem:[%s210] sm:$0xf]
        %v212 = vld [vmem:[%s210 + $0x4] sm:$0xf]
        %v215 = vunpack.c.l.b16 %v211
        %v216 = vunpack.c.l.b16 %v212
        %v217 = vpack.c.b16 %v216, %v215
        %v220 = vunpack.c.l.b16 %v206
        %v221 = vunpack.c.h.b16 %v206
        %v222 = vunpack.c.l.b16 %v207
        %v223 = vunpack.c.h.b16 %v207
        %v224 = vpack.c.b16 %v222, %v220
        %v225 = vpack.c.b16 %v223, %v221
        %226 = vrot.lane.b32.xlu0 %v224, 127
        %v227 = vpop.permute.xlu0 %226
        %228 = vrot.lane.b32.xlu0 %v225, 127
        %v229 = vpop.permute.xlu0 %228
        %vm230 = vcmask 1039360
        %v231 = vsel %vm230, %v227, %v229
        %vm233 = vcmask 130048
        %v235 = vsel %vm233, %v217, 0
        %237 = vmatprep.subr.bf16.mxu0 0
        %238 = vmatpush1.bf16.msra.mxu0 %v231
        %239 = vmatprep.subr.bf16.mxu0 0
        %240 = vmatpush1.bf16.msra.mxu0 0
        %241 = vmatprep.subr.bf16.mxu0 0
        %242 = vmatpush1.bf16.msra.mxu0 0
        %243 = vmatprep.subr.bf16.mxu0 0
        %244 = vmatpush1.bf16.msra.mxu0 0
        %245 = vmatprep.subr.bf16.mxu0 0
        %246 = vmatpush1.bf16.msra.mxu0 0
        %247 = vmatprep.subr.bf16.mxu0 0
        %248 = vmatpush1.bf16.msra.mxu0 0
        %249 = vmatprep.subr.bf16.mxu0 0
        %250 = vmatpush1.bf16.msra.mxu0 0
        %251 = vmatprep.subr.bf16.mxu0 0
        %252 = vmatpush1.bf16.msra.mxu0 0
        %253 = vmatprep.subr.bf16.mxu0 0
        %254 = vmatpush1.bf16.msra.mxu0 0
        %255 = vmatprep.subr.bf16.mxu0 0
        %256 = vmatpush1.bf16.msra.mxu0 0
        %257 = vmatprep.subr.bf16.mxu0 0
        %258 = vmatpush1.bf16.msra.mxu0 0
        %259 = vmatprep.subr.bf16.mxu0 0
        %260 = vmatpush1.bf16.msra.mxu0 0
        %261 = vmatprep.subr.bf16.mxu0 0
        %262 = vmatpush1.bf16.msra.mxu0 0
        %263 = vmatprep.subr.bf16.mxu0 0
        %264 = vmatpush1.bf16.msra.mxu0 0
        %265 = vmatprep.subr.bf16.mxu0 0
        %266 = vmatpush1.bf16.msra.mxu0 0
        %267 = vmatprep.subr.bf16.mxu0 0
        %268 = vmatpush1.bf16.msra.mxu0 0
        %269 = vmatprep.mubr.bf16.mxu0 0
        %270 = vmatmul.mubr.bf16.gmra.mrb[0].mxu0 %v235
        %v271 = vpop.f32.mrb[0].mxu0
        %v272 = vadd.f32 0.0, %v271
        %v273 = vpop.f32.mrb[0].mxu0
        %v274 = vpop.f32.mrb[0].mxu0
        %v275 = vadd.f32 0.0, %v274
        %v276 = vpop.f32.mrb[0].mxu0
        %277 = vdwg.mxu0
        %v280 = vunpack.c.l.b16 %v208
        %v281 = vunpack.c.l.b16 %v209
        %v282 = vpack.c.b16 %v281, %v280
        %v285 = vsel %vm233, %v282, 0
        %287 = vmatprep.subr.bf16.mxu0 0
        %288 = vmatpush1.bf16.msra.mxu0 %v224
        %289 = vmatprep.subr.bf16.mxu0 0
        %290 = vmatpush1.bf16.msra.mxu0 0
        %291 = vmatprep.subr.bf16.mxu0 0
        %292 = vmatpush1.bf16.msra.mxu0 0
        %293 = vmatprep.subr.bf16.mxu0 0
        %294 = vmatpush1.bf16.msra.mxu0 0
        %295 = vmatprep.subr.bf16.mxu0 0
        %296 = vmatpush1.bf16.msra.mxu0 0
        %297 = vmatprep.subr.bf16.mxu0 0
        %298 = vmatpush1.bf16.msra.mxu0 0
        %299 = vmatprep.subr.bf16.mxu0 0
        %300 = vmatpush1.bf16.msra.mxu0 0
        %301 = vmatprep.subr.bf16.mxu0 0
        %302 = vmatpush1.bf16.msra.mxu0 0
        %303 = vmatprep.subr.bf16.mxu0 0
        %304 = vmatpush1.bf16.msra.mxu0 0
        %305 = vmatprep.subr.bf16.mxu0 0
        %306 = vmatpush1.bf16.msra.mxu0 0
        %307 = vmatprep.subr.bf16.mxu0 0
        %308 = vmatpush1.bf16.msra.mxu0 0
        %309 = vmatprep.subr.bf16.mxu0 0
        %310 = vmatpush1.bf16.msra.mxu0 0
        %311 = vmatprep.subr.bf16.mxu0 0
        %312 = vmatpush1.bf16.msra.mxu0 0
        %313 = vmatprep.subr.bf16.mxu0 0
        %314 = vmatpush1.bf16.msra.mxu0 0
        %315 = vmatprep.subr.bf16.mxu0 0
        %316 = vmatpush1.bf16.msra.mxu0 0
        %317 = vmatprep.subr.bf16.mxu0 0
        %318 = vmatpush1.bf16.msra.mxu0 0
        %319 = vmatprep.mubr.bf16.mxu0 0
        %320 = vmatmul.mubr.bf16.gmra.mrb[0].mxu0 %v285
        %v321 = vpop.f32.mrb[0].mxu0
        %v322 = vadd.f32 %v272, %v321
        %v323 = vpop.f32.mrb[0].mxu0
        %v324 = vpop.f32.mrb[0].mxu0
        %v325 = vadd.f32 %v275, %v324
        %v326 = vpop.f32.mrb[0].mxu0
        %327 = vdwg.mxu0
        %s328 = scalar_lea.vmem %s1, 16
        %v329 = vld [vmem:[%s328] sm:$0xf]
        %v330 = vld [vmem:[%s328 + $0x4] sm:$0xf]
        %v333 = vunpack.c.l.b16 %v329
        %v334 = vunpack.c.l.b16 %v330
        %v335 = vpack.c.b16 %v334, %v333
        %336 = vrot.lane.b32.xlu0 %v224, 126
        %v337 = vpop.permute.xlu0 %336
        %338 = vrot.lane.b32.xlu0 %v225, 126
        %v339 = vpop.permute.xlu0 %338
        %vm340 = vcmask 1031168
        %v341 = vsel %vm340, %v337, %v339
        %v344 = vsel %vm233, %v335, 0
        %346 = vmatprep.subr.bf16.mxu0 0
        %347 = vmatpush1.bf16.msra.mxu0 %v341
        %348 = vmatprep.subr.bf16.mxu0 0
        %349 = vmatpush1.bf16.msra.mxu0 0
        %350 = vmatprep.subr.bf16.mxu0 0
        %351 = vmatpush1.bf16.msra.mxu0 0
        %352 = vmatprep.subr.bf16.mxu0 0
        %353 = vmatpush1.bf16.msra.mxu0 0
        %354 = vmatprep.subr.bf16.mxu0 0
        %355 = vmatpush1.bf16.msra.mxu0 0
        %356 = vmatprep.subr.bf16.mxu0 0
        %357 = vmatpush1.bf16.msra.mxu0 0
        %358 = vmatprep.subr.bf16.mxu0 0
        %359 = vmatpush1.bf16.msra.mxu0 0
        %360 = vmatprep.subr.bf16.mxu0 0
        %361 = vmatpush1.bf16.msra.mxu0 0
        %362 = vmatprep.subr.bf16.mxu0 0
        %363 = vmatpush1.bf16.msra.mxu0 0
        %364 = vmatprep.subr.bf16.mxu0 0
        %365 = vmatpush1.bf16.msra.mxu0 0
        %366 = vmatprep.subr.bf16.mxu0 0
        %367 = vmatpush1.bf16.msra.mxu0 0
        %368 = vmatprep.subr.bf16.mxu0 0
        %369 = vmatpush1.bf16.msra.mxu0 0
        %370 = vmatprep.subr.bf16.mxu0 0
        %371 = vmatpush1.bf16.msra.mxu0 0
        %372 = vmatprep.subr.bf16.mxu0 0
        %373 = vmatpush1.bf16.msra.mxu0 0
        %374 = vmatprep.subr.bf16.mxu0 0
        %375 = vmatpush1.bf16.msra.mxu0 0
        %376 = vmatprep.subr.bf16.mxu0 0
        %377 = vmatpush1.bf16.msra.mxu0 0
        %378 = vmatprep.mubr.bf16.mxu0 0
        %379 = vmatmul.mubr.bf16.gmra.mrb[0].mxu0 %v344
        %v380 = vpop.f32.mrb[0].mxu0
        %v381 = vadd.f32 0.0, %v380
        %v382 = vpop.f32.mrb[0].mxu0
        %v383 = vpop.f32.mrb[0].mxu0
        %v384 = vadd.f32 0.0, %v383
        %v385 = vpop.f32.mrb[0].mxu0
        %386 = vdwg.mxu0
        %v387 = vadd.f32 %v322, %v381
        %v388 = vadd.f32 %v325, %v384
        %s389 = scalar_lea.vmem %s1, 24
        %v390 = vld [vmem:[%s389] sm:$0xf]
        %v391 = vld [vmem:[%s389 + $0x4] sm:$0xf]
        %v394 = vunpack.c.l.b16 %v390
        %v395 = vunpack.c.l.b16 %v391
        %v396 = vpack.c.b16 %v395, %v394
        %397 = vrot.lane.b32.xlu0 %v224, 121
        %v398 = vpop.permute.xlu0 %397
        %399 = vrot.lane.b32.xlu0 %v225, 121
        %v400 = vpop.permute.xlu0 %399
        %vm401 = vcmask 990208
        %v402 = vsel %vm401, %v398, %v400
        %v405 = vsel %vm233, %v396, 0
        %407 = vmatprep.subr.bf16.mxu0 0
        %408 = vmatpush1.bf16.msra.mxu0 %v402
        %409 = vmatprep.subr.bf16.mxu0 0
        %410 = vmatpush1.bf16.msra.mxu0 0
        %411 = vmatprep.subr.bf16.mxu0 0
        %412 = vmatpush1.bf16.msra.mxu0 0
        %413 = vmatprep.subr.bf16.mxu0 0
        %414 = vmatpush1.bf16.msra.mxu0 0
        %415 = vmatprep.subr.bf16.mxu0 0
        %416 = vmatpush1.bf16.msra.mxu0 0
        %417 = vmatprep.subr.bf16.mxu0 0
        %418 = vmatpush1.bf16.msra.mxu0 0
        %419 = vmatprep.subr.bf16.mxu0 0
        %420 = vmatpush1.bf16.msra.mxu0 0
        %421 = vmatprep.subr.bf16.mxu0 0
        %422 = vmatpush1.bf16.msra.mxu0 0
        %423 = vmatprep.subr.bf16.mxu0 0
        %424 = vmatpush1.bf16.msra.mxu0 0
        %425 = vmatprep.subr.bf16.mxu0 0
        %426 = vmatpush1.bf16.msra.mxu0 0
        %427 = vmatprep.subr.bf16.mxu0 0
        %428 = vmatpush1.bf16.msra.mxu0 0
        %429 = vmatprep.subr.bf16.mxu0 0
        %430 = vmatpush1.bf16.msra.mxu0 0
        %431 = vmatprep.subr.bf16.mxu0 0
        %432 = vmatpush1.bf16.msra.mxu0 0
        %433 = vmatprep.subr.bf16.mxu0 0
        %434 = vmatpush1.bf16.msra.mxu0 0
        %435 = vmatprep.subr.bf16.mxu0 0
        %436 = vmatpush1.bf16.msra.mxu0 0
        %437 = vmatprep.subr.bf16.mxu0 0
        %438 = vmatpush1.bf16.msra.mxu0 0
        %439 = vmatprep.mubr.bf16.mxu0 0
        %440 = vmatmul.mubr.bf16.gmra.mrb[0].mxu0 %v405
        %v441 = vpop.f32.mrb[0].mxu0
        %v442 = vadd.f32 0.0, %v441
        %v443 = vpop.f32.mrb[0].mxu0
        %v444 = vpop.f32.mrb[0].mxu0
        %v445 = vadd.f32 0.0, %v444
        %v446 = vpop.f32.mrb[0].mxu0
        %447 = vdwg.mxu0
        %v448 = vadd.f32 %v387, %v442
        %v449 = vadd.f32 %v388, %v445
        %s450 = scalar_lea.vmem %s1, 32
        %v451 = vld [vmem:[%s450] sm:$0xf]
        %v452 = vld [vmem:[%s450 + $0x4] sm:$0xf]
        %v455 = vunpack.c.l.b16 %v451
        %v456 = vunpack.c.l.b16 %v452
        %v457 = vpack.c.b16 %v456, %v455
        %458 = vrot.lane.b32.xlu0 %v224, 120
        %v459 = vpop.permute.xlu0 %458
        %460 = vrot.lane.b32.xlu0 %v225, 120
        %v461 = vpop.permute.xlu0 %460
        %vm462 = vcmask 982016
        %v463 = vsel %vm462, %v459, %v461
        %v466 = vsel %vm233, %v457, 0
        %468 = vmatprep.subr.bf16.mxu0 0
        %469 = vmatpush1.bf16.msra.mxu0 %v463
        %470 = vmatprep.subr.bf16.mxu0 0
        %471 = vmatpush1.bf16.msra.mxu0 0
        %472 = vmatprep.subr.bf16.mxu0 0
        %473 = vmatpush1.bf16.msra.mxu0 0
        %474 = vmatprep.subr.bf16.mxu0 0
        %475 = vmatpush1.bf16.msra.mxu0 0
        %476 = vmatprep.subr.bf16.mxu0 0
        %477 = vmatpush1.bf16.msra.mxu0 0
        %478 = vmatprep.subr.bf16.mxu0 0
        %479 = vmatpush1.bf16.msra.mxu0 0
        %480 = vmatprep.subr.bf16.mxu0 0
        %481 = vmatpush1.bf16.msra.mxu0 0
        %482 = vmatprep.subr.bf16.mxu0 0
        %483 = vmatpush1.bf16.msra.mxu0 0
        %484 = vmatprep.subr.bf16.mxu0 0
        %485 = vmatpush1.bf16.msra.mxu0 0
        %486 = vmatprep.subr.bf16.mxu0 0
        %487 = vmatpush1.bf16.msra.mxu0 0
        %488 = vmatprep.subr.bf16.mxu0 0
        %489 = vmatpush1.bf16.msra.mxu0 0
        %490 = vmatprep.subr.bf16.mxu0 0
        %491 = vmatpush1.bf16.msra.mxu0 0
        %492 = vmatprep.subr.bf16.mxu0 0
        %493 = vmatpush1.bf16.msra.mxu0 0
        %494 = vmatprep.subr.bf16.mxu0 0
        %495 = vmatpush1.bf16.msra.mxu0 0
        %496 = vmatprep.subr.bf16.mxu0 0
        %497 = vmatpush1.bf16.msra.mxu0 0
        %498 = vmatprep.subr.bf16.mxu0 0
        %499 = vmatpush1.bf16.msra.mxu0 0
        %500 = vmatprep.mubr.bf16.mxu0 0
        %501 = vmatmul.mubr.bf16.gmra.mrb[0].mxu0 %v466
        %v502 = vpop.f32.mrb[0].mxu0
        %v503 = vadd.f32 0.0, %v502
        %v504 = vpop.f32.mrb[0].mxu0
        %v505 = vpop.f32.mrb[0].mxu0
        %v506 = vadd.f32 0.0, %v505
        %v507 = vpop.f32.mrb[0].mxu0
        %508 = vdwg.mxu0
        %v509 = vadd.f32 %v448, %v503
        %v510 = vadd.f32 %v449, %v506
        %s511 = scalar_lea.vmem %s1, 40
        %v512 = vld [vmem:[%s511] sm:$0xf]
        %v513 = vld [vmem:[%s511 + $0x4] sm:$0xf]
        %v516 = vunpack.c.l.b16 %v512
        %v517 = vunpack.c.l.b16 %v513
        %v518 = vpack.c.b16 %v517, %v516
        %519 = vrot.lane.b32.xlu0 %v224, 119
        %v520 = vpop.permute.xlu0 %519
        %521 = vrot.lane.b32.xlu0 %v225, 119
        %v522 = vpop.permute.xlu0 %521
        %vm523 = vcmask 973824
        %v524 = vsel %vm523, %v520, %v522
        %v527 = vsel %vm233, %v518, 0
        %529 = vmatprep.subr.bf16.mxu0 0
        %530 = vmatpush1.bf16.msra.mxu0 %v524
        %531 = vmatprep.subr.bf16.mxu0 0
        %532 = vmatpush1.bf16.msra.mxu0 0
        %533 = vmatprep.subr.bf16.mxu0 0
        %534 = vmatpush1.bf16.msra.mxu0 0
        %535 = vmatprep.subr.bf16.mxu0 0
        %536 = vmatpush1.bf16.msra.mxu0 0
        %537 = vmatprep.subr.bf16.mxu0 0
        %538 = vmatpush1.bf16.msra.mxu0 0
        %539 = vmatprep.subr.bf16.mxu0 0
        %540 = vmatpush1.bf16.msra.mxu0 0
        %541 = vmatprep.subr.bf16.mxu0 0
        %542 = vmatpush1.bf16.msra.mxu0 0
        %543 = vmatprep.subr.bf16.mxu0 0
        %544 = vmatpush1.bf16.msra.mxu0 0
        %545 = vmatprep.subr.bf16.mxu0 0
        %546 = vmatpush1.bf16.msra.mxu0 0
        %547 = vmatprep.subr.bf16.mxu0 0
        %548 = vmatpush1.bf16.msra.mxu0 0
        %549 = vmatprep.subr.bf16.mxu0 0
        %550 = vmatpush1.bf16.msra.mxu0 0
        %551 = vmatprep.subr.bf16.mxu0 0
        %552 = vmatpush1.bf16.msra.mxu0 0
        %553 = vmatprep.subr.bf16.mxu0 0
        %554 = vmatpush1.bf16.msra.mxu0 0
        %555 = vmatprep.subr.bf16.mxu0 0
        %556 = vmatpush1.bf16.msra.mxu0 0
        %557 = vmatprep.subr.bf16.mxu0 0
        %558 = vmatpush1.bf16.msra.mxu0 0
        %559 = vmatprep.subr.bf16.mxu0 0
        %560 = vmatpush1.bf16.msra.mxu0 0
        %561 = vmatprep.mubr.bf16.mxu0 0
        %562 = vmatmul.mubr.bf16.gmra.mrb[0].mxu0 %v527
        %v563 = vpop.f32.mrb[0].mxu0
        %v564 = vadd.f32 0.0, %v563
        %v565 = vpop.f32.mrb[0].mxu0
        %v566 = vpop.f32.mrb[0].mxu0
        %v567 = vadd.f32 0.0, %v566
        %v568 = vpop.f32.mrb[0].mxu0
        %569 = vdwg.mxu0
        %v570 = vadd.f32 %v509, %v564
        %v571 = vadd.f32 %v510, %v567
        %s572 = scalar_lea.vmem %s1, 48
        %v573 = vld [vmem:[%s572] sm:$0xf]
        %v574 = vld [vmem:[%s572 + $0x4] sm:$0xf]
        %v577 = vunpack.c.l.b16 %v573
        %v578 = vunpack.c.l.b16 %v574
        %v579 = vpack.c.b16 %v578, %v577
        %580 = vrot.lane.b32.xlu0 %v224, 114
        %v581 = vpop.permute.xlu0 %580
        %582 = vrot.lane.b32.xlu0 %v225, 114
        %v583 = vpop.permute.xlu0 %582
        %vm584 = vcmask 932864
        %v585 = vsel %vm584, %v581, %v583
        %v588 = vsel %vm233, %v579, 0
        %590 = vmatprep.subr.bf16.mxu0 0
        %591 = vmatpush1.bf16.msra.mxu0 %v585
        %592 = vmatprep.subr.bf16.mxu0 0
        %593 = vmatpush1.bf16.msra.mxu0 0
        %594 = vmatprep.subr.bf16.mxu0 0
        %595 = vmatpush1.bf16.msra.mxu0 0
        %596 = vmatprep.subr.bf16.mxu0 0
        %597 = vmatpush1.bf16.msra.mxu0 0
        %598 = vmatprep.subr.bf16.mxu0 0
        %599 = vmatpush1.bf16.msra.mxu0 0
        %600 = vmatprep.subr.bf16.mxu0 0
        %601 = vmatpush1.bf16.msra.mxu0 0
        %602 = vmatprep.subr.bf16.mxu0 0
        %603 = vmatpush1.bf16.msra.mxu0 0
        %604 = vmatprep.subr.bf16.mxu0 0
        %605 = vmatpush1.bf16.msra.mxu0 0
        %606 = vmatprep.subr.bf16.mxu0 0
        %607 = vmatpush1.bf16.msra.mxu0 0
        %608 = vmatprep.subr.bf16.mxu0 0
        %609 = vmatpush1.bf16.msra.mxu0 0
        %610 = vmatprep.subr.bf16.mxu0 0
        %611 = vmatpush1.bf16.msra.mxu0 0
        %612 = vmatprep.subr.bf16.mxu0 0
        %613 = vmatpush1.bf16.msra.mxu0 0
        %614 = vmatprep.subr.bf16.mxu0 0
        %615 = vmatpush1.bf16.msra.mxu0 0
        %616 = vmatprep.subr.bf16.mxu0 0
        %617 = vmatpush1.bf16.msra.mxu0 0
        %618 = vmatprep.subr.bf16.mxu0 0
        %619 = vmatpush1.bf16.msra.mxu0 0
        %620 = vmatprep.subr.bf16.mxu0 0
        %621 = vmatpush1.bf16.msra.mxu0 0
        %622 = vmatprep.mubr.bf16.mxu0 0
        %623 = vmatmul.mubr.bf16.gmra.mrb[0].mxu0 %v588
        %v624 = vpop.f32.mrb[0].mxu0
        %v625 = vadd.f32 0.0, %v624
        %v626 = vpop.f32.mrb[0].mxu0
        %v627 = vpop.f32.mrb[0].mxu0
        %v628 = vadd.f32 0.0, %v627
        %v629 = vpop.f32.mrb[0].mxu0
        %630 = vdwg.mxu0
        %v631 = vadd.f32 %v570, %v625
        %v632 = vadd.f32 %v571, %v628
        %s633 = scalar_lea.vmem %s1, 56
        %v634 = vld [vmem:[%s633] sm:$0xf]
        %v635 = vld [vmem:[%s633 + $0x4] sm:$0xf]
        %v638 = vunpack.c.l.b16 %v634
        %v639 = vunpack.c.l.b16 %v635
        %v640 = vpack.c.b16 %v639, %v638
        %641 = vrot.lane.b32.xlu0 %v224, 113
        %v642 = vpop.permute.xlu0 %641
        %643 = vrot.lane.b32.xlu0 %v225, 113
        %v644 = vpop.permute.xlu0 %643
        %vm645 = vcmask 924672
        %v646 = vsel %vm645, %v642, %v644
        %v649 = vsel %vm233, %v640, 0
        %651 = vmatprep.subr.bf16.mxu0 0
        %652 = vmatpush1.bf16.msra.mxu0 %v646
        %653 = vmatprep.subr.bf16.mxu0 0
        %654 = vmatpush1.bf16.msra.mxu0 0
        %655 = vmatprep.subr.bf16.mxu0 0
        %656 = vmatpush1.bf16.msra.mxu0 0
        %657 = vmatprep.subr.bf16.mxu0 0
        %658 = vmatpush1.bf16.msra.mxu0 0
        %659 = vmatprep.subr.bf16.mxu0 0
        %660 = vmatpush1.bf16.msra.mxu0 0
        %661 = vmatprep.subr.bf16.mxu0 0
        %662 = vmatpush1.bf16.msra.mxu0 0
        %663 = vmatprep.subr.bf16.mxu0 0
        %664 = vmatpush1.bf16.msra.mxu0 0
        %665 = vmatprep.subr.bf16.mxu0 0
        %666 = vmatpush1.bf16.msra.mxu0 0
        %667 = vmatprep.subr.bf16.mxu0 0
        %668 = vmatpush1.bf16.msra.mxu0 0
        %669 = vmatprep.subr.bf16.mxu0 0
        %670 = vmatpush1.bf16.msra.mxu0 0
        %671 = vmatprep.subr.bf16.mxu0 0
        %672 = vmatpush1.bf16.msra.mxu0 0
        %673 = vmatprep.subr.bf16.mxu0 0
        %674 = vmatpush1.bf16.msra.mxu0 0
        %675 = vmatprep.subr.bf16.mxu0 0
        %676 = vmatpush1.bf16.msra.mxu0 0
        %677 = vmatprep.subr.bf16.mxu0 0
        %678 = vmatpush1.bf16.msra.mxu0 0
        %679 = vmatprep.subr.bf16.mxu0 0
        %680 = vmatpush1.bf16.msra.mxu0 0
        %681 = vmatprep.subr.bf16.mxu0 0
        %682 = vmatpush1.bf16.msra.mxu0 0
        %683 = vmatprep.mubr.bf16.mxu0 0
        %684 = vmatmul.mubr.bf16.gmra.mrb[0].mxu0 %v649
        %v685 = vpop.f32.mrb[0].mxu0
        %v686 = vadd.f32 0.0, %v685
        %v687 = vpop.f32.mrb[0].mxu0
        %v688 = vpop.f32.mrb[0].mxu0
        %v689 = vadd.f32 0.0, %v688
        %v690 = vpop.f32.mrb[0].mxu0
        %691 = vdwg.mxu0
        %v692 = vadd.f32 %v631, %v686
        %v693 = vadd.f32 %v632, %v689
        %s694 = scalar_lea.vmem %s1, 64
        %v695 = vld [vmem:[%s694] sm:$0xf]
        %v696 = vld [vmem:[%s694 + $0x4] sm:$0xf]
        %v699 = vunpack.c.l.b16 %v695
        %v700 = vunpack.c.l.b16 %v696
        %v701 = vpack.c.b16 %v700, %v699
        %702 = vrot.lane.b32.xlu0 %v224, 112
        %v703 = vpop.permute.xlu0 %702
        %704 = vrot.lane.b32.xlu0 %v225, 112
        %v705 = vpop.permute.xlu0 %704
        %vm706 = vcmask 916480
        %v707 = vsel %vm706, %v703, %v705
        %v710 = vsel %vm233, %v701, 0
        %712 = vmatprep.subr.bf16.mxu0 0
        %713 = vmatpush1.bf16.msra.mxu0 %v707
        %714 = vmatprep.subr.bf16.mxu0 0
        %715 = vmatpush1.bf16.msra.mxu0 0
        %716 = vmatprep.subr.bf16.mxu0 0
        %717 = vmatpush1.bf16.msra.mxu0 0
        %718 = vmatprep.subr.bf16.mxu0 0
        %719 = vmatpush1.bf16.msra.mxu0 0
        %720 = vmatprep.subr.bf16.mxu0 0
        %721 = vmatpush1.bf16.msra.mxu0 0
        %722 = vmatprep.subr.bf16.mxu0 0
        %723 = vmatpush1.bf16.msra.mxu0 0
        %724 = vmatprep.subr.bf16.mxu0 0
        %725 = vmatpush1.bf16.msra.mxu0 0
        %726 = vmatprep.subr.bf16.mxu0 0
        %727 = vmatpush1.bf16.msra.mxu0 0
        %728 = vmatprep.subr.bf16.mxu0 0
        %729 = vmatpush1.bf16.msra.mxu0 0
        %730 = vmatprep.subr.bf16.mxu0 0
        %731 = vmatpush1.bf16.msra.mxu0 0
        %732 = vmatprep.subr.bf16.mxu0 0
        %733 = vmatpush1.bf16.msra.mxu0 0
        %734 = vmatprep.subr.bf16.mxu0 0
        %735 = vmatpush1.bf16.msra.mxu0 0
        %736 = vmatprep.subr.bf16.mxu0 0
        %737 = vmatpush1.bf16.msra.mxu0 0
        %738 = vmatprep.subr.bf16.mxu0 0
        %739 = vmatpush1.bf16.msra.mxu0 0
        %740 = vmatprep.subr.bf16.mxu0 0
        %741 = vmatpush1.bf16.msra.mxu0 0
        %742 = vmatprep.subr.bf16.mxu0 0
        %743 = vmatpush1.bf16.msra.mxu0 0
        %744 = vmatprep.mubr.bf16.mxu0 0
        %745 = vmatmul.mubr.bf16.gmra.mrb[0].mxu0 %v710
        %v746 = vpop.f32.mrb[0].mxu0
        %v747 = vadd.f32 0.0, %v746
        %v748 = vpop.f32.mrb[0].mxu0
        %v749 = vpop.f32.mrb[0].mxu0
        %v750 = vadd.f32 0.0, %v749
        %v751 = vpop.f32.mrb[0].mxu0
        %752 = vdwg.mxu0
        %v753 = vadd.f32 %v692, %v747
        %v754 = vadd.f32 %v693, %v750
        %v755 = vld [vmem:[%s2] sm:$0xff]
        %v756 = vld [vmem:[%s2 + $0x8] sm:$0xff]
        %758 = vset.pattern.permute.xlu0 0
        %759 = vperm.xlu0 %758, %v755
        %v760 = vpop.permute.xlu0 %759
        %763 = vset.pattern.permute.xlu0 0
        %764 = vperm.xlu0 %763, %v756
        %v765 = vpop.permute.xlu0 %764
        %v767 = vadd.f32 %v753, %v760
        %v768 = vadd.f32 %v754, %v765
        %v769 = vmax.f32 %v767, 0.0
        %v770 = vmax.f32 %v768, 0.0
        %v771 = vmin.f32 %v769, 1.0
        %v772 = vmin.f32 %v770, 1.0
        %v773 = vmul.f32 %v771, 15.0
        %v774 = vmul.f32 %v772, 15.0
        %v775 = vround.ne.pseudo %v773
        %v776 = vround.ne.pseudo %v774
        %v777 = vmul.f32 %v775, 0.06666667
        %v778 = vmul.f32 %v776, 0.06666667
        %v779 = vpack.c.bf16 %v778, %v777
        %v781 = vunpack.c.l.b16 %v779
        %v782 = vunpack.c.h.b16 %v779
        %v783 = vpack.c.b16 %v781, %v781
        %v784 = vpack.c.b16 %v782, %v782
        %787 = vst [vmem:[%s203] sm:$0xf] %v783
        %788 = vst [vmem:[%s203 + $0x4] sm:$0xf] %v784
        %s789 = sand.u32 %s90, 1
        %s790 = sand.u32 %s90, 1
        %s791 = smul.addr %s790, 8
        %s792 = scalar_lea.vmem [#allocation3], %s791
        // Predicated region
        $region71: #{svhnq_forward.12} parent=65 // pred_check
          %p793 = pneg %p100
        $region72: #{svhnq_forward.12} parent=65 // pred_check_branch
          %795 = sbr.rel (%p793) target = $region74
        $region73: #{svhnq_forward.12} parent=65 // pred_region
          %s796 = smul.addr %s14, 4
          %s797 = scalar_lea.vmem %s3, %s796
          // Predicated region
          $region75: #{svhnq_forward.12} parent=73 // pred_check
            _
          $region76: #{svhnq_forward.12} parent=73 // pred_check_branch
            %799 = sbr.rel (0) target = $region78
          $region77: #{svhnq_forward.12} parent=73 // pred_region
            // Predicated region
            $region79: #{svhnq_forward.12} parent=77 // pred_check
              _
            $region80: #{svhnq_forward.12} parent=77 // pred_check_branch
              %801 = sbr.rel target = $region82
            $region81: #{svhnq_forward.12} parent=77 // pred_region
              // Predicated region
              $region94: #{svhnq_forward.12} parent=81 // pred_check
                _
              $region95: #{svhnq_forward.12} parent=81 // pred_check_branch
                %818 = sbr.rel (0) target = $region97
              $region96: #{svhnq_forward.12} parent=81 // pred_region
                loop: start=0, step=1, limit=1
                $region98: #{svhnq_forward.12} parent=96 // loop_pre_header
                  _
                $region99: #{svhnq_forward.12} parent=96 // loop_header
                  %s820 = sphi 0, %s824
                  %p821 = scmp.ge.s32.totalorder %s820, 1
                  %s825 = sphi %s792, %s792
                  %s826 = sphi %s797, %s797
                $region100: #{svhnq_forward.12} parent=96 // loop_header_branch
                  %823 = sbr.rel (%p821) target = $region104
                $region101: #{svhnq_forward.12} parent=96 // loop_body
                  _
                $region102: #{svhnq_forward.12} parent=96 // loop_footer
                  %s824 = sadd.s32 1, %s820
                $region103: #{svhnq_forward.12} parent=96 // loop_footer_branch
                  %819 = sbr.rel target = $region99
                $region104: #{svhnq_forward.12} parent=96 // loop_exit
                  _
                loop: start=0, step=1, limit=1
                $region105: #{svhnq_forward.12} parent=96 // loop_pre_header
                  _
                $region106: #{svhnq_forward.12} parent=96 // loop_header
                  %s829 = sphi 0, %s833
                  %p830 = scmp.ge.s32.totalorder %s829, 1
                  %s834 = sphi %s792, %s792
                  %s835 = sphi %s797, %s797
                $region107: #{svhnq_forward.12} parent=96 // loop_header_branch
                  %832 = sbr.rel (%p830) target = $region111
                $region108: #{svhnq_forward.12} parent=96 // loop_body
                  %v836 = vld [vmem:[%s834] sm:$0xf]
                  %837 = vst [vmem:[%s835] sm:$0xf] %v836
                  %v838 = vld [vmem:[%s834 + $0x4] sm:$0xf]
                  %839 = vst [vmem:[%s835 + $0x8] sm:$0xf] %v838
                $region109: #{svhnq_forward.12} parent=96 // loop_footer
                  %s833 = sadd.s32 1, %s829
                $region110: #{svhnq_forward.12} parent=96 // loop_footer_branch
                  %828 = sbr.rel target = $region106
                $region111: #{svhnq_forward.12} parent=96 // loop_exit
                  _
              $region97: #{svhnq_forward.12} parent=81 // pred_fallthru
                _
            $region82: #{svhnq_forward.12} parent=77 // pred_fallthru
              _
            // Predicated region
            $region83: #{svhnq_forward.12} parent=77 // pred_check
              _
            $region84: #{svhnq_forward.12} parent=77 // pred_check_branch
              %803 = sbr.rel (0) target = $region86
            $region85: #{svhnq_forward.12} parent=77 // pred_region
              loop: start=0, step=1, limit=1
              $region87: #{svhnq_forward.12} parent=85 // loop_pre_header
                _
              $region88: #{svhnq_forward.12} parent=85 // loop_header
                %s806 = sphi 0, %s810
                %p807 = scmp.ge.s32.totalorder %s806, 1
                %s811 = sphi %s792, %s792
                %s812 = sphi %s797, %s797
              $region89: #{svhnq_forward.12} parent=85 // loop_header_branch
                %809 = sbr.rel (%p807) target = $region93
              $region90: #{svhnq_forward.12} parent=85 // loop_body
                %v813 = vld [vmem:[%s811] sm:$0xf]
                %814 = vst [vmem:[%s812] sm:$0xf] %v813
                %v815 = vld [vmem:[%s811 + $0x4] sm:$0xf]
                %816 = vst [vmem:[%s812 + $0x8] sm:$0xf] %v815
              $region91: #{svhnq_forward.12} parent=85 // loop_footer
                %s810 = sadd.s32 1, %s806
              $region92: #{svhnq_forward.12} parent=85 // loop_footer_branch
                %805 = sbr.rel target = $region88
              $region93: #{svhnq_forward.12} parent=85 // loop_exit
                _
            $region86: #{svhnq_forward.12} parent=77 // pred_fallthru
              _
          $region78: #{svhnq_forward.12} parent=73 // pred_fallthru
            _
          %840 = vnop
        $region74: #{svhnq_forward.12} parent=65 // pred_fallthru
          _
      $region66: #{svhnq_forward.12} parent=5 // pred_fallthru
        _
      %p841 = scmp.le.s32.totalorder 2, %s9
      // Predicated region
      $region112: #{svhnq_forward.12} parent=5 // pred_check
        %p842 = pneg %p841
      $region113: #{svhnq_forward.12} parent=5 // pred_check_branch
        %844 = sbr.rel (%p842) target = $region115
      $region114: #{svhnq_forward.12} parent=5 // pred_region
        %s845 = ssub.s32 %s9, 2
        // Predicated region
        $region116: #{svhnq_forward.12} parent=114 // pred_check
          %p846 = pneg %p106
        $region117: #{svhnq_forward.12} parent=114 // pred_check_branch
          %848 = sbr.rel (%p846) target = $region119
        $region118: #{svhnq_forward.12} parent=114 // pred_region
          %s849 = sand.u32 %s91, 1
          %s850 = sand.u32 %s91, 1
          %s851 = smul.addr %s850, 8
          %s852 = scalar_lea.vmem [#allocation3], %s851
        $region119: #{svhnq_forward.12} parent=114 // pred_fallthru
          _
      $region115: #{svhnq_forward.12} parent=5 // pred_fallthru
        _
    $region6: #{svhnq_forward.12} parent=1 // loop_footer
      %s13 = sadd.s32 1, %s9
    $region7: #{svhnq_forward.12} parent=1 // loop_footer_branch
      %8 = sbr.rel target = $region3
    $region8: #{svhnq_forward.12} parent=1 // loop_exit
      _

// kernel: svhnq_forward.13
$region0: #{svhnq_forward.13}
  #allocation0 [shape = 'u32[]', space=smem, size = 0x4, offset = 0x4, fixed_abs, tag = 'smem constant byte address 0x4 - core index']
  #allocation1 [shape = 'u32[144,128]{1,0:T(1,128)}', space=vmem, size = 0x12000, scoped, tag = 'internal scratch']
  %s0 = inlined_call_operand.vmem [shape: bf16[2,400], index: 0, kind: input, shape index: {}]
  %s1 = inlined_call_operand.vmem [shape: bf16[400,64], index: 1, kind: input, shape index: {}]
  %s2 = inlined_call_operand.vmem [shape: bf16[64,10], index: 2, kind: input, shape index: {}]
  %s3 = inlined_call_operand.vmem [shape: f32[1,10], index: 3, kind: input, shape index: {}]
  %s4 = inlined_call_operand.hbm [shape: f32[2,10], index: 4, kind: output, shape index: {}]
  %s5 = sld [smem:[#allocation0]]
  $region26: #{svhnq_forward.13} parent=0
    _
  %s7 = ssub.s32 1, %s5
  %s8 = scalar_select 0, %s7, %s5
  $region1: #{svhnq_forward.13} parent=0
    #allocation2 [shape = 'u8[1024]{0}', space=vmem, size = 0x400, scoped, tag = 'output window, operand 0, single buffered']
    #allocation3 [shape = 's32[1]{0}', space=sflag, size = 0x4, scoped, tag = 'scoped memory for svhnq_forward.13']
    %9 = vsyncpa [#allocation3], 0
    // Predicated region
    $region2: #{svhnq_forward.13} parent=1 // pred_check
      _
    $region3: #{svhnq_forward.13} parent=1 // pred_check_branch
      %11 = sbr.rel (0) target = $region5
    $region4: #{svhnq_forward.13} parent=1 // pred_region
      _
    $region5: #{svhnq_forward.13} parent=1 // pred_fallthru
      _
    // Predicated region
    $region6: #{svhnq_forward.13} parent=1 // pred_check
      _
    $region7: #{svhnq_forward.13} parent=1 // pred_check_branch
      %13 = sbr.rel (0) target = $region9
    $region8: #{svhnq_forward.13} parent=1 // pred_region
      _
    $region9: #{svhnq_forward.13} parent=1 // pred_fallthru
      _
    // Predicated region
    $region10: #{svhnq_forward.13} parent=1 // pred_check
      _
    $region11: #{svhnq_forward.13} parent=1 // pred_check_branch
      %15 = sbr.rel (0) target = $region13
    $region12: #{svhnq_forward.13} parent=1 // pred_region
      _
    $region13: #{svhnq_forward.13} parent=1 // pred_fallthru
      _
    // Predicated region
    $region14: #{svhnq_forward.13} parent=1 // pred_check
      _
    $region15: #{svhnq_forward.13} parent=1 // pred_check_branch
      %17 = sbr.rel (0) target = $region17
    $region16: #{svhnq_forward.13} parent=1 // pred_region
      _
    $region17: #{svhnq_forward.13} parent=1 // pred_fallthru
      _
    %v19 = vld [vmem:[%s0] sm:$0xf]
    %v20 = vld [vmem:[%s1] sm:$0xf]
    %v21 = vld [vmem:[%s1 + $0x4] sm:$0xf]
    %v22 = vld [vmem:[%s1 + $0x8] sm:$0xf]
    %v23 = vld [vmem:[%s1 + $0xc] sm:$0xf]
    %v24 = vld [vmem:[%s1 + $0x10] sm:$0xf]
    %v25 = vld [vmem:[%s1 + $0x14] sm:$0xf]
    %v26 = vld [vmem:[%s1 + $0x18] sm:$0xf]
    %v27 = vld [vmem:[%s1 + $0x1c] sm:$0xf]
    %v28 = vld [vmem:[%s1 + $0x20] sm:$0xf]
    %v29 = vld [vmem:[%s1 + $0x24] sm:$0xf]
    %v30 = vld [vmem:[%s1 + $0x28] sm:$0xf]
    %v31 = vld [vmem:[%s1 + $0x2c] sm:$0xf]
    %v32 = vld [vmem:[%s1 + $0x30] sm:$0xf]
    %v33 = vld [vmem:[%s1 + $0x34] sm:$0xf]
    %v34 = vld [vmem:[%s1 + $0x38] sm:$0xf]
    %v35 = vld [vmem:[%s1 + $0x3c] sm:$0xf]
    %v36 = vld [vmem:[%s1 + $0x40] sm:$0xf]
    %v37 = vld [vmem:[%s1 + $0x44] sm:$0xf]
    %v38 = vld [vmem:[%s1 + $0x48] sm:$0xf]
    %v39 = vld [vmem:[%s1 + $0x4c] sm:$0xf]
    %v40 = vld [vmem:[%s1 + $0x50] sm:$0xf]
    %v41 = vld [vmem:[%s1 + $0x54] sm:$0xf]
    %v42 = vld [vmem:[%s1 + $0x58] sm:$0xf]
    %v43 = vld [vmem:[%s1 + $0x5c] sm:$0xf]
    %v44 = vld [vmem:[%s1 + $0x60] sm:$0xf]
    %v45 = vld [vmem:[%s1 + $0x64] sm:$0xf]
    %v46 = vld [vmem:[%s1 + $0x68] sm:$0xf]
    %v47 = vld [vmem:[%s1 + $0x6c] sm:$0xf]
    %v48 = vld [vmem:[%s1 + $0x70] sm:$0xf]
    %v49 = vld [vmem:[%s1 + $0x74] sm:$0xf]
    %v50 = vld [vmem:[%s1 + $0x78] sm:$0xf]
    %v51 = vld [vmem:[%s1 + $0x7c] sm:$0xf]
    %v52 = vld [vmem:[%s1 + $0x80] sm:$0xf]
    %v53 = vld [vmem:[%s1 + $0x84] sm:$0xf]
    %v54 = vld [vmem:[%s1 + $0x88] sm:$0xf]
    %v55 = vld [vmem:[%s1 + $0x8c] sm:$0xf]
    %v56 = vld [vmem:[%s1 + $0x90] sm:$0xf]
    %v57 = vld [vmem:[%s1 + $0x94] sm:$0xf]
    %v58 = vld [vmem:[%s1 + $0x98] sm:$0xf]
    %v59 = vld [vmem:[%s1 + $0x9c] sm:$0xf]
    %v60 = vld [vmem:[%s1 + $0xa0] sm:$0xf]
    %v61 = vld [vmem:[%s1 + $0xa4] sm:$0xf]
    %v62 = vld [vmem:[%s1 + $0xa8] sm:$0xf]
    %v63 = vld [vmem:[%s1 + $0xac] sm:$0xf]
    %v64 = vld [vmem:[%s1 + $0xb0] sm:$0xf]
    %v65 = vld [vmem:[%s1 + $0xb4] sm:$0xf]
    %v66 = vld [vmem:[%s1 + $0xb8] sm:$0xf]
    %v67 = vld [vmem:[%s1 + $0xbc] sm:$0xf]
    %v68 = vld [vmem:[%s1 + $0xc0] sm:$0xf]
    %v69 = vld [vmem:[%s1 + $0xc4] sm:$0xf]
    %v72 = vunpack.c.l.s4 1966171168
    %v73 = vunpack.c.0.s8 %v72
    %v74 = vlaneseq
    %v75 = vshrl.u32 %v74, 7
    %v76 = vsub.s32 %v73, %v75
    %v77 = vrot.slane %v19, %v76
    %v78 = vcombine.high %v77, %v77
    %v80 = vunpack.c.l.s4 1966171168
    %v81 = vunpack.c.0.s8 %v80
    %v82 = vlaneseq
    %v83 = vshrl.u32 %v82, 7
    %v84 = vsub.s32 %v81, %v83
    %v85 = vrot.slane %v77, %v84
    %v87 = vunpack.c.l.s4 1966171168
    %v88 = vunpack.c.0.s8 %v87
    %v89 = vlaneseq
    %v90 = vshrl.u32 %v89, 7
    %v91 = vsub.s32 %v88, %v90
    %v92 = vrot.slane %v78, %v91
    %v93 = vcombine.high %v85, %v85
    %v94 = vcombine.high %v92, %v92
    %v148 = vunpack.c.l.b16 %v20
    %v149 = vunpack.c.l.b16 %v21
    %v150 = vunpack.c.l.b16 %v22
    %v151 = vunpack.c.l.b16 %v23
    %v152 = vunpack.c.l.b16 %v24
    %v153 = vunpack.c.l.b16 %v25
    %v154 = vunpack.c.l.b16 %v26
    %v155 = vunpack.c.l.b16 %v27
    %v156 = vunpack.c.l.b16 %v28
    %v157 = vunpack.c.l.b16 %v29
    %v158 = vunpack.c.l.b16 %v30
    %v159 = vunpack.c.l.b16 %v31
    %v160 = vunpack.c.l.b16 %v32
    %v161 = vunpack.c.l.b16 %v33
    %v162 = vunpack.c.l.b16 %v34
    %v163 = vunpack.c.l.b16 %v35
    %v164 = vunpack.c.l.b16 %v36
    %v165 = vunpack.c.l.b16 %v37
    %v166 = vunpack.c.l.b16 %v38
    %v167 = vunpack.c.l.b16 %v39
    %v168 = vunpack.c.l.b16 %v40
    %v169 = vunpack.c.l.b16 %v41
    %v170 = vunpack.c.l.b16 %v42
    %v171 = vunpack.c.l.b16 %v43
    %v172 = vunpack.c.l.b16 %v44
    %v173 = vunpack.c.l.b16 %v45
    %v174 = vunpack.c.l.b16 %v46
    %v175 = vunpack.c.l.b16 %v47
    %v176 = vunpack.c.l.b16 %v48
    %v177 = vunpack.c.l.b16 %v49
    %v178 = vunpack.c.l.b16 %v50
    %v179 = vunpack.c.l.b16 %v51
    %v180 = vunpack.c.l.b16 %v52
    %v181 = vunpack.c.l.b16 %v53
    %v182 = vunpack.c.l.b16 %v54
    %v183 = vunpack.c.l.b16 %v55
    %v184 = vunpack.c.l.b16 %v56
    %v185 = vunpack.c.l.b16 %v57
    %v186 = vunpack.c.l.b16 %v58
    %v187 = vunpack.c.l.b16 %v59
    %v188 = vunpack.c.l.b16 %v60
    %v189 = vunpack.c.l.b16 %v61
    %v190 = vunpack.c.l.b16 %v62
    %v191 = vunpack.c.l.b16 %v63
    %v192 = vunpack.c.l.b16 %v64
    %v193 = vunpack.c.l.b16 %v65
    %v194 = vunpack.c.l.b16 %v66
    %v195 = vunpack.c.l.b16 %v67
    %v196 = vunpack.c.l.b16 %v68
    %v197 = vunpack.c.l.b16 %v69
    %v198 = vpack.c.b16 %v149, %v148
    %v199 = vpack.c.b16 %v151, %v150
    %v200 = vpack.c.b16 %v153, %v152
    %v201 = vpack.c.b16 %v155, %v154
    %v202 = vpack.c.b16 %v157, %v156
    %v203 = vpack.c.b16 %v159, %v158
    %v204 = vpack.c.b16 %v161, %v160
    %v205 = vpack.c.b16 %v163, %v162
    %v206 = vpack.c.b16 %v165, %v164
    %v207 = vpack.c.b16 %v167, %v166
    %v208 = vpack.c.b16 %v169, %v168
    %v209 = vpack.c.b16 %v171, %v170
    %v210 = vpack.c.b16 %v173, %v172
    %v211 = vpack.c.b16 %v175, %v174
    %v212 = vpack.c.b16 %v177, %v176
    %v213 = vpack.c.b16 %v179, %v178
    %v214 = vpack.c.b16 %v181, %v180
    %v215 = vpack.c.b16 %v183, %v182
    %v216 = vpack.c.b16 %v185, %v184
    %v217 = vpack.c.b16 %v187, %v186
    %v218 = vpack.c.b16 %v189, %v188
    %v219 = vpack.c.b16 %v191, %v190
    %v220 = vpack.c.b16 %v193, %v192
    %v221 = vpack.c.b16 %v195, %v194
    %v222 = vpack.c.b16 %v197, %v196
    %vm248 = vcmask 130048
    %v250 = vsel %vm248, %v94, 0
    %252 = vmatprep.subr.bf16.mxu0 0
    %253 = vmatpush1.bf16.msra.mxu0 %v198
    %254 = vmatprep.subr.bf16.mxu0 0
    %255 = vmatpush1.bf16.msra.mxu0 %v199
    %256 = vmatprep.subr.bf16.mxu0 0
    %257 = vmatpush1.bf16.msra.mxu0 %v200
    %258 = vmatprep.subr.bf16.mxu0 0
    %259 = vmatpush1.bf16.msra.mxu0 %v201
    %260 = vmatprep.subr.bf16.mxu0 0
    %261 = vmatpush1.bf16.msra.mxu0 %v202
    %262 = vmatprep.subr.bf16.mxu0 0
    %263 = vmatpush1.bf16.msra.mxu0 %v203
    %264 = vmatprep.subr.bf16.mxu0 0
    %265 = vmatpush1.bf16.msra.mxu0 %v204
    %266 = vmatprep.subr.bf16.mxu0 0
    %267 = vmatpush1.bf16.msra.mxu0 %v205
    %268 = vmatprep.subr.bf16.mxu0 0
    %269 = vmatpush1.bf16.msra.mxu0 %v206
    %270 = vmatprep.subr.bf16.mxu0 0
    %271 = vmatpush1.bf16.msra.mxu0 %v207
    %272 = vmatprep.subr.bf16.mxu0 0
    %273 = vmatpush1.bf16.msra.mxu0 %v208
    %274 = vmatprep.subr.bf16.mxu0 0
    %275 = vmatpush1.bf16.msra.mxu0 %v209
    %276 = vmatprep.subr.bf16.mxu0 0
    %277 = vmatpush1.bf16.msra.mxu0 %v210
    %278 = vmatprep.subr.bf16.mxu0 0
    %279 = vmatpush1.bf16.msra.mxu0 %v211
    %280 = vmatprep.subr.bf16.mxu0 0
    %281 = vmatpush1.bf16.msra.mxu0 %v212
    %282 = vmatprep.subr.bf16.mxu0 0
    %283 = vmatpush1.bf16.msra.mxu0 %v213
    %284 = vmatprep.mubr.bf16.mxu0 %v92
    %285 = vmatmul.mubr.bf16.gmra.mrb[0].mxu0 %v85
    %v286 = vpop.f32.mrb[0].mxu0
    %v287 = vadd.f32 0.0, %v286
    %v288 = vpop.f32.mrb[0].mxu0
    %v289 = vpop.f32.mrb[0].mxu0
    %v290 = vpop.f32.mrb[0].mxu0
    %291 = vdwg.mxu0
    %292 = vmatprep.subr.bf16.mxu0 0
    %293 = vmatpush1.bf16.msra.mxu0 %v214
    %294 = vmatprep.subr.bf16.mxu0 0
    %295 = vmatpush1.bf16.msra.mxu0 %v215
    %296 = vmatprep.subr.bf16.mxu0 0
    %297 = vmatpush1.bf16.msra.mxu0 %v216
    %298 = vmatprep.subr.bf16.mxu0 0
    %299 = vmatpush1.bf16.msra.mxu0 %v217
    %300 = vmatprep.subr.bf16.mxu0 0
    %301 = vmatpush1.bf16.msra.mxu0 %v218
    %302 = vmatprep.subr.bf16.mxu0 0
    %303 = vmatpush1.bf16.msra.mxu0 %v219
    %304 = vmatprep.subr.bf16.mxu0 0
    %305 = vmatpush1.bf16.msra.mxu0 %v220
    %306 = vmatprep.subr.bf16.mxu0 0
    %307 = vmatpush1.bf16.msra.mxu0 %v221
    %308 = vmatprep.subr.bf16.mxu0 0
    %309 = vmatpush1.bf16.msra.mxu0 %v222
    %310 = vmatprep.subr.bf16.mxu0 0
    %311 = vmatpush1.bf16.msra.mxu0 0
    %312 = vmatprep.subr.bf16.mxu0 0
    %313 = vmatpush1.bf16.msra.mxu0 0
    %314 = vmatprep.subr.bf16.mxu0 0
    %315 = vmatpush1.bf16.msra.mxu0 0
    %316 = vmatprep.subr.bf16.mxu0 0
    %317 = vmatpush1.bf16.msra.mxu0 0
    %318 = vmatprep.subr.bf16.mxu0 0
    %319 = vmatpush1.bf16.msra.mxu0 0
    %320 = vmatprep.subr.bf16.mxu0 0
    %321 = vmatpush1.bf16.msra.mxu0 0
    %322 = vmatprep.subr.bf16.mxu0 0
    %323 = vmatpush1.bf16.msra.mxu0 0
    %324 = vmatprep.mubr.bf16.mxu0 %v250
    %325 = vmatmul.mubr.bf16.gmra.mrb[0].mxu0 %v93
    %v326 = vpop.f32.mrb[0].mxu0
    %v327 = vadd.f32 %v287, %v326
    %v328 = vpop.f32.mrb[0].mxu0
    %v329 = vpop.f32.mrb[0].mxu0
    %v330 = vpop.f32.mrb[0].mxu0
    %331 = vdwg.mxu0
    %v332 = vmax.f32 %v327, 0.0
    %v333 = vmin.f32 %v332, 1.0
    %v334 = vpack.c.bf16 %v333, %v333
    %v335 = vld [vmem:[%s2] sm:$0xf]
    %v336 = vld [vmem:[%s2 + $0x4] sm:$0xf]
    %v337 = vld [vmem:[%s2 + $0x8] sm:$0xf]
    %v338 = vld [vmem:[%s2 + $0xc] sm:$0xf]
    %v339 = vld [vmem:[%s2 + $0x10] sm:$0xf]
    %v340 = vld [vmem:[%s2 + $0x14] sm:$0xf]
    %v341 = vld [vmem:[%s2 + $0x18] sm:$0xf]
    %v342 = vld [vmem:[%s2 + $0x1c] sm:$0xf]
    %v343 = vld [vmem:[%s3] sm:$0x1]
    %v345 = vlaneseq
    %v346 = vshrl.u32 %v345, 7
    %v347 = vsub.s32 0, %v346
    %v348 = vrot.slane %v343, %v347
    %v358 = vunpack.c.l.b16 %v335
    %v359 = vunpack.c.l.b16 %v336
    %v360 = vunpack.c.l.b16 %v337
    %v361 = vunpack.c.l.b16 %v338
    %v362 = vunpack.c.l.b16 %v339
    %v363 = vunpack.c.l.b16 %v340
    %v364 = vunpack.c.l.b16 %v341
    %v365 = vunpack.c.l.b16 %v342
    %v366 = vpack.c.b16 %v359, %v358
    %v367 = vpack.c.b16 %v361, %v360
    %v368 = vpack.c.b16 %v363, %v362
    %v369 = vpack.c.b16 %v365, %v364
    %vm374 = vcmask 523264
    %v376 = vsel %vm374, %v334, 0
    %378 = vmatprep.subr.bf16.mxu0 0
    %379 = vmatpush1.bf16.msra.mxu0 %v366
    %380 = vmatprep.subr.bf16.mxu0 0
    %381 = vmatpush1.bf16.msra.mxu0 %v367
    %382 = vmatprep.subr.bf16.mxu0 0
    %383 = vmatpush1.bf16.msra.mxu0 %v368
    %384 = vmatprep.subr.bf16.mxu0 0
    %385 = vmatpush1.bf16.msra.mxu0 %v369
    %386 = vmatprep.subr.bf16.mxu0 0
    %387 = vmatpush1.bf16.msra.mxu0 0
    %388 = vmatprep.subr.bf16.mxu0 0
    %389 = vmatpush1.bf16.msra.mxu0 0
    %390 = vmatprep.subr.bf16.mxu0 0
    %391 = vmatpush1.bf16.msra.mxu0 0
    %392 = vmatprep.subr.bf16.mxu0 0
    %393 = vmatpush1.bf16.msra.mxu0 0
    %394 = vmatprep.subr.bf16.mxu0 0
    %395 = vmatpush1.bf16.msra.mxu0 0
    %396 = vmatprep.subr.bf16.mxu0 0
    %397 = vmatpush1.bf16.msra.mxu0 0
    %398 = vmatprep.subr.bf16.mxu0 0
    %399 = vmatpush1.bf16.msra.mxu0 0
    %400 = vmatprep.subr.bf16.mxu0 0
    %401 = vmatpush1.bf16.msra.mxu0 0
    %402 = vmatprep.subr.bf16.mxu0 0
    %403 = vmatpush1.bf16.msra.mxu0 0
    %404 = vmatprep.subr.bf16.mxu0 0
    %405 = vmatpush1.bf16.msra.mxu0 0
    %406 = vmatprep.subr.bf16.mxu0 0
    %407 = vmatpush1.bf16.msra.mxu0 0
    %408 = vmatprep.subr.bf16.mxu0 0
    %409 = vmatpush1.bf16.msra.mxu0 0
    %410 = vmatprep.mubr.bf16.mxu0 0
    %411 = vmatmul.mubr.bf16.gmra.mrb[0].mxu0 %v376
    %v412 = vpop.f32.mrb[0].mxu0
    %v413 = vadd.f32 %v348, %v412
    %v414 = vpop.f32.mrb[0].mxu0
    %v415 = vpop.f32.mrb[0].mxu0
    %v416 = vpop.f32.mrb[0].mxu0
    %417 = vdwg.mxu0
    %vm418 = vcmask 74752
    %419 = vst.msk [vmem:[#allocation2] sm:$0x3] %vm418, %v413
    // Predicated region
    $region18: #{svhnq_forward.13} parent=1 // pred_check
      _
    $region19: #{svhnq_forward.13} parent=1 // pred_check_branch
      %421 = sbr.rel (0) target = $region21
    $region20: #{svhnq_forward.13} parent=1 // pred_region
      %s423 = ssub.s32 32, 32
      %424 = vsyncadd [#allocation3], %s423
      %s426 = sshll.u32 [#allocation2], 4
      %s427 = int_to_ptr.vmem [resolvable:$true] %s426
      %429 = dma.vmem_to_hbm [thread:$0]  %s427, 32, %s4, [#allocation3]
    $region21: #{svhnq_forward.13} parent=1 // pred_fallthru
      _
    // Predicated region
    $region22: #{svhnq_forward.13} parent=1 // pred_check
      _
    $region23: #{svhnq_forward.13} parent=1 // pred_check_branch
      %431 = sbr.rel (0) target = $region25
    $region24: #{svhnq_forward.13} parent=1 // pred_region
      %432 = dma.done [#allocation3], 32
    $region25: #{svhnq_forward.13} parent=1 // pred_fallthru
      _
    %433 = vsyncpa [#allocation3], 1

</llo_original>
